<compile_context>
chip_gen: v7x
topology: tpu7x:2x2x1
jax: 0.10.0
libtpu: 0.0.40
codegen_flags: <defaults>
</compile_context>

<pallas_src>
import functools
import math

import numpy as np
import jax
import jax.numpy as jnp
from jax.experimental import pallas as pl
from jax.experimental.pallas import tpu as pltpu


# ----------------------------------------------------------------------------
# Helpers
# ----------------------------------------------------------------------------
def _round_up(x, m):
    return ((x + m - 1) // m) * m


# ----------------------------------------------------------------------------
# Pallas kernel 1: conv1 im2col matmul (BN scale pre-folded), bias+ReLU.
# grid = (B,): one image (Ho*Wo rows) per step -> 2 parallel tiles on v7x,
# only 2 cheap sequential steps on v5e/v6e.
# ----------------------------------------------------------------------------
def _conv1_kernel(a_ref, w_ref, b_ref, o_ref):
    acc = jnp.dot(a_ref[...], w_ref[...], preferred_element_type=jnp.float32)
    o_ref[...] = jnp.maximum(acc + b_ref[...], 0.0).astype(o_ref.dtype)


def conv1_matmul(cols, w, bias, batch, rows_per_image):
    m_tot, kp = cols.shape
    n = w.shape[1]
    return pl.pallas_call(
        _conv1_kernel,
        out_shape=jax.ShapeDtypeStruct((m_tot, n), jnp.bfloat16),
        grid=(batch,),
        in_specs=[
            pl.BlockSpec((rows_per_image, kp), lambda b: (b, 0)),
            pl.BlockSpec((kp, n), lambda b: (0, 0)),
            pl.BlockSpec((1, n), lambda b: (0, 0)),
        ],
        out_specs=pl.BlockSpec((rows_per_image, n), lambda b: (b, 0)),
        compiler_params=pltpu.CompilerParams(
            dimension_semantics=("parallel",)),
    )(cols, w, bias)


# ----------------------------------------------------------------------------
# Pallas kernel 2: layer1 (2 BasicBlocks, tap-based 3x3 convs from VMEM) fused
# with the whole head (bottleneck+PE+pool+classifier folded into constants,
# masked softmax over classes).  One image per grid step.
# ----------------------------------------------------------------------------
def _layer1_head_kernel(x_ref, w_ref, b_ref, pt_ref, wc_ref, bc_ref, o_ref,
                        pad_ref, *, H, W, C, n_classes):
    HW = H * W
    COFF = 8  # sublane-aligned column offset of the valid window in pad_ref

    # Zero the padded scratch once; the border stays zero, the centre is
    # overwritten before every conv.
    pad_ref[...] = jnp.zeros_like(pad_ref)

    def set_center(val_hwc):                       # val_hwc: (H, W, C) bf16
        pad_ref[1:1 + H, COFF:COFF + W, :] = val_hwc

    def conv3x3(idx):                              # 9-tap sum of matmuls
        acc = jnp.zeros((HW, C), jnp.float32)
        for i in range(3):
            for j in range(3):
                lhs = pad_ref[i:i + H, COFF - 1 + j:COFF - 1 + j + W, :]
                acc = acc + jnp.dot(lhs.reshape(HW, C),
                                    w_ref[idx, i * 3 + j],
                                    preferred_element_type=jnp.float32)
        return acc + b_ref[idx]                    # bias = BN beta (f32)

    x0 = x_ref[0]                                  # (H, W, C) bf16
    ident = x0.reshape(HW, C).astype(jnp.float32)

    # ---- layer1 block 1 ----
    set_center(x0)
    h = jnp.maximum(conv3x3(0), 0.0)
    set_center(h.astype(jnp.bfloat16).reshape(H, W, C))
    x1 = jnp.maximum(conv3x3(1) + ident, 0.0)
    # ---- layer1 block 2 ----
    set_center(x1.astype(jnp.bfloat16).reshape(H, W, C))
    h = jnp.maximum(conv3x3(2), 0.0)
    set_center(h.astype(jnp.bfloat16).reshape(H, W, C))
    x2 = jnp.maximum(conv3x3(3) + x1, 0.0)         # (HW, C) f32

    # ---- fused head ----
    # pooled[s, c] = sum_l PT[s, l] * x2[l, c]   (AdaptiveAvgPool1d(500))
    pooled = jnp.dot(pt_ref[...], x2.astype(jnp.bfloat16),
                     preferred_element_type=jnp.float32)          # (Sp, C)
    # logitsT[k, s] = sum_c Wfold[k, c] * pooled[s, c] + biasT[k, s]
    logits = jax.lax.dot_general(
        wc_ref[...], pooled.astype(jnp.bfloat16),
        (((1,), (1,)), ((), ())),
        preferred_element_type=jnp.float32) + bc_ref[...]         # (Cp, Sp)

    row = jax.lax.broadcasted_iota(jnp.int32, logits.shape, 0)
    logits = jnp.where(row < n_classes, logits, jnp.float32(-1e30))
    m = jnp.max(logits, axis=0, keepdims=True)
    e = jnp.exp(logits - m)
    o_ref[0] = e / jnp.sum(e, axis=0, keepdims=True)


def layer1_head(x, w_l1, b_l1, pt, wcls, bcls, *, n_classes):
    B, H, W, C = x.shape
    Sp, L = pt.shape
    Cp = wcls.shape[0]
    assert L == H * W, (L, H, W)
    kernel = functools.partial(_layer1_head_kernel, H=H, W=W, C=C,
                               n_classes=n_classes)
    return pl.pallas_call(
        kernel,
        out_shape=jax.ShapeDtypeStruct((B, Cp, Sp), jnp.float32),
        grid=(B,),
        in_specs=[
            pl.BlockSpec((1, H, W, C), lambda b: (b, 0, 0, 0)),
            pl.BlockSpec(w_l1.shape, lambda b: (0, 0, 0, 0)),
            pl.BlockSpec(b_l1.shape, lambda b: (0, 0, 0)),
            pl.BlockSpec(pt.shape, lambda b: (0, 0)),
            pl.BlockSpec(wcls.shape, lambda b: (0, 0)),
            pl.BlockSpec(bcls.shape, lambda b: (0, 0)),
        ],
        out_specs=pl.BlockSpec((1, Cp, Sp), lambda b: (b, 0, 0)),
        scratch_shapes=[pltpu.VMEM((H + 2, W + 16, C), jnp.bfloat16)],
        compiler_params=pltpu.CompilerParams(
            dimension_semantics=("parallel",)),
    )(x, w_l1, b_l1, pt, wcls, bcls)


# ----------------------------------------------------------------------------
# XLA glue: im2col for conv1, positional encoding, adaptive-pool matrix
# ----------------------------------------------------------------------------
def _im2col(x, kh, kw, stride, pad):
    # x: (B, H, W, C) bf16 NHWC -> (B*Ho*Wo, kh*kw*C) with (i, j, c) ordering.
    if pad:
        x = jnp.pad(x, ((0, 0), (pad, pad), (pad, pad), (0, 0)))
    B, Hp, Wp, C = x.shape
    Ho = (Hp - kh) // stride + 1
    Wo = (Wp - kw) // stride + 1
    patches = []
    for i in range(kh):
        for j in range(kw):
            patches.append(
                x[:, i:i + (Ho - 1) * stride + 1:stride,
                     j:j + (Wo - 1) * stride + 1:stride, :])
    cols = jnp.stack(patches, axis=3)                 # (B, Ho, Wo, kh*kw, C)
    return cols.reshape(B * Ho * Wo, kh * kw * C), Ho, Wo


def _make_pe_1d(d, max_len):
    pe = np.zeros((max_len, d), np.float32)
    pos = np.arange(max_len, dtype=np.float32)[:, None]
    div = np.exp(np.arange(0, d, 2, dtype=np.float32) * (-math.log(10000.0) / d))
    pe[:, 0::2] = np.sin(pos * div)
    pe[:, 1::2] = np.cos(pos * div)
    return pe


def make_pe_2d(d_model, H, W):
    # PositionalEncoding2D: first half channels encode H, second half encode W.
    dh = d_model // 2
    pe = np.zeros((d_model, H, W), np.float32)
    pe[:dh] = _make_pe_1d(dh, H).T[:, :, None]
    pe[dh:] = _make_pe_1d(dh, W).T[:, None, :]
    return pe


def adaptive_avgpool1d_matrix(L, out_size):
    # nn.AdaptiveAvgPool1d: out[i] = mean(in[floor(i*L/out) : ceil((i+1)*L/out)])
    P = np.zeros((L, out_size), np.float32)
    for i in range(out_size):
        start = (i * L) // out_size
        end = -((-(i + 1) * L) // out_size)
        P[start:end, i] = 1.0 / (end - start)
    return P


# ----------------------------------------------------------------------------
# Parameters (deterministic synthetic init — shapes match Cnn.__init__)
# ----------------------------------------------------------------------------
def init_params(key, d_model, num_classes):
    keys = iter(jax.random.split(key, 32))

    def nk():
        return next(keys)

    def conv_w(cout, cin, kh, kw):
        fan_out = cout * kh * kw
        return jax.random.normal(nk(), (cout, cin, kh, kw),
                                 jnp.float32) * math.sqrt(2.0 / fan_out)

    p = {}
    p["conv1_w"] = conv_w(64, 3, 7, 7)
    p["bn1_g"] = 1.0 + 0.1 * jax.random.normal(nk(), (64,), jnp.float32)
    p["bn1_b"] = 0.1 * jax.random.normal(nk(), (64,), jnp.float32)
    for blk in ("l1b1", "l1b2"):
        for cv in ("1", "2"):
            p[f"{blk}_conv{cv}_w"] = conv_w(64, 64, 3, 3)
            p[f"{blk}_bn{cv}_g"] = 1.0 + 0.1 * jax.random.normal(
                nk(), (64,), jnp.float32)
            p[f"{blk}_bn{cv}_b"] = 0.1 * jax.random.normal(
                nk(), (64,), jnp.float32)
    p["bottleneck_w"] = conv_w(d_model, 64, 1, 1)
    p["bottleneck_b"] = (1.0 / math.sqrt(d_model)) * jax.random.normal(
        nk(), (d_model,), jnp.float32)
    p["toclass_w"] = jax.random.uniform(nk(), (num_classes, d_model),
                                        jnp.float32, -0.1, 0.1)
    p["toclass_b"] = jax.random.uniform(nk(), (num_classes,),
                                        jnp.float32, -0.1, 0.1)
    return p


# ----------------------------------------------------------------------------
# One-time constant preparation: BN scales folded into bf16 weights,
# bottleneck + PE + pool + toclass folded into the head constants.
# ----------------------------------------------------------------------------
def prepare_constants(params, d_model, num_classes, in_hw):
    H, W = in_hw
    eps = 1e-5

    # spatial dims after conv1 (k7 s2 p3) and maxpool (k3 s2 p1)
    Hc1 = (H + 2 * 3 - 7) // 2 + 1
    Wc1 = (W + 2 * 3 - 7) // 2 + 1
    Hp = (Hc1 + 2 * 1 - 3) // 2 + 1
    Wp = (Wc1 + 2 * 1 - 3) // 2 + 1
    L = Hp * Wp
    S, C, E = 500, num_classes, d_model
    Sp = _round_up(S, 128)                       # 512
    Cp = max(_round_up(C, 8), 8)                 # 16 for 10 classes
    Kp1 = _round_up(7 * 7 * 3, 128)              # 256

    def bn_scale(g):   # inference BN with running_mean=0, running_var=1
        return np.asarray(g, np.float32) / np.sqrt(1.0 + eps)

    c = {}
    # conv1: fold BN scale into weight columns
    w1 = np.asarray(params["conv1_w"], np.float32)              # (64,3,7,7)
    w1 = np.transpose(w1, (2, 3, 1, 0)).reshape(7 * 7 * 3, 64)  # (147,64)
    w1 = w1 * bn_scale(params["bn1_g"])[None, :]
    w1 = np.pad(w1, ((0, Kp1 - w1.shape[0]), (0, 0)))
    c["w1"] = jnp.asarray(w1, jnp.bfloat16)
    c["b1"] = jnp.asarray(np.asarray(params["bn1_b"], np.float32)[None, :])

    # layer1: 4 convs, each (9, 64, 64) tap matrices with BN scale folded in
    wl, bl = [], []
    for blk in ("l1b1", "l1b2"):
        for cv in ("1", "2"):
            w = np.asarray(params[f"{blk}_conv{cv}_w"], np.float32)
            w = np.transpose(w, (2, 3, 1, 0)).reshape(9, 64, 64)
            w = w * bn_scale(params[f"{blk}_bn{cv}_g"])[None, None, :]
            wl.append(w)
            bl.append(np.asarray(params[f"{blk}_bn{cv}_b"],
                                 np.float32)[None, :])
    c["w_l1"] = jnp.asarray(np.stack(wl, 0), jnp.bfloat16)      # (4,9,64,64)
    c["b_l1"] = jnp.asarray(np.stack(bl, 0), jnp.float32)       # (4,1,64)

    # head: bottleneck(1x1 conv + bias) + PE + AdaptiveAvgPool1d(500) + toclass
    # are all linear => fold into:  pooled = PT @ x64 ; logitsT = Wfold@pooled^T + biasT
    P = adaptive_avgpool1d_matrix(L, S)                         # (L, S)
    PT = P.T                                                    # (S, L)
    pe = make_pe_2d(E, Hp, Wp).reshape(E, L)                    # (E, L)
    Wb = np.asarray(params["bottleneck_w"], np.float32).reshape(E, 64)
    bb = np.asarray(params["bottleneck_b"], np.float32)         # (E,)
    Wt = np.asarray(params["toclass_w"], np.float32)            # (C, E)
    bt = np.asarray(params["toclass_b"], np.float32)            # (C,)
    Wfold = Wt @ Wb                                             # (C, 64)
    pe_pooled = PT @ pe.T                                       # (S, E)
    bias_sc = pe_pooled @ Wt.T + (Wt @ bb)[None, :] + bt[None, :]   # (S, C)
    biasT = bias_sc.T                                           # (C, S)

    c["head_pt"] = jnp.asarray(np.pad(PT, ((0, Sp - S), (0, 0))),
                               jnp.bfloat16)                    # (Sp, L)
    c["head_w"] = jnp.asarray(np.pad(Wfold, ((0, Cp - C), (0, 0))),
                              jnp.bfloat16)                     # (Cp, 64)
    c["head_b"] = jnp.asarray(np.pad(biasT, ((0, Cp - C), (0, Sp - S))),
                              jnp.float32)                      # (Cp, Sp)

    meta = dict(Hp=Hp, Wp=Wp, L=L, Sp=Sp, Cp=Cp, Kp1=Kp1)
    return c, meta


# ----------------------------------------------------------------------------
# Forward pass: x (B, C, H, W), y unused  ->  (B, num_classes, 500)
# ----------------------------------------------------------------------------
def forward(consts, x, y, *, num_classes, kp1):
    del y  # unused argument of Cnn.forward (kept for signature parity)
    if x.shape[1] == 1:                           # x.repeat(1, 3, 1, 1)
        x = jnp.tile(x, (1, 3, 1, 1))
    x = jnp.transpose(x, (0, 2, 3, 1)).astype(jnp.bfloat16)     # NHWC bf16
    B = x.shape[0]

    # conv1 (7x7, s2, p3) + BN + ReLU: im2col glue + Pallas matmul kernel
    cols, Ho, Wo = _im2col(x, 7, 7, stride=2, pad=3)
    cols = jnp.pad(cols, ((0, 0), (0, kp1 - cols.shape[1])))
    y1 = conv1_matmul(cols, consts["w1"], consts["b1"], B, Ho * Wo)
    y1 = y1.reshape(B, Ho, Wo, 64)

    # maxpool 3x3 s2 p1 — single XLA reduce_window
    pooled = jax.lax.reduce_window(
        y1, jnp.array(-jnp.inf, y1.dtype), jax.lax.max,
        (1, 3, 3, 1), (1, 2, 2, 1), ((0, 0), (1, 1), (1, 1), (0, 0)))

    # layer1 + (folded bottleneck/PE/pool/toclass/softmax) head: ONE kernel,
    # output already transposed to (B, Cpad, Spad).
    probs = layer1_head(pooled, consts["w_l1"], consts["b_l1"],
                        consts["head_pt"], consts["head_w"], consts["head_b"],
                        n_classes=num_classes)
    return probs[:, :num_classes, :500]           # (B, num_classes, 500)


# ----------------------------------------------------------------------------
if __name__ == "__main__":
    B, Cin, H, W = 2, 1, 32, 32        # 1 channel exercises the repeat-to-3 path
    d_model, num_classes = 32, 10

    key = jax.random.PRNGKey(0)
    kx, ky, kp = jax.random.split(key, 3)
    x = jax.random.normal(kx, (B, Cin, H, W), jnp.float32)
    y = jax.random.randint(ky, (B, 8), 0, num_classes)   # unused (parity)

    params = init_params(kp, d_model, num_classes)
    consts, meta = prepare_constants(params, d_model, num_classes, (H, W))

    fwd = jax.jit(functools.partial(forward, num_classes=num_classes,
                                    kp1=meta["Kp1"]))
    out = fwd(consts, x, y)
    out = jax.block_until_ready(out)

    assert out.shape == (B, num_classes, 500), out.shape
    assert bool(jnp.all(jnp.isfinite(out)))
    # softmax over classes must sum to ~1 at every position
    assert bool(jnp.allclose(jnp.sum(out, axis=1), 1.0, atol=2e-3))
    print("KERNEL_OK")
</pallas_src>

<mosaic_0001>
module attributes {stable_mosaic.version = 11 : i64} {
  func.func @_conv1_kernel(%arg0: i32, %arg1: memref<256x256xbf16, #tpu.memory_space<vmem>>, %arg2: memref<256x64xbf16, #tpu.memory_space<vmem>>, %arg3: memref<1x64xf32, #tpu.memory_space<vmem>>, %arg4: memref<256x64xbf16, #tpu.memory_space<vmem>>) attributes {dimension_semantics = [#tpu.dimension_semantics<parallel>], iteration_bounds = array<i64: 2>, scalar_prefetch = 0 : i64, scratch_operands = 0 : i64, tpu.core_type = #tpu.core_type<tc>, window_params = [{transform_indices = @transform_0, window_bounds = array<i64: 256, 256>}, {pipeline_mode = #tpu.pipeline_mode<synchronous>, transform_indices = @transform_1, window_bounds = array<i64: 256, 64>}, {pipeline_mode = #tpu.pipeline_mode<synchronous>, transform_indices = @transform_2, window_bounds = array<i64: 1, 64>}, {transform_indices = @transform_3, window_bounds = array<i64: 256, 64>}]} {
    %c0 = arith.constant 0 : index
    %c0_0 = arith.constant 0 : index
    %0 = vector.load %arg1[%c0, %c0_0] : memref<256x256xbf16, #tpu.memory_space<vmem>>, vector<256x256xbf16>
    %c0_1 = arith.constant 0 : index
    %c0_2 = arith.constant 0 : index
    %1 = vector.load %arg2[%c0_1, %c0_2] : memref<256x64xbf16, #tpu.memory_space<vmem>>, vector<256x64xbf16>
    %cst = arith.constant dense<0.000000e+00> : vector<256x64xf32>
    %2 = tpu.matmul %0, %1, %cst {dimension_numbers = #tpu.dot_dimension_numbers<[1], [0], [0], [1], [0, 0, 1, 1], [], []>} : vector<256x256xbf16>, vector<256x64xbf16>, vector<256x64xf32> -> vector<256x64xf32>
    %c0_3 = arith.constant 0 : index
    %c0_4 = arith.constant 0 : index
    %3 = vector.load %arg3[%c0_3, %c0_4] : memref<1x64xf32, #tpu.memory_space<vmem>>, vector<1x64xf32>
    %4 = vector.broadcast %3 : vector<1x64xf32> to vector<256x64xf32>
    %5 = arith.addf %2, %4 : vector<256x64xf32>
    %cst_5 = arith.constant 0.000000e+00 : f32
    %6 = vector.broadcast %cst_5 : f32 to vector<256x64xf32>
    %7 = arith.maximumf %5, %6 : vector<256x64xf32>
    %8 = arith.truncf %7 : vector<256x64xf32> to vector<256x64xbf16>
    %c0_6 = arith.constant 0 : index
    %c0_7 = arith.constant 0 : index
    %9 = vector.load %arg4[%c0_6, %c0_7] : memref<256x64xbf16, #tpu.memory_space<vmem>>, vector<256x64xbf16>
    tpu.vector_store %arg4[%c0_6, %c0_7], %8 {strides = array<i32>} : memref<256x64xbf16, #tpu.memory_space<vmem>>, vector<256x64xbf16>,
    return
  }
  func.func @transform_0(%arg0: i32) -> (i32, i32) {
    %c0_i32 = arith.constant 0 : i32
    %c0_i32_0 = arith.constant 0 : i32
    return %arg0, %c0_i32 : i32, i32
  }
  func.func @transform_1(%arg0: i32) -> (i32, i32) {
    %c0_i32 = arith.constant 0 : i32
    %c0_i32_0 = arith.constant 0 : i32
    %c0_i32_1 = arith.constant 0 : i32
    return %c0_i32, %c0_i32_0 : i32, i32
  }
  func.func @transform_2(%arg0: i32) -> (i32, i32) {
    %c0_i32 = arith.constant 0 : i32
    %c0_i32_0 = arith.constant 0 : i32
    %c0_i32_1 = arith.constant 0 : i32
    return %c0_i32, %c0_i32_0 : i32, i32
  }
  func.func @transform_3(%arg0: i32) -> (i32, i32) {
    %c0_i32 = arith.constant 0 : i32
    %c0_i32_0 = arith.constant 0 : i32
    return %arg0, %c0_i32 : i32, i32
  }
}

module attributes {stable_mosaic.version = 11 : i64} {
  func.func @_layer1_head_kernel(%arg0: i32, %arg1: memref<1x8x8x64xbf16, #tpu.memory_space<vmem>>, %arg2: memref<4x9x64x64xbf16, #tpu.memory_space<vmem>>, %arg3: memref<4x1x64xf32, #tpu.memory_space<vmem>>, %arg4: memref<512x64xbf16, #tpu.memory_space<vmem>>, %arg5: memref<16x64xbf16, #tpu.memory_space<vmem>>, %arg6: memref<16x512xf32, #tpu.memory_space<vmem>>, %arg7: memref<1x16x512xf32, #tpu.memory_space<vmem>>, %arg8: memref<10x24x64xbf16, #tpu.memory_space<vmem>>) attributes {dimension_semantics = [#tpu.dimension_semantics<parallel>], iteration_bounds = array<i64: 2>, scalar_prefetch = 0 : i64, scratch_operands = 1 : i64, tpu.core_type = #tpu.core_type<tc>, window_params = [{transform_indices = @transform_0, window_bounds = array<i64: 1, 8, 8, 64>}, {pipeline_mode = #tpu.pipeline_mode<synchronous>, transform_indices = @transform_1, window_bounds = array<i64: 4, 9, 64, 64>}, {pipeline_mode = #tpu.pipeline_mode<synchronous>, transform_indices = @transform_2, window_bounds = array<i64: 4, 1, 64>}, {pipeline_mode = #tpu.pipeline_mode<synchronous>, transform_indices = @transform_3, window_bounds = array<i64: 512, 64>}, {pipeline_mode = #tpu.pipeline_mode<synchronous>, transform_indices = @transform_4, window_bounds = array<i64: 16, 64>}, {pipeline_mode = #tpu.pipeline_mode<synchronous>, transform_indices = @transform_5, window_bounds = array<i64: 16, 512>}, {transform_indices = @transform_6, window_bounds = array<i64: 1, 16, 512>}]} {
    %cst = arith.constant 0.000000e+00 : bf16
    %0 = vector.broadcast %cst : bf16 to vector<10x24x64xbf16>
    %c0 = arith.constant 0 : index
    %c0_0 = arith.constant 0 : index
    %c0_1 = arith.constant 0 : index
    %1 = vector.load %arg8[%c0, %c0_0, %c0_1] : memref<10x24x64xbf16, #tpu.memory_space<vmem>>, vector<10x24x64xbf16>
    tpu.vector_store %arg8[%c0, %c0_0, %c0_1], %0 {strides = array<i32>} : memref<10x24x64xbf16, #tpu.memory_space<vmem>>, vector<10x24x64xbf16>,
    %c0_2 = arith.constant 0 : index
    %c0_3 = arith.constant 0 : index
    %c0_4 = arith.constant 0 : index
    %c0_5 = arith.constant 0 : index
    %2 = vector.load %arg1[%c0_2, %c0_3, %c0_4, %c0_5] : memref<1x8x8x64xbf16, #tpu.memory_space<vmem>>, vector<1x8x8x64xbf16>
    %3 = vector.shape_cast %2 : vector<1x8x8x64xbf16> to vector<8x8x64xbf16>
    %4 = vector.shape_cast %3 : vector<8x8x64xbf16> to vector<64x64xbf16>
    %5 = arith.extf %4 : vector<64x64xbf16> to vector<64x64xf32>
    %c1 = arith.constant 1 : index
    %c8 = arith.constant 8 : index
    %c0_6 = arith.constant 0 : index
    %6 = vector.load %arg8[%c1, %c8, %c0_6] : memref<10x24x64xbf16, #tpu.memory_space<vmem>>, vector<8x8x64xbf16>
    tpu.vector_store %arg8[%c1, %c8, %c0_6], %3 {strides = array<i32>} : memref<10x24x64xbf16, #tpu.memory_space<vmem>>, vector<8x8x64xbf16>,
    %cst_7 = arith.constant 0.000000e+00 : f32
    %7 = vector.broadcast %cst_7 : f32 to vector<64x64xf32>
    %c0_8 = arith.constant 0 : index
    %c7 = arith.constant 7 : index
    %c0_9 = arith.constant 0 : index
    %8 = vector.load %arg8[%c0_8, %c7, %c0_9] : memref<10x24x64xbf16, #tpu.memory_space<vmem>>, vector<8x8x64xbf16>
    %9 = vector.shape_cast %8 : vector<8x8x64xbf16> to vector<64x64xbf16>
    %c0_10 = arith.constant 0 : index
    %c0_11 = arith.constant 0 : index
    %c0_12 = arith.constant 0 : index
    %c0_13 = arith.constant 0 : index
    %10 = vector.load %arg2[%c0_10, %c0_11, %c0_12, %c0_13] : memref<4x9x64x64xbf16, #tpu.memory_space<vmem>>, vector<1x1x64x64xbf16>
    %11 = vector.shape_cast %10 : vector<1x1x64x64xbf16> to vector<64x64xbf16>
    %cst_14 = arith.constant dense<0.000000e+00> : vector<64x64xf32>
    %12 = tpu.matmul %9, %11, %cst_14 {dimension_numbers = #tpu.dot_dimension_numbers<[1], [0], [0], [1], [0, 0, 1, 1], [], []>} : vector<64x64xbf16>, vector<64x64xbf16>, vector<64x64xf32> -> vector<64x64xf32>
    %13 = arith.addf %7, %12 : vector<64x64xf32>
    %c0_15 = arith.constant 0 : index
    %c8_16 = arith.constant 8 : index
    %c0_17 = arith.constant 0 : index
    %14 = vector.load %arg8[%c0_15, %c8_16, %c0_17] : memref<10x24x64xbf16, #tpu.memory_space<vmem>>, vector<8x8x64xbf16>
    %15 = vector.shape_cast %14 : vector<8x8x64xbf16> to vector<64x64xbf16>
    %c0_18 = arith.constant 0 : index
    %c1_19 = arith.constant 1 : index
    %c0_20 = arith.constant 0 : index
    %c0_21 = arith.constant 0 : index
    %16 = vector.load %arg2[%c0_18, %c1_19, %c0_20, %c0_21] : memref<4x9x64x64xbf16, #tpu.memory_space<vmem>>, vector<1x1x64x64xbf16>
    %17 = vector.shape_cast %16 : vector<1x1x64x64xbf16> to vector<64x64xbf16>
    %cst_22 = arith.constant dense<0.000000e+00> : vector<64x64xf32>
    %18 = tpu.matmul %15, %17, %cst_22 {dimension_numbers = #tpu.dot_dimension_numbers<[1], [0], [0], [1], [0, 0, 1, 1], [], []>} : vector<64x64xbf16>, vector<64x64xbf16>, vector<64x64xf32> -> vector<64x64xf32>
    %19 = arith.addf %13, %18 : vector<64x64xf32>
    %c0_23 = arith.constant 0 : index
    %c9 = arith.constant 9 : index
    %c0_24 = arith.constant 0 : index
    %20 = vector.load %arg8[%c0_23, %c9, %c0_24] : memref<10x24x64xbf16, #tpu.memory_space<vmem>>, vector<8x8x64xbf16>
    %21 = vector.shape_cast %20 : vector<8x8x64xbf16> to vector<64x64xbf16>
    %c0_25 = arith.constant 0 : index
    %c2 = arith.constant 2 : index
    %c0_26 = arith.constant 0 : index
    %c0_27 = arith.constant 0 : index
    %22 = vector.load %arg2[%c0_25, %c2, %c0_26, %c0_27] : memref<4x9x64x64xbf16, #tpu.memory_space<vmem>>, vector<1x1x64x64xbf16>
    %23 = vector.shape_cast %22 : vector<1x1x64x64xbf16> to vector<64x64xbf16>
    %cst_28 = arith.constant dense<0.000000e+00> : vector<64x64xf32>
    %24 = tpu.matmul %21, %23, %cst_28 {dimension_numbers = #tpu.dot_dimension_numbers<[1], [0], [0], [1], [0, 0, 1, 1], [], []>} : vector<64x64xbf16>, vector<64x64xbf16>, vector<64x64xf32> -> vector<64x64xf32>
    %25 = arith.addf %19, %24 : vector<64x64xf32>
    %c1_29 = arith.constant 1 : index
    %c7_30 = arith.constant 7 : index
    %c0_31 = arith.constant 0 : index
    %26 = vector.load %arg8[%c1_29, %c7_30, %c0_31] : memref<10x24x64xbf16, #tpu.memory_space<vmem>>, vector<8x8x64xbf16>
    %27 = vector.shape_cast %26 : vector<8x8x64xbf16> to vector<64x64xbf16>
    %c0_32 = arith.constant 0 : index
    %c3 = arith.constant 3 : index
    %c0_33 = arith.constant 0 : index
    %c0_34 = arith.constant 0 : index
    %28 = vector.load %arg2[%c0_32, %c3, %c0_33, %c0_34] : memref<4x9x64x64xbf16, #tpu.memory_space<vmem>>, vector<1x1x64x64xbf16>
    %29 = vector.shape_cast %28 : vector<1x1x64x64xbf16> to vector<64x64xbf16>
    %cst_35 = arith.constant dense<0.000000e+00> : vector<64x64xf32>
    %30 = tpu.matmul %27, %29, %cst_35 {dimension_numbers = #tpu.dot_dimension_numbers<[1], [0], [0], [1], [0, 0, 1, 1], [], []>} : vector<64x64xbf16>, vector<64x64xbf16>, vector<64x64xf32> -> vector<64x64xf32>
    %31 = arith.addf %25, %30 : vector<64x64xf32>
    %c1_36 = arith.constant 1 : index
    %c8_37 = arith.constant 8 : index
    %c0_38 = arith.constant 0 : index
    %32 = vector.load %arg8[%c1_36, %c8_37, %c0_38] : memref<10x24x64xbf16, #tpu.memory_space<vmem>>, vector<8x8x64xbf16>
    %33 = vector.shape_cast %32 : vector<8x8x64xbf16> to vector<64x64xbf16>
    %c0_39 = arith.constant 0 : index
    %c4 = arith.constant 4 : index
    %c0_40 = arith.constant 0 : index
    %c0_41 = arith.constant 0 : index
    %34 = vector.load %arg2[%c0_39, %c4, %c0_40, %c0_41] : memref<4x9x64x64xbf16, #tpu.memory_space<vmem>>, vector<1x1x64x64xbf16>
    %35 = vector.shape_cast %34 : vector<1x1x64x64xbf16> to vector<64x64xbf16>
    %cst_42 = arith.constant dense<0.000000e+00> : vector<64x64xf32>
    %36 = tpu.matmul %33, %35, %cst_42 {dimension_numbers = #tpu.dot_dimension_numbers<[1], [0], [0], [1], [0, 0, 1, 1], [], []>} : vector<64x64xbf16>, vector<64x64xbf16>, vector<64x64xf32> -> vector<64x64xf32>
    %37 = arith.addf %31, %36 : vector<64x64xf32>
    %c1_43 = arith.constant 1 : index
    %c9_44 = arith.constant 9 : index
    %c0_45 = arith.constant 0 : index
    %38 = vector.load %arg8[%c1_43, %c9_44, %c0_45] : memref<10x24x64xbf16, #tpu.memory_space<vmem>>, vector<8x8x64xbf16>
    %39 = vector.shape_cast %38 : vector<8x8x64xbf16> to vector<64x64xbf16>
    %c0_46 = arith.constant 0 : index
    %c5 = arith.constant 5 : index
    %c0_47 = arith.constant 0 : index
    %c0_48 = arith.constant 0 : index
    %40 = vector.load %arg2[%c0_46, %c5, %c0_47, %c0_48] : memref<4x9x64x64xbf16, #tpu.memory_space<vmem>>, vector<1x1x64x64xbf16>
    %41 = vector.shape_cast %40 : vector<1x1x64x64xbf16> to vector<64x64xbf16>
    %cst_49 = arith.constant dense<0.000000e+00> : vector<64x64xf32>
    %42 = tpu.matmul %39, %41, %cst_49 {dimension_numbers = #tpu.dot_dimension_numbers<[1], [0], [0], [1], [0, 0, 1, 1], [], []>} : vector<64x64xbf16>, vector<64x64xbf16>, vector<64x64xf32> -> vector<64x64xf32>
    %43 = arith.addf %37, %42 : vector<64x64xf32>
    %c2_50 = arith.constant 2 : index
    %c7_51 = arith.constant 7 : index
    %c0_52 = arith.constant 0 : index
    %44 = vector.load %arg8[%c2_50, %c7_51, %c0_52] : memref<10x24x64xbf16, #tpu.memory_space<vmem>>, vector<8x8x64xbf16>
    %45 = vector.shape_cast %44 : vector<8x8x64xbf16> to vector<64x64xbf16>
    %c0_53 = arith.constant 0 : index
    %c6 = arith.constant 6 : index
    %c0_54 = arith.constant 0 : index
    %c0_55 = arith.constant 0 : index
    %46 = vector.load %arg2[%c0_53, %c6, %c0_54, %c0_55] : memref<4x9x64x64xbf16, #tpu.memory_space<vmem>>, vector<1x1x64x64xbf16>
    %47 = vector.shape_cast %46 : vector<1x1x64x64xbf16> to vector<64x64xbf16>
    %cst_56 = arith.constant dense<0.000000e+00> : vector<64x64xf32>
    %48 = tpu.matmul %45, %47, %cst_56 {dimension_numbers = #tpu.dot_dimension_numbers<[1], [0], [0], [1], [0, 0, 1, 1], [], []>} : vector<64x64xbf16>, vector<64x64xbf16>, vector<64x64xf32> -> vector<64x64xf32>
    %49 = arith.addf %43, %48 : vector<64x64xf32>
    %c2_57 = arith.constant 2 : index
    %c8_58 = arith.constant 8 : index
    %c0_59 = arith.constant 0 : index
    %50 = vector.load %arg8[%c2_57, %c8_58, %c0_59] : memref<10x24x64xbf16, #tpu.memory_space<vmem>>, vector<8x8x64xbf16>
    %51 = vector.shape_cast %50 : vector<8x8x64xbf16> to vector<64x64xbf16>
    %c0_60 = arith.constant 0 : index
    %c7_61 = arith.constant 7 : index
    %c0_62 = arith.constant 0 : index
    %c0_63 = arith.constant 0 : index
    %52 = vector.load %arg2[%c0_60, %c7_61, %c0_62, %c0_63] : memref<4x9x64x64xbf16, #tpu.memory_space<vmem>>, vector<1x1x64x64xbf16>
    %53 = vector.shape_cast %52 : vector<1x1x64x64xbf16> to vector<64x64xbf16>
    %cst_64 = arith.constant dense<0.000000e+00> : vector<64x64xf32>
    %54 = tpu.matmul %51, %53, %cst_64 {dimension_numbers = #tpu.dot_dimension_numbers<[1], [0], [0], [1], [0, 0, 1, 1], [], []>} : vector<64x64xbf16>, vector<64x64xbf16>, vector<64x64xf32> -> vector<64x64xf32>
    %55 = arith.addf %49, %54 : vector<64x64xf32>
    %c2_65 = arith.constant 2 : index
    %c9_66 = arith.constant 9 : index
    %c0_67 = arith.constant 0 : index
    %56 = vector.load %arg8[%c2_65, %c9_66, %c0_67] : memref<10x24x64xbf16, #tpu.memory_space<vmem>>, vector<8x8x64xbf16>
    %57 = vector.shape_cast %56 : vector<8x8x64xbf16> to vector<64x64xbf16>
    %c0_68 = arith.constant 0 : index
    %c8_69 = arith.constant 8 : index
    %c0_70 = arith.constant 0 : index
    %c0_71 = arith.constant 0 : index
    %58 = vector.load %arg2[%c0_68, %c8_69, %c0_70, %c0_71] : memref<4x9x64x64xbf16, #tpu.memory_space<vmem>>, vector<1x1x64x64xbf16>
    %59 = vector.shape_cast %58 : vector<1x1x64x64xbf16> to vector<64x64xbf16>
    %cst_72 = arith.constant dense<0.000000e+00> : vector<64x64xf32>
    %60 = tpu.matmul %57, %59, %cst_72 {dimension_numbers = #tpu.dot_dimension_numbers<[1], [0], [0], [1], [0, 0, 1, 1], [], []>} : vector<64x64xbf16>, vector<64x64xbf16>, vector<64x64xf32> -> vector<64x64xf32>
    %61 = arith.addf %55, %60 : vector<64x64xf32>
    %c0_73 = arith.constant 0 : index
    %c0_74 = arith.constant 0 : index
    %c0_75 = arith.constant 0 : index
    %62 = vector.load %arg3[%c0_73, %c0_74, %c0_75] : memref<4x1x64xf32, #tpu.memory_space<vmem>>, vector<1x1x64xf32>
    %63 = vector.shape_cast %62 : vector<1x1x64xf32> to vector<1x64xf32>
    %64 = vector.broadcast %63 : vector<1x64xf32> to vector<64x64xf32>
    %65 = arith.addf %61, %64 : vector<64x64xf32>
    %cst_76 = arith.constant 0.000000e+00 : f32
    %66 = vector.broadcast %cst_76 : f32 to vector<64x64xf32>
    %67 = arith.maximumf %65, %66 : vector<64x64xf32>
    %68 = arith.truncf %67 : vector<64x64xf32> to vector<64x64xbf16>
    %69 = vector.shape_cast %68 : vector<64x64xbf16> to vector<8x8x64xbf16>
    %c1_77 = arith.constant 1 : index
    %c8_78 = arith.constant 8 : index
    %c0_79 = arith.constant 0 : index
    %70 = vector.load %arg8[%c1_77, %c8_78, %c0_79] : memref<10x24x64xbf16, #tpu.memory_space<vmem>>, vector<8x8x64xbf16>
    tpu.vector_store %arg8[%c1_77, %c8_78, %c0_79], %69 {strides = array<i32>} : memref<10x24x64xbf16, #tpu.memory_space<vmem>>, vector<8x8x64xbf16>,
    %cst_80 = arith.constant 0.000000e+00 : f32
    %71 = vector.broadcast %cst_80 : f32 to vector<64x64xf32>
    %c0_81 = arith.constant 0 : index
    %c7_82 = arith.constant 7 : index
    %c0_83 = arith.constant 0 : index
    %72 = vector.load %arg8[%c0_81, %c7_82, %c0_83] : memref<10x24x64xbf16, #tpu.memory_space<vmem>>, vector<8x8x64xbf16>
    %73 = vector.shape_cast %72 : vector<8x8x64xbf16> to vector<64x64xbf16>
    %c1_84 = arith.constant 1 : index
    %c0_85 = arith.constant 0 : index
    %c0_86 = arith.constant 0 : index
    %c0_87 = arith.constant 0 : index
    %74 = vector.load %arg2[%c1_84, %c0_85, %c0_86, %c0_87] : memref<4x9x64x64xbf16, #tpu.memory_space<vmem>>, vector<1x1x64x64xbf16>
    %75 = vector.shape_cast %74 : vector<1x1x64x64xbf16> to vector<64x64xbf16>
    %cst_88 = arith.constant dense<0.000000e+00> : vector<64x64xf32>
    %76 = tpu.matmul %73, %75, %cst_88 {dimension_numbers = #tpu.dot_dimension_numbers<[1], [0], [0], [1], [0, 0, 1, 1], [], []>} : vector<64x64xbf16>, vector<64x64xbf16>, vector<64x64xf32> -> vector<64x64xf32>
    %77 = arith.addf %71, %76 : vector<64x64xf32>
    %c0_89 = arith.constant 0 : index
    %c8_90 = arith.constant 8 : index
    %c0_91 = arith.constant 0 : index
    %78 = vector.load %arg8[%c0_89, %c8_90, %c0_91] : memref<10x24x64xbf16, #tpu.memory_space<vmem>>, vector<8x8x64xbf16>
    %79 = vector.shape_cast %78 : vector<8x8x64xbf16> to vector<64x64xbf16>
    %c1_92 = arith.constant 1 : index
    %c1_93 = arith.constant 1 : index
    %c0_94 = arith.constant 0 : index
    %c0_95 = arith.constant 0 : index
    %80 = vector.load %arg2[%c1_92, %c1_93, %c0_94, %c0_95] : memref<4x9x64x64xbf16, #tpu.memory_space<vmem>>, vector<1x1x64x64xbf16>
    %81 = vector.shape_cast %80 : vector<1x1x64x64xbf16> to vector<64x64xbf16>
    %cst_96 = arith.constant dense<0.000000e+00> : vector<64x64xf32>
    %82 = tpu.matmul %79, %81, %cst_96 {dimension_numbers = #tpu.dot_dimension_numbers<[1], [0], [0], [1], [0, 0, 1, 1], [], []>} : vector<64x64xbf16>, vector<64x64xbf16>, vector<64x64xf32> -> vector<64x64xf32>
    %83 = arith.addf %77, %82 : vector<64x64xf32>
    %c0_97 = arith.constant 0 : index
    %c9_98 = arith.constant 9 : index
    %c0_99 = arith.constant 0 : index
    %84 = vector.load %arg8[%c0_97, %c9_98, %c0_99] : memref<10x24x64xbf16, #tpu.memory_space<vmem>>, vector<8x8x64xbf16>
    %85 = vector.shape_cast %84 : vector<8x8x64xbf16> to vector<64x64xbf16>
    %c1_100 = arith.constant 1 : index
    %c2_101 = arith.constant 2 : index
    %c0_102 = arith.constant 0 : index
    %c0_103 = arith.constant 0 : index
    %86 = vector.load %arg2[%c1_100, %c2_101, %c0_102, %c0_103] : memref<4x9x64x64xbf16, #tpu.memory_space<vmem>>, vector<1x1x64x64xbf16>
    %87 = vector.shape_cast %86 : vector<1x1x64x64xbf16> to vector<64x64xbf16>
    %cst_104 = arith.constant dense<0.000000e+00> : vector<64x64xf32>
    %88 = tpu.matmul %85, %87, %cst_104 {dimension_numbers = #tpu.dot_dimension_numbers<[1], [0], [0], [1], [0, 0, 1, 1], [], []>} : vector<64x64xbf16>, vector<64x64xbf16>, vector<64x64xf32> -> vector<64x64xf32>
    %89 = arith.addf %83, %88 : vector<64x64xf32>
    %c1_105 = arith.constant 1 : index
    %c7_106 = arith.constant 7 : index
    %c0_107 = arith.constant 0 : index
    %90 = vector.load %arg8[%c1_105, %c7_106, %c0_107] : memref<10x24x64xbf16, #tpu.memory_space<vmem>>, vector<8x8x64xbf16>
    %91 = vector.shape_cast %90 : vector<8x8x64xbf16> to vector<64x64xbf16>
    %c1_108 = arith.constant 1 : index
    %c3_109 = arith.constant 3 : index
    %c0_110 = arith.constant 0 : index
    %c0_111 = arith.constant 0 : index
    %92 = vector.load %arg2[%c1_108, %c3_109, %c0_110, %c0_111] : memref<4x9x64x64xbf16, #tpu.memory_space<vmem>>, vector<1x1x64x64xbf16>
    %93 = vector.shape_cast %92 : vector<1x1x64x64xbf16> to vector<64x64xbf16>
    %cst_112 = arith.constant dense<0.000000e+00> : vector<64x64xf32>
    %94 = tpu.matmul %91, %93, %cst_112 {dimension_numbers = #tpu.dot_dimension_numbers<[1], [0], [0], [1], [0, 0, 1, 1], [], []>} : vector<64x64xbf16>, vector<64x64xbf16>, vector<64x64xf32> -> vector<64x64xf32>
    %95 = arith.addf %89, %94 : vector<64x64xf32>
    %c1_113 = arith.constant 1 : index
    %c8_114 = arith.constant 8 : index
    %c0_115 = arith.constant 0 : index
    %96 = vector.load %arg8[%c1_113, %c8_114, %c0_115] : memref<10x24x64xbf16, #tpu.memory_space<vmem>>, vector<8x8x64xbf16>
    %97 = vector.shape_cast %96 : vector<8x8x64xbf16> to vector<64x64xbf16>
    %c1_116 = arith.constant 1 : index
    %c4_117 = arith.constant 4 : index
    %c0_118 = arith.constant 0 : index
    %c0_119 = arith.constant 0 : index
    %98 = vector.load %arg2[%c1_116, %c4_117, %c0_118, %c0_119] : memref<4x9x64x64xbf16, #tpu.memory_space<vmem>>, vector<1x1x64x64xbf16>
    %99 = vector.shape_cast %98 : vector<1x1x64x64xbf16> to vector<64x64xbf16>
    %cst_120 = arith.constant dense<0.000000e+00> : vector<64x64xf32>
    %100 = tpu.matmul %97, %99, %cst_120 {dimension_numbers = #tpu.dot_dimension_numbers<[1], [0], [0], [1], [0, 0, 1, 1], [], []>} : vector<64x64xbf16>, vector<64x64xbf16>, vector<64x64xf32> -> vector<64x64xf32>
    %101 = arith.addf %95, %100 : vector<64x64xf32>
    %c1_121 = arith.constant 1 : index
    %c9_122 = arith.constant 9 : index
    %c0_123 = arith.constant 0 : index
    %102 = vector.load %arg8[%c1_121, %c9_122, %c0_123] : memref<10x24x64xbf16, #tpu.memory_space<vmem>>, vector<8x8x64xbf16>
    %103 = vector.shape_cast %102 : vector<8x8x64xbf16> to vector<64x64xbf16>
    %c1_124 = arith.constant 1 : index
    %c5_125 = arith.constant 5 : index
    %c0_126 = arith.constant 0 : index
    %c0_127 = arith.constant 0 : index
    %104 = vector.load %arg2[%c1_124, %c5_125, %c0_126, %c0_127] : memref<4x9x64x64xbf16, #tpu.memory_space<vmem>>, vector<1x1x64x64xbf16>
    %105 = vector.shape_cast %104 : vector<1x1x64x64xbf16> to vector<64x64xbf16>
    %cst_128 = arith.constant dense<0.000000e+00> : vector<64x64xf32>
    %106 = tpu.matmul %103, %105, %cst_128 {dimension_numbers = #tpu.dot_dimension_numbers<[1], [0], [0], [1], [0, 0, 1, 1], [], []>} : vector<64x64xbf16>, vector<64x64xbf16>, vector<64x64xf32> -> vector<64x64xf32>
    %107 = arith.addf %101, %106 : vector<64x64xf32>
    %c2_129 = arith.constant 2 : index
    %c7_130 = arith.constant 7 : index
    %c0_131 = arith.constant 0 : index
    %108 = vector.load %arg8[%c2_129, %c7_130, %c0_131] : memref<10x24x64xbf16, #tpu.memory_space<vmem>>, vector<8x8x64xbf16>
    %109 = vector.shape_cast %108 : vector<8x8x64xbf16> to vector<64x64xbf16>
    %c1_132 = arith.constant 1 : index
    %c6_133 = arith.constant 6 : index
    %c0_134 = arith.constant 0 : index
    %c0_135 = arith.constant 0 : index
    %110 = vector.load %arg2[%c1_132, %c6_133, %c0_134, %c0_135] : memref<4x9x64x64xbf16, #tpu.memory_space<vmem>>, vector<1x1x64x64xbf16>
    %111 = vector.shape_cast %110 : vector<1x1x64x64xbf16> to vector<64x64xbf16>
    %cst_136 = arith.constant dense<0.000000e+00> : vector<64x64xf32>
    %112 = tpu.matmul %109, %111, %cst_136 {dimension_numbers = #tpu.dot_dimension_numbers<[1], [0], [0], [1], [0, 0, 1, 1], [], []>} : vector<64x64xbf16>, vector<64x64xbf16>, vector<64x64xf32> -> vector<64x64xf32>
    %113 = arith.addf %107, %112 : vector<64x64xf32>
    %c2_137 = arith.constant 2 : index
    %c8_138 = arith.constant 8 : index
    %c0_139 = arith.constant 0 : index
    %114 = vector.load %arg8[%c2_137, %c8_138, %c0_139] : memref<10x24x64xbf16, #tpu.memory_space<vmem>>, vector<8x8x64xbf16>
    %115 = vector.shape_cast %114 : vector<8x8x64xbf16> to vector<64x64xbf16>
    %c1_140 = arith.constant 1 : index
    %c7_141 = arith.constant 7 : index
    %c0_142 = arith.constant 0 : index
    %c0_143 = arith.constant 0 : index
    %116 = vector.load %arg2[%c1_140, %c7_141, %c0_142, %c0_143] : memref<4x9x64x64xbf16, #tpu.memory_space<vmem>>, vector<1x1x64x64xbf16>
    %117 = vector.shape_cast %116 : vector<1x1x64x64xbf16> to vector<64x64xbf16>
    %cst_144 = arith.constant dense<0.000000e+00> : vector<64x64xf32>
    %118 = tpu.matmul %115, %117, %cst_144 {dimension_numbers = #tpu.dot_dimension_numbers<[1], [0], [0], [1], [0, 0, 1, 1], [], []>} : vector<64x64xbf16>, vector<64x64xbf16>, vector<64x64xf32> -> vector<64x64xf32>
    %119 = arith.addf %113, %118 : vector<64x64xf32>
    %c2_145 = arith.constant 2 : index
    %c9_146 = arith.constant 9 : index
    %c0_147 = arith.constant 0 : index
    %120 = vector.load %arg8[%c2_145, %c9_146, %c0_147] : memref<10x24x64xbf16, #tpu.memory_space<vmem>>, vector<8x8x64xbf16>
    %121 = vector.shape_cast %120 : vector<8x8x64xbf16> to vector<64x64xbf16>
    %c1_148 = arith.constant 1 : index
    %c8_149 = arith.constant 8 : index
    %c0_150 = arith.constant 0 : index
    %c0_151 = arith.constant 0 : index
    %122 = vector.load %arg2[%c1_148, %c8_149, %c0_150, %c0_151] : memref<4x9x64x64xbf16, #tpu.memory_space<vmem>>, vector<1x1x64x64xbf16>
    %123 = vector.shape_cast %122 : vector<1x1x64x64xbf16> to vector<64x64xbf16>
    %cst_152 = arith.constant dense<0.000000e+00> : vector<64x64xf32>
    %124 = tpu.matmul %121, %123, %cst_152 {dimension_numbers = #tpu.dot_dimension_numbers<[1], [0], [0], [1], [0, 0, 1, 1], [], []>} : vector<64x64xbf16>, vector<64x64xbf16>, vector<64x64xf32> -> vector<64x64xf32>
    %125 = arith.addf %119, %124 : vector<64x64xf32>
    %c1_153 = arith.constant 1 : index
    %c0_154 = arith.constant 0 : index
    %c0_155 = arith.constant 0 : index
    %126 = vector.load %arg3[%c1_153, %c0_154, %c0_155] : memref<4x1x64xf32, #tpu.memory_space<vmem>>, vector<1x1x64xf32>
    %127 = vector.shape_cast %126 : vector<1x1x64xf32> to vector<1x64xf32>
    %128 = vector.broadcast %127 : vector<1x64xf32> to vector<64x64xf32>
    %129 = arith.addf %125, %128 : vector<64x64xf32>
    %130 = arith.addf %129, %5 : vector<64x64xf32>
    %cst_156 = arith.constant 0.000000e+00 : f32
    %131 = vector.broadcast %cst_156 : f32 to vector<64x64xf32>
    %132 = arith.maximumf %130, %131 : vector<64x64xf32>
    %133 = arith.truncf %132 : vector<64x64xf32> to vector<64x64xbf16>
    %134 = vector.shape_cast %133 : vector<64x64xbf16> to vector<8x8x64xbf16>
    %c1_157 = arith.constant 1 : index
    %c8_158 = arith.constant 8 : index
    %c0_159 = arith.constant 0 : index
    %135 = vector.load %arg8[%c1_157, %c8_158, %c0_159] : memref<10x24x64xbf16, #tpu.memory_space<vmem>>, vector<8x8x64xbf16>
    tpu.vector_store %arg8[%c1_157, %c8_158, %c0_159], %134 {strides = array<i32>} : memref<10x24x64xbf16, #tpu.memory_space<vmem>>, vector<8x8x64xbf16>,
    %cst_160 = arith.constant 0.000000e+00 : f32
    %136 = vector.broadcast %cst_160 : f32 to vector<64x64xf32>
    %c0_161 = arith.constant 0 : index
    %c7_162 = arith.constant 7 : index
    %c0_163 = arith.constant 0 : index
    %137 = vector.load %arg8[%c0_161, %c7_162, %c0_163] : memref<10x24x64xbf16, #tpu.memory_space<vmem>>, vector<8x8x64xbf16>
    %138 = vector.shape_cast %137 : vector<8x8x64xbf16> to vector<64x64xbf16>
    %c2_164 = arith.constant 2 : index
    %c0_165 = arith.constant 0 : index
    %c0_166 = arith.constant 0 : index
    %c0_167 = arith.constant 0 : index
    %139 = vector.load %arg2[%c2_164, %c0_165, %c0_166, %c0_167] : memref<4x9x64x64xbf16, #tpu.memory_space<vmem>>, vector<1x1x64x64xbf16>
    %140 = vector.shape_cast %139 : vector<1x1x64x64xbf16> to vector<64x64xbf16>
    %cst_168 = arith.constant dense<0.000000e+00> : vector<64x64xf32>
    %141 = tpu.matmul %138, %140, %cst_168 {dimension_numbers = #tpu.dot_dimension_numbers<[1], [0], [0], [1], [0, 0, 1, 1], [], []>} : vector<64x64xbf16>, vector<64x64xbf16>, vector<64x64xf32> -> vector<64x64xf32>
    %142 = arith.addf %136, %141 : vector<64x64xf32>
    %c0_169 = arith.constant 0 : index
    %c8_170 = arith.constant 8 : index
    %c0_171 = arith.constant 0 : index
    %143 = vector.load %arg8[%c0_169, %c8_170, %c0_171] : memref<10x24x64xbf16, #tpu.memory_space<vmem>>, vector<8x8x64xbf16>
    %144 = vector.shape_cast %143 : vector<8x8x64xbf16> to vector<64x64xbf16>
    %c2_172 = arith.constant 2 : index
    %c1_173 = arith.constant 1 : index
    %c0_174 = arith.constant 0 : index
    %c0_175 = arith.constant 0 : index
    %145 = vector.load %arg2[%c2_172, %c1_173, %c0_174, %c0_175] : memref<4x9x64x64xbf16, #tpu.memory_space<vmem>>, vector<1x1x64x64xbf16>
    %146 = vector.shape_cast %145 : vector<1x1x64x64xbf16> to vector<64x64xbf16>
    %cst_176 = arith.constant dense<0.000000e+00> : vector<64x64xf32>
    %147 = tpu.matmul %144, %146, %cst_176 {dimension_numbers = #tpu.dot_dimension_numbers<[1], [0], [0], [1], [0, 0, 1, 1], [], []>} : vector<64x64xbf16>, vector<64x64xbf16>, vector<64x64xf32> -> vector<64x64xf32>
    %148 = arith.addf %142, %147 : vector<64x64xf32>
    %c0_177 = arith.constant 0 : index
    %c9_178 = arith.constant 9 : index
    %c0_179 = arith.constant 0 : index
    %149 = vector.load %arg8[%c0_177, %c9_178, %c0_179] : memref<10x24x64xbf16, #tpu.memory_space<vmem>>, vector<8x8x64xbf16>
    %150 = vector.shape_cast %149 : vector<8x8x64xbf16> to vector<64x64xbf16>
    %c2_180 = arith.constant 2 : index
    %c2_181 = arith.constant 2 : index
    %c0_182 = arith.constant 0 : index
    %c0_183 = arith.constant 0 : index
    %151 = vector.load %arg2[%c2_180, %c2_181, %c0_182, %c0_183] : memref<4x9x64x64xbf16, #tpu.memory_space<vmem>>, vector<1x1x64x64xbf16>
    %152 = vector.shape_cast %151 : vector<1x1x64x64xbf16> to vector<64x64xbf16>
    %cst_184 = arith.constant dense<0.000000e+00> : vector<64x64xf32>
    %153 = tpu.matmul %150, %152, %cst_184 {dimension_numbers = #tpu.dot_dimension_numbers<[1], [0], [0], [1], [0, 0, 1, 1], [], []>} : vector<64x64xbf16>, vector<64x64xbf16>, vector<64x64xf32> -> vector<64x64xf32>
    %154 = arith.addf %148, %153 : vector<64x64xf32>
    %c1_185 = arith.constant 1 : index
    %c7_186 = arith.constant 7 : index
    %c0_187 = arith.constant 0 : index
    %155 = vector.load %arg8[%c1_185, %c7_186, %c0_187] : memref<10x24x64xbf16, #tpu.memory_space<vmem>>, vector<8x8x64xbf16>
    %156 = vector.shape_cast %155 : vector<8x8x64xbf16> to vector<64x64xbf16>
    %c2_188 = arith.constant 2 : index
    %c3_189 = arith.constant 3 : index
    %c0_190 = arith.constant 0 : index
    %c0_191 = arith.constant 0 : index
    %157 = vector.load %arg2[%c2_188, %c3_189, %c0_190, %c0_191] : memref<4x9x64x64xbf16, #tpu.memory_space<vmem>>, vector<1x1x64x64xbf16>
    %158 = vector.shape_cast %157 : vector<1x1x64x64xbf16> to vector<64x64xbf16>
    %cst_192 = arith.constant dense<0.000000e+00> : vector<64x64xf32>
    %159 = tpu.matmul %156, %158, %cst_192 {dimension_numbers = #tpu.dot_dimension_numbers<[1], [0], [0], [1], [0, 0, 1, 1], [], []>} : vector<64x64xbf16>, vector<64x64xbf16>, vector<64x64xf32> -> vector<64x64xf32>
    %160 = arith.addf %154, %159 : vector<64x64xf32>
    %c1_193 = arith.constant 1 : index
    %c8_194 = arith.constant 8 : index
    %c0_195 = arith.constant 0 : index
    %161 = vector.load %arg8[%c1_193, %c8_194, %c0_195] : memref<10x24x64xbf16, #tpu.memory_space<vmem>>, vector<8x8x64xbf16>
    %162 = vector.shape_cast %161 : vector<8x8x64xbf16> to vector<64x64xbf16>
    %c2_196 = arith.constant 2 : index
    %c4_197 = arith.constant 4 : index
    %c0_198 = arith.constant 0 : index
    %c0_199 = arith.constant 0 : index
    %163 = vector.load %arg2[%c2_196, %c4_197, %c0_198, %c0_199] : memref<4x9x64x64xbf16, #tpu.memory_space<vmem>>, vector<1x1x64x64xbf16>
    %164 = vector.shape_cast %163 : vector<1x1x64x64xbf16> to vector<64x64xbf16>
    %cst_200 = arith.constant dense<0.000000e+00> : vector<64x64xf32>
    %165 = tpu.matmul %162, %164, %cst_200 {dimension_numbers = #tpu.dot_dimension_numbers<[1], [0], [0], [1], [0, 0, 1, 1], [], []>} : vector<64x64xbf16>, vector<64x64xbf16>, vector<64x64xf32> -> vector<64x64xf32>
    %166 = arith.addf %160, %165 : vector<64x64xf32>
    %c1_201 = arith.constant 1 : index
    %c9_202 = arith.constant 9 : index
    %c0_203 = arith.constant 0 : index
    %167 = vector.load %arg8[%c1_201, %c9_202, %c0_203] : memref<10x24x64xbf16, #tpu.memory_space<vmem>>, vector<8x8x64xbf16>
    %168 = vector.shape_cast %167 : vector<8x8x64xbf16> to vector<64x64xbf16>
    %c2_204 = arith.constant 2 : index
    %c5_205 = arith.constant 5 : index
    %c0_206 = arith.constant 0 : index
    %c0_207 = arith.constant 0 : index
    %169 = vector.load %arg2[%c2_204, %c5_205, %c0_206, %c0_207] : memref<4x9x64x64xbf16, #tpu.memory_space<vmem>>, vector<1x1x64x64xbf16>
    %170 = vector.shape_cast %169 : vector<1x1x64x64xbf16> to vector<64x64xbf16>
    %cst_208 = arith.constant dense<0.000000e+00> : vector<64x64xf32>
    %171 = tpu.matmul %168, %170, %cst_208 {dimension_numbers = #tpu.dot_dimension_numbers<[1], [0], [0], [1], [0, 0, 1, 1], [], []>} : vector<64x64xbf16>, vector<64x64xbf16>, vector<64x64xf32> -> vector<64x64xf32>
    %172 = arith.addf %166, %171 : vector<64x64xf32>
    %c2_209 = arith.constant 2 : index
    %c7_210 = arith.constant 7 : index
    %c0_211 = arith.constant 0 : index
    %173 = vector.load %arg8[%c2_209, %c7_210, %c0_211] : memref<10x24x64xbf16, #tpu.memory_space<vmem>>, vector<8x8x64xbf16>
    %174 = vector.shape_cast %173 : vector<8x8x64xbf16> to vector<64x64xbf16>
    %c2_212 = arith.constant 2 : index
    %c6_213 = arith.constant 6 : index
    %c0_214 = arith.constant 0 : index
    %c0_215 = arith.constant 0 : index
    %175 = vector.load %arg2[%c2_212, %c6_213, %c0_214, %c0_215] : memref<4x9x64x64xbf16, #tpu.memory_space<vmem>>, vector<1x1x64x64xbf16>
    %176 = vector.shape_cast %175 : vector<1x1x64x64xbf16> to vector<64x64xbf16>
    %cst_216 = arith.constant dense<0.000000e+00> : vector<64x64xf32>
    %177 = tpu.matmul %174, %176, %cst_216 {dimension_numbers = #tpu.dot_dimension_numbers<[1], [0], [0], [1], [0, 0, 1, 1], [], []>} : vector<64x64xbf16>, vector<64x64xbf16>, vector<64x64xf32> -> vector<64x64xf32>
    %178 = arith.addf %172, %177 : vector<64x64xf32>
    %c2_217 = arith.constant 2 : index
    %c8_218 = arith.constant 8 : index
    %c0_219 = arith.constant 0 : index
    %179 = vector.load %arg8[%c2_217, %c8_218, %c0_219] : memref<10x24x64xbf16, #tpu.memory_space<vmem>>, vector<8x8x64xbf16>
    %180 = vector.shape_cast %179 : vector<8x8x64xbf16> to vector<64x64xbf16>
    %c2_220 = arith.constant 2 : index
    %c7_221 = arith.constant 7 : index
    %c0_222 = arith.constant 0 : index
    %c0_223 = arith.constant 0 : index
    %181 = vector.load %arg2[%c2_220, %c7_221, %c0_222, %c0_223] : memref<4x9x64x64xbf16, #tpu.memory_space<vmem>>, vector<1x1x64x64xbf16>
    %182 = vector.shape_cast %181 : vector<1x1x64x64xbf16> to vector<64x64xbf16>
    %cst_224 = arith.constant dense<0.000000e+00> : vector<64x64xf32>
    %183 = tpu.matmul %180, %182, %cst_224 {dimension_numbers = #tpu.dot_dimension_numbers<[1], [0], [0], [1], [0, 0, 1, 1], [], []>} : vector<64x64xbf16>, vector<64x64xbf16>, vector<64x64xf32> -> vector<64x64xf32>
    %184 = arith.addf %178, %183 : vector<64x64xf32>
    %c2_225 = arith.constant 2 : index
    %c9_226 = arith.constant 9 : index
    %c0_227 = arith.constant 0 : index
    %185 = vector.load %arg8[%c2_225, %c9_226, %c0_227] : memref<10x24x64xbf16, #tpu.memory_space<vmem>>, vector<8x8x64xbf16>
    %186 = vector.shape_cast %185 : vector<8x8x64xbf16> to vector<64x64xbf16>
    %c2_228 = arith.constant 2 : index
    %c8_229 = arith.constant 8 : index
    %c0_230 = arith.constant 0 : index
    %c0_231 = arith.constant 0 : index
    %187 = vector.load %arg2[%c2_228, %c8_229, %c0_230, %c0_231] : memref<4x9x64x64xbf16, #tpu.memory_space<vmem>>, vector<1x1x64x64xbf16>
    %188 = vector.shape_cast %187 : vector<1x1x64x64xbf16> to vector<64x64xbf16>
    %cst_232 = arith.constant dense<0.000000e+00> : vector<64x64xf32>
    %189 = tpu.matmul %186, %188, %cst_232 {dimension_numbers = #tpu.dot_dimension_numbers<[1], [0], [0], [1], [0, 0, 1, 1], [], []>} : vector<64x64xbf16>, vector<64x64xbf16>, vector<64x64xf32> -> vector<64x64xf32>
    %190 = arith.addf %184, %189 : vector<64x64xf32>
    %c2_233 = arith.constant 2 : index
    %c0_234 = arith.constant 0 : index
    %c0_235 = arith.constant 0 : index
    %191 = vector.load %arg3[%c2_233, %c0_234, %c0_235] : memref<4x1x64xf32, #tpu.memory_space<vmem>>, vector<1x1x64xf32>
    %192 = vector.shape_cast %191 : vector<1x1x64xf32> to vector<1x64xf32>
    %193 = vector.broadcast %192 : vector<1x64xf32> to vector<64x64xf32>
    %194 = arith.addf %190, %193 : vector<64x64xf32>
    %cst_236 = arith.constant 0.000000e+00 : f32
    %195 = vector.broadcast %cst_236 : f32 to vector<64x64xf32>
    %196 = arith.maximumf %194, %195 : vector<64x64xf32>
    %197 = arith.truncf %196 : vector<64x64xf32> to vector<64x64xbf16>
    %198 = vector.shape_cast %197 : vector<64x64xbf16> to vector<8x8x64xbf16>
    %c1_237 = arith.constant 1 : index
    %c8_238 = arith.constant 8 : index
    %c0_239 = arith.constant 0 : index
    %199 = vector.load %arg8[%c1_237, %c8_238, %c0_239] : memref<10x24x64xbf16, #tpu.memory_space<vmem>>, vector<8x8x64xbf16>
    tpu.vector_store %arg8[%c1_237, %c8_238, %c0_239], %198 {strides = array<i32>} : memref<10x24x64xbf16, #tpu.memory_space<vmem>>, vector<8x8x64xbf16>,
    %cst_240 = arith.constant 0.000000e+00 : f32
    %200 = vector.broadcast %cst_240 : f32 to vector<64x64xf32>
    %c0_241 = arith.constant 0 : index
    %c7_242 = arith.constant 7 : index
    %c0_243 = arith.constant 0 : index
    %201 = vector.load %arg8[%c0_241, %c7_242, %c0_243] : memref<10x24x64xbf16, #tpu.memory_space<vmem>>, vector<8x8x64xbf16>
    %202 = vector.shape_cast %201 : vector<8x8x64xbf16> to vector<64x64xbf16>
    %c3_244 = arith.constant 3 : index
    %c0_245 = arith.constant 0 : index
    %c0_246 = arith.constant 0 : index
    %c0_247 = arith.constant 0 : index
    %203 = vector.load %arg2[%c3_244, %c0_245, %c0_246, %c0_247] : memref<4x9x64x64xbf16, #tpu.memory_space<vmem>>, vector<1x1x64x64xbf16>
    %204 = vector.shape_cast %203 : vector<1x1x64x64xbf16> to vector<64x64xbf16>
    %cst_248 = arith.constant dense<0.000000e+00> : vector<64x64xf32>
    %205 = tpu.matmul %202, %204, %cst_248 {dimension_numbers = #tpu.dot_dimension_numbers<[1], [0], [0], [1], [0, 0, 1, 1], [], []>} : vector<64x64xbf16>, vector<64x64xbf16>, vector<64x64xf32> -> vector<64x64xf32>
    %206 = arith.addf %200, %205 : vector<64x64xf32>
    %c0_249 = arith.constant 0 : index
    %c8_250 = arith.constant 8 : index
    %c0_251 = arith.constant 0 : index
    %207 = vector.load %arg8[%c0_249, %c8_250, %c0_251] : memref<10x24x64xbf16, #tpu.memory_space<vmem>>, vector<8x8x64xbf16>
    %208 = vector.shape_cast %207 : vector<8x8x64xbf16> to vector<64x64xbf16>
    %c3_252 = arith.constant 3 : index
    %c1_253 = arith.constant 1 : index
    %c0_254 = arith.constant 0 : index
    %c0_255 = arith.constant 0 : index
    %209 = vector.load %arg2[%c3_252, %c1_253, %c0_254, %c0_255] : memref<4x9x64x64xbf16, #tpu.memory_space<vmem>>, vector<1x1x64x64xbf16>
    %210 = vector.shape_cast %209 : vector<1x1x64x64xbf16> to vector<64x64xbf16>
    %cst_256 = arith.constant dense<0.000000e+00> : vector<64x64xf32>
    %211 = tpu.matmul %208, %210, %cst_256 {dimension_numbers = #tpu.dot_dimension_numbers<[1], [0], [0], [1], [0, 0, 1, 1], [], []>} : vector<64x64xbf16>, vector<64x64xbf16>, vector<64x64xf32> -> vector<64x64xf32>
    %212 = arith.addf %206, %211 : vector<64x64xf32>
    %c0_257 = arith.constant 0 : index
    %c9_258 = arith.constant 9 : index
    %c0_259 = arith.constant 0 : index
    %213 = vector.load %arg8[%c0_257, %c9_258, %c0_259] : memref<10x24x64xbf16, #tpu.memory_space<vmem>>, vector<8x8x64xbf16>
    %214 = vector.shape_cast %213 : vector<8x8x64xbf16> to vector<64x64xbf16>
    %c3_260 = arith.constant 3 : index
    %c2_261 = arith.constant 2 : index
    %c0_262 = arith.constant 0 : index
    %c0_263 = arith.constant 0 : index
    %215 = vector.load %arg2[%c3_260, %c2_261, %c0_262, %c0_263] : memref<4x9x64x64xbf16, #tpu.memory_space<vmem>>, vector<1x1x64x64xbf16>
    %216 = vector.shape_cast %215 : vector<1x1x64x64xbf16> to vector<64x64xbf16>
    %cst_264 = arith.constant dense<0.000000e+00> : vector<64x64xf32>
    %217 = tpu.matmul %214, %216, %cst_264 {dimension_numbers = #tpu.dot_dimension_numbers<[1], [0], [0], [1], [0, 0, 1, 1], [], []>} : vector<64x64xbf16>, vector<64x64xbf16>, vector<64x64xf32> -> vector<64x64xf32>
    %218 = arith.addf %212, %217 : vector<64x64xf32>
    %c1_265 = arith.constant 1 : index
    %c7_266 = arith.constant 7 : index
    %c0_267 = arith.constant 0 : index
    %219 = vector.load %arg8[%c1_265, %c7_266, %c0_267] : memref<10x24x64xbf16, #tpu.memory_space<vmem>>, vector<8x8x64xbf16>
    %220 = vector.shape_cast %219 : vector<8x8x64xbf16> to vector<64x64xbf16>
    %c3_268 = arith.constant 3 : index
    %c3_269 = arith.constant 3 : index
    %c0_270 = arith.constant 0 : index
    %c0_271 = arith.constant 0 : index
    %221 = vector.load %arg2[%c3_268, %c3_269, %c0_270, %c0_271] : memref<4x9x64x64xbf16, #tpu.memory_space<vmem>>, vector<1x1x64x64xbf16>
    %222 = vector.shape_cast %221 : vector<1x1x64x64xbf16> to vector<64x64xbf16>
    %cst_272 = arith.constant dense<0.000000e+00> : vector<64x64xf32>
    %223 = tpu.matmul %220, %222, %cst_272 {dimension_numbers = #tpu.dot_dimension_numbers<[1], [0], [0], [1], [0, 0, 1, 1], [], []>} : vector<64x64xbf16>, vector<64x64xbf16>, vector<64x64xf32> -> vector<64x64xf32>
    %224 = arith.addf %218, %223 : vector<64x64xf32>
    %c1_273 = arith.constant 1 : index
    %c8_274 = arith.constant 8 : index
    %c0_275 = arith.constant 0 : index
    %225 = vector.load %arg8[%c1_273, %c8_274, %c0_275] : memref<10x24x64xbf16, #tpu.memory_space<vmem>>, vector<8x8x64xbf16>
    %226 = vector.shape_cast %225 : vector<8x8x64xbf16> to vector<64x64xbf16>
    %c3_276 = arith.constant 3 : index
    %c4_277 = arith.constant 4 : index
    %c0_278 = arith.constant 0 : index
    %c0_279 = arith.constant 0 : index
    %227 = vector.load %arg2[%c3_276, %c4_277, %c0_278, %c0_279] : memref<4x9x64x64xbf16, #tpu.memory_space<vmem>>, vector<1x1x64x64xbf16>
    %228 = vector.shape_cast %227 : vector<1x1x64x64xbf16> to vector<64x64xbf16>
    %cst_280 = arith.constant dense<0.000000e+00> : vector<64x64xf32>
    %229 = tpu.matmul %226, %228, %cst_280 {dimension_numbers = #tpu.dot_dimension_numbers<[1], [0], [0], [1], [0, 0, 1, 1], [], []>} : vector<64x64xbf16>, vector<64x64xbf16>, vector<64x64xf32> -> vector<64x64xf32>
    %230 = arith.addf %224, %229 : vector<64x64xf32>
    %c1_281 = arith.constant 1 : index
    %c9_282 = arith.constant 9 : index
    %c0_283 = arith.constant 0 : index
    %231 = vector.load %arg8[%c1_281, %c9_282, %c0_283] : memref<10x24x64xbf16, #tpu.memory_space<vmem>>, vector<8x8x64xbf16>
    %232 = vector.shape_cast %231 : vector<8x8x64xbf16> to vector<64x64xbf16>
    %c3_284 = arith.constant 3 : index
    %c5_285 = arith.constant 5 : index
    %c0_286 = arith.constant 0 : index
    %c0_287 = arith.constant 0 : index
    %233 = vector.load %arg2[%c3_284, %c5_285, %c0_286, %c0_287] : memref<4x9x64x64xbf16, #tpu.memory_space<vmem>>, vector<1x1x64x64xbf16>
    %234 = vector.shape_cast %233 : vector<1x1x64x64xbf16> to vector<64x64xbf16>
    %cst_288 = arith.constant dense<0.000000e+00> : vector<64x64xf32>
    %235 = tpu.matmul %232, %234, %cst_288 {dimension_numbers = #tpu.dot_dimension_numbers<[1], [0], [0], [1], [0, 0, 1, 1], [], []>} : vector<64x64xbf16>, vector<64x64xbf16>, vector<64x64xf32> -> vector<64x64xf32>
    %236 = arith.addf %230, %235 : vector<64x64xf32>
    %c2_289 = arith.constant 2 : index
    %c7_290 = arith.constant 7 : index
    %c0_291 = arith.constant 0 : index
    %237 = vector.load %arg8[%c2_289, %c7_290, %c0_291] : memref<10x24x64xbf16, #tpu.memory_space<vmem>>, vector<8x8x64xbf16>
    %238 = vector.shape_cast %237 : vector<8x8x64xbf16> to vector<64x64xbf16>
    %c3_292 = arith.constant 3 : index
    %c6_293 = arith.constant 6 : index
    %c0_294 = arith.constant 0 : index
    %c0_295 = arith.constant 0 : index
    %239 = vector.load %arg2[%c3_292, %c6_293, %c0_294, %c0_295] : memref<4x9x64x64xbf16, #tpu.memory_space<vmem>>, vector<1x1x64x64xbf16>
    %240 = vector.shape_cast %239 : vector<1x1x64x64xbf16> to vector<64x64xbf16>
    %cst_296 = arith.constant dense<0.000000e+00> : vector<64x64xf32>
    %241 = tpu.matmul %238, %240, %cst_296 {dimension_numbers = #tpu.dot_dimension_numbers<[1], [0], [0], [1], [0, 0, 1, 1], [], []>} : vector<64x64xbf16>, vector<64x64xbf16>, vector<64x64xf32> -> vector<64x64xf32>
    %242 = arith.addf %236, %241 : vector<64x64xf32>
    %c2_297 = arith.constant 2 : index
    %c8_298 = arith.constant 8 : index
    %c0_299 = arith.constant 0 : index
    %243 = vector.load %arg8[%c2_297, %c8_298, %c0_299] : memref<10x24x64xbf16, #tpu.memory_space<vmem>>, vector<8x8x64xbf16>
    %244 = vector.shape_cast %243 : vector<8x8x64xbf16> to vector<64x64xbf16>
    %c3_300 = arith.constant 3 : index
    %c7_301 = arith.constant 7 : index
    %c0_302 = arith.constant 0 : index
    %c0_303 = arith.constant 0 : index
    %245 = vector.load %arg2[%c3_300, %c7_301, %c0_302, %c0_303] : memref<4x9x64x64xbf16, #tpu.memory_space<vmem>>, vector<1x1x64x64xbf16>
    %246 = vector.shape_cast %245 : vector<1x1x64x64xbf16> to vector<64x64xbf16>
    %cst_304 = arith.constant dense<0.000000e+00> : vector<64x64xf32>
    %247 = tpu.matmul %244, %246, %cst_304 {dimension_numbers = #tpu.dot_dimension_numbers<[1], [0], [0], [1], [0, 0, 1, 1], [], []>} : vector<64x64xbf16>, vector<64x64xbf16>, vector<64x64xf32> -> vector<64x64xf32>
    %248 = arith.addf %242, %247 : vector<64x64xf32>
    %c2_305 = arith.constant 2 : index
    %c9_306 = arith.constant 9 : index
    %c0_307 = arith.constant 0 : index
    %249 = vector.load %arg8[%c2_305, %c9_306, %c0_307] : memref<10x24x64xbf16, #tpu.memory_space<vmem>>, vector<8x8x64xbf16>
    %250 = vector.shape_cast %249 : vector<8x8x64xbf16> to vector<64x64xbf16>
    %c3_308 = arith.constant 3 : index
    %c8_309 = arith.constant 8 : index
    %c0_310 = arith.constant 0 : index
    %c0_311 = arith.constant 0 : index
    %251 = vector.load %arg2[%c3_308, %c8_309, %c0_310, %c0_311] : memref<4x9x64x64xbf16, #tpu.memory_space<vmem>>, vector<1x1x64x64xbf16>
    %252 = vector.shape_cast %251 : vector<1x1x64x64xbf16> to vector<64x64xbf16>
    %cst_312 = arith.constant dense<0.000000e+00> : vector<64x64xf32>
    %253 = tpu.matmul %250, %252, %cst_312 {dimension_numbers = #tpu.dot_dimension_numbers<[1], [0], [0], [1], [0, 0, 1, 1], [], []>} : vector<64x64xbf16>, vector<64x64xbf16>, vector<64x64xf32> -> vector<64x64xf32>
    %254 = arith.addf %248, %253 : vector<64x64xf32>
    %c3_313 = arith.constant 3 : index
    %c0_314 = arith.constant 0 : index
    %c0_315 = arith.constant 0 : index
    %255 = vector.load %arg3[%c3_313, %c0_314, %c0_315] : memref<4x1x64xf32, #tpu.memory_space<vmem>>, vector<1x1x64xf32>
    %256 = vector.shape_cast %255 : vector<1x1x64xf32> to vector<1x64xf32>
    %257 = vector.broadcast %256 : vector<1x64xf32> to vector<64x64xf32>
    %258 = arith.addf %254, %257 : vector<64x64xf32>
    %259 = arith.addf %258, %132 : vector<64x64xf32>
    %cst_316 = arith.constant 0.000000e+00 : f32
    %260 = vector.broadcast %cst_316 : f32 to vector<64x64xf32>
    %261 = arith.maximumf %259, %260 : vector<64x64xf32>
    %c0_317 = arith.constant 0 : index
    %c0_318 = arith.constant 0 : index
    %262 = vector.load %arg4[%c0_317, %c0_318] : memref<512x64xbf16, #tpu.memory_space<vmem>>, vector<512x64xbf16>
    %263 = arith.truncf %261 : vector<64x64xf32> to vector<64x64xbf16>
    %cst_319 = arith.constant dense<0.000000e+00> : vector<512x64xf32>
    %264 = tpu.matmul %262, %263, %cst_319 {dimension_numbers = #tpu.dot_dimension_numbers<[1], [0], [0], [1], [0, 0, 1, 1], [], []>} : vector<512x64xbf16>, vector<64x64xbf16>, vector<512x64xf32> -> vector<512x64xf32>
    %c0_320 = arith.constant 0 : index
    %c0_321 = arith.constant 0 : index
    %265 = vector.load %arg5[%c0_320, %c0_321] : memref<16x64xbf16, #tpu.memory_space<vmem>>, vector<16x64xbf16>
    %266 = arith.truncf %264 : vector<512x64xf32> to vector<512x64xbf16>
    %cst_322 = arith.constant dense<0.000000e+00> : vector<16x512xf32>
    %267 = tpu.matmul %265, %266, %cst_322 {dimension_numbers = #tpu.dot_dimension_numbers<[1], [1], [0], [0], [0, 0, 1, 0], [], []>} : vector<16x64xbf16>, vector<512x64xbf16>, vector<16x512xf32> -> vector<16x512xf32>
    %c0_323 = arith.constant 0 : index
    %c0_324 = arith.constant 0 : index
    %268 = vector.load %arg6[%c0_323, %c0_324] : memref<16x512xf32, #tpu.memory_space<vmem>>, vector<16x512xf32>
    %269 = arith.addf %267, %268 : vector<16x512xf32>
    %270 = tpu.iota {dimensions = array<i32: 0>} : vector<16x512xi32>
    %c10_i32 = arith.constant 10 : i32
    %271 = vector.broadcast %c10_i32 : i32 to vector<16x512xi32>
    %272 = arith.cmpi slt, %270, %271 : vector<16x512xi32>
    %cst_325 = arith.constant -1.000000e+30 : f32
    %273 = vector.broadcast %cst_325 : f32 to vector<16x512xf32>
    %274 = arith.select %272, %269, %273 : vector<16x512xi1>, vector<16x512xf32>
    %cst_326 = arith.constant dense<0xFF800000> : vector<512xf32>
    %275 = vector.multi_reduction <maximumf>, %274, %cst_326 [0] : vector<16x512xf32> to vector<512xf32>
    %276 = vector.shape_cast %275 : vector<512xf32> to vector<1x512xf32>
    %277 = vector.broadcast %276 : vector<1x512xf32> to vector<16x512xf32>
    %278 = arith.subf %274, %277 : vector<16x512xf32>
    %279 = math.exp %278 : vector<16x512xf32>
    %cst_327 = arith.constant dense<0.000000e+00> : vector<512xf32>
    %280 = vector.multi_reduction <add>, %279, %cst_327 [0] : vector<16x512xf32> to vector<512xf32>
    %281 = vector.shape_cast %280 : vector<512xf32> to vector<1x512xf32>
    %282 = vector.broadcast %281 : vector<1x512xf32> to vector<16x512xf32>
    %283 = arith.divf %279, %282 : vector<16x512xf32>
    %c0_328 = arith.constant 0 : index
    %c0_329 = arith.constant 0 : index
    %c0_330 = arith.constant 0 : index
    %284 = vector.load %arg7[%c0_328, %c0_329, %c0_330] : memref<1x16x512xf32, #tpu.memory_space<vmem>>, vector<1x16x512xf32>
    %285 = vector.shape_cast %284 : vector<1x16x512xf32> to vector<16x512xf32>
    %286 = vector.shape_cast %283 : vector<16x512xf32> to vector<1x16x512xf32>
    tpu.vector_store %arg7[%c0_328, %c0_329, %c0_330], %286 {strides = array<i32>} : memref<1x16x512xf32, #tpu.memory_space<vmem>>, vector<1x16x512xf32>,
    return
  }
  func.func @transform_0(%arg0: i32) -> (i32, i32, i32, i32) {
    %c0_i32 = arith.constant 0 : i32
    %c0_i32_0 = arith.constant 0 : i32
    %c0_i32_1 = arith.constant 0 : i32
    %c0_i32_2 = arith.constant 0 : i32
    return %arg0, %c0_i32, %c0_i32_0, %c0_i32_1 : i32, i32, i32, i32
  }
  func.func @transform_1(%arg0: i32) -> (i32, i32, i32, i32) {
    %c0_i32 = arith.constant 0 : i32
    %c0_i32_0 = arith.constant 0 : i32
    %c0_i32_1 = arith.constant 0 : i32
    %c0_i32_2 = arith.constant 0 : i32
    %c0_i32_3 = arith.constant 0 : i32
    return %c0_i32, %c0_i32_0, %c0_i32_1, %c0_i32_2 : i32, i32, i32, i32
  }
  func.func @transform_2(%arg0: i32) -> (i32, i32, i32) {
    %c0_i32 = arith.constant 0 : i32
    %c0_i32_0 = arith.constant 0 : i32
    %c0_i32_1 = arith.constant 0 : i32
    %c0_i32_2 = arith.constant 0 : i32
    return %c0_i32, %c0_i32_0, %c0_i32_1 : i32, i32, i32
  }
  func.func @transform_3(%arg0: i32) -> (i32, i32) {
    %c0_i32 = arith.constant 0 : i32
    %c0_i32_0 = arith.constant 0 : i32
    %c0_i32_1 = arith.constant 0 : i32
    return %c0_i32, %c0_i32_0 : i32, i32
  }
  func.func @transform_4(%arg0: i32) -> (i32, i32) {
    %c0_i32 = arith.constant 0 : i32
    %c0_i32_0 = arith.constant 0 : i32
    %c0_i32_1 = arith.constant 0 : i32
    return %c0_i32, %c0_i32_0 : i32, i32
  }
  func.func @transform_5(%arg0: i32) -> (i32, i32) {
    %c0_i32 = arith.constant 0 : i32
    %c0_i32_0 = arith.constant 0 : i32
    %c0_i32_1 = arith.constant 0 : i32
    return %c0_i32, %c0_i32_0 : i32, i32
  }
  func.func @transform_6(%arg0: i32) -> (i32, i32, i32) {
    %c0_i32 = arith.constant 0 : i32
    %c0_i32_0 = arith.constant 0 : i32
    %c0_i32_1 = arith.constant 0 : i32
    return %arg0, %c0_i32, %c0_i32_0 : i32, i32, i32
  }
}

</mosaic_0001>

<llo_original>
// kernel: forward.2
$region0: #{forward.2}
  #allocation0 [shape = 'u32[]', space=smem, size = 0x4, offset = 0x4, fixed_abs, tag = 'smem constant byte address 0x4 - core index']
  #allocation1 [shape = 'u32[144,128]{1,0:T(1,128)}', space=vmem, size = 0x12000, scoped, tag = 'internal scratch']
  %s0 = inlined_call_operand.vmem [shape: bf16[512,256], index: 0, kind: input, shape index: {}]
  %s1 = inlined_call_operand.vmem [shape: bf16[256,64], index: 1, kind: input, shape index: {}]
  %s2 = inlined_call_operand.vmem [shape: f32[1,64], index: 2, kind: input, shape index: {}]
  %s3 = inlined_call_operand.vmem [shape: bf16[512,64], index: 3, kind: output, shape index: {}]
  %s4 = sld [smem:[#allocation0]]
  $region45: #{forward.2} parent=0
    _
  %s6 = ssub.s32 1, %s4
  %s7 = scalar_select 0, %s6, %s4
  loop: start=0, step=1, limit=4
  $region2: #{forward.2} parent=0 // loop_pre_header
    _
  $region3: #{forward.2} parent=0 // loop_header
    %s9 = sphi 0, %s13
    %p10 = scmp.ge.s32.totalorder %s9, 4
    %s19 = sphi 0, %s21
    %s22 = sphi 0, %s19
    %s23 = sphi 0, %s22
    %s39 = sphi 0, %s23
    %s43 = sphi 0, %s43
    %s45 = sphi 0, %s43
    %s46 = sphi 0, %s45
    %s60 = sphi 0, %s46
    %s64 = sphi 0, %s64
    %s66 = sphi 0, %s64
    %s67 = sphi 0, %s66
    %s81 = sphi 0, %s67
    %s87 = sphi 0, %s89
    %s90 = sphi 0, %s87
    %s91 = sphi 0, %s90
    %s107 = sphi 0, %s91
  $region4: #{forward.2} parent=0 // loop_header_branch
    %12 = sbr.rel (%p10) target = $region8
  $region5: #{forward.2} parent=0 // loop_body
    %s14 = ssub.s32 %s9, 1
    %s15 = ssub.s32 %s9, 2
    %s16 = sadd.s32 %s9, 1
    %s17 = ssub.s32 %s9, %s16
    %p18 = scmp.eq.s32.totalorder %s17, 0
    %s20 = sadd.s32 %s19, 1
    %s21 = scalar_select %p18, %s19, %s20
    %p24 = pneg %p18
    %p25 = scmp.eq.s32.totalorder %s9, 1
    %p26 = por %p24, %p25
    %p27 = scmp.ne.s32.totalorder %s19, %s22
    %p28 = scmp.eq.s32.totalorder %s9, 0
    %p29 = por %p27, %p28
    %p30 = scmp.ne.s32.totalorder %s19, %s22
    %p31 = scmp.eq.s32.totalorder %s14, 1
    %p32 = por %p30, %p31
    %p33 = scmp.ne.s32.totalorder %s22, %s23
    %p34 = scmp.eq.s32.totalorder %s14, 0
    %p35 = por %p33, %p34
    %p36 = scmp.ne.s32.totalorder %s22, %s23
    %p37 = scmp.eq.s32.totalorder %s15, 1
    %p38 = por %p36, %p37
    %p40 = scmp.ne.s32.totalorder %s23, %s39
    %p41 = scmp.eq.s32.totalorder %s15, 0
    %p42 = por %p40, %p41
    %s44 = sadd.s32 %s43, 1
    %p47 = scmp.eq.s32.totalorder %s9, 1
    %p48 = scmp.ne.s32.totalorder %s43, %s45
    %p49 = scmp.eq.s32.totalorder %s9, 0
    %p50 = por %p48, %p49
    %p51 = scmp.ne.s32.totalorder %s43, %s45
    %p52 = scmp.eq.s32.totalorder %s14, 1
    %p53 = por %p51, %p52
    %p54 = scmp.ne.s32.totalorder %s45, %s46
    %p55 = scmp.eq.s32.totalorder %s14, 0
    %p56 = por %p54, %p55
    %p57 = scmp.ne.s32.totalorder %s45, %s46
    %p58 = scmp.eq.s32.totalorder %s15, 1
    %p59 = por %p57, %p58
    %p61 = scmp.ne.s32.totalorder %s46, %s60
    %p62 = scmp.eq.s32.totalorder %s15, 0
    %p63 = por %p61, %p62
    %s65 = sadd.s32 %s64, 1
    %p68 = scmp.eq.s32.totalorder %s9, 1
    %p69 = scmp.ne.s32.totalorder %s64, %s66
    %p70 = scmp.eq.s32.totalorder %s9, 0
    %p71 = por %p69, %p70
    %p72 = scmp.ne.s32.totalorder %s64, %s66
    %p73 = scmp.eq.s32.totalorder %s14, 1
    %p74 = por %p72, %p73
    %p75 = scmp.ne.s32.totalorder %s66, %s67
    %p76 = scmp.eq.s32.totalorder %s14, 0
    %p77 = por %p75, %p76
    %p78 = scmp.ne.s32.totalorder %s66, %s67
    %p79 = scmp.eq.s32.totalorder %s15, 1
    %p80 = por %p78, %p79
    %p82 = scmp.ne.s32.totalorder %s67, %s81
    %p83 = scmp.eq.s32.totalorder %s15, 0
    %p84 = por %p82, %p83
    %s85 = ssub.s32 %s9, %s16
    %p86 = scmp.eq.s32.totalorder %s85, 0
    %s88 = sadd.s32 %s87, 1
    %s89 = scalar_select %p86, %s87, %s88
    %p92 = pneg %p86
    %p93 = scmp.eq.s32.totalorder %s9, 1
    %p94 = por %p92, %p93
    %p95 = scmp.ne.s32.totalorder %s87, %s90
    %p96 = scmp.eq.s32.totalorder %s9, 0
    %p97 = por %p95, %p96
    %p98 = scmp.ne.s32.totalorder %s87, %s90
    %p99 = scmp.eq.s32.totalorder %s14, 1
    %p100 = por %p98, %p99
    %p101 = scmp.ne.s32.totalorder %s90, %s91
    %p102 = scmp.eq.s32.totalorder %s14, 0
    %p103 = por %p101, %p102
    %p104 = scmp.ne.s32.totalorder %s90, %s91
    %p105 = scmp.eq.s32.totalorder %s15, 1
    %p106 = por %p104, %p105
    %p108 = scmp.ne.s32.totalorder %s91, %s107
    %p109 = scmp.eq.s32.totalorder %s15, 0
    %p110 = por %p108, %p109
    %p111 = scmp.le.s32.totalorder 1, %s9
    %p112 = scmp.lt.s32.totalorder %s9, 3
    %p113 = pnand %p111, %p112
    %p114 = pneg %p113
    // Predicated region
    $region9: #{forward.2} parent=5 // pred_check
      _
    $region10: #{forward.2} parent=5 // pred_check_branch
      %116 = sbr.rel (%p113) target = $region12
    $region11: #{forward.2} parent=5 // pred_region
      %s117 = ssub.s32 %s9, 1
      // Predicated region
      $region13: #{forward.2} parent=11 // pred_check
        %p118 = pneg %p56
      $region14: #{forward.2} parent=11 // pred_check_branch
        %120 = sbr.rel (%p118) target = $region16
      $region15: #{forward.2} parent=11 // pred_region
        _
      $region16: #{forward.2} parent=11 // pred_fallthru
        _
      // Predicated region
      $region17: #{forward.2} parent=11 // pred_check
        %p121 = pneg %p77
      $region18: #{forward.2} parent=11 // pred_check_branch
        %123 = sbr.rel (%p121) target = $region20
      $region19: #{forward.2} parent=11 // pred_region
        _
      $region20: #{forward.2} parent=11 // pred_fallthru
        _
    $region12: #{forward.2} parent=5 // pred_fallthru
      _
    %p124 = scmp.lt.s32.totalorder %s9, 2
    // Predicated region
    $region21: #{forward.2} parent=5 // pred_check
      %p125 = pneg %p124
    $region22: #{forward.2} parent=5 // pred_check_branch
      %127 = sbr.rel (%p125) target = $region24
    $region23: #{forward.2} parent=5 // pred_region
      // Predicated region
      $region25: #{forward.2} parent=23 // pred_check
        %p128 = pneg %p29
      $region26: #{forward.2} parent=23 // pred_check_branch
        %130 = sbr.rel (%p128) target = $region28
      $region27: #{forward.2} parent=23 // pred_region
        %s131 = smul.u32 32, %s9
        %p132 = scmp.lt.s32.totalorder %s131, 63
        %s133 = scalar_select %p132, %s131, 63
        %s134 = smul.addr %s133, 2
        %s135 = smul.addr %s134, 4
        %s136 = scalar_lea.vmem %s0, %s135
        %s137 = smul.u32 32, %s9
      $region28: #{forward.2} parent=23 // pred_fallthru
        _
    $region24: #{forward.2} parent=5 // pred_fallthru
      _
    %p138 = scmp.le.s32.totalorder 1, %s9
    %p139 = scmp.lt.s32.totalorder %s9, 3
    %p140 = pnand %p138, %p139
    %p141 = pneg %p140
    // Predicated region
    $region29: #{forward.2} parent=5 // pred_check
      _
    $region30: #{forward.2} parent=5 // pred_check_branch
      %143 = sbr.rel (%p140) target = $region32
    $region31: #{forward.2} parent=5 // pred_region
      %s144 = ssub.s32 %s9, 1
      %s145 = smul.u32 32, %s14
      %p146 = scmp.lt.s32.totalorder %s145, 63
      %s147 = scalar_select %p146, %s145, 63
      %s148 = smul.addr %s147, 2
      %s149 = smul.addr %s148, 4
      %s150 = scalar_lea.vmem %s0, %s149
      %p151 = pneg %p35
      %p152 = pneg %p32
      %p153 = pneg %p56
      %p154 = pneg %p53
      %p155 = pneg %p77
      %p156 = pneg %p74
      %p157 = pneg %p103
      %p158 = pneg %p100
      %s159 = smul.u32 32, %s14
      %p160 = scmp.lt.s32.totalorder %s159, 63
      %s161 = scalar_select %p160, %s159, 63
      %s162 = smul.addr %s161, 4
      %s163 = scalar_lea.vmem %s3, %s162
      %s164 = smul.u32 32, %s14
      %p165 = scmp.lt.s32.totalorder %s164, 63
      %s166 = scalar_select %p165, %s164, 63
      %s167 = smul.addr %s166, 2
      %s168 = smul.addr %s167, 4
      %s169 = scalar_lea.vmem %s0, %s168
      %s170 = smul.u32 32, %s14
      %s171 = smul.u32 32, %s14
      %p172 = scmp.lt.s32.totalorder %s171, 63
      %s173 = scalar_select %p172, %s171, 63
      %s174 = smul.addr %s173, 4
      %s175 = scalar_lea.vmem %s3, %s174
      %s176 = smul.u32 32, %s14
      %v178 = vld [vmem:[%s169] sm:$0xff]
      %v179 = vld [vmem:[%s169 + $0x8] sm:$0xff]
      %v180 = vld [vmem:[%s169 + $0x10] sm:$0xff]
      %v181 = vld [vmem:[%s169 + $0x18] sm:$0xff]
      %v182 = vld [vmem:[%s169 + $0x20] sm:$0xff]
      %v183 = vld [vmem:[%s169 + $0x28] sm:$0xff]
      %v184 = vld [vmem:[%s169 + $0x30] sm:$0xff]
      %v185 = vld [vmem:[%s169 + $0x38] sm:$0xff]
      %v186 = vld [vmem:[%s169 + $0x40] sm:$0xff]
      %v187 = vld [vmem:[%s169 + $0x48] sm:$0xff]
      %v188 = vld [vmem:[%s169 + $0x50] sm:$0xff]
      %v189 = vld [vmem:[%s169 + $0x58] sm:$0xff]
      %v190 = vld [vmem:[%s169 + $0x60] sm:$0xff]
      %v191 = vld [vmem:[%s169 + $0x68] sm:$0xff]
      %v192 = vld [vmem:[%s169 + $0x70] sm:$0xff]
      %v193 = vld [vmem:[%s169 + $0x78] sm:$0xff]
      %v194 = vld [vmem:[%s169 + $0x80] sm:$0xff]
      %v195 = vld [vmem:[%s169 + $0x88] sm:$0xff]
      %v196 = vld [vmem:[%s169 + $0x90] sm:$0xff]
      %v197 = vld [vmem:[%s169 + $0x98] sm:$0xff]
      %v198 = vld [vmem:[%s169 + $0xa0] sm:$0xff]
      %v199 = vld [vmem:[%s169 + $0xa8] sm:$0xff]
      %v200 = vld [vmem:[%s169 + $0xb0] sm:$0xff]
      %v201 = vld [vmem:[%s169 + $0xb8] sm:$0xff]
      %v202 = vld [vmem:[%s169 + $0xc0] sm:$0xff]
      %v203 = vld [vmem:[%s169 + $0xc8] sm:$0xff]
      %v204 = vld [vmem:[%s169 + $0xd0] sm:$0xff]
      %v205 = vld [vmem:[%s169 + $0xd8] sm:$0xff]
      %v206 = vld [vmem:[%s169 + $0xe0] sm:$0xff]
      %v207 = vld [vmem:[%s169 + $0xe8] sm:$0xff]
      %v208 = vld [vmem:[%s169 + $0xf0] sm:$0xff]
      %v209 = vld [vmem:[%s169 + $0xf8] sm:$0xff]
      %v210 = vld [vmem:[%s1] sm:$0xf]
      %v211 = vld [vmem:[%s1 + $0x4] sm:$0xf]
      %v212 = vld [vmem:[%s1 + $0x8] sm:$0xf]
      %v213 = vld [vmem:[%s1 + $0xc] sm:$0xf]
      %v214 = vld [vmem:[%s1 + $0x10] sm:$0xf]
      %v215 = vld [vmem:[%s1 + $0x14] sm:$0xf]
      %v216 = vld [vmem:[%s1 + $0x18] sm:$0xf]
      %v217 = vld [vmem:[%s1 + $0x1c] sm:$0xf]
      %v218 = vld [vmem:[%s1 + $0x20] sm:$0xf]
      %v219 = vld [vmem:[%s1 + $0x24] sm:$0xf]
      %v220 = vld [vmem:[%s1 + $0x28] sm:$0xf]
      %v221 = vld [vmem:[%s1 + $0x2c] sm:$0xf]
      %v222 = vld [vmem:[%s1 + $0x30] sm:$0xf]
      %v223 = vld [vmem:[%s1 + $0x34] sm:$0xf]
      %v224 = vld [vmem:[%s1 + $0x38] sm:$0xf]
      %v225 = vld [vmem:[%s1 + $0x3c] sm:$0xf]
      %v226 = vld [vmem:[%s1 + $0x40] sm:$0xf]
      %v227 = vld [vmem:[%s1 + $0x44] sm:$0xf]
      %v228 = vld [vmem:[%s1 + $0x48] sm:$0xf]
      %v229 = vld [vmem:[%s1 + $0x4c] sm:$0xf]
      %v230 = vld [vmem:[%s1 + $0x50] sm:$0xf]
      %v231 = vld [vmem:[%s1 + $0x54] sm:$0xf]
      %v232 = vld [vmem:[%s1 + $0x58] sm:$0xf]
      %v233 = vld [vmem:[%s1 + $0x5c] sm:$0xf]
      %v234 = vld [vmem:[%s1 + $0x60] sm:$0xf]
      %v235 = vld [vmem:[%s1 + $0x64] sm:$0xf]
      %v236 = vld [vmem:[%s1 + $0x68] sm:$0xf]
      %v237 = vld [vmem:[%s1 + $0x6c] sm:$0xf]
      %v238 = vld [vmem:[%s1 + $0x70] sm:$0xf]
      %v239 = vld [vmem:[%s1 + $0x74] sm:$0xf]
      %v240 = vld [vmem:[%s1 + $0x78] sm:$0xf]
      %v241 = vld [vmem:[%s1 + $0x7c] sm:$0xf]
      %v242 = vld [vmem:[%s2] sm:$0x1]
      %v244 = vlaneseq
      %v245 = vshrl.u32 %v244, 7
      %v246 = vsub.s32 0, %v245
      %v247 = vrot.slane %v242, %v246
      %v281 = vunpack.c.l.b16 %v178
      %v282 = vunpack.c.h.b16 %v178
      %v283 = vunpack.c.l.b16 %v179
      %v284 = vunpack.c.h.b16 %v179
      %v285 = vunpack.c.l.b16 %v180
      %v286 = vunpack.c.h.b16 %v180
      %v287 = vunpack.c.l.b16 %v181
      %v288 = vunpack.c.h.b16 %v181
      %v289 = vunpack.c.l.b16 %v182
      %v290 = vunpack.c.h.b16 %v182
      %v291 = vunpack.c.l.b16 %v183
      %v292 = vunpack.c.h.b16 %v183
      %v293 = vunpack.c.l.b16 %v184
      %v294 = vunpack.c.h.b16 %v184
      %v295 = vunpack.c.l.b16 %v185
      %v296 = vunpack.c.h.b16 %v185
      %v297 = vunpack.c.l.b16 %v186
      %v298 = vunpack.c.h.b16 %v186
      %v299 = vunpack.c.l.b16 %v187
      %v300 = vunpack.c.h.b16 %v187
      %v301 = vunpack.c.l.b16 %v188
      %v302 = vunpack.c.h.b16 %v188
      %v303 = vunpack.c.l.b16 %v189
      %v304 = vunpack.c.h.b16 %v189
      %v305 = vunpack.c.l.b16 %v190
      %v306 = vunpack.c.h.b16 %v190
      %v307 = vunpack.c.l.b16 %v191
      %v308 = vunpack.c.h.b16 %v191
      %v309 = vunpack.c.l.b16 %v192
      %v310 = vunpack.c.h.b16 %v192
      %v311 = vunpack.c.l.b16 %v193
      %v312 = vunpack.c.h.b16 %v193
      %v313 = vunpack.c.l.b16 %v194
      %v314 = vunpack.c.h.b16 %v194
      %v315 = vunpack.c.l.b16 %v195
      %v316 = vunpack.c.h.b16 %v195
      %v317 = vunpack.c.l.b16 %v196
      %v318 = vunpack.c.h.b16 %v196
      %v319 = vunpack.c.l.b16 %v197
      %v320 = vunpack.c.h.b16 %v197
      %v321 = vunpack.c.l.b16 %v198
      %v322 = vunpack.c.h.b16 %v198
      %v323 = vunpack.c.l.b16 %v199
      %v324 = vunpack.c.h.b16 %v199
      %v325 = vunpack.c.l.b16 %v200
      %v326 = vunpack.c.h.b16 %v200
      %v327 = vunpack.c.l.b16 %v201
      %v328 = vunpack.c.h.b16 %v201
      %v329 = vunpack.c.l.b16 %v202
      %v330 = vunpack.c.h.b16 %v202
      %v331 = vunpack.c.l.b16 %v203
      %v332 = vunpack.c.h.b16 %v203
      %v333 = vunpack.c.l.b16 %v204
      %v334 = vunpack.c.h.b16 %v204
      %v335 = vunpack.c.l.b16 %v205
      %v336 = vunpack.c.h.b16 %v205
      %v337 = vunpack.c.l.b16 %v206
      %v338 = vunpack.c.h.b16 %v206
      %v339 = vunpack.c.l.b16 %v207
      %v340 = vunpack.c.h.b16 %v207
      %v341 = vunpack.c.l.b16 %v208
      %v342 = vunpack.c.h.b16 %v208
      %v343 = vunpack.c.l.b16 %v209
      %v344 = vunpack.c.h.b16 %v209
      %v345 = vpack.c.b16 %v283, %v281
      %v346 = vpack.c.b16 %v284, %v282
      %v347 = vpack.c.b16 %v287, %v285
      %v348 = vpack.c.b16 %v288, %v286
      %v349 = vpack.c.b16 %v291, %v289
      %v350 = vpack.c.b16 %v292, %v290
      %v351 = vpack.c.b16 %v295, %v293
      %v352 = vpack.c.b16 %v296, %v294
      %v353 = vpack.c.b16 %v299, %v297
      %v354 = vpack.c.b16 %v300, %v298
      %v355 = vpack.c.b16 %v303, %v301
      %v356 = vpack.c.b16 %v304, %v302
      %v357 = vpack.c.b16 %v307, %v305
      %v358 = vpack.c.b16 %v308, %v306
      %v359 = vpack.c.b16 %v311, %v309
      %v360 = vpack.c.b16 %v312, %v310
      %v361 = vpack.c.b16 %v315, %v313
      %v362 = vpack.c.b16 %v316, %v314
      %v363 = vpack.c.b16 %v319, %v317
      %v364 = vpack.c.b16 %v320, %v318
      %v365 = vpack.c.b16 %v323, %v321
      %v366 = vpack.c.b16 %v324, %v322
      %v367 = vpack.c.b16 %v327, %v325
      %v368 = vpack.c.b16 %v328, %v326
      %v369 = vpack.c.b16 %v331, %v329
      %v370 = vpack.c.b16 %v332, %v330
      %v371 = vpack.c.b16 %v335, %v333
      %v372 = vpack.c.b16 %v336, %v334
      %v373 = vpack.c.b16 %v339, %v337
      %v374 = vpack.c.b16 %v340, %v338
      %v375 = vpack.c.b16 %v343, %v341
      %v376 = vpack.c.b16 %v344, %v342
      %v441 = vunpack.c.l.b16 %v210
      %v442 = vunpack.c.l.b16 %v211
      %v443 = vunpack.c.l.b16 %v212
      %v444 = vunpack.c.l.b16 %v213
      %v445 = vunpack.c.l.b16 %v214
      %v446 = vunpack.c.l.b16 %v215
      %v447 = vunpack.c.l.b16 %v216
      %v448 = vunpack.c.l.b16 %v217
      %v449 = vunpack.c.l.b16 %v218
      %v450 = vunpack.c.l.b16 %v219
      %v451 = vunpack.c.l.b16 %v220
      %v452 = vunpack.c.l.b16 %v221
      %v453 = vunpack.c.l.b16 %v222
      %v454 = vunpack.c.l.b16 %v223
      %v455 = vunpack.c.l.b16 %v224
      %v456 = vunpack.c.l.b16 %v225
      %v457 = vunpack.c.l.b16 %v226
      %v458 = vunpack.c.l.b16 %v227
      %v459 = vunpack.c.l.b16 %v228
      %v460 = vunpack.c.l.b16 %v229
      %v461 = vunpack.c.l.b16 %v230
      %v462 = vunpack.c.l.b16 %v231
      %v463 = vunpack.c.l.b16 %v232
      %v464 = vunpack.c.l.b16 %v233
      %v465 = vunpack.c.l.b16 %v234
      %v466 = vunpack.c.l.b16 %v235
      %v467 = vunpack.c.l.b16 %v236
      %v468 = vunpack.c.l.b16 %v237
      %v469 = vunpack.c.l.b16 %v238
      %v470 = vunpack.c.l.b16 %v239
      %v471 = vunpack.c.l.b16 %v240
      %v472 = vunpack.c.l.b16 %v241
      %v473 = vpack.c.b16 %v442, %v441
      %v474 = vpack.c.b16 %v444, %v443
      %v475 = vpack.c.b16 %v446, %v445
      %v476 = vpack.c.b16 %v448, %v447
      %v477 = vpack.c.b16 %v450, %v449
      %v478 = vpack.c.b16 %v452, %v451
      %v479 = vpack.c.b16 %v454, %v453
      %v480 = vpack.c.b16 %v456, %v455
      %v481 = vpack.c.b16 %v458, %v457
      %v482 = vpack.c.b16 %v460, %v459
      %v483 = vpack.c.b16 %v462, %v461
      %v484 = vpack.c.b16 %v464, %v463
      %v485 = vpack.c.b16 %v466, %v465
      %v486 = vpack.c.b16 %v468, %v467
      %v487 = vpack.c.b16 %v470, %v469
      %v488 = vpack.c.b16 %v472, %v471
      %505 = vmatprep.subr.bf16.mxu0 0
      %506 = vmatpush1.bf16.msra.mxu0 %v473
      %507 = vmatprep.subr.bf16.mxu0 0
      %508 = vmatpush1.bf16.msra.mxu0 %v474
      %509 = vmatprep.subr.bf16.mxu0 0
      %510 = vmatpush1.bf16.msra.mxu0 %v475
      %511 = vmatprep.subr.bf16.mxu0 0
      %512 = vmatpush1.bf16.msra.mxu0 %v476
      %513 = vmatprep.subr.bf16.mxu0 0
      %514 = vmatpush1.bf16.msra.mxu0 %v477
      %515 = vmatprep.subr.bf16.mxu0 0
      %516 = vmatpush1.bf16.msra.mxu0 %v478
      %517 = vmatprep.subr.bf16.mxu0 0
      %518 = vmatpush1.bf16.msra.mxu0 %v479
      %519 = vmatprep.subr.bf16.mxu0 0
      %520 = vmatpush1.bf16.msra.mxu0 %v480
      %521 = vmatprep.subr.bf16.mxu0 0
      %522 = vmatpush1.bf16.msra.mxu0 %v481
      %523 = vmatprep.subr.bf16.mxu0 0
      %524 = vmatpush1.bf16.msra.mxu0 %v482
      %525 = vmatprep.subr.bf16.mxu0 0
      %526 = vmatpush1.bf16.msra.mxu0 %v483
      %527 = vmatprep.subr.bf16.mxu0 0
      %528 = vmatpush1.bf16.msra.mxu0 %v484
      %529 = vmatprep.subr.bf16.mxu0 0
      %530 = vmatpush1.bf16.msra.mxu0 %v485
      %531 = vmatprep.subr.bf16.mxu0 0
      %532 = vmatpush1.bf16.msra.mxu0 %v486
      %533 = vmatprep.subr.bf16.mxu0 0
      %534 = vmatpush1.bf16.msra.mxu0 %v487
      %535 = vmatprep.subr.bf16.mxu0 0
      %536 = vmatpush1.bf16.msra.mxu0 %v488
      %537 = vmatprep.mubr.bf16.mxu0 %v346
      %538 = vmatmul.mubr.bf16.gmra.mrb[0].mxu0 %v345
      %v539 = vpop.f32.mrb[0].mxu0
      %v540 = vadd.f32 %v247, %v539
      %v541 = vpop.f32.mrb[0].mxu0
      %v542 = vpop.f32.mrb[0].mxu0
      %v543 = vadd.f32 %v247, %v542
      %v544 = vpop.f32.mrb[0].mxu0
      %545 = vmatprep.mubr.bf16.mxu0 %v348
      %546 = vmatmul.mubr.bf16.gmra.mrb[0].mxu0 %v347
      %v547 = vpop.f32.mrb[0].mxu0
      %v548 = vadd.f32 %v247, %v547
      %v549 = vpop.f32.mrb[0].mxu0
      %v550 = vpop.f32.mrb[0].mxu0
      %v551 = vadd.f32 %v247, %v550
      %v552 = vpop.f32.mrb[0].mxu0
      %553 = vmatprep.mubr.bf16.mxu0 %v350
      %554 = vmatmul.mubr.bf16.gmra.mrb[0].mxu0 %v349
      %v555 = vpop.f32.mrb[0].mxu0
      %v556 = vadd.f32 %v247, %v555
      %v557 = vpop.f32.mrb[0].mxu0
      %v558 = vpop.f32.mrb[0].mxu0
      %v559 = vadd.f32 %v247, %v558
      %v560 = vpop.f32.mrb[0].mxu0
      %561 = vmatprep.mubr.bf16.mxu0 %v352
      %562 = vmatmul.mubr.bf16.gmra.mrb[0].mxu0 %v351
      %v563 = vpop.f32.mrb[0].mxu0
      %v564 = vadd.f32 %v247, %v563
      %v565 = vpop.f32.mrb[0].mxu0
      %v566 = vpop.f32.mrb[0].mxu0
      %v567 = vadd.f32 %v247, %v566
      %v568 = vpop.f32.mrb[0].mxu0
      %569 = vmatprep.mubr.bf16.mxu0 %v354
      %570 = vmatmul.mubr.bf16.gmra.mrb[0].mxu0 %v353
      %v571 = vpop.f32.mrb[0].mxu0
      %v572 = vadd.f32 %v247, %v571
      %v573 = vpop.f32.mrb[0].mxu0
      %v574 = vpop.f32.mrb[0].mxu0
      %v575 = vadd.f32 %v247, %v574
      %v576 = vpop.f32.mrb[0].mxu0
      %577 = vmatprep.mubr.bf16.mxu0 %v356
      %578 = vmatmul.mubr.bf16.gmra.mrb[0].mxu0 %v355
      %v579 = vpop.f32.mrb[0].mxu0
      %v580 = vadd.f32 %v247, %v579
      %v581 = vpop.f32.mrb[0].mxu0
      %v582 = vpop.f32.mrb[0].mxu0
      %v583 = vadd.f32 %v247, %v582
      %v584 = vpop.f32.mrb[0].mxu0
      %585 = vmatprep.mubr.bf16.mxu0 %v358
      %586 = vmatmul.mubr.bf16.gmra.mrb[0].mxu0 %v357
      %v587 = vpop.f32.mrb[0].mxu0
      %v588 = vadd.f32 %v247, %v587
      %v589 = vpop.f32.mrb[0].mxu0
      %v590 = vpop.f32.mrb[0].mxu0
      %v591 = vadd.f32 %v247, %v590
      %v592 = vpop.f32.mrb[0].mxu0
      %593 = vmatprep.mubr.bf16.mxu0 %v360
      %594 = vmatmul.mubr.bf16.gmra.mrb[0].mxu0 %v359
      %v595 = vpop.f32.mrb[0].mxu0
      %v596 = vadd.f32 %v247, %v595
      %v597 = vpop.f32.mrb[0].mxu0
      %v598 = vpop.f32.mrb[0].mxu0
      %v599 = vadd.f32 %v247, %v598
      %v600 = vpop.f32.mrb[0].mxu0
      %601 = vmatprep.mubr.bf16.mxu0 %v362
      %602 = vmatmul.mubr.bf16.gmra.mrb[0].mxu0 %v361
      %v603 = vpop.f32.mrb[0].mxu0
      %v604 = vadd.f32 %v247, %v603
      %v605 = vpop.f32.mrb[0].mxu0
      %v606 = vpop.f32.mrb[0].mxu0
      %v607 = vadd.f32 %v247, %v606
      %v608 = vpop.f32.mrb[0].mxu0
      %609 = vmatprep.mubr.bf16.mxu0 %v364
      %610 = vmatmul.mubr.bf16.gmra.mrb[0].mxu0 %v363
      %v611 = vpop.f32.mrb[0].mxu0
      %v612 = vadd.f32 %v247, %v611
      %v613 = vpop.f32.mrb[0].mxu0
      %v614 = vpop.f32.mrb[0].mxu0
      %v615 = vadd.f32 %v247, %v614
      %v616 = vpop.f32.mrb[0].mxu0
      %617 = vmatprep.mubr.bf16.mxu0 %v366
      %618 = vmatmul.mubr.bf16.gmra.mrb[0].mxu0 %v365
      %v619 = vpop.f32.mrb[0].mxu0
      %v620 = vadd.f32 %v247, %v619
      %v621 = vpop.f32.mrb[0].mxu0
      %v622 = vpop.f32.mrb[0].mxu0
      %v623 = vadd.f32 %v247, %v622
      %v624 = vpop.f32.mrb[0].mxu0
      %625 = vmatprep.mubr.bf16.mxu0 %v368
      %626 = vmatmul.mubr.bf16.gmra.mrb[0].mxu0 %v367
      %v627 = vpop.f32.mrb[0].mxu0
      %v628 = vadd.f32 %v247, %v627
      %v629 = vpop.f32.mrb[0].mxu0
      %v630 = vpop.f32.mrb[0].mxu0
      %v631 = vadd.f32 %v247, %v630
      %v632 = vpop.f32.mrb[0].mxu0
      %633 = vmatprep.mubr.bf16.mxu0 %v370
      %634 = vmatmul.mubr.bf16.gmra.mrb[0].mxu0 %v369
      %v635 = vpop.f32.mrb[0].mxu0
      %v636 = vadd.f32 %v247, %v635
      %v637 = vpop.f32.mrb[0].mxu0
      %v638 = vpop.f32.mrb[0].mxu0
      %v639 = vadd.f32 %v247, %v638
      %v640 = vpop.f32.mrb[0].mxu0
      %641 = vmatprep.mubr.bf16.mxu0 %v372
      %642 = vmatmul.mubr.bf16.gmra.mrb[0].mxu0 %v371
      %v643 = vpop.f32.mrb[0].mxu0
      %v644 = vadd.f32 %v247, %v643
      %v645 = vpop.f32.mrb[0].mxu0
      %v646 = vpop.f32.mrb[0].mxu0
      %v647 = vadd.f32 %v247, %v646
      %v648 = vpop.f32.mrb[0].mxu0
      %649 = vmatprep.mubr.bf16.mxu0 %v374
      %650 = vmatmul.mubr.bf16.gmra.mrb[0].mxu0 %v373
      %v651 = vpop.f32.mrb[0].mxu0
      %v652 = vadd.f32 %v247, %v651
      %v653 = vpop.f32.mrb[0].mxu0
      %v654 = vpop.f32.mrb[0].mxu0
      %v655 = vadd.f32 %v247, %v654
      %v656 = vpop.f32.mrb[0].mxu0
      %657 = vmatprep.mubr.bf16.mxu0 %v376
      %658 = vmatmul.mubr.bf16.gmra.mrb[0].mxu0 %v375
      %v659 = vpop.f32.mrb[0].mxu0
      %v660 = vadd.f32 %v247, %v659
      %v661 = vpop.f32.mrb[0].mxu0
      %v662 = vpop.f32.mrb[0].mxu0
      %v663 = vadd.f32 %v247, %v662
      %v664 = vpop.f32.mrb[0].mxu0
      %665 = vdwg.mxu0
      %v666 = vmax.f32 %v540, 0.0
      %v667 = vmax.f32 %v543, 0.0
      %v668 = vmax.f32 %v548, 0.0
      %v669 = vmax.f32 %v551, 0.0
      %v670 = vmax.f32 %v556, 0.0
      %v671 = vmax.f32 %v559, 0.0
      %v672 = vmax.f32 %v564, 0.0
      %v673 = vmax.f32 %v567, 0.0
      %v674 = vmax.f32 %v572, 0.0
      %v675 = vmax.f32 %v575, 0.0
      %v676 = vmax.f32 %v580, 0.0
      %v677 = vmax.f32 %v583, 0.0
      %v678 = vmax.f32 %v588, 0.0
      %v679 = vmax.f32 %v591, 0.0
      %v680 = vmax.f32 %v596, 0.0
      %v681 = vmax.f32 %v599, 0.0
      %v682 = vmax.f32 %v604, 0.0
      %v683 = vmax.f32 %v607, 0.0
      %v684 = vmax.f32 %v612, 0.0
      %v685 = vmax.f32 %v615, 0.0
      %v686 = vmax.f32 %v620, 0.0
      %v687 = vmax.f32 %v623, 0.0
      %v688 = vmax.f32 %v628, 0.0
      %v689 = vmax.f32 %v631, 0.0
      %v690 = vmax.f32 %v636, 0.0
      %v691 = vmax.f32 %v639, 0.0
      %v692 = vmax.f32 %v644, 0.0
      %v693 = vmax.f32 %v647, 0.0
      %v694 = vmax.f32 %v652, 0.0
      %v695 = vmax.f32 %v655, 0.0
      %v696 = vmax.f32 %v660, 0.0
      %v697 = vmax.f32 %v663, 0.0
      %v698 = vpack.c.bf16 %v667, %v666
      %v699 = vpack.c.bf16 %v669, %v668
      %v700 = vpack.c.bf16 %v671, %v670
      %v701 = vpack.c.bf16 %v673, %v672
      %v702 = vpack.c.bf16 %v675, %v674
      %v703 = vpack.c.bf16 %v677, %v676
      %v704 = vpack.c.bf16 %v679, %v678
      %v705 = vpack.c.bf16 %v681, %v680
      %v706 = vpack.c.bf16 %v683, %v682
      %v707 = vpack.c.bf16 %v685, %v684
      %v708 = vpack.c.bf16 %v687, %v686
      %v709 = vpack.c.bf16 %v689, %v688
      %v710 = vpack.c.bf16 %v691, %v690
      %v711 = vpack.c.bf16 %v693, %v692
      %v712 = vpack.c.bf16 %v695, %v694
      %v713 = vpack.c.bf16 %v697, %v696
      %v730 = vunpack.c.l.b16 %v698
      %v731 = vunpack.c.h.b16 %v698
      %v732 = vunpack.c.l.b16 %v699
      %v733 = vunpack.c.h.b16 %v699
      %v734 = vunpack.c.l.b16 %v700
      %v735 = vunpack.c.h.b16 %v700
      %v736 = vunpack.c.l.b16 %v701
      %v737 = vunpack.c.h.b16 %v701
      %v738 = vunpack.c.l.b16 %v702
      %v739 = vunpack.c.h.b16 %v702
      %v740 = vunpack.c.l.b16 %v703
      %v741 = vunpack.c.h.b16 %v703
      %v742 = vunpack.c.l.b16 %v704
      %v743 = vunpack.c.h.b16 %v704
      %v744 = vunpack.c.l.b16 %v705
      %v745 = vunpack.c.h.b16 %v705
      %v746 = vunpack.c.l.b16 %v706
      %v747 = vunpack.c.h.b16 %v706
      %v748 = vunpack.c.l.b16 %v707
      %v749 = vunpack.c.h.b16 %v707
      %v750 = vunpack.c.l.b16 %v708
      %v751 = vunpack.c.h.b16 %v708
      %v752 = vunpack.c.l.b16 %v709
      %v753 = vunpack.c.h.b16 %v709
      %v754 = vunpack.c.l.b16 %v710
      %v755 = vunpack.c.h.b16 %v710
      %v756 = vunpack.c.l.b16 %v711
      %v757 = vunpack.c.h.b16 %v711
      %v758 = vunpack.c.l.b16 %v712
      %v759 = vunpack.c.h.b16 %v712
      %v760 = vunpack.c.l.b16 %v713
      %v761 = vunpack.c.h.b16 %v713
      %v762 = vpack.c.b16 %v730, %v730
      %v763 = vpack.c.b16 %v731, %v731
      %v764 = vpack.c.b16 %v732, %v732
      %v765 = vpack.c.b16 %v733, %v733
      %v766 = vpack.c.b16 %v734, %v734
      %v767 = vpack.c.b16 %v735, %v735
      %v768 = vpack.c.b16 %v736, %v736
      %v769 = vpack.c.b16 %v737, %v737
      %v770 = vpack.c.b16 %v738, %v738
      %v771 = vpack.c.b16 %v739, %v739
      %v772 = vpack.c.b16 %v740, %v740
      %v773 = vpack.c.b16 %v741, %v741
      %v774 = vpack.c.b16 %v742, %v742
      %v775 = vpack.c.b16 %v743, %v743
      %v776 = vpack.c.b16 %v744, %v744
      %v777 = vpack.c.b16 %v745, %v745
      %v778 = vpack.c.b16 %v746, %v746
      %v779 = vpack.c.b16 %v747, %v747
      %v780 = vpack.c.b16 %v748, %v748
      %v781 = vpack.c.b16 %v749, %v749
      %v782 = vpack.c.b16 %v750, %v750
      %v783 = vpack.c.b16 %v751, %v751
      %v784 = vpack.c.b16 %v752, %v752
      %v785 = vpack.c.b16 %v753, %v753
      %v786 = vpack.c.b16 %v754, %v754
      %v787 = vpack.c.b16 %v755, %v755
      %v788 = vpack.c.b16 %v756, %v756
      %v789 = vpack.c.b16 %v757, %v757
      %v790 = vpack.c.b16 %v758, %v758
      %v791 = vpack.c.b16 %v759, %v759
      %v792 = vpack.c.b16 %v760, %v760
      %v793 = vpack.c.b16 %v761, %v761
      %vm826 = vcmask 519168
      %827 = vst.msk [vmem:[%s175] sm:$0xf] %vm826, %v762
      %828 = vst.msk [vmem:[%s175 + $0x4] sm:$0xf] %vm826, %v763
      %829 = vst.msk [vmem:[%s175 + $0x8] sm:$0xf] %vm826, %v764
      %830 = vst.msk [vmem:[%s175 + $0xc] sm:$0xf] %vm826, %v765
      %831 = vst.msk [vmem:[%s175 + $0x10] sm:$0xf] %vm826, %v766
      %832 = vst.msk [vmem:[%s175 + $0x14] sm:$0xf] %vm826, %v767
      %833 = vst.msk [vmem:[%s175 + $0x18] sm:$0xf] %vm826, %v768
      %834 = vst.msk [vmem:[%s175 + $0x1c] sm:$0xf] %vm826, %v769
      %835 = vst.msk [vmem:[%s175 + $0x20] sm:$0xf] %vm826, %v770
      %836 = vst.msk [vmem:[%s175 + $0x24] sm:$0xf] %vm826, %v771
      %837 = vst.msk [vmem:[%s175 + $0x28] sm:$0xf] %vm826, %v772
      %838 = vst.msk [vmem:[%s175 + $0x2c] sm:$0xf] %vm826, %v773
      %839 = vst.msk [vmem:[%s175 + $0x30] sm:$0xf] %vm826, %v774
      %840 = vst.msk [vmem:[%s175 + $0x34] sm:$0xf] %vm826, %v775
      %841 = vst.msk [vmem:[%s175 + $0x38] sm:$0xf] %vm826, %v776
      %842 = vst.msk [vmem:[%s175 + $0x3c] sm:$0xf] %vm826, %v777
      %843 = vst.msk [vmem:[%s175 + $0x40] sm:$0xf] %vm826, %v778
      %844 = vst.msk [vmem:[%s175 + $0x44] sm:$0xf] %vm826, %v779
      %845 = vst.msk [vmem:[%s175 + $0x48] sm:$0xf] %vm826, %v780
      %846 = vst.msk [vmem:[%s175 + $0x4c] sm:$0xf] %vm826, %v781
      %847 = vst.msk [vmem:[%s175 + $0x50] sm:$0xf] %vm826, %v782
      %848 = vst.msk [vmem:[%s175 + $0x54] sm:$0xf] %vm826, %v783
      %849 = vst.msk [vmem:[%s175 + $0x58] sm:$0xf] %vm826, %v784
      %850 = vst.msk [vmem:[%s175 + $0x5c] sm:$0xf] %vm826, %v785
      %851 = vst.msk [vmem:[%s175 + $0x60] sm:$0xf] %vm826, %v786
      %852 = vst.msk [vmem:[%s175 + $0x64] sm:$0xf] %vm826, %v787
      %853 = vst.msk [vmem:[%s175 + $0x68] sm:$0xf] %vm826, %v788
      %854 = vst.msk [vmem:[%s175 + $0x6c] sm:$0xf] %vm826, %v789
      %855 = vst.msk [vmem:[%s175 + $0x70] sm:$0xf] %vm826, %v790
      %856 = vst.msk [vmem:[%s175 + $0x74] sm:$0xf] %vm826, %v791
      %857 = vst.msk [vmem:[%s175 + $0x78] sm:$0xf] %vm826, %v792
      %858 = vst.msk [vmem:[%s175 + $0x7c] sm:$0xf] %vm826, %v793
      %s859 = smul.u32 32, %s14
      %p860 = scmp.lt.s32.totalorder %s859, 63
      %s861 = scalar_select %p860, %s859, 63
      %s862 = smul.addr %s861, 4
      %s863 = scalar_lea.vmem %s3, %s862
      // Predicated region
      $region33: #{forward.2} parent=31 // pred_check
        %p864 = pneg %p100
      $region34: #{forward.2} parent=31 // pred_check_branch
        %866 = sbr.rel (%p864) target = $region36
      $region35: #{forward.2} parent=31 // pred_region
        %s867 = smul.u32 32, %s14
      $region36: #{forward.2} parent=31 // pred_fallthru
        _
    $region32: #{forward.2} parent=5 // pred_fallthru
      _
    %p868 = scmp.le.s32.totalorder 2, %s9
    // Predicated region
    $region37: #{forward.2} parent=5 // pred_check
      %p869 = pneg %p868
    $region38: #{forward.2} parent=5 // pred_check_branch
      %871 = sbr.rel (%p869) target = $region40
    $region39: #{forward.2} parent=5 // pred_region
      %s872 = ssub.s32 %s9, 2
      // Predicated region
      $region41: #{forward.2} parent=39 // pred_check
        %p873 = pneg %p106
      $region42: #{forward.2} parent=39 // pred_check_branch
        %875 = sbr.rel (%p873) target = $region44
      $region43: #{forward.2} parent=39 // pred_region
        %s876 = smul.u32 32, %s15
        %p877 = scmp.lt.s32.totalorder %s876, 63
        %s878 = scalar_select %p877, %s876, 63
        %s879 = smul.addr %s878, 4
        %s880 = scalar_lea.vmem %s3, %s879
      $region44: #{forward.2} parent=39 // pred_fallthru
        _
    $region40: #{forward.2} parent=5 // pred_fallthru
      _
  $region6: #{forward.2} parent=0 // loop_footer
    %s13 = sadd.s32 1, %s9
  $region7: #{forward.2} parent=0 // loop_footer_branch
    %8 = sbr.rel target = $region3
  $region8: #{forward.2} parent=0 // loop_exit
    _

// kernel: forward.3
$region0: #{forward.3}
  #allocation0 [shape = 'u32[]', space=smem, size = 0x4, offset = 0x4, fixed_abs, tag = 'smem constant byte address 0x4 - core index']
  #allocation1 [shape = 'u32[144,128]{1,0:T(1,128)}', space=vmem, size = 0x12000, scoped, tag = 'internal scratch']
  #allocation2 [shape = 'bf16[10,24,64]{2,1,0:T(8,128)(2,1)}', space=vmem, size = 0xf000, scoped, tag = 'scratch operand']
  %s0 = inlined_call_operand.vmem [shape: bf16[2,8,8,64], index: 0, kind: input, shape index: {}]
  %s1 = inlined_call_operand.vmem [shape: bf16[4,9,64,64], index: 1, kind: input, shape index: {}]
  %s2 = inlined_call_operand.vmem [shape: f32[4,1,64], index: 2, kind: input, shape index: {}]
  %s3 = inlined_call_operand.vmem [shape: bf16[512,64], index: 3, kind: input, shape index: {}]
  %s4 = inlined_call_operand.vmem [shape: bf16[16,64], index: 4, kind: input, shape index: {}]
  %s5 = inlined_call_operand.vmem [shape: f32[16,512], index: 5, kind: input, shape index: {}]
  %s6 = inlined_call_operand.vmem [shape: f32[2,16,512], index: 6, kind: output, shape index: {}]
  %s7 = sld [smem:[#allocation0]]
  $region57: #{forward.3} parent=0
    _
  %s9 = ssub.s32 1, %s7
  %s10 = scalar_select 0, %s9, %s7
  loop: start=0, step=1, limit=4
  $region2: #{forward.3} parent=0 // loop_pre_header
    _
  $region3: #{forward.3} parent=0 // loop_header
    %s12 = sphi 0, %s16
    %p13 = scmp.ge.s32.totalorder %s12, 4
    %s22 = sphi 0, %s24
    %s25 = sphi 0, %s22
    %s26 = sphi 0, %s25
    %s42 = sphi 0, %s26
    %s46 = sphi 0, %s46
    %s48 = sphi 0, %s46
    %s49 = sphi 0, %s48
    %s63 = sphi 0, %s49
    %s67 = sphi 0, %s67
    %s69 = sphi 0, %s67
    %s70 = sphi 0, %s69
    %s84 = sphi 0, %s70
    %s88 = sphi 0, %s88
    %s90 = sphi 0, %s88
    %s91 = sphi 0, %s90
    %s105 = sphi 0, %s91
    %s109 = sphi 0, %s109
    %s111 = sphi 0, %s109
    %s112 = sphi 0, %s111
    %s126 = sphi 0, %s112
    %s130 = sphi 0, %s130
    %s132 = sphi 0, %s130
    %s133 = sphi 0, %s132
    %s147 = sphi 0, %s133
    %s153 = sphi 0, %s155
    %s156 = sphi 0, %s153
    %s157 = sphi 0, %s156
    %s173 = sphi 0, %s157
  $region4: #{forward.3} parent=0 // loop_header_branch
    %15 = sbr.rel (%p13) target = $region8
  $region5: #{forward.3} parent=0 // loop_body
    %s17 = ssub.s32 %s12, 1
    %s18 = ssub.s32 %s12, 2
    %s19 = sadd.s32 %s12, 1
    %s20 = ssub.s32 %s12, %s19
    %p21 = scmp.eq.s32.totalorder %s20, 0
    %s23 = sadd.s32 %s22, 1
    %s24 = scalar_select %p21, %s22, %s23
    %p27 = pneg %p21
    %p28 = scmp.eq.s32.totalorder %s12, 1
    %p29 = por %p27, %p28
    %p30 = scmp.ne.s32.totalorder %s22, %s25
    %p31 = scmp.eq.s32.totalorder %s12, 0
    %p32 = por %p30, %p31
    %p33 = scmp.ne.s32.totalorder %s22, %s25
    %p34 = scmp.eq.s32.totalorder %s17, 1
    %p35 = por %p33, %p34
    %p36 = scmp.ne.s32.totalorder %s25, %s26
    %p37 = scmp.eq.s32.totalorder %s17, 0
    %p38 = por %p36, %p37
    %p39 = scmp.ne.s32.totalorder %s25, %s26
    %p40 = scmp.eq.s32.totalorder %s18, 1
    %p41 = por %p39, %p40
    %p43 = scmp.ne.s32.totalorder %s26, %s42
    %p44 = scmp.eq.s32.totalorder %s18, 0
    %p45 = por %p43, %p44
    %s47 = sadd.s32 %s46, 1
    %p50 = scmp.eq.s32.totalorder %s12, 1
    %p51 = scmp.ne.s32.totalorder %s46, %s48
    %p52 = scmp.eq.s32.totalorder %s12, 0
    %p53 = por %p51, %p52
    %p54 = scmp.ne.s32.totalorder %s46, %s48
    %p55 = scmp.eq.s32.totalorder %s17, 1
    %p56 = por %p54, %p55
    %p57 = scmp.ne.s32.totalorder %s48, %s49
    %p58 = scmp.eq.s32.totalorder %s17, 0
    %p59 = por %p57, %p58
    %p60 = scmp.ne.s32.totalorder %s48, %s49
    %p61 = scmp.eq.s32.totalorder %s18, 1
    %p62 = por %p60, %p61
    %p64 = scmp.ne.s32.totalorder %s49, %s63
    %p65 = scmp.eq.s32.totalorder %s18, 0
    %p66 = por %p64, %p65
    %s68 = sadd.s32 %s67, 1
    %p71 = scmp.eq.s32.totalorder %s12, 1
    %p72 = scmp.ne.s32.totalorder %s67, %s69
    %p73 = scmp.eq.s32.totalorder %s12, 0
    %p74 = por %p72, %p73
    %p75 = scmp.ne.s32.totalorder %s67, %s69
    %p76 = scmp.eq.s32.totalorder %s17, 1
    %p77 = por %p75, %p76
    %p78 = scmp.ne.s32.totalorder %s69, %s70
    %p79 = scmp.eq.s32.totalorder %s17, 0
    %p80 = por %p78, %p79
    %p81 = scmp.ne.s32.totalorder %s69, %s70
    %p82 = scmp.eq.s32.totalorder %s18, 1
    %p83 = por %p81, %p82
    %p85 = scmp.ne.s32.totalorder %s70, %s84
    %p86 = scmp.eq.s32.totalorder %s18, 0
    %p87 = por %p85, %p86
    %s89 = sadd.s32 %s88, 1
    %p92 = scmp.eq.s32.totalorder %s12, 1
    %p93 = scmp.ne.s32.totalorder %s88, %s90
    %p94 = scmp.eq.s32.totalorder %s12, 0
    %p95 = por %p93, %p94
    %p96 = scmp.ne.s32.totalorder %s88, %s90
    %p97 = scmp.eq.s32.totalorder %s17, 1
    %p98 = por %p96, %p97
    %p99 = scmp.ne.s32.totalorder %s90, %s91
    %p100 = scmp.eq.s32.totalorder %s17, 0
    %p101 = por %p99, %p100
    %p102 = scmp.ne.s32.totalorder %s90, %s91
    %p103 = scmp.eq.s32.totalorder %s18, 1
    %p104 = por %p102, %p103
    %p106 = scmp.ne.s32.totalorder %s91, %s105
    %p107 = scmp.eq.s32.totalorder %s18, 0
    %p108 = por %p106, %p107
    %s110 = sadd.s32 %s109, 1
    %p113 = scmp.eq.s32.totalorder %s12, 1
    %p114 = scmp.ne.s32.totalorder %s109, %s111
    %p115 = scmp.eq.s32.totalorder %s12, 0
    %p116 = por %p114, %p115
    %p117 = scmp.ne.s32.totalorder %s109, %s111
    %p118 = scmp.eq.s32.totalorder %s17, 1
    %p119 = por %p117, %p118
    %p120 = scmp.ne.s32.totalorder %s111, %s112
    %p121 = scmp.eq.s32.totalorder %s17, 0
    %p122 = por %p120, %p121
    %p123 = scmp.ne.s32.totalorder %s111, %s112
    %p124 = scmp.eq.s32.totalorder %s18, 1
    %p125 = por %p123, %p124
    %p127 = scmp.ne.s32.totalorder %s112, %s126
    %p128 = scmp.eq.s32.totalorder %s18, 0
    %p129 = por %p127, %p128
    %s131 = sadd.s32 %s130, 1
    %p134 = scmp.eq.s32.totalorder %s12, 1
    %p135 = scmp.ne.s32.totalorder %s130, %s132
    %p136 = scmp.eq.s32.totalorder %s12, 0
    %p137 = por %p135, %p136
    %p138 = scmp.ne.s32.totalorder %s130, %s132
    %p139 = scmp.eq.s32.totalorder %s17, 1
    %p140 = por %p138, %p139
    %p141 = scmp.ne.s32.totalorder %s132, %s133
    %p142 = scmp.eq.s32.totalorder %s17, 0
    %p143 = por %p141, %p142
    %p144 = scmp.ne.s32.totalorder %s132, %s133
    %p145 = scmp.eq.s32.totalorder %s18, 1
    %p146 = por %p144, %p145
    %p148 = scmp.ne.s32.totalorder %s133, %s147
    %p149 = scmp.eq.s32.totalorder %s18, 0
    %p150 = por %p148, %p149
    %s151 = ssub.s32 %s12, %s19
    %p152 = scmp.eq.s32.totalorder %s151, 0
    %s154 = sadd.s32 %s153, 1
    %s155 = scalar_select %p152, %s153, %s154
    %p158 = pneg %p152
    %p159 = scmp.eq.s32.totalorder %s12, 1
    %p160 = por %p158, %p159
    %p161 = scmp.ne.s32.totalorder %s153, %s156
    %p162 = scmp.eq.s32.totalorder %s12, 0
    %p163 = por %p161, %p162
    %p164 = scmp.ne.s32.totalorder %s153, %s156
    %p165 = scmp.eq.s32.totalorder %s17, 1
    %p166 = por %p164, %p165
    %p167 = scmp.ne.s32.totalorder %s156, %s157
    %p168 = scmp.eq.s32.totalorder %s17, 0
    %p169 = por %p167, %p168
    %p170 = scmp.ne.s32.totalorder %s156, %s157
    %p171 = scmp.eq.s32.totalorder %s18, 1
    %p172 = por %p170, %p171
    %p174 = scmp.ne.s32.totalorder %s157, %s173
    %p175 = scmp.eq.s32.totalorder %s18, 0
    %p176 = por %p174, %p175
    %p177 = scmp.le.s32.totalorder 1, %s12
    %p178 = scmp.lt.s32.totalorder %s12, 3
    %p179 = pnand %p177, %p178
    %p180 = pneg %p179
    // Predicated region
    $region9: #{forward.3} parent=5 // pred_check
      _
    $region10: #{forward.3} parent=5 // pred_check_branch
      %182 = sbr.rel (%p179) target = $region12
    $region11: #{forward.3} parent=5 // pred_region
      %s183 = ssub.s32 %s12, 1
      // Predicated region
      $region13: #{forward.3} parent=11 // pred_check
        %p184 = pneg %p59
      $region14: #{forward.3} parent=11 // pred_check_branch
        %186 = sbr.rel (%p184) target = $region16
      $region15: #{forward.3} parent=11 // pred_region
        _
      $region16: #{forward.3} parent=11 // pred_fallthru
        _
      // Predicated region
      $region17: #{forward.3} parent=11 // pred_check
        %p187 = pneg %p80
      $region18: #{forward.3} parent=11 // pred_check_branch
        %189 = sbr.rel (%p187) target = $region20
      $region19: #{forward.3} parent=11 // pred_region
        _
      $region20: #{forward.3} parent=11 // pred_fallthru
        _
      // Predicated region
      $region21: #{forward.3} parent=11 // pred_check
        %p190 = pneg %p101
      $region22: #{forward.3} parent=11 // pred_check_branch
        %192 = sbr.rel (%p190) target = $region24
      $region23: #{forward.3} parent=11 // pred_region
        _
      $region24: #{forward.3} parent=11 // pred_fallthru
        _
      // Predicated region
      $region25: #{forward.3} parent=11 // pred_check
        %p193 = pneg %p122
      $region26: #{forward.3} parent=11 // pred_check_branch
        %195 = sbr.rel (%p193) target = $region28
      $region27: #{forward.3} parent=11 // pred_region
        _
      $region28: #{forward.3} parent=11 // pred_fallthru
        _
      // Predicated region
      $region29: #{forward.3} parent=11 // pred_check
        %p196 = pneg %p143
      $region30: #{forward.3} parent=11 // pred_check_branch
        %198 = sbr.rel (%p196) target = $region32
      $region31: #{forward.3} parent=11 // pred_region
        _
      $region32: #{forward.3} parent=11 // pred_fallthru
        _
    $region12: #{forward.3} parent=5 // pred_fallthru
      _
    %p199 = scmp.lt.s32.totalorder %s12, 2
    // Predicated region
    $region33: #{forward.3} parent=5 // pred_check
      %p200 = pneg %p199
    $region34: #{forward.3} parent=5 // pred_check_branch
      %202 = sbr.rel (%p200) target = $region36
    $region35: #{forward.3} parent=5 // pred_region
      // Predicated region
      $region37: #{forward.3} parent=35 // pred_check
        %p203 = pneg %p32
      $region38: #{forward.3} parent=35 // pred_check_branch
        %205 = sbr.rel (%p203) target = $region40
      $region39: #{forward.3} parent=35 // pred_region
        %p206 = scmp.lt.s32.totalorder %s12, 1
        %s207 = scalar_select %p206, %s12, 1
        %s208 = smul.addr %s207, 8
        %s209 = smul.addr %s208, 4
        %s210 = scalar_lea.vmem %s0, %s209
      $region40: #{forward.3} parent=35 // pred_fallthru
        _
    $region36: #{forward.3} parent=5 // pred_fallthru
      _
    %p211 = scmp.le.s32.totalorder 1, %s12
    %p212 = scmp.lt.s32.totalorder %s12, 3
    %p213 = pnand %p211, %p212
    %p214 = pneg %p213
    // Predicated region
    $region41: #{forward.3} parent=5 // pred_check
      _
    $region42: #{forward.3} parent=5 // pred_check_branch
      %216 = sbr.rel (%p213) target = $region44
    $region43: #{forward.3} parent=5 // pred_region
      %s217 = ssub.s32 %s12, 1
      %p218 = scmp.lt.s32.totalorder %s17, 1
      %s219 = scalar_select %p218, %s17, 1
      %s220 = smul.addr %s219, 8
      %s221 = smul.addr %s220, 4
      %s222 = scalar_lea.vmem %s0, %s221
      %p223 = pneg %p38
      %p224 = pneg %p35
      %p225 = pneg %p59
      %p226 = pneg %p56
      %p227 = pneg %p80
      %p228 = pneg %p77
      %p229 = pneg %p101
      %p230 = pneg %p98
      %p231 = pneg %p122
      %p232 = pneg %p119
      %p233 = pneg %p143
      %p234 = pneg %p140
      %p235 = pneg %p169
      %p236 = pneg %p166
      %p237 = scmp.lt.s32.totalorder %s17, 1
      %s238 = scalar_select %p237, %s17, 1
      %s239 = smul.addr %s238, 8
      %s240 = smul.addr %s239, 8
      %s241 = scalar_lea.vmem %s6, %s240
      %p242 = scmp.lt.s32.totalorder %s17, 1
      %s243 = scalar_select %p242, %s17, 1
      %s244 = smul.addr %s243, 8
      %s245 = smul.addr %s244, 4
      %s246 = scalar_lea.vmem %s0, %s245
      %p247 = scmp.lt.s32.totalorder %s17, 1
      %s248 = scalar_select %p247, %s17, 1
      %s249 = smul.addr %s248, 8
      %s250 = smul.addr %s249, 8
      %s251 = scalar_lea.vmem %s6, %s250
      %vm253 = vcmask 519168
      %254 = vst.msk [vmem:[#allocation2] sm:$0xf] %vm253, 0
      %255 = vst.msk [vmem:[#allocation2 + $0x4] sm:$0xf] %vm253, 0
      %256 = vst.msk [vmem:[#allocation2 + $0x8] sm:$0xf] %vm253, 0
      %257 = vst.msk [vmem:[#allocation2 + $0xc] sm:$0xf] %vm253, 0
      %258 = vst.msk [vmem:[#allocation2 + $0x10] sm:$0xf] %vm253, 0
      %259 = vst.msk [vmem:[#allocation2 + $0x14] sm:$0xf] %vm253, 0
      %260 = vst.msk [vmem:[#allocation2 + $0x18] sm:$0xf] %vm253, 0
      %261 = vst.msk [vmem:[#allocation2 + $0x1c] sm:$0xf] %vm253, 0
      %262 = vst.msk [vmem:[#allocation2 + $0x20] sm:$0xf] %vm253, 0
      %263 = vst.msk [vmem:[#allocation2 + $0x24] sm:$0xf] %vm253, 0
      %264 = vst.msk [vmem:[#allocation2 + $0x28] sm:$0xf] %vm253, 0
      %265 = vst.msk [vmem:[#allocation2 + $0x2c] sm:$0xf] %vm253, 0
      %266 = vst.msk [vmem:[#allocation2 + $0x30] sm:$0xf] %vm253, 0
      %267 = vst.msk [vmem:[#allocation2 + $0x34] sm:$0xf] %vm253, 0
      %268 = vst.msk [vmem:[#allocation2 + $0x38] sm:$0xf] %vm253, 0
      %269 = vst.msk [vmem:[#allocation2 + $0x3c] sm:$0xf] %vm253, 0
      %270 = vst.msk [vmem:[#allocation2 + $0x40] sm:$0xf] %vm253, 0
      %271 = vst.msk [vmem:[#allocation2 + $0x44] sm:$0xf] %vm253, 0
      %272 = vst.msk [vmem:[#allocation2 + $0x48] sm:$0xf] %vm253, 0
      %273 = vst.msk [vmem:[#allocation2 + $0x4c] sm:$0xf] %vm253, 0
      %274 = vst.msk [vmem:[#allocation2 + $0x50] sm:$0xf] %vm253, 0
      %275 = vst.msk [vmem:[#allocation2 + $0x54] sm:$0xf] %vm253, 0
      %276 = vst.msk [vmem:[#allocation2 + $0x58] sm:$0xf] %vm253, 0
      %277 = vst.msk [vmem:[#allocation2 + $0x5c] sm:$0xf] %vm253, 0
      %278 = vst.msk [vmem:[#allocation2 + $0x60] sm:$0xf] %vm253, 0
      %279 = vst.msk [vmem:[#allocation2 + $0x64] sm:$0xf] %vm253, 0
      %280 = vst.msk [vmem:[#allocation2 + $0x68] sm:$0xf] %vm253, 0
      %281 = vst.msk [vmem:[#allocation2 + $0x6c] sm:$0xf] %vm253, 0
      %282 = vst.msk [vmem:[#allocation2 + $0x70] sm:$0xf] %vm253, 0
      %283 = vst.msk [vmem:[#allocation2 + $0x74] sm:$0xf] %vm253, 0
      %v284 = vld [vmem:[%s246] sm:$0xf]
      %v285 = vld [vmem:[%s246 + $0x4] sm:$0xf]
      %v286 = vld [vmem:[%s246 + $0x8] sm:$0xf]
      %v287 = vld [vmem:[%s246 + $0xc] sm:$0xf]
      %v288 = vld [vmem:[%s246 + $0x10] sm:$0xf]
      %v289 = vld [vmem:[%s246 + $0x14] sm:$0xf]
      %v290 = vld [vmem:[%s246 + $0x18] sm:$0xf]
      %v291 = vld [vmem:[%s246 + $0x1c] sm:$0xf]
      %v292 = vunpack.c.l.bf16 %v284
      %v293 = vunpack.c.l.bf16 %v285
      %v294 = vunpack.c.l.bf16 %v286
      %v295 = vunpack.c.l.bf16 %v287
      %v296 = vunpack.c.l.bf16 %v288
      %v297 = vunpack.c.l.bf16 %v289
      %v298 = vunpack.c.l.bf16 %v290
      %v299 = vunpack.c.l.bf16 %v291
      %s300 = scalar_lea.vmem [#allocation2], 12
      %301 = vst.msk [vmem:[%s300 + $0x4] sm:$0xf] %vm253, %v284
      %302 = vst.msk [vmem:[%s300 + $0x10] sm:$0xf] %vm253, %v285
      %303 = vst.msk [vmem:[%s300 + $0x1c] sm:$0xf] %vm253, %v286
      %304 = vst.msk [vmem:[%s300 + $0x28] sm:$0xf] %vm253, %v287
      %305 = vst.msk [vmem:[%s300 + $0x34] sm:$0xf] %vm253, %v288
      %306 = vst.msk [vmem:[%s300 + $0x40] sm:$0xf] %vm253, %v289
      %307 = vst.msk [vmem:[%s300 + $0x4c] sm:$0xf] %vm253, %v290
      %308 = vst.msk [vmem:[%s300 + $0x58] sm:$0xf] %vm253, %v291
      %v309 = vld [vmem:[#allocation2] sm:$0x8]
      %v310 = vld [vmem:[#allocation2 + $0x4] sm:$0xf]
      %v311 = vld [vmem:[#allocation2 + $0xc] sm:$0x8]
      %v312 = vld [vmem:[#allocation2 + $0x10] sm:$0xf]
      %v313 = vld [vmem:[#allocation2 + $0x18] sm:$0x8]
      %v314 = vld [vmem:[#allocation2 + $0x1c] sm:$0xf]
      %v315 = vld [vmem:[#allocation2 + $0x24] sm:$0x8]
      %v316 = vld [vmem:[#allocation2 + $0x28] sm:$0xf]
      %v317 = vld [vmem:[#allocation2 + $0x30] sm:$0x8]
      %v318 = vld [vmem:[#allocation2 + $0x34] sm:$0xf]
      %v319 = vld [vmem:[#allocation2 + $0x3c] sm:$0x8]
      %v320 = vld [vmem:[#allocation2 + $0x40] sm:$0xf]
      %v321 = vld [vmem:[#allocation2 + $0x48] sm:$0x8]
      %v322 = vld [vmem:[#allocation2 + $0x4c] sm:$0xf]
      %v323 = vld [vmem:[#allocation2 + $0x54] sm:$0x8]
      %v324 = vld [vmem:[#allocation2 + $0x58] sm:$0xf]
      %vm325 = vsmask.f32 256
      %vm326 = vsmask.f32 4368
      %vm327 = vmor %vm325, %vm326
      %v329 = vshrl.u32 %v309, 16
      %v331 = vrot.slane %v329, 7
      %v332 = vrot.slane %v331, 4
      %v334 = vshrl.u32 %v310, 16
      %v336 = vrot.slane %v334, 7
      %v337 = vshll.u32 %v310, 16
      %v339 = vor.u32 %v336, %v337
      %v340 = vsel %vm327, %v332, %v339
      %v342 = vshrl.u32 %v311, 16
      %v344 = vrot.slane %v342, 7
      %v345 = vrot.slane %v344, 4
      %v347 = vshrl.u32 %v312, 16
      %v349 = vrot.slane %v347, 7
      %v350 = vshll.u32 %v312, 16
      %v352 = vor.u32 %v349, %v350
      %v353 = vsel %vm327, %v345, %v352
      %v355 = vshrl.u32 %v313, 16
      %v357 = vrot.slane %v355, 7
      %v358 = vrot.slane %v357, 4
      %v360 = vshrl.u32 %v314, 16
      %v362 = vrot.slane %v360, 7
      %v363 = vshll.u32 %v314, 16
      %v365 = vor.u32 %v362, %v363
      %v366 = vsel %vm327, %v358, %v365
      %v368 = vshrl.u32 %v315, 16
      %v370 = vrot.slane %v368, 7
      %v371 = vrot.slane %v370, 4
      %v373 = vshrl.u32 %v316, 16
      %v375 = vrot.slane %v373, 7
      %v376 = vshll.u32 %v316, 16
      %v378 = vor.u32 %v375, %v376
      %v379 = vsel %vm327, %v371, %v378
      %v381 = vshrl.u32 %v317, 16
      %v383 = vrot.slane %v381, 7
      %v384 = vrot.slane %v383, 4
      %v386 = vshrl.u32 %v318, 16
      %v388 = vrot.slane %v386, 7
      %v389 = vshll.u32 %v318, 16
      %v391 = vor.u32 %v388, %v389
      %v392 = vsel %vm327, %v384, %v391
      %v394 = vshrl.u32 %v319, 16
      %v396 = vrot.slane %v394, 7
      %v397 = vrot.slane %v396, 4
      %v399 = vshrl.u32 %v320, 16
      %v401 = vrot.slane %v399, 7
      %v402 = vshll.u32 %v320, 16
      %v404 = vor.u32 %v401, %v402
      %v405 = vsel %vm327, %v397, %v404
      %v407 = vshrl.u32 %v321, 16
      %v409 = vrot.slane %v407, 7
      %v410 = vrot.slane %v409, 4
      %v412 = vshrl.u32 %v322, 16
      %v414 = vrot.slane %v412, 7
      %v415 = vshll.u32 %v322, 16
      %v417 = vor.u32 %v414, %v415
      %v418 = vsel %vm327, %v410, %v417
      %v420 = vshrl.u32 %v323, 16
      %v422 = vrot.slane %v420, 7
      %v423 = vrot.slane %v422, 4
      %v425 = vshrl.u32 %v324, 16
      %v427 = vrot.slane %v425, 7
      %v428 = vshll.u32 %v324, 16
      %v430 = vor.u32 %v427, %v428
      %v431 = vsel %vm327, %v423, %v430
      %v432 = vld [vmem:[%s1] sm:$0xf]
      %v433 = vld [vmem:[%s1 + $0x4] sm:$0xf]
      %v434 = vld [vmem:[%s1 + $0x8] sm:$0xf]
      %v435 = vld [vmem:[%s1 + $0xc] sm:$0xf]
      %v436 = vld [vmem:[%s1 + $0x10] sm:$0xf]
      %v437 = vld [vmem:[%s1 + $0x14] sm:$0xf]
      %v438 = vld [vmem:[%s1 + $0x18] sm:$0xf]
      %v439 = vld [vmem:[%s1 + $0x1c] sm:$0xf]
      %s440 = scalar_lea.vmem %s1, 32
      %v441 = vld [vmem:[%s440] sm:$0xf]
      %v442 = vld [vmem:[%s440 + $0x4] sm:$0xf]
      %v443 = vld [vmem:[%s440 + $0x8] sm:$0xf]
      %v444 = vld [vmem:[%s440 + $0xc] sm:$0xf]
      %v445 = vld [vmem:[%s440 + $0x10] sm:$0xf]
      %v446 = vld [vmem:[%s440 + $0x14] sm:$0xf]
      %v447 = vld [vmem:[%s440 + $0x18] sm:$0xf]
      %v448 = vld [vmem:[%s440 + $0x1c] sm:$0xf]
      %v457 = vunpack.c.l.b16 %v310
      %v458 = vunpack.c.l.b16 %v312
      %v459 = vunpack.c.l.b16 %v314
      %v460 = vunpack.c.l.b16 %v316
      %v461 = vunpack.c.l.b16 %v318
      %v462 = vunpack.c.l.b16 %v320
      %v463 = vunpack.c.l.b16 %v322
      %v464 = vunpack.c.l.b16 %v324
      %v465 = vpack.c.b16 %v458, %v457
      %v466 = vpack.c.b16 %v460, %v459
      %v467 = vpack.c.b16 %v462, %v461
      %v468 = vpack.c.b16 %v464, %v463
      %v477 = vunpack.c.l.b16 %v441
      %v478 = vunpack.c.l.b16 %v442
      %v479 = vunpack.c.l.b16 %v443
      %v480 = vunpack.c.l.b16 %v444
      %v481 = vunpack.c.l.b16 %v445
      %v482 = vunpack.c.l.b16 %v446
      %v483 = vunpack.c.l.b16 %v447
      %v484 = vunpack.c.l.b16 %v448
      %v485 = vpack.c.b16 %v478, %v477
      %v486 = vpack.c.b16 %v480, %v479
      %v487 = vpack.c.b16 %v482, %v481
      %v488 = vpack.c.b16 %v484, %v483
      %vm493 = vcmask 523264
      %v495 = vsel %vm493, %v465, 0
      %v498 = vsel %vm493, %v466, 0
      %v501 = vsel %vm493, %v467, 0
      %v504 = vsel %vm493, %v468, 0
      %506 = vmatprep.subr.bf16.mxu0 0
      %507 = vmatpush1.bf16.msra.mxu0 %v485
      %508 = vmatprep.subr.bf16.mxu0 0
      %509 = vmatpush1.bf16.msra.mxu0 %v486
      %510 = vmatprep.subr.bf16.mxu0 0
      %511 = vmatpush1.bf16.msra.mxu0 %v487
      %512 = vmatprep.subr.bf16.mxu0 0
      %513 = vmatpush1.bf16.msra.mxu0 %v488
      %514 = vmatprep.subr.bf16.mxu0 0
      %515 = vmatpush1.bf16.msra.mxu0 0
      %516 = vmatprep.subr.bf16.mxu0 0
      %517 = vmatpush1.bf16.msra.mxu0 0
      %518 = vmatprep.subr.bf16.mxu0 0
      %519 = vmatpush1.bf16.msra.mxu0 0
      %520 = vmatprep.subr.bf16.mxu0 0
      %521 = vmatpush1.bf16.msra.mxu0 0
      %522 = vmatprep.subr.bf16.mxu0 0
      %523 = vmatpush1.bf16.msra.mxu0 0
      %524 = vmatprep.subr.bf16.mxu0 0
      %525 = vmatpush1.bf16.msra.mxu0 0
      %526 = vmatprep.subr.bf16.mxu0 0
      %527 = vmatpush1.bf16.msra.mxu0 0
      %528 = vmatprep.subr.bf16.mxu0 0
      %529 = vmatpush1.bf16.msra.mxu0 0
      %530 = vmatprep.subr.bf16.mxu0 0
      %531 = vmatpush1.bf16.msra.mxu0 0
      %532 = vmatprep.subr.bf16.mxu0 0
      %533 = vmatpush1.bf16.msra.mxu0 0
      %534 = vmatprep.subr.bf16.mxu0 0
      %535 = vmatpush1.bf16.msra.mxu0 0
      %536 = vmatprep.subr.bf16.mxu0 0
      %537 = vmatpush1.bf16.msra.mxu0 0
      %538 = vmatprep.mubr.bf16.mxu0 0
      %539 = vmatmul.mubr.bf16.gmra.mrb[0].mxu0 %v495
      %v540 = vpop.f32.mrb[0].mxu0
      %v541 = vadd.f32 0.0, %v540
      %v542 = vpop.f32.mrb[0].mxu0
      %v543 = vpop.f32.mrb[0].mxu0
      %v544 = vadd.f32 0.0, %v543
      %v545 = vpop.f32.mrb[0].mxu0
      %546 = vmatprep.mubr.bf16.mxu0 0
      %547 = vmatmul.mubr.bf16.gmra.mrb[0].mxu0 %v498
      %v548 = vpop.f32.mrb[0].mxu0
      %v549 = vadd.f32 0.0, %v548
      %v550 = vpop.f32.mrb[0].mxu0
      %v551 = vpop.f32.mrb[0].mxu0
      %v552 = vadd.f32 0.0, %v551
      %v553 = vpop.f32.mrb[0].mxu0
      %554 = vmatprep.mubr.bf16.mxu0 0
      %555 = vmatmul.mubr.bf16.gmra.mrb[0].mxu0 %v501
      %v556 = vpop.f32.mrb[0].mxu0
      %v557 = vadd.f32 0.0, %v556
      %v558 = vpop.f32.mrb[0].mxu0
      %v559 = vpop.f32.mrb[0].mxu0
      %v560 = vadd.f32 0.0, %v559
      %v561 = vpop.f32.mrb[0].mxu0
      %562 = vmatprep.mubr.bf16.mxu0 0
      %563 = vmatmul.mubr.bf16.gmra.mrb[0].mxu0 %v504
      %v564 = vpop.f32.mrb[0].mxu0
      %v565 = vadd.f32 0.0, %v564
      %v566 = vpop.f32.mrb[0].mxu0
      %v567 = vpop.f32.mrb[0].mxu0
      %v568 = vadd.f32 0.0, %v567
      %v569 = vpop.f32.mrb[0].mxu0
      %570 = vdwg.mxu0
      %v571 = vunpack.c.l.b16 %v340
      %v572 = vunpack.c.l.b16 %v353
      %v573 = vunpack.c.l.b16 %v366
      %v574 = vunpack.c.l.b16 %v379
      %v575 = vunpack.c.l.b16 %v392
      %v576 = vunpack.c.l.b16 %v405
      %v577 = vunpack.c.l.b16 %v418
      %v578 = vunpack.c.l.b16 %v431
      %v579 = vpack.c.b16 %v572, %v571
      %v580 = vpack.c.b16 %v574, %v573
      %v581 = vpack.c.b16 %v576, %v575
      %v582 = vpack.c.b16 %v578, %v577
      %v591 = vunpack.c.l.b16 %v432
      %v592 = vunpack.c.l.b16 %v433
      %v593 = vunpack.c.l.b16 %v434
      %v594 = vunpack.c.l.b16 %v435
      %v595 = vunpack.c.l.b16 %v436
      %v596 = vunpack.c.l.b16 %v437
      %v597 = vunpack.c.l.b16 %v438
      %v598 = vunpack.c.l.b16 %v439
      %v599 = vpack.c.b16 %v592, %v591
      %v600 = vpack.c.b16 %v594, %v593
      %v601 = vpack.c.b16 %v596, %v595
      %v602 = vpack.c.b16 %v598, %v597
      %v608 = vsel %vm493, %v579, 0
      %v611 = vsel %vm493, %v580, 0
      %v614 = vsel %vm493, %v581, 0
      %v617 = vsel %vm493, %v582, 0
      %619 = vmatprep.subr.bf16.mxu0 0
      %620 = vmatpush1.bf16.msra.mxu0 %v599
      %621 = vmatprep.subr.bf16.mxu0 0
      %622 = vmatpush1.bf16.msra.mxu0 %v600
      %623 = vmatprep.subr.bf16.mxu0 0
      %624 = vmatpush1.bf16.msra.mxu0 %v601
      %625 = vmatprep.subr.bf16.mxu0 0
      %626 = vmatpush1.bf16.msra.mxu0 %v602
      %627 = vmatprep.subr.bf16.mxu0 0
      %628 = vmatpush1.bf16.msra.mxu0 0
      %629 = vmatprep.subr.bf16.mxu0 0
      %630 = vmatpush1.bf16.msra.mxu0 0
      %631 = vmatprep.subr.bf16.mxu0 0
      %632 = vmatpush1.bf16.msra.mxu0 0
      %633 = vmatprep.subr.bf16.mxu0 0
      %634 = vmatpush1.bf16.msra.mxu0 0
      %635 = vmatprep.subr.bf16.mxu0 0
      %636 = vmatpush1.bf16.msra.mxu0 0
      %637 = vmatprep.subr.bf16.mxu0 0
      %638 = vmatpush1.bf16.msra.mxu0 0
      %639 = vmatprep.subr.bf16.mxu0 0
      %640 = vmatpush1.bf16.msra.mxu0 0
      %641 = vmatprep.subr.bf16.mxu0 0
      %642 = vmatpush1.bf16.msra.mxu0 0
      %643 = vmatprep.subr.bf16.mxu0 0
      %644 = vmatpush1.bf16.msra.mxu0 0
      %645 = vmatprep.subr.bf16.mxu0 0
      %646 = vmatpush1.bf16.msra.mxu0 0
      %647 = vmatprep.subr.bf16.mxu0 0
      %648 = vmatpush1.bf16.msra.mxu0 0
      %649 = vmatprep.subr.bf16.mxu0 0
      %650 = vmatpush1.bf16.msra.mxu0 0
      %651 = vmatprep.mubr.bf16.mxu0 0
      %652 = vmatmul.mubr.bf16.gmra.mrb[0].mxu0 %v608
      %v653 = vpop.f32.mrb[0].mxu0
      %v654 = vadd.f32 %v541, %v653
      %v655 = vpop.f32.mrb[0].mxu0
      %v656 = vpop.f32.mrb[0].mxu0
      %v657 = vadd.f32 %v544, %v656
      %v658 = vpop.f32.mrb[0].mxu0
      %659 = vmatprep.mubr.bf16.mxu0 0
      %660 = vmatmul.mubr.bf16.gmra.mrb[0].mxu0 %v611
      %v661 = vpop.f32.mrb[0].mxu0
      %v662 = vadd.f32 %v549, %v661
      %v663 = vpop.f32.mrb[0].mxu0
      %v664 = vpop.f32.mrb[0].mxu0
      %v665 = vadd.f32 %v552, %v664
      %v666 = vpop.f32.mrb[0].mxu0
      %667 = vmatprep.mubr.bf16.mxu0 0
      %668 = vmatmul.mubr.bf16.gmra.mrb[0].mxu0 %v614
      %v669 = vpop.f32.mrb[0].mxu0
      %v670 = vadd.f32 %v557, %v669
      %v671 = vpop.f32.mrb[0].mxu0
      %v672 = vpop.f32.mrb[0].mxu0
      %v673 = vadd.f32 %v560, %v672
      %v674 = vpop.f32.mrb[0].mxu0
      %675 = vmatprep.mubr.bf16.mxu0 0
      %676 = vmatmul.mubr.bf16.gmra.mrb[0].mxu0 %v617
      %v677 = vpop.f32.mrb[0].mxu0
      %v678 = vadd.f32 %v565, %v677
      %v679 = vpop.f32.mrb[0].mxu0
      %v680 = vpop.f32.mrb[0].mxu0
      %v681 = vadd.f32 %v568, %v680
      %v682 = vpop.f32.mrb[0].mxu0
      %683 = vdwg.mxu0
      %v684 = vld [vmem:[#allocation2 + $0x4] sm:$0xf]
      %v685 = vld [vmem:[#allocation2 + $0x8] sm:$0x1]
      %v686 = vld [vmem:[#allocation2 + $0x10] sm:$0xf]
      %v687 = vld [vmem:[#allocation2 + $0x14] sm:$0x1]
      %v688 = vld [vmem:[#allocation2 + $0x1c] sm:$0xf]
      %v689 = vld [vmem:[#allocation2 + $0x20] sm:$0x1]
      %v690 = vld [vmem:[#allocation2 + $0x28] sm:$0xf]
      %v691 = vld [vmem:[#allocation2 + $0x2c] sm:$0x1]
      %v692 = vld [vmem:[#allocation2 + $0x34] sm:$0xf]
      %v693 = vld [vmem:[#allocation2 + $0x38] sm:$0x1]
      %v694 = vld [vmem:[#allocation2 + $0x40] sm:$0xf]
      %v695 = vld [vmem:[#allocation2 + $0x44] sm:$0x1]
      %v696 = vld [vmem:[#allocation2 + $0x4c] sm:$0xf]
      %v697 = vld [vmem:[#allocation2 + $0x50] sm:$0x1]
      %v698 = vld [vmem:[#allocation2 + $0x58] sm:$0xf]
      %v699 = vld [vmem:[#allocation2 + $0x5c] sm:$0x1]
      %vm700 = vsmask.f32 3328
      %vm701 = vsmask.f32 7440
      %vm702 = vmor %vm700, %vm701
      %v704 = vshrl.u32 %v684, 16
      %v706 = vrot.slane %v704, 4
      %v707 = vshll.u32 %v684, 16
      %v709 = vrot.slane %v707, 5
      %v710 = vor.u32 %v706, %v709
      %v711 = vrot.slane %v710, 4
      %v713 = vshll.u32 %v685, 16
      %v715 = vrot.slane %v713, 5
      %v716 = vsel %vm702, %v711, %v715
      %v718 = vshrl.u32 %v686, 16
      %v720 = vrot.slane %v718, 4
      %v721 = vshll.u32 %v686, 16
      %v723 = vrot.slane %v721, 5
      %v724 = vor.u32 %v720, %v723
      %v725 = vrot.slane %v724, 4
      %v727 = vshll.u32 %v687, 16
      %v729 = vrot.slane %v727, 5
      %v730 = vsel %vm702, %v725, %v729
      %v732 = vshrl.u32 %v688, 16
      %v734 = vrot.slane %v732, 4
      %v735 = vshll.u32 %v688, 16
      %v737 = vrot.slane %v735, 5
      %v738 = vor.u32 %v734, %v737
      %v739 = vrot.slane %v738, 4
      %v741 = vshll.u32 %v689, 16
      %v743 = vrot.slane %v741, 5
      %v744 = vsel %vm702, %v739, %v743
      %v746 = vshrl.u32 %v690, 16
      %v748 = vrot.slane %v746, 4
      %v749 = vshll.u32 %v690, 16
      %v751 = vrot.slane %v749, 5
      %v752 = vor.u32 %v748, %v751
      %v753 = vrot.slane %v752, 4
      %v755 = vshll.u32 %v691, 16
      %v757 = vrot.slane %v755, 5
      %v758 = vsel %vm702, %v753, %v757
      %v760 = vshrl.u32 %v692, 16
      %v762 = vrot.slane %v760, 4
      %v763 = vshll.u32 %v692, 16
      %v765 = vrot.slane %v763, 5
      %v766 = vor.u32 %v762, %v765
      %v767 = vrot.slane %v766, 4
      %v769 = vshll.u32 %v693, 16
      %v771 = vrot.slane %v769, 5
      %v772 = vsel %vm702, %v767, %v771
      %v774 = vshrl.u32 %v694, 16
      %v776 = vrot.slane %v774, 4
      %v777 = vshll.u32 %v694, 16
      %v779 = vrot.slane %v777, 5
      %v780 = vor.u32 %v776, %v779
      %v781 = vrot.slane %v780, 4
      %v783 = vshll.u32 %v695, 16
      %v785 = vrot.slane %v783, 5
      %v786 = vsel %vm702, %v781, %v785
      %v788 = vshrl.u32 %v696, 16
      %v790 = vrot.slane %v788, 4
      %v791 = vshll.u32 %v696, 16
      %v793 = vrot.slane %v791, 5
      %v794 = vor.u32 %v790, %v793
      %v795 = vrot.slane %v794, 4
      %v797 = vshll.u32 %v697, 16
      %v799 = vrot.slane %v797, 5
      %v800 = vsel %vm702, %v795, %v799
      %v802 = vshrl.u32 %v698, 16
      %v804 = vrot.slane %v802, 4
      %v805 = vshll.u32 %v698, 16
      %v807 = vrot.slane %v805, 5
      %v808 = vor.u32 %v804, %v807
      %v809 = vrot.slane %v808, 4
      %v811 = vshll.u32 %v699, 16
      %v813 = vrot.slane %v811, 5
      %v814 = vsel %vm702, %v809, %v813
      %s815 = scalar_lea.vmem %s1, 64
      %v816 = vld [vmem:[%s815] sm:$0xf]
      %v817 = vld [vmem:[%s815 + $0x4] sm:$0xf]
      %v818 = vld [vmem:[%s815 + $0x8] sm:$0xf]
      %v819 = vld [vmem:[%s815 + $0xc] sm:$0xf]
      %v820 = vld [vmem:[%s815 + $0x10] sm:$0xf]
      %v821 = vld [vmem:[%s815 + $0x14] sm:$0xf]
      %v822 = vld [vmem:[%s815 + $0x18] sm:$0xf]
      %v823 = vld [vmem:[%s815 + $0x1c] sm:$0xf]
      %v824 = vunpack.c.l.b16 %v716
      %v825 = vunpack.c.l.b16 %v730
      %v826 = vunpack.c.l.b16 %v744
      %v827 = vunpack.c.l.b16 %v758
      %v828 = vunpack.c.l.b16 %v772
      %v829 = vunpack.c.l.b16 %v786
      %v830 = vunpack.c.l.b16 %v800
      %v831 = vunpack.c.l.b16 %v814
      %v832 = vpack.c.b16 %v825, %v824
      %v833 = vpack.c.b16 %v827, %v826
      %v834 = vpack.c.b16 %v829, %v828
      %v835 = vpack.c.b16 %v831, %v830
      %v844 = vunpack.c.l.b16 %v816
      %v845 = vunpack.c.l.b16 %v817
      %v846 = vunpack.c.l.b16 %v818
      %v847 = vunpack.c.l.b16 %v819
      %v848 = vunpack.c.l.b16 %v820
      %v849 = vunpack.c.l.b16 %v821
      %v850 = vunpack.c.l.b16 %v822
      %v851 = vunpack.c.l.b16 %v823
      %v852 = vpack.c.b16 %v845, %v844
      %v853 = vpack.c.b16 %v847, %v846
      %v854 = vpack.c.b16 %v849, %v848
      %v855 = vpack.c.b16 %v851, %v850
      %v861 = vsel %vm493, %v832, 0
      %v864 = vsel %vm493, %v833, 0
      %v867 = vsel %vm493, %v834, 0
      %v870 = vsel %vm493, %v835, 0
      %872 = vmatprep.subr.bf16.mxu0 0
      %873 = vmatpush1.bf16.msra.mxu0 %v852
      %874 = vmatprep.subr.bf16.mxu0 0
      %875 = vmatpush1.bf16.msra.mxu0 %v853
      %876 = vmatprep.subr.bf16.mxu0 0
      %877 = vmatpush1.bf16.msra.mxu0 %v854
      %878 = vmatprep.subr.bf16.mxu0 0
      %879 = vmatpush1.bf16.msra.mxu0 %v855
      %880 = vmatprep.subr.bf16.mxu0 0
      %881 = vmatpush1.bf16.msra.mxu0 0
      %882 = vmatprep.subr.bf16.mxu0 0
      %883 = vmatpush1.bf16.msra.mxu0 0
      %884 = vmatprep.subr.bf16.mxu0 0
      %885 = vmatpush1.bf16.msra.mxu0 0
      %886 = vmatprep.subr.bf16.mxu0 0
      %887 = vmatpush1.bf16.msra.mxu0 0
      %888 = vmatprep.subr.bf16.mxu0 0
      %889 = vmatpush1.bf16.msra.mxu0 0
      %890 = vmatprep.subr.bf16.mxu0 0
      %891 = vmatpush1.bf16.msra.mxu0 0
      %892 = vmatprep.subr.bf16.mxu0 0
      %893 = vmatpush1.bf16.msra.mxu0 0
      %894 = vmatprep.subr.bf16.mxu0 0
      %895 = vmatpush1.bf16.msra.mxu0 0
      %896 = vmatprep.subr.bf16.mxu0 0
      %897 = vmatpush1.bf16.msra.mxu0 0
      %898 = vmatprep.subr.bf16.mxu0 0
      %899 = vmatpush1.bf16.msra.mxu0 0
      %900 = vmatprep.subr.bf16.mxu0 0
      %901 = vmatpush1.bf16.msra.mxu0 0
      %902 = vmatprep.subr.bf16.mxu0 0
      %903 = vmatpush1.bf16.msra.mxu0 0
      %904 = vmatprep.mubr.bf16.mxu0 0
      %905 = vmatmul.mubr.bf16.gmra.mrb[0].mxu0 %v861
      %v906 = vpop.f32.mrb[0].mxu0
      %v907 = vadd.f32 0.0, %v906
      %v908 = vpop.f32.mrb[0].mxu0
      %v909 = vpop.f32.mrb[0].mxu0
      %v910 = vadd.f32 0.0, %v909
      %v911 = vpop.f32.mrb[0].mxu0
      %912 = vmatprep.mubr.bf16.mxu0 0
      %913 = vmatmul.mubr.bf16.gmra.mrb[0].mxu0 %v864
      %v914 = vpop.f32.mrb[0].mxu0
      %v915 = vadd.f32 0.0, %v914
      %v916 = vpop.f32.mrb[0].mxu0
      %v917 = vpop.f32.mrb[0].mxu0
      %v918 = vadd.f32 0.0, %v917
      %v919 = vpop.f32.mrb[0].mxu0
      %920 = vmatprep.mubr.bf16.mxu0 0
      %921 = vmatmul.mubr.bf16.gmra.mrb[0].mxu0 %v867
      %v922 = vpop.f32.mrb[0].mxu0
      %v923 = vadd.f32 0.0, %v922
      %v924 = vpop.f32.mrb[0].mxu0
      %v925 = vpop.f32.mrb[0].mxu0
      %v926 = vadd.f32 0.0, %v925
      %v927 = vpop.f32.mrb[0].mxu0
      %928 = vmatprep.mubr.bf16.mxu0 0
      %929 = vmatmul.mubr.bf16.gmra.mrb[0].mxu0 %v870
      %v930 = vpop.f32.mrb[0].mxu0
      %v931 = vadd.f32 0.0, %v930
      %v932 = vpop.f32.mrb[0].mxu0
      %v933 = vpop.f32.mrb[0].mxu0
      %v934 = vadd.f32 0.0, %v933
      %v935 = vpop.f32.mrb[0].mxu0
      %936 = vdwg.mxu0
      %v937 = vadd.f32 %v654, %v907
      %v938 = vadd.f32 %v657, %v910
      %v939 = vadd.f32 %v662, %v915
      %v940 = vadd.f32 %v665, %v918
      %v941 = vadd.f32 %v670, %v923
      %v942 = vadd.f32 %v673, %v926
      %v943 = vadd.f32 %v678, %v931
      %v944 = vadd.f32 %v681, %v934
      %v945 = vld [vmem:[%s300] sm:$0x8]
      %v946 = vld [vmem:[%s300 + $0x4] sm:$0xf]
      %v947 = vld [vmem:[%s300 + $0xc] sm:$0x8]
      %v948 = vld [vmem:[%s300 + $0x10] sm:$0xf]
      %v949 = vld [vmem:[%s300 + $0x18] sm:$0x8]
      %v950 = vld [vmem:[%s300 + $0x1c] sm:$0xf]
      %v951 = vld [vmem:[%s300 + $0x24] sm:$0x8]
      %v952 = vld [vmem:[%s300 + $0x28] sm:$0xf]
      %v953 = vld [vmem:[%s300 + $0x30] sm:$0x8]
      %v954 = vld [vmem:[%s300 + $0x34] sm:$0xf]
      %v955 = vld [vmem:[%s300 + $0x3c] sm:$0x8]
      %v956 = vld [vmem:[%s300 + $0x40] sm:$0xf]
      %v957 = vld [vmem:[%s300 + $0x48] sm:$0x8]
      %v958 = vld [vmem:[%s300 + $0x4c] sm:$0xf]
      %v959 = vld [vmem:[%s300 + $0x54] sm:$0x8]
      %v960 = vld [vmem:[%s300 + $0x58] sm:$0xf]
      %v962 = vshrl.u32 %v945, 16
      %v964 = vrot.slane %v962, 7
      %v965 = vrot.slane %v964, 4
      %v967 = vshrl.u32 %v946, 16
      %v969 = vrot.slane %v967, 7
      %v970 = vshll.u32 %v946, 16
      %v972 = vor.u32 %v969, %v970
      %v973 = vsel %vm327, %v965, %v972
      %v975 = vshrl.u32 %v947, 16
      %v977 = vrot.slane %v975, 7
      %v978 = vrot.slane %v977, 4
      %v980 = vshrl.u32 %v948, 16
      %v982 = vrot.slane %v980, 7
      %v983 = vshll.u32 %v948, 16
      %v985 = vor.u32 %v982, %v983
      %v986 = vsel %vm327, %v978, %v985
      %v988 = vshrl.u32 %v949, 16
      %v990 = vrot.slane %v988, 7
      %v991 = vrot.slane %v990, 4
      %v993 = vshrl.u32 %v950, 16
      %v995 = vrot.slane %v993, 7
      %v996 = vshll.u32 %v950, 16
      %v998 = vor.u32 %v995, %v996
      %v999 = vsel %vm327, %v991, %v998
      %v1001 = vshrl.u32 %v951, 16
      %v1003 = vrot.slane %v1001, 7
      %v1004 = vrot.slane %v1003, 4
      %v1006 = vshrl.u32 %v952, 16
      %v1008 = vrot.slane %v1006, 7
      %v1009 = vshll.u32 %v952, 16
      %v1011 = vor.u32 %v1008, %v1009
      %v1012 = vsel %vm327, %v1004, %v1011
      %v1014 = vshrl.u32 %v953, 16
      %v1016 = vrot.slane %v1014, 7
      %v1017 = vrot.slane %v1016, 4
      %v1019 = vshrl.u32 %v954, 16
      %v1021 = vrot.slane %v1019, 7
      %v1022 = vshll.u32 %v954, 16
      %v1024 = vor.u32 %v1021, %v1022
      %v1025 = vsel %vm327, %v1017, %v1024
      %v1027 = vshrl.u32 %v955, 16
      %v1029 = vrot.slane %v1027, 7
      %v1030 = vrot.slane %v1029, 4
      %v1032 = vshrl.u32 %v956, 16
      %v1034 = vrot.slane %v1032, 7
      %v1035 = vshll.u32 %v956, 16
      %v1037 = vor.u32 %v1034, %v1035
      %v1038 = vsel %vm327, %v1030, %v1037
      %v1040 = vshrl.u32 %v957, 16
      %v1042 = vrot.slane %v1040, 7
      %v1043 = vrot.slane %v1042, 4
      %v1045 = vshrl.u32 %v958, 16
      %v1047 = vrot.slane %v1045, 7
      %v1048 = vshll.u32 %v958, 16
      %v1050 = vor.u32 %v1047, %v1048
      %v1051 = vsel %vm327, %v1043, %v1050
      %v1053 = vshrl.u32 %v959, 16
      %v1055 = vrot.slane %v1053, 7
      %v1056 = vrot.slane %v1055, 4
      %v1058 = vshrl.u32 %v960, 16
      %v1060 = vrot.slane %v1058, 7
      %v1061 = vshll.u32 %v960, 16
      %v1063 = vor.u32 %v1060, %v1061
      %v1064 = vsel %vm327, %v1056, %v1063
      %s1065 = scalar_lea.vmem %s1, 96
      %v1066 = vld [vmem:[%s1065] sm:$0xf]
      %v1067 = vld [vmem:[%s1065 + $0x4] sm:$0xf]
      %v1068 = vld [vmem:[%s1065 + $0x8] sm:$0xf]
      %v1069 = vld [vmem:[%s1065 + $0xc] sm:$0xf]
      %v1070 = vld [vmem:[%s1065 + $0x10] sm:$0xf]
      %v1071 = vld [vmem:[%s1065 + $0x14] sm:$0xf]
      %v1072 = vld [vmem:[%s1065 + $0x18] sm:$0xf]
      %v1073 = vld [vmem:[%s1065 + $0x1c] sm:$0xf]
      %v1074 = vunpack.c.l.b16 %v973
      %v1075 = vunpack.c.l.b16 %v986
      %v1076 = vunpack.c.l.b16 %v999
      %v1077 = vunpack.c.l.b16 %v1012
      %v1078 = vunpack.c.l.b16 %v1025
      %v1079 = vunpack.c.l.b16 %v1038
      %v1080 = vunpack.c.l.b16 %v1051
      %v1081 = vunpack.c.l.b16 %v1064
      %v1082 = vpack.c.b16 %v1075, %v1074
      %v1083 = vpack.c.b16 %v1077, %v1076
      %v1084 = vpack.c.b16 %v1079, %v1078
      %v1085 = vpack.c.b16 %v1081, %v1080
      %v1094 = vunpack.c.l.b16 %v1066
      %v1095 = vunpack.c.l.b16 %v1067
      %v1096 = vunpack.c.l.b16 %v1068
      %v1097 = vunpack.c.l.b16 %v1069
      %v1098 = vunpack.c.l.b16 %v1070
      %v1099 = vunpack.c.l.b16 %v1071
      %v1100 = vunpack.c.l.b16 %v1072
      %v1101 = vunpack.c.l.b16 %v1073
      %v1102 = vpack.c.b16 %v1095, %v1094
      %v1103 = vpack.c.b16 %v1097, %v1096
      %v1104 = vpack.c.b16 %v1099, %v1098
      %v1105 = vpack.c.b16 %v1101, %v1100
      %v1111 = vsel %vm493, %v1082, 0
      %v1114 = vsel %vm493, %v1083, 0
      %v1117 = vsel %vm493, %v1084, 0
      %v1120 = vsel %vm493, %v1085, 0
      %1122 = vmatprep.subr.bf16.mxu0 0
      %1123 = vmatpush1.bf16.msra.mxu0 %v1102
      %1124 = vmatprep.subr.bf16.mxu0 0
      %1125 = vmatpush1.bf16.msra.mxu0 %v1103
      %1126 = vmatprep.subr.bf16.mxu0 0
      %1127 = vmatpush1.bf16.msra.mxu0 %v1104
      %1128 = vmatprep.subr.bf16.mxu0 0
      %1129 = vmatpush1.bf16.msra.mxu0 %v1105
      %1130 = vmatprep.subr.bf16.mxu0 0
      %1131 = vmatpush1.bf16.msra.mxu0 0
      %1132 = vmatprep.subr.bf16.mxu0 0
      %1133 = vmatpush1.bf16.msra.mxu0 0
      %1134 = vmatprep.subr.bf16.mxu0 0
      %1135 = vmatpush1.bf16.msra.mxu0 0
      %1136 = vmatprep.subr.bf16.mxu0 0
      %1137 = vmatpush1.bf16.msra.mxu0 0
      %1138 = vmatprep.subr.bf16.mxu0 0
      %1139 = vmatpush1.bf16.msra.mxu0 0
      %1140 = vmatprep.subr.bf16.mxu0 0
      %1141 = vmatpush1.bf16.msra.mxu0 0
      %1142 = vmatprep.subr.bf16.mxu0 0
      %1143 = vmatpush1.bf16.msra.mxu0 0
      %1144 = vmatprep.subr.bf16.mxu0 0
      %1145 = vmatpush1.bf16.msra.mxu0 0
      %1146 = vmatprep.subr.bf16.mxu0 0
      %1147 = vmatpush1.bf16.msra.mxu0 0
      %1148 = vmatprep.subr.bf16.mxu0 0
      %1149 = vmatpush1.bf16.msra.mxu0 0
      %1150 = vmatprep.subr.bf16.mxu0 0
      %1151 = vmatpush1.bf16.msra.mxu0 0
      %1152 = vmatprep.subr.bf16.mxu0 0
      %1153 = vmatpush1.bf16.msra.mxu0 0
      %1154 = vmatprep.mubr.bf16.mxu0 0
      %1155 = vmatmul.mubr.bf16.gmra.mrb[0].mxu0 %v1111
      %v1156 = vpop.f32.mrb[0].mxu0
      %v1157 = vadd.f32 0.0, %v1156
      %v1158 = vpop.f32.mrb[0].mxu0
      %v1159 = vpop.f32.mrb[0].mxu0
      %v1160 = vadd.f32 0.0, %v1159
      %v1161 = vpop.f32.mrb[0].mxu0
      %1162 = vmatprep.mubr.bf16.mxu0 0
      %1163 = vmatmul.mubr.bf16.gmra.mrb[0].mxu0 %v1114
      %v1164 = vpop.f32.mrb[0].mxu0
      %v1165 = vadd.f32 0.0, %v1164
      %v1166 = vpop.f32.mrb[0].mxu0
      %v1167 = vpop.f32.mrb[0].mxu0
      %v1168 = vadd.f32 0.0, %v1167
      %v1169 = vpop.f32.mrb[0].mxu0
      %1170 = vmatprep.mubr.bf16.mxu0 0
      %1171 = vmatmul.mubr.bf16.gmra.mrb[0].mxu0 %v1117
      %v1172 = vpop.f32.mrb[0].mxu0
      %v1173 = vadd.f32 0.0, %v1172
      %v1174 = vpop.f32.mrb[0].mxu0
      %v1175 = vpop.f32.mrb[0].mxu0
      %v1176 = vadd.f32 0.0, %v1175
      %v1177 = vpop.f32.mrb[0].mxu0
      %1178 = vmatprep.mubr.bf16.mxu0 0
      %1179 = vmatmul.mubr.bf16.gmra.mrb[0].mxu0 %v1120
      %v1180 = vpop.f32.mrb[0].mxu0
      %v1181 = vadd.f32 0.0, %v1180
      %v1182 = vpop.f32.mrb[0].mxu0
      %v1183 = vpop.f32.mrb[0].mxu0
      %v1184 = vadd.f32 0.0, %v1183
      %v1185 = vpop.f32.mrb[0].mxu0
      %1186 = vdwg.mxu0
      %v1187 = vadd.f32 %v937, %v1157
      %v1188 = vadd.f32 %v938, %v1160
      %v1189 = vadd.f32 %v939, %v1165
      %v1190 = vadd.f32 %v940, %v1168
      %v1191 = vadd.f32 %v941, %v1173
      %v1192 = vadd.f32 %v942, %v1176
      %v1193 = vadd.f32 %v943, %v1181
      %v1194 = vadd.f32 %v944, %v1184
      %s1195 = scalar_lea.vmem %s1, 128
      %v1196 = vld [vmem:[%s1195] sm:$0xf]
      %v1197 = vld [vmem:[%s1195 + $0x4] sm:$0xf]
      %v1198 = vld [vmem:[%s1195 + $0x8] sm:$0xf]
      %v1199 = vld [vmem:[%s1195 + $0xc] sm:$0xf]
      %v1200 = vld [vmem:[%s1195 + $0x10] sm:$0xf]
      %v1201 = vld [vmem:[%s1195 + $0x14] sm:$0xf]
      %v1202 = vld [vmem:[%s1195 + $0x18] sm:$0xf]
      %v1203 = vld [vmem:[%s1195 + $0x1c] sm:$0xf]
      %v1212 = vunpack.c.l.b16 %v946
      %v1213 = vunpack.c.l.b16 %v948
      %v1214 = vunpack.c.l.b16 %v950
      %v1215 = vunpack.c.l.b16 %v952
      %v1216 = vunpack.c.l.b16 %v954
      %v1217 = vunpack.c.l.b16 %v956
      %v1218 = vunpack.c.l.b16 %v958
      %v1219 = vunpack.c.l.b16 %v960
      %v1220 = vpack.c.b16 %v1213, %v1212
      %v1221 = vpack.c.b16 %v1215, %v1214
      %v1222 = vpack.c.b16 %v1217, %v1216
      %v1223 = vpack.c.b16 %v1219, %v1218
      %v1232 = vunpack.c.l.b16 %v1196
      %v1233 = vunpack.c.l.b16 %v1197
      %v1234 = vunpack.c.l.b16 %v1198
      %v1235 = vunpack.c.l.b16 %v1199
      %v1236 = vunpack.c.l.b16 %v1200
      %v1237 = vunpack.c.l.b16 %v1201
      %v1238 = vunpack.c.l.b16 %v1202
      %v1239 = vunpack.c.l.b16 %v1203
      %v1240 = vpack.c.b16 %v1233, %v1232
      %v1241 = vpack.c.b16 %v1235, %v1234
      %v1242 = vpack.c.b16 %v1237, %v1236
      %v1243 = vpack.c.b16 %v1239, %v1238
      %v1249 = vsel %vm493, %v1220, 0
      %v1252 = vsel %vm493, %v1221, 0
      %v1255 = vsel %vm493, %v1222, 0
      %v1258 = vsel %vm493, %v1223, 0
      %1260 = vmatprep.subr.bf16.mxu0 0
      %1261 = vmatpush1.bf16.msra.mxu0 %v1240
      %1262 = vmatprep.subr.bf16.mxu0 0
      %1263 = vmatpush1.bf16.msra.mxu0 %v1241
      %1264 = vmatprep.subr.bf16.mxu0 0
      %1265 = vmatpush1.bf16.msra.mxu0 %v1242
      %1266 = vmatprep.subr.bf16.mxu0 0
      %1267 = vmatpush1.bf16.msra.mxu0 %v1243
      %1268 = vmatprep.subr.bf16.mxu0 0
      %1269 = vmatpush1.bf16.msra.mxu0 0
      %1270 = vmatprep.subr.bf16.mxu0 0
      %1271 = vmatpush1.bf16.msra.mxu0 0
      %1272 = vmatprep.subr.bf16.mxu0 0
      %1273 = vmatpush1.bf16.msra.mxu0 0
      %1274 = vmatprep.subr.bf16.mxu0 0
      %1275 = vmatpush1.bf16.msra.mxu0 0
      %1276 = vmatprep.subr.bf16.mxu0 0
      %1277 = vmatpush1.bf16.msra.mxu0 0
      %1278 = vmatprep.subr.bf16.mxu0 0
      %1279 = vmatpush1.bf16.msra.mxu0 0
      %1280 = vmatprep.subr.bf16.mxu0 0
      %1281 = vmatpush1.bf16.msra.mxu0 0
      %1282 = vmatprep.subr.bf16.mxu0 0
      %1283 = vmatpush1.bf16.msra.mxu0 0
      %1284 = vmatprep.subr.bf16.mxu0 0
      %1285 = vmatpush1.bf16.msra.mxu0 0
      %1286 = vmatprep.subr.bf16.mxu0 0
      %1287 = vmatpush1.bf16.msra.mxu0 0
      %1288 = vmatprep.subr.bf16.mxu0 0
      %1289 = vmatpush1.bf16.msra.mxu0 0
      %1290 = vmatprep.subr.bf16.mxu0 0
      %1291 = vmatpush1.bf16.msra.mxu0 0
      %1292 = vmatprep.mubr.bf16.mxu0 0
      %1293 = vmatmul.mubr.bf16.gmra.mrb[0].mxu0 %v1249
      %v1294 = vpop.f32.mrb[0].mxu0
      %v1295 = vadd.f32 0.0, %v1294
      %v1296 = vpop.f32.mrb[0].mxu0
      %v1297 = vpop.f32.mrb[0].mxu0
      %v1298 = vadd.f32 0.0, %v1297
      %v1299 = vpop.f32.mrb[0].mxu0
      %1300 = vmatprep.mubr.bf16.mxu0 0
      %1301 = vmatmul.mubr.bf16.gmra.mrb[0].mxu0 %v1252
      %v1302 = vpop.f32.mrb[0].mxu0
      %v1303 = vadd.f32 0.0, %v1302
      %v1304 = vpop.f32.mrb[0].mxu0
      %v1305 = vpop.f32.mrb[0].mxu0
      %v1306 = vadd.f32 0.0, %v1305
      %v1307 = vpop.f32.mrb[0].mxu0
      %1308 = vmatprep.mubr.bf16.mxu0 0
      %1309 = vmatmul.mubr.bf16.gmra.mrb[0].mxu0 %v1255
      %v1310 = vpop.f32.mrb[0].mxu0
      %v1311 = vadd.f32 0.0, %v1310
      %v1312 = vpop.f32.mrb[0].mxu0
      %v1313 = vpop.f32.mrb[0].mxu0
      %v1314 = vadd.f32 0.0, %v1313
      %v1315 = vpop.f32.mrb[0].mxu0
      %1316 = vmatprep.mubr.bf16.mxu0 0
      %1317 = vmatmul.mubr.bf16.gmra.mrb[0].mxu0 %v1258
      %v1318 = vpop.f32.mrb[0].mxu0
      %v1319 = vadd.f32 0.0, %v1318
      %v1320 = vpop.f32.mrb[0].mxu0
      %v1321 = vpop.f32.mrb[0].mxu0
      %v1322 = vadd.f32 0.0, %v1321
      %v1323 = vpop.f32.mrb[0].mxu0
      %1324 = vdwg.mxu0
      %v1325 = vadd.f32 %v1187, %v1295
      %v1326 = vadd.f32 %v1188, %v1298
      %v1327 = vadd.f32 %v1189, %v1303
      %v1328 = vadd.f32 %v1190, %v1306
      %v1329 = vadd.f32 %v1191, %v1311
      %v1330 = vadd.f32 %v1192, %v1314
      %v1331 = vadd.f32 %v1193, %v1319
      %v1332 = vadd.f32 %v1194, %v1322
      %v1333 = vld [vmem:[%s300 + $0x4] sm:$0xf]
      %v1334 = vld [vmem:[%s300 + $0x8] sm:$0x1]
      %v1335 = vld [vmem:[%s300 + $0x10] sm:$0xf]
      %v1336 = vld [vmem:[%s300 + $0x14] sm:$0x1]
      %v1337 = vld [vmem:[%s300 + $0x1c] sm:$0xf]
      %v1338 = vld [vmem:[%s300 + $0x20] sm:$0x1]
      %v1339 = vld [vmem:[%s300 + $0x28] sm:$0xf]
      %v1340 = vld [vmem:[%s300 + $0x2c] sm:$0x1]
      %v1341 = vld [vmem:[%s300 + $0x34] sm:$0xf]
      %v1342 = vld [vmem:[%s300 + $0x38] sm:$0x1]
      %v1343 = vld [vmem:[%s300 + $0x40] sm:$0xf]
      %v1344 = vld [vmem:[%s300 + $0x44] sm:$0x1]
      %v1345 = vld [vmem:[%s300 + $0x4c] sm:$0xf]
      %v1346 = vld [vmem:[%s300 + $0x50] sm:$0x1]
      %v1347 = vld [vmem:[%s300 + $0x58] sm:$0xf]
      %v1348 = vld [vmem:[%s300 + $0x5c] sm:$0x1]
      %v1350 = vshrl.u32 %v1333, 16
      %v1352 = vrot.slane %v1350, 4
      %v1353 = vshll.u32 %v1333, 16
      %v1355 = vrot.slane %v1353, 5
      %v1356 = vor.u32 %v1352, %v1355
      %v1357 = vrot.slane %v1356, 4
      %v1359 = vshll.u32 %v1334, 16
      %v1361 = vrot.slane %v1359, 5
      %v1362 = vsel %vm702, %v1357, %v1361
      %v1364 = vshrl.u32 %v1335, 16
      %v1366 = vrot.slane %v1364, 4
      %v1367 = vshll.u32 %v1335, 16
      %v1369 = vrot.slane %v1367, 5
      %v1370 = vor.u32 %v1366, %v1369
      %v1371 = vrot.slane %v1370, 4
      %v1373 = vshll.u32 %v1336, 16
      %v1375 = vrot.slane %v1373, 5
      %v1376 = vsel %vm702, %v1371, %v1375
      %v1378 = vshrl.u32 %v1337, 16
      %v1380 = vrot.slane %v1378, 4
      %v1381 = vshll.u32 %v1337, 16
      %v1383 = vrot.slane %v1381, 5
      %v1384 = vor.u32 %v1380, %v1383
      %v1385 = vrot.slane %v1384, 4
      %v1387 = vshll.u32 %v1338, 16
      %v1389 = vrot.slane %v1387, 5
      %v1390 = vsel %vm702, %v1385, %v1389
      %v1392 = vshrl.u32 %v1339, 16
      %v1394 = vrot.slane %v1392, 4
      %v1395 = vshll.u32 %v1339, 16
      %v1397 = vrot.slane %v1395, 5
      %v1398 = vor.u32 %v1394, %v1397
      %v1399 = vrot.slane %v1398, 4
      %v1401 = vshll.u32 %v1340, 16
      %v1403 = vrot.slane %v1401, 5
      %v1404 = vsel %vm702, %v1399, %v1403
      %v1406 = vshrl.u32 %v1341, 16
      %v1408 = vrot.slane %v1406, 4
      %v1409 = vshll.u32 %v1341, 16
      %v1411 = vrot.slane %v1409, 5
      %v1412 = vor.u32 %v1408, %v1411
      %v1413 = vrot.slane %v1412, 4
      %v1415 = vshll.u32 %v1342, 16
      %v1417 = vrot.slane %v1415, 5
      %v1418 = vsel %vm702, %v1413, %v1417
      %v1420 = vshrl.u32 %v1343, 16
      %v1422 = vrot.slane %v1420, 4
      %v1423 = vshll.u32 %v1343, 16
      %v1425 = vrot.slane %v1423, 5
      %v1426 = vor.u32 %v1422, %v1425
      %v1427 = vrot.slane %v1426, 4
      %v1429 = vshll.u32 %v1344, 16
      %v1431 = vrot.slane %v1429, 5
      %v1432 = vsel %vm702, %v1427, %v1431
      %v1434 = vshrl.u32 %v1345, 16
      %v1436 = vrot.slane %v1434, 4
      %v1437 = vshll.u32 %v1345, 16
      %v1439 = vrot.slane %v1437, 5
      %v1440 = vor.u32 %v1436, %v1439
      %v1441 = vrot.slane %v1440, 4
      %v1443 = vshll.u32 %v1346, 16
      %v1445 = vrot.slane %v1443, 5
      %v1446 = vsel %vm702, %v1441, %v1445
      %v1448 = vshrl.u32 %v1347, 16
      %v1450 = vrot.slane %v1448, 4
      %v1451 = vshll.u32 %v1347, 16
      %v1453 = vrot.slane %v1451, 5
      %v1454 = vor.u32 %v1450, %v1453
      %v1455 = vrot.slane %v1454, 4
      %v1457 = vshll.u32 %v1348, 16
      %v1459 = vrot.slane %v1457, 5
      %v1460 = vsel %vm702, %v1455, %v1459
      %s1461 = scalar_lea.vmem %s1, 160
      %v1462 = vld [vmem:[%s1461] sm:$0xf]
      %v1463 = vld [vmem:[%s1461 + $0x4] sm:$0xf]
      %v1464 = vld [vmem:[%s1461 + $0x8] sm:$0xf]
      %v1465 = vld [vmem:[%s1461 + $0xc] sm:$0xf]
      %v1466 = vld [vmem:[%s1461 + $0x10] sm:$0xf]
      %v1467 = vld [vmem:[%s1461 + $0x14] sm:$0xf]
      %v1468 = vld [vmem:[%s1461 + $0x18] sm:$0xf]
      %v1469 = vld [vmem:[%s1461 + $0x1c] sm:$0xf]
      %v1470 = vunpack.c.l.b16 %v1362
      %v1471 = vunpack.c.l.b16 %v1376
      %v1472 = vunpack.c.l.b16 %v1390
      %v1473 = vunpack.c.l.b16 %v1404
      %v1474 = vunpack.c.l.b16 %v1418
      %v1475 = vunpack.c.l.b16 %v1432
      %v1476 = vunpack.c.l.b16 %v1446
      %v1477 = vunpack.c.l.b16 %v1460
      %v1478 = vpack.c.b16 %v1471, %v1470
      %v1479 = vpack.c.b16 %v1473, %v1472
      %v1480 = vpack.c.b16 %v1475, %v1474
      %v1481 = vpack.c.b16 %v1477, %v1476
      %v1490 = vunpack.c.l.b16 %v1462
      %v1491 = vunpack.c.l.b16 %v1463
      %v1492 = vunpack.c.l.b16 %v1464
      %v1493 = vunpack.c.l.b16 %v1465
      %v1494 = vunpack.c.l.b16 %v1466
      %v1495 = vunpack.c.l.b16 %v1467
      %v1496 = vunpack.c.l.b16 %v1468
      %v1497 = vunpack.c.l.b16 %v1469
      %v1498 = vpack.c.b16 %v1491, %v1490
      %v1499 = vpack.c.b16 %v1493, %v1492
      %v1500 = vpack.c.b16 %v1495, %v1494
      %v1501 = vpack.c.b16 %v1497, %v1496
      %v1507 = vsel %vm493, %v1478, 0
      %v1510 = vsel %vm493, %v1479, 0
      %v1513 = vsel %vm493, %v1480, 0
      %v1516 = vsel %vm493, %v1481, 0
      %1518 = vmatprep.subr.bf16.mxu0 0
      %1519 = vmatpush1.bf16.msra.mxu0 %v1498
      %1520 = vmatprep.subr.bf16.mxu0 0
      %1521 = vmatpush1.bf16.msra.mxu0 %v1499
      %1522 = vmatprep.subr.bf16.mxu0 0
      %1523 = vmatpush1.bf16.msra.mxu0 %v1500
      %1524 = vmatprep.subr.bf16.mxu0 0
      %1525 = vmatpush1.bf16.msra.mxu0 %v1501
      %1526 = vmatprep.subr.bf16.mxu0 0
      %1527 = vmatpush1.bf16.msra.mxu0 0
      %1528 = vmatprep.subr.bf16.mxu0 0
      %1529 = vmatpush1.bf16.msra.mxu0 0
      %1530 = vmatprep.subr.bf16.mxu0 0
      %1531 = vmatpush1.bf16.msra.mxu0 0
      %1532 = vmatprep.subr.bf16.mxu0 0
      %1533 = vmatpush1.bf16.msra.mxu0 0
      %1534 = vmatprep.subr.bf16.mxu0 0
      %1535 = vmatpush1.bf16.msra.mxu0 0
      %1536 = vmatprep.subr.bf16.mxu0 0
      %1537 = vmatpush1.bf16.msra.mxu0 0
      %1538 = vmatprep.subr.bf16.mxu0 0
      %1539 = vmatpush1.bf16.msra.mxu0 0
      %1540 = vmatprep.subr.bf16.mxu0 0
      %1541 = vmatpush1.bf16.msra.mxu0 0
      %1542 = vmatprep.subr.bf16.mxu0 0
      %1543 = vmatpush1.bf16.msra.mxu0 0
      %1544 = vmatprep.subr.bf16.mxu0 0
      %1545 = vmatpush1.bf16.msra.mxu0 0
      %1546 = vmatprep.subr.bf16.mxu0 0
      %1547 = vmatpush1.bf16.msra.mxu0 0
      %1548 = vmatprep.subr.bf16.mxu0 0
      %1549 = vmatpush1.bf16.msra.mxu0 0
      %1550 = vmatprep.mubr.bf16.mxu0 0
      %1551 = vmatmul.mubr.bf16.gmra.mrb[0].mxu0 %v1507
      %v1552 = vpop.f32.mrb[0].mxu0
      %v1553 = vadd.f32 0.0, %v1552
      %v1554 = vpop.f32.mrb[0].mxu0
      %v1555 = vpop.f32.mrb[0].mxu0
      %v1556 = vadd.f32 0.0, %v1555
      %v1557 = vpop.f32.mrb[0].mxu0
      %1558 = vmatprep.mubr.bf16.mxu0 0
      %1559 = vmatmul.mubr.bf16.gmra.mrb[0].mxu0 %v1510
      %v1560 = vpop.f32.mrb[0].mxu0
      %v1561 = vadd.f32 0.0, %v1560
      %v1562 = vpop.f32.mrb[0].mxu0
      %v1563 = vpop.f32.mrb[0].mxu0
      %v1564 = vadd.f32 0.0, %v1563
      %v1565 = vpop.f32.mrb[0].mxu0
      %1566 = vmatprep.mubr.bf16.mxu0 0
      %1567 = vmatmul.mubr.bf16.gmra.mrb[0].mxu0 %v1513
      %v1568 = vpop.f32.mrb[0].mxu0
      %v1569 = vadd.f32 0.0, %v1568
      %v1570 = vpop.f32.mrb[0].mxu0
      %v1571 = vpop.f32.mrb[0].mxu0
      %v1572 = vadd.f32 0.0, %v1571
      %v1573 = vpop.f32.mrb[0].mxu0
      %1574 = vmatprep.mubr.bf16.mxu0 0
      %1575 = vmatmul.mubr.bf16.gmra.mrb[0].mxu0 %v1516
      %v1576 = vpop.f32.mrb[0].mxu0
      %v1577 = vadd.f32 0.0, %v1576
      %v1578 = vpop.f32.mrb[0].mxu0
      %v1579 = vpop.f32.mrb[0].mxu0
      %v1580 = vadd.f32 0.0, %v1579
      %v1581 = vpop.f32.mrb[0].mxu0
      %1582 = vdwg.mxu0
      %v1583 = vadd.f32 %v1325, %v1553
      %v1584 = vadd.f32 %v1326, %v1556
      %v1585 = vadd.f32 %v1327, %v1561
      %v1586 = vadd.f32 %v1328, %v1564
      %v1587 = vadd.f32 %v1329, %v1569
      %v1588 = vadd.f32 %v1330, %v1572
      %v1589 = vadd.f32 %v1331, %v1577
      %v1590 = vadd.f32 %v1332, %v1580
      %s1591 = scalar_lea.vmem [#allocation2], 24
      %v1592 = vld [vmem:[%s1591] sm:$0x8]
      %v1593 = vld [vmem:[%s1591 + $0x4] sm:$0xf]
      %v1594 = vld [vmem:[%s1591 + $0xc] sm:$0x8]
      %v1595 = vld [vmem:[%s1591 + $0x10] sm:$0xf]
      %v1596 = vld [vmem:[%s1591 + $0x18] sm:$0x8]
      %v1597 = vld [vmem:[%s1591 + $0x1c] sm:$0xf]
      %v1598 = vld [vmem:[%s1591 + $0x24] sm:$0x8]
      %v1599 = vld [vmem:[%s1591 + $0x28] sm:$0xf]
      %v1600 = vld [vmem:[%s1591 + $0x30] sm:$0x8]
      %v1601 = vld [vmem:[%s1591 + $0x34] sm:$0xf]
      %v1602 = vld [vmem:[%s1591 + $0x3c] sm:$0x8]
      %v1603 = vld [vmem:[%s1591 + $0x40] sm:$0xf]
      %v1604 = vld [vmem:[%s1591 + $0x48] sm:$0x8]
      %v1605 = vld [vmem:[%s1591 + $0x4c] sm:$0xf]
      %v1606 = vld [vmem:[%s1591 + $0x54] sm:$0x8]
      %v1607 = vld [vmem:[%s1591 + $0x58] sm:$0xf]
      %v1609 = vshrl.u32 %v1592, 16
      %v1611 = vrot.slane %v1609, 7
      %v1612 = vrot.slane %v1611, 4
      %v1614 = vshrl.u32 %v1593, 16
      %v1616 = vrot.slane %v1614, 7
      %v1617 = vshll.u32 %v1593, 16
      %v1619 = vor.u32 %v1616, %v1617
      %v1620 = vsel %vm327, %v1612, %v1619
      %v1622 = vshrl.u32 %v1594, 16
      %v1624 = vrot.slane %v1622, 7
      %v1625 = vrot.slane %v1624, 4
      %v1627 = vshrl.u32 %v1595, 16
      %v1629 = vrot.slane %v1627, 7
      %v1630 = vshll.u32 %v1595, 16
      %v1632 = vor.u32 %v1629, %v1630
      %v1633 = vsel %vm327, %v1625, %v1632
      %v1635 = vshrl.u32 %v1596, 16
      %v1637 = vrot.slane %v1635, 7
      %v1638 = vrot.slane %v1637, 4
      %v1640 = vshrl.u32 %v1597, 16
      %v1642 = vrot.slane %v1640, 7
      %v1643 = vshll.u32 %v1597, 16
      %v1645 = vor.u32 %v1642, %v1643
      %v1646 = vsel %vm327, %v1638, %v1645
      %v1648 = vshrl.u32 %v1598, 16
      %v1650 = vrot.slane %v1648, 7
      %v1651 = vrot.slane %v1650, 4
      %v1653 = vshrl.u32 %v1599, 16
      %v1655 = vrot.slane %v1653, 7
      %v1656 = vshll.u32 %v1599, 16
      %v1658 = vor.u32 %v1655, %v1656
      %v1659 = vsel %vm327, %v1651, %v1658
      %v1661 = vshrl.u32 %v1600, 16
      %v1663 = vrot.slane %v1661, 7
      %v1664 = vrot.slane %v1663, 4
      %v1666 = vshrl.u32 %v1601, 16
      %v1668 = vrot.slane %v1666, 7
      %v1669 = vshll.u32 %v1601, 16
      %v1671 = vor.u32 %v1668, %v1669
      %v1672 = vsel %vm327, %v1664, %v1671
      %v1674 = vshrl.u32 %v1602, 16
      %v1676 = vrot.slane %v1674, 7
      %v1677 = vrot.slane %v1676, 4
      %v1679 = vshrl.u32 %v1603, 16
      %v1681 = vrot.slane %v1679, 7
      %v1682 = vshll.u32 %v1603, 16
      %v1684 = vor.u32 %v1681, %v1682
      %v1685 = vsel %vm327, %v1677, %v1684
      %v1687 = vshrl.u32 %v1604, 16
      %v1689 = vrot.slane %v1687, 7
      %v1690 = vrot.slane %v1689, 4
      %v1692 = vshrl.u32 %v1605, 16
      %v1694 = vrot.slane %v1692, 7
      %v1695 = vshll.u32 %v1605, 16
      %v1697 = vor.u32 %v1694, %v1695
      %v1698 = vsel %vm327, %v1690, %v1697
      %v1700 = vshrl.u32 %v1606, 16
      %v1702 = vrot.slane %v1700, 7
      %v1703 = vrot.slane %v1702, 4
      %v1705 = vshrl.u32 %v1607, 16
      %v1707 = vrot.slane %v1705, 7
      %v1708 = vshll.u32 %v1607, 16
      %v1710 = vor.u32 %v1707, %v1708
      %v1711 = vsel %vm327, %v1703, %v1710
      %s1712 = scalar_lea.vmem %s1, 192
      %v1713 = vld [vmem:[%s1712] sm:$0xf]
      %v1714 = vld [vmem:[%s1712 + $0x4] sm:$0xf]
      %v1715 = vld [vmem:[%s1712 + $0x8] sm:$0xf]
      %v1716 = vld [vmem:[%s1712 + $0xc] sm:$0xf]
      %v1717 = vld [vmem:[%s1712 + $0x10] sm:$0xf]
      %v1718 = vld [vmem:[%s1712 + $0x14] sm:$0xf]
      %v1719 = vld [vmem:[%s1712 + $0x18] sm:$0xf]
      %v1720 = vld [vmem:[%s1712 + $0x1c] sm:$0xf]
      %v1721 = vunpack.c.l.b16 %v1620
      %v1722 = vunpack.c.l.b16 %v1633
      %v1723 = vunpack.c.l.b16 %v1646
      %v1724 = vunpack.c.l.b16 %v1659
      %v1725 = vunpack.c.l.b16 %v1672
      %v1726 = vunpack.c.l.b16 %v1685
      %v1727 = vunpack.c.l.b16 %v1698
      %v1728 = vunpack.c.l.b16 %v1711
      %v1729 = vpack.c.b16 %v1722, %v1721
      %v1730 = vpack.c.b16 %v1724, %v1723
      %v1731 = vpack.c.b16 %v1726, %v1725
      %v1732 = vpack.c.b16 %v1728, %v1727
      %v1741 = vunpack.c.l.b16 %v1713
      %v1742 = vunpack.c.l.b16 %v1714
      %v1743 = vunpack.c.l.b16 %v1715
      %v1744 = vunpack.c.l.b16 %v1716
      %v1745 = vunpack.c.l.b16 %v1717
      %v1746 = vunpack.c.l.b16 %v1718
      %v1747 = vunpack.c.l.b16 %v1719
      %v1748 = vunpack.c.l.b16 %v1720
      %v1749 = vpack.c.b16 %v1742, %v1741
      %v1750 = vpack.c.b16 %v1744, %v1743
      %v1751 = vpack.c.b16 %v1746, %v1745
      %v1752 = vpack.c.b16 %v1748, %v1747
      %v1758 = vsel %vm493, %v1729, 0
      %v1761 = vsel %vm493, %v1730, 0
      %v1764 = vsel %vm493, %v1731, 0
      %v1767 = vsel %vm493, %v1732, 0
      %1769 = vmatprep.subr.bf16.mxu0 0
      %1770 = vmatpush1.bf16.msra.mxu0 %v1749
      %1771 = vmatprep.subr.bf16.mxu0 0
      %1772 = vmatpush1.bf16.msra.mxu0 %v1750
      %1773 = vmatprep.subr.bf16.mxu0 0
      %1774 = vmatpush1.bf16.msra.mxu0 %v1751
      %1775 = vmatprep.subr.bf16.mxu0 0
      %1776 = vmatpush1.bf16.msra.mxu0 %v1752
      %1777 = vmatprep.subr.bf16.mxu0 0
      %1778 = vmatpush1.bf16.msra.mxu0 0
      %1779 = vmatprep.subr.bf16.mxu0 0
      %1780 = vmatpush1.bf16.msra.mxu0 0
      %1781 = vmatprep.subr.bf16.mxu0 0
      %1782 = vmatpush1.bf16.msra.mxu0 0
      %1783 = vmatprep.subr.bf16.mxu0 0
      %1784 = vmatpush1.bf16.msra.mxu0 0
      %1785 = vmatprep.subr.bf16.mxu0 0
      %1786 = vmatpush1.bf16.msra.mxu0 0
      %1787 = vmatprep.subr.bf16.mxu0 0
      %1788 = vmatpush1.bf16.msra.mxu0 0
      %1789 = vmatprep.subr.bf16.mxu0 0
      %1790 = vmatpush1.bf16.msra.mxu0 0
      %1791 = vmatprep.subr.bf16.mxu0 0
      %1792 = vmatpush1.bf16.msra.mxu0 0
      %1793 = vmatprep.subr.bf16.mxu0 0
      %1794 = vmatpush1.bf16.msra.mxu0 0
      %1795 = vmatprep.subr.bf16.mxu0 0
      %1796 = vmatpush1.bf16.msra.mxu0 0
      %1797 = vmatprep.subr.bf16.mxu0 0
      %1798 = vmatpush1.bf16.msra.mxu0 0
      %1799 = vmatprep.subr.bf16.mxu0 0
      %1800 = vmatpush1.bf16.msra.mxu0 0
      %1801 = vmatprep.mubr.bf16.mxu0 0
      %1802 = vmatmul.mubr.bf16.gmra.mrb[0].mxu0 %v1758
      %v1803 = vpop.f32.mrb[0].mxu0
      %v1804 = vadd.f32 0.0, %v1803
      %v1805 = vpop.f32.mrb[0].mxu0
      %v1806 = vpop.f32.mrb[0].mxu0
      %v1807 = vadd.f32 0.0, %v1806
      %v1808 = vpop.f32.mrb[0].mxu0
      %1809 = vmatprep.mubr.bf16.mxu0 0
      %1810 = vmatmul.mubr.bf16.gmra.mrb[0].mxu0 %v1761
      %v1811 = vpop.f32.mrb[0].mxu0
      %v1812 = vadd.f32 0.0, %v1811
      %v1813 = vpop.f32.mrb[0].mxu0
      %v1814 = vpop.f32.mrb[0].mxu0
      %v1815 = vadd.f32 0.0, %v1814
      %v1816 = vpop.f32.mrb[0].mxu0
      %1817 = vmatprep.mubr.bf16.mxu0 0
      %1818 = vmatmul.mubr.bf16.gmra.mrb[0].mxu0 %v1764
      %v1819 = vpop.f32.mrb[0].mxu0
      %v1820 = vadd.f32 0.0, %v1819
      %v1821 = vpop.f32.mrb[0].mxu0
      %v1822 = vpop.f32.mrb[0].mxu0
      %v1823 = vadd.f32 0.0, %v1822
      %v1824 = vpop.f32.mrb[0].mxu0
      %1825 = vmatprep.mubr.bf16.mxu0 0
      %1826 = vmatmul.mubr.bf16.gmra.mrb[0].mxu0 %v1767
      %v1827 = vpop.f32.mrb[0].mxu0
      %v1828 = vadd.f32 0.0, %v1827
      %v1829 = vpop.f32.mrb[0].mxu0
      %v1830 = vpop.f32.mrb[0].mxu0
      %v1831 = vadd.f32 0.0, %v1830
      %v1832 = vpop.f32.mrb[0].mxu0
      %1833 = vdwg.mxu0
      %v1834 = vadd.f32 %v1583, %v1804
      %v1835 = vadd.f32 %v1584, %v1807
      %v1836 = vadd.f32 %v1585, %v1812
      %v1837 = vadd.f32 %v1586, %v1815
      %v1838 = vadd.f32 %v1587, %v1820
      %v1839 = vadd.f32 %v1588, %v1823
      %v1840 = vadd.f32 %v1589, %v1828
      %v1841 = vadd.f32 %v1590, %v1831
      %s1842 = scalar_lea.vmem %s1, 224
      %v1843 = vld [vmem:[%s1842] sm:$0xf]
      %v1844 = vld [vmem:[%s1842 + $0x4] sm:$0xf]
      %v1845 = vld [vmem:[%s1842 + $0x8] sm:$0xf]
      %v1846 = vld [vmem:[%s1842 + $0xc] sm:$0xf]
      %v1847 = vld [vmem:[%s1842 + $0x10] sm:$0xf]
      %v1848 = vld [vmem:[%s1842 + $0x14] sm:$0xf]
      %v1849 = vld [vmem:[%s1842 + $0x18] sm:$0xf]
      %v1850 = vld [vmem:[%s1842 + $0x1c] sm:$0xf]
      %v1859 = vunpack.c.l.b16 %v1593
      %v1860 = vunpack.c.l.b16 %v1595
      %v1861 = vunpack.c.l.b16 %v1597
      %v1862 = vunpack.c.l.b16 %v1599
      %v1863 = vunpack.c.l.b16 %v1601
      %v1864 = vunpack.c.l.b16 %v1603
      %v1865 = vunpack.c.l.b16 %v1605
      %v1866 = vunpack.c.l.b16 %v1607
      %v1867 = vpack.c.b16 %v1860, %v1859
      %v1868 = vpack.c.b16 %v1862, %v1861
      %v1869 = vpack.c.b16 %v1864, %v1863
      %v1870 = vpack.c.b16 %v1866, %v1865
      %v1879 = vunpack.c.l.b16 %v1843
      %v1880 = vunpack.c.l.b16 %v1844
      %v1881 = vunpack.c.l.b16 %v1845
      %v1882 = vunpack.c.l.b16 %v1846
      %v1883 = vunpack.c.l.b16 %v1847
      %v1884 = vunpack.c.l.b16 %v1848
      %v1885 = vunpack.c.l.b16 %v1849
      %v1886 = vunpack.c.l.b16 %v1850
      %v1887 = vpack.c.b16 %v1880, %v1879
      %v1888 = vpack.c.b16 %v1882, %v1881
      %v1889 = vpack.c.b16 %v1884, %v1883
      %v1890 = vpack.c.b16 %v1886, %v1885
      %v1896 = vsel %vm493, %v1867, 0
      %v1899 = vsel %vm493, %v1868, 0
      %v1902 = vsel %vm493, %v1869, 0
      %v1905 = vsel %vm493, %v1870, 0
      %1907 = vmatprep.subr.bf16.mxu0 0
      %1908 = vmatpush1.bf16.msra.mxu0 %v1887
      %1909 = vmatprep.subr.bf16.mxu0 0
      %1910 = vmatpush1.bf16.msra.mxu0 %v1888
      %1911 = vmatprep.subr.bf16.mxu0 0
      %1912 = vmatpush1.bf16.msra.mxu0 %v1889
      %1913 = vmatprep.subr.bf16.mxu0 0
      %1914 = vmatpush1.bf16.msra.mxu0 %v1890
      %1915 = vmatprep.subr.bf16.mxu0 0
      %1916 = vmatpush1.bf16.msra.mxu0 0
      %1917 = vmatprep.subr.bf16.mxu0 0
      %1918 = vmatpush1.bf16.msra.mxu0 0
      %1919 = vmatprep.subr.bf16.mxu0 0
      %1920 = vmatpush1.bf16.msra.mxu0 0
      %1921 = vmatprep.subr.bf16.mxu0 0
      %1922 = vmatpush1.bf16.msra.mxu0 0
      %1923 = vmatprep.subr.bf16.mxu0 0
      %1924 = vmatpush1.bf16.msra.mxu0 0
      %1925 = vmatprep.subr.bf16.mxu0 0
      %1926 = vmatpush1.bf16.msra.mxu0 0
      %1927 = vmatprep.subr.bf16.mxu0 0
      %1928 = vmatpush1.bf16.msra.mxu0 0
      %1929 = vmatprep.subr.bf16.mxu0 0
      %1930 = vmatpush1.bf16.msra.mxu0 0
      %1931 = vmatprep.subr.bf16.mxu0 0
      %1932 = vmatpush1.bf16.msra.mxu0 0
      %1933 = vmatprep.subr.bf16.mxu0 0
      %1934 = vmatpush1.bf16.msra.mxu0 0
      %1935 = vmatprep.subr.bf16.mxu0 0
      %1936 = vmatpush1.bf16.msra.mxu0 0
      %1937 = vmatprep.subr.bf16.mxu0 0
      %1938 = vmatpush1.bf16.msra.mxu0 0
      %1939 = vmatprep.mubr.bf16.mxu0 0
      %1940 = vmatmul.mubr.bf16.gmra.mrb[0].mxu0 %v1896
      %v1941 = vpop.f32.mrb[0].mxu0
      %v1942 = vadd.f32 0.0, %v1941
      %v1943 = vpop.f32.mrb[0].mxu0
      %v1944 = vpop.f32.mrb[0].mxu0
      %v1945 = vadd.f32 0.0, %v1944
      %v1946 = vpop.f32.mrb[0].mxu0
      %1947 = vmatprep.mubr.bf16.mxu0 0
      %1948 = vmatmul.mubr.bf16.gmra.mrb[0].mxu0 %v1899
      %v1949 = vpop.f32.mrb[0].mxu0
      %v1950 = vadd.f32 0.0, %v1949
      %v1951 = vpop.f32.mrb[0].mxu0
      %v1952 = vpop.f32.mrb[0].mxu0
      %v1953 = vadd.f32 0.0, %v1952
      %v1954 = vpop.f32.mrb[0].mxu0
      %1955 = vmatprep.mubr.bf16.mxu0 0
      %1956 = vmatmul.mubr.bf16.gmra.mrb[0].mxu0 %v1902
      %v1957 = vpop.f32.mrb[0].mxu0
      %v1958 = vadd.f32 0.0, %v1957
      %v1959 = vpop.f32.mrb[0].mxu0
      %v1960 = vpop.f32.mrb[0].mxu0
      %v1961 = vadd.f32 0.0, %v1960
      %v1962 = vpop.f32.mrb[0].mxu0
      %1963 = vmatprep.mubr.bf16.mxu0 0
      %1964 = vmatmul.mubr.bf16.gmra.mrb[0].mxu0 %v1905
      %v1965 = vpop.f32.mrb[0].mxu0
      %v1966 = vadd.f32 0.0, %v1965
      %v1967 = vpop.f32.mrb[0].mxu0
      %v1968 = vpop.f32.mrb[0].mxu0
      %v1969 = vadd.f32 0.0, %v1968
      %v1970 = vpop.f32.mrb[0].mxu0
      %1971 = vdwg.mxu0
      %v1972 = vadd.f32 %v1834, %v1942
      %v1973 = vadd.f32 %v1835, %v1945
      %v1974 = vadd.f32 %v1836, %v1950
      %v1975 = vadd.f32 %v1837, %v1953
      %v1976 = vadd.f32 %v1838, %v1958
      %v1977 = vadd.f32 %v1839, %v1961
      %v1978 = vadd.f32 %v1840, %v1966
      %v1979 = vadd.f32 %v1841, %v1969
      %v1980 = vld [vmem:[%s1591 + $0x4] sm:$0xf]
      %v1981 = vld [vmem:[%s1591 + $0x8] sm:$0x1]
      %v1982 = vld [vmem:[%s1591 + $0x10] sm:$0xf]
      %v1983 = vld [vmem:[%s1591 + $0x14] sm:$0x1]
      %v1984 = vld [vmem:[%s1591 + $0x1c] sm:$0xf]
      %v1985 = vld [vmem:[%s1591 + $0x20] sm:$0x1]
      %v1986 = vld [vmem:[%s1591 + $0x28] sm:$0xf]
      %v1987 = vld [vmem:[%s1591 + $0x2c] sm:$0x1]
      %v1988 = vld [vmem:[%s1591 + $0x34] sm:$0xf]
      %v1989 = vld [vmem:[%s1591 + $0x38] sm:$0x1]
      %v1990 = vld [vmem:[%s1591 + $0x40] sm:$0xf]
      %v1991 = vld [vmem:[%s1591 + $0x44] sm:$0x1]
      %v1992 = vld [vmem:[%s1591 + $0x4c] sm:$0xf]
      %v1993 = vld [vmem:[%s1591 + $0x50] sm:$0x1]
      %v1994 = vld [vmem:[%s1591 + $0x58] sm:$0xf]
      %v1995 = vld [vmem:[%s1591 + $0x5c] sm:$0x1]
      %v1997 = vshrl.u32 %v1980, 16
      %v1999 = vrot.slane %v1997, 4
      %v2000 = vshll.u32 %v1980, 16
      %v2002 = vrot.slane %v2000, 5
      %v2003 = vor.u32 %v1999, %v2002
      %v2004 = vrot.slane %v2003, 4
      %v2006 = vshll.u32 %v1981, 16
      %v2008 = vrot.slane %v2006, 5
      %v2009 = vsel %vm702, %v2004, %v2008
      %v2011 = vshrl.u32 %v1982, 16
      %v2013 = vrot.slane %v2011, 4
      %v2014 = vshll.u32 %v1982, 16
      %v2016 = vrot.slane %v2014, 5
      %v2017 = vor.u32 %v2013, %v2016
      %v2018 = vrot.slane %v2017, 4
      %v2020 = vshll.u32 %v1983, 16
      %v2022 = vrot.slane %v2020, 5
      %v2023 = vsel %vm702, %v2018, %v2022
      %v2025 = vshrl.u32 %v1984, 16
      %v2027 = vrot.slane %v2025, 4
      %v2028 = vshll.u32 %v1984, 16
      %v2030 = vrot.slane %v2028, 5
      %v2031 = vor.u32 %v2027, %v2030
      %v2032 = vrot.slane %v2031, 4
      %v2034 = vshll.u32 %v1985, 16
      %v2036 = vrot.slane %v2034, 5
      %v2037 = vsel %vm702, %v2032, %v2036
      %v2039 = vshrl.u32 %v1986, 16
      %v2041 = vrot.slane %v2039, 4
      %v2042 = vshll.u32 %v1986, 16
      %v2044 = vrot.slane %v2042, 5
      %v2045 = vor.u32 %v2041, %v2044
      %v2046 = vrot.slane %v2045, 4
      %v2048 = vshll.u32 %v1987, 16
      %v2050 = vrot.slane %v2048, 5
      %v2051 = vsel %vm702, %v2046, %v2050
      %v2053 = vshrl.u32 %v1988, 16
      %v2055 = vrot.slane %v2053, 4
      %v2056 = vshll.u32 %v1988, 16
      %v2058 = vrot.slane %v2056, 5
      %v2059 = vor.u32 %v2055, %v2058
      %v2060 = vrot.slane %v2059, 4
      %v2062 = vshll.u32 %v1989, 16
      %v2064 = vrot.slane %v2062, 5
      %v2065 = vsel %vm702, %v2060, %v2064
      %v2067 = vshrl.u32 %v1990, 16
      %v2069 = vrot.slane %v2067, 4
      %v2070 = vshll.u32 %v1990, 16
      %v2072 = vrot.slane %v2070, 5
      %v2073 = vor.u32 %v2069, %v2072
      %v2074 = vrot.slane %v2073, 4
      %v2076 = vshll.u32 %v1991, 16
      %v2078 = vrot.slane %v2076, 5
      %v2079 = vsel %vm702, %v2074, %v2078
      %v2081 = vshrl.u32 %v1992, 16
      %v2083 = vrot.slane %v2081, 4
      %v2084 = vshll.u32 %v1992, 16
      %v2086 = vrot.slane %v2084, 5
      %v2087 = vor.u32 %v2083, %v2086
      %v2088 = vrot.slane %v2087, 4
      %v2090 = vshll.u32 %v1993, 16
      %v2092 = vrot.slane %v2090, 5
      %v2093 = vsel %vm702, %v2088, %v2092
      %v2095 = vshrl.u32 %v1994, 16
      %v2097 = vrot.slane %v2095, 4
      %v2098 = vshll.u32 %v1994, 16
      %v2100 = vrot.slane %v2098, 5
      %v2101 = vor.u32 %v2097, %v2100
      %v2102 = vrot.slane %v2101, 4
      %v2104 = vshll.u32 %v1995, 16
      %v2106 = vrot.slane %v2104, 5
      %v2107 = vsel %vm702, %v2102, %v2106
      %s2108 = scalar_lea.vmem %s1, 256
      %v2109 = vld [vmem:[%s2108] sm:$0xf]
      %v2110 = vld [vmem:[%s2108 + $0x4] sm:$0xf]
      %v2111 = vld [vmem:[%s2108 + $0x8] sm:$0xf]
      %v2112 = vld [vmem:[%s2108 + $0xc] sm:$0xf]
      %v2113 = vld [vmem:[%s2108 + $0x10] sm:$0xf]
      %v2114 = vld [vmem:[%s2108 + $0x14] sm:$0xf]
      %v2115 = vld [vmem:[%s2108 + $0x18] sm:$0xf]
      %v2116 = vld [vmem:[%s2108 + $0x1c] sm:$0xf]
      %v2117 = vunpack.c.l.b16 %v2009
      %v2118 = vunpack.c.l.b16 %v2023
      %v2119 = vunpack.c.l.b16 %v2037
      %v2120 = vunpack.c.l.b16 %v2051
      %v2121 = vunpack.c.l.b16 %v2065
      %v2122 = vunpack.c.l.b16 %v2079
      %v2123 = vunpack.c.l.b16 %v2093
      %v2124 = vunpack.c.l.b16 %v2107
      %v2125 = vpack.c.b16 %v2118, %v2117
      %v2126 = vpack.c.b16 %v2120, %v2119
      %v2127 = vpack.c.b16 %v2122, %v2121
      %v2128 = vpack.c.b16 %v2124, %v2123
      %v2137 = vunpack.c.l.b16 %v2109
      %v2138 = vunpack.c.l.b16 %v2110
      %v2139 = vunpack.c.l.b16 %v2111
      %v2140 = vunpack.c.l.b16 %v2112
      %v2141 = vunpack.c.l.b16 %v2113
      %v2142 = vunpack.c.l.b16 %v2114
      %v2143 = vunpack.c.l.b16 %v2115
      %v2144 = vunpack.c.l.b16 %v2116
      %v2145 = vpack.c.b16 %v2138, %v2137
      %v2146 = vpack.c.b16 %v2140, %v2139
      %v2147 = vpack.c.b16 %v2142, %v2141
      %v2148 = vpack.c.b16 %v2144, %v2143
      %v2154 = vsel %vm493, %v2125, 0
      %v2157 = vsel %vm493, %v2126, 0
      %v2160 = vsel %vm493, %v2127, 0
      %v2163 = vsel %vm493, %v2128, 0
      %2165 = vmatprep.subr.bf16.mxu0 0
      %2166 = vmatpush1.bf16.msra.mxu0 %v2145
      %2167 = vmatprep.subr.bf16.mxu0 0
      %2168 = vmatpush1.bf16.msra.mxu0 %v2146
      %2169 = vmatprep.subr.bf16.mxu0 0
      %2170 = vmatpush1.bf16.msra.mxu0 %v2147
      %2171 = vmatprep.subr.bf16.mxu0 0
      %2172 = vmatpush1.bf16.msra.mxu0 %v2148
      %2173 = vmatprep.subr.bf16.mxu0 0
      %2174 = vmatpush1.bf16.msra.mxu0 0
      %2175 = vmatprep.subr.bf16.mxu0 0
      %2176 = vmatpush1.bf16.msra.mxu0 0
      %2177 = vmatprep.subr.bf16.mxu0 0
      %2178 = vmatpush1.bf16.msra.mxu0 0
      %2179 = vmatprep.subr.bf16.mxu0 0
      %2180 = vmatpush1.bf16.msra.mxu0 0
      %2181 = vmatprep.subr.bf16.mxu0 0
      %2182 = vmatpush1.bf16.msra.mxu0 0
      %2183 = vmatprep.subr.bf16.mxu0 0
      %2184 = vmatpush1.bf16.msra.mxu0 0
      %2185 = vmatprep.subr.bf16.mxu0 0
      %2186 = vmatpush1.bf16.msra.mxu0 0
      %2187 = vmatprep.subr.bf16.mxu0 0
      %2188 = vmatpush1.bf16.msra.mxu0 0
      %2189 = vmatprep.subr.bf16.mxu0 0
      %2190 = vmatpush1.bf16.msra.mxu0 0
      %2191 = vmatprep.subr.bf16.mxu0 0
      %2192 = vmatpush1.bf16.msra.mxu0 0
      %2193 = vmatprep.subr.bf16.mxu0 0
      %2194 = vmatpush1.bf16.msra.mxu0 0
      %2195 = vmatprep.subr.bf16.mxu0 0
      %2196 = vmatpush1.bf16.msra.mxu0 0
      %2197 = vmatprep.mubr.bf16.mxu0 0
      %2198 = vmatmul.mubr.bf16.gmra.mrb[0].mxu0 %v2154
      %v2199 = vpop.f32.mrb[0].mxu0
      %v2200 = vadd.f32 0.0, %v2199
      %v2201 = vpop.f32.mrb[0].mxu0
      %v2202 = vpop.f32.mrb[0].mxu0
      %v2203 = vadd.f32 0.0, %v2202
      %v2204 = vpop.f32.mrb[0].mxu0
      %2205 = vmatprep.mubr.bf16.mxu0 0
      %2206 = vmatmul.mubr.bf16.gmra.mrb[0].mxu0 %v2157
      %v2207 = vpop.f32.mrb[0].mxu0
      %v2208 = vadd.f32 0.0, %v2207
      %v2209 = vpop.f32.mrb[0].mxu0
      %v2210 = vpop.f32.mrb[0].mxu0
      %v2211 = vadd.f32 0.0, %v2210
      %v2212 = vpop.f32.mrb[0].mxu0
      %2213 = vmatprep.mubr.bf16.mxu0 0
      %2214 = vmatmul.mubr.bf16.gmra.mrb[0].mxu0 %v2160
      %v2215 = vpop.f32.mrb[0].mxu0
      %v2216 = vadd.f32 0.0, %v2215
      %v2217 = vpop.f32.mrb[0].mxu0
      %v2218 = vpop.f32.mrb[0].mxu0
      %v2219 = vadd.f32 0.0, %v2218
      %v2220 = vpop.f32.mrb[0].mxu0
      %2221 = vmatprep.mubr.bf16.mxu0 0
      %2222 = vmatmul.mubr.bf16.gmra.mrb[0].mxu0 %v2163
      %v2223 = vpop.f32.mrb[0].mxu0
      %v2224 = vadd.f32 0.0, %v2223
      %v2225 = vpop.f32.mrb[0].mxu0
      %v2226 = vpop.f32.mrb[0].mxu0
      %v2227 = vadd.f32 0.0, %v2226
      %v2228 = vpop.f32.mrb[0].mxu0
      %2229 = vdwg.mxu0
      %v2230 = vadd.f32 %v1972, %v2200
      %v2231 = vadd.f32 %v1973, %v2203
      %v2232 = vadd.f32 %v1974, %v2208
      %v2233 = vadd.f32 %v1975, %v2211
      %v2234 = vadd.f32 %v1976, %v2216
      %v2235 = vadd.f32 %v1977, %v2219
      %v2236 = vadd.f32 %v1978, %v2224
      %v2237 = vadd.f32 %v1979, %v2227
      %v2238 = vld [vmem:[%s2] sm:$0x1]
      %v2240 = vlaneseq
      %v2241 = vshrl.u32 %v2240, 7
      %v2242 = vsub.s32 0, %v2241
      %v2243 = vrot.slane %v2238, %v2242
      %v2245 = vadd.f32 %v2230, %v2243
      %v2246 = vadd.f32 %v2231, %v2243
      %v2247 = vadd.f32 %v2232, %v2243
      %v2248 = vadd.f32 %v2233, %v2243
      %v2249 = vadd.f32 %v2234, %v2243
      %v2250 = vadd.f32 %v2235, %v2243
      %v2251 = vadd.f32 %v2236, %v2243
      %v2252 = vadd.f32 %v2237, %v2243
      %v2253 = vmax.f32 %v2245, 0.0
      %v2254 = vmax.f32 %v2246, 0.0
      %v2255 = vmax.f32 %v2247, 0.0
      %v2256 = vmax.f32 %v2248, 0.0
      %v2257 = vmax.f32 %v2249, 0.0
      %v2258 = vmax.f32 %v2250, 0.0
      %v2259 = vmax.f32 %v2251, 0.0
      %v2260 = vmax.f32 %v2252, 0.0
      %v2261 = vpack.c.bf16 %v2254, %v2253
      %v2262 = vpack.c.bf16 %v2256, %v2255
      %v2263 = vpack.c.bf16 %v2258, %v2257
      %v2264 = vpack.c.bf16 %v2260, %v2259
      %v2269 = vunpack.c.l.b16 %v2261
      %v2270 = vunpack.c.h.b16 %v2261
      %v2271 = vunpack.c.l.b16 %v2262
      %v2272 = vunpack.c.h.b16 %v2262
      %v2273 = vunpack.c.l.b16 %v2263
      %v2274 = vunpack.c.h.b16 %v2263
      %v2275 = vunpack.c.l.b16 %v2264
      %v2276 = vunpack.c.h.b16 %v2264
      %v2277 = vpack.c.b16 %v2269, %v2269
      %v2278 = vpack.c.b16 %v2270, %v2270
      %v2279 = vpack.c.b16 %v2271, %v2271
      %v2280 = vpack.c.b16 %v2272, %v2272
      %v2281 = vpack.c.b16 %v2273, %v2273
      %v2282 = vpack.c.b16 %v2274, %v2274
      %v2283 = vpack.c.b16 %v2275, %v2275
      %v2284 = vpack.c.b16 %v2276, %v2276
      %2293 = vst.msk [vmem:[%s300 + $0x4] sm:$0xf] %vm253, %v2277
      %2294 = vst.msk [vmem:[%s300 + $0x10] sm:$0xf] %vm253, %v2278
      %2295 = vst.msk [vmem:[%s300 + $0x1c] sm:$0xf] %vm253, %v2279
      %2296 = vst.msk [vmem:[%s300 + $0x28] sm:$0xf] %vm253, %v2280
      %2297 = vst.msk [vmem:[%s300 + $0x34] sm:$0xf] %vm253, %v2281
      %2298 = vst.msk [vmem:[%s300 + $0x40] sm:$0xf] %vm253, %v2282
      %2299 = vst.msk [vmem:[%s300 + $0x4c] sm:$0xf] %vm253, %v2283
      %2300 = vst.msk [vmem:[%s300 + $0x58] sm:$0xf] %vm253, %v2284
      %v2301 = vld [vmem:[#allocation2] sm:$0x8]
      %v2302 = vld [vmem:[#allocation2 + $0x4] sm:$0xf]
      %v2303 = vld [vmem:[#allocation2 + $0xc] sm:$0x8]
      %v2304 = vld [vmem:[#allocation2 + $0x10] sm:$0xf]
      %v2305 = vld [vmem:[#allocation2 + $0x18] sm:$0x8]
      %v2306 = vld [vmem:[#allocation2 + $0x1c] sm:$0xf]
      %v2307 = vld [vmem:[#allocation2 + $0x24] sm:$0x8]
      %v2308 = vld [vmem:[#allocation2 + $0x28] sm:$0xf]
      %v2309 = vld [vmem:[#allocation2 + $0x30] sm:$0x8]
      %v2310 = vld [vmem:[#allocation2 + $0x34] sm:$0xf]
      %v2311 = vld [vmem:[#allocation2 + $0x3c] sm:$0x8]
      %v2312 = vld [vmem:[#allocation2 + $0x40] sm:$0xf]
      %v2313 = vld [vmem:[#allocation2 + $0x48] sm:$0x8]
      %v2314 = vld [vmem:[#allocation2 + $0x4c] sm:$0xf]
      %v2315 = vld [vmem:[#allocation2 + $0x54] sm:$0x8]
      %v2316 = vld [vmem:[#allocation2 + $0x58] sm:$0xf]
      %v2318 = vshrl.u32 %v2301, 16
      %v2320 = vrot.slane %v2318, 7
      %v2321 = vrot.slane %v2320, 4
      %v2323 = vshrl.u32 %v2302, 16
      %v2325 = vrot.slane %v2323, 7
      %v2326 = vshll.u32 %v2302, 16
      %v2328 = vor.u32 %v2325, %v2326
      %v2329 = vsel %vm327, %v2321, %v2328
      %v2331 = vshrl.u32 %v2303, 16
      %v2333 = vrot.slane %v2331, 7
      %v2334 = vrot.slane %v2333, 4
      %v2336 = vshrl.u32 %v2304, 16
      %v2338 = vrot.slane %v2336, 7
      %v2339 = vshll.u32 %v2304, 16
      %v2341 = vor.u32 %v2338, %v2339
      %v2342 = vsel %vm327, %v2334, %v2341
      %v2344 = vshrl.u32 %v2305, 16
      %v2346 = vrot.slane %v2344, 7
      %v2347 = vrot.slane %v2346, 4
      %v2349 = vshrl.u32 %v2306, 16
      %v2351 = vrot.slane %v2349, 7
      %v2352 = vshll.u32 %v2306, 16
      %v2354 = vor.u32 %v2351, %v2352
      %v2355 = vsel %vm327, %v2347, %v2354
      %v2357 = vshrl.u32 %v2307, 16
      %v2359 = vrot.slane %v2357, 7
      %v2360 = vrot.slane %v2359, 4
      %v2362 = vshrl.u32 %v2308, 16
      %v2364 = vrot.slane %v2362, 7
      %v2365 = vshll.u32 %v2308, 16
      %v2367 = vor.u32 %v2364, %v2365
      %v2368 = vsel %vm327, %v2360, %v2367
      %v2370 = vshrl.u32 %v2309, 16
      %v2372 = vrot.slane %v2370, 7
      %v2373 = vrot.slane %v2372, 4
      %v2375 = vshrl.u32 %v2310, 16
      %v2377 = vrot.slane %v2375, 7
      %v2378 = vshll.u32 %v2310, 16
      %v2380 = vor.u32 %v2377, %v2378
      %v2381 = vsel %vm327, %v2373, %v2380
      %v2383 = vshrl.u32 %v2311, 16
      %v2385 = vrot.slane %v2383, 7
      %v2386 = vrot.slane %v2385, 4
      %v2388 = vshrl.u32 %v2312, 16
      %v2390 = vrot.slane %v2388, 7
      %v2391 = vshll.u32 %v2312, 16
      %v2393 = vor.u32 %v2390, %v2391
      %v2394 = vsel %vm327, %v2386, %v2393
      %v2396 = vshrl.u32 %v2313, 16
      %v2398 = vrot.slane %v2396, 7
      %v2399 = vrot.slane %v2398, 4
      %v2401 = vshrl.u32 %v2314, 16
      %v2403 = vrot.slane %v2401, 7
      %v2404 = vshll.u32 %v2314, 16
      %v2406 = vor.u32 %v2403, %v2404
      %v2407 = vsel %vm327, %v2399, %v2406
      %v2409 = vshrl.u32 %v2315, 16
      %v2411 = vrot.slane %v2409, 7
      %v2412 = vrot.slane %v2411, 4
      %v2414 = vshrl.u32 %v2316, 16
      %v2416 = vrot.slane %v2414, 7
      %v2417 = vshll.u32 %v2316, 16
      %v2419 = vor.u32 %v2416, %v2417
      %v2420 = vsel %vm327, %v2412, %v2419
      %s2421 = scalar_lea.vmem %s1, 288
      %v2422 = vld [vmem:[%s2421] sm:$0xf]
      %v2423 = vld [vmem:[%s2421 + $0x4] sm:$0xf]
      %v2424 = vld [vmem:[%s2421 + $0x8] sm:$0xf]
      %v2425 = vld [vmem:[%s2421 + $0xc] sm:$0xf]
      %v2426 = vld [vmem:[%s2421 + $0x10] sm:$0xf]
      %v2427 = vld [vmem:[%s2421 + $0x14] sm:$0xf]
      %v2428 = vld [vmem:[%s2421 + $0x18] sm:$0xf]
      %v2429 = vld [vmem:[%s2421 + $0x1c] sm:$0xf]
      %s2430 = scalar_lea.vmem %s1, 320
      %v2431 = vld [vmem:[%s2430] sm:$0xf]
      %v2432 = vld [vmem:[%s2430 + $0x4] sm:$0xf]
      %v2433 = vld [vmem:[%s2430 + $0x8] sm:$0xf]
      %v2434 = vld [vmem:[%s2430 + $0xc] sm:$0xf]
      %v2435 = vld [vmem:[%s2430 + $0x10] sm:$0xf]
      %v2436 = vld [vmem:[%s2430 + $0x14] sm:$0xf]
      %v2437 = vld [vmem:[%s2430 + $0x18] sm:$0xf]
      %v2438 = vld [vmem:[%s2430 + $0x1c] sm:$0xf]
      %v2447 = vunpack.c.l.b16 %v2302
      %v2448 = vunpack.c.l.b16 %v2304
      %v2449 = vunpack.c.l.b16 %v2306
      %v2450 = vunpack.c.l.b16 %v2308
      %v2451 = vunpack.c.l.b16 %v2310
      %v2452 = vunpack.c.l.b16 %v2312
      %v2453 = vunpack.c.l.b16 %v2314
      %v2454 = vunpack.c.l.b16 %v2316
      %v2455 = vpack.c.b16 %v2448, %v2447
      %v2456 = vpack.c.b16 %v2450, %v2449
      %v2457 = vpack.c.b16 %v2452, %v2451
      %v2458 = vpack.c.b16 %v2454, %v2453
      %v2467 = vunpack.c.l.b16 %v2431
      %v2468 = vunpack.c.l.b16 %v2432
      %v2469 = vunpack.c.l.b16 %v2433
      %v2470 = vunpack.c.l.b16 %v2434
      %v2471 = vunpack.c.l.b16 %v2435
      %v2472 = vunpack.c.l.b16 %v2436
      %v2473 = vunpack.c.l.b16 %v2437
      %v2474 = vunpack.c.l.b16 %v2438
      %v2475 = vpack.c.b16 %v2468, %v2467
      %v2476 = vpack.c.b16 %v2470, %v2469
      %v2477 = vpack.c.b16 %v2472, %v2471
      %v2478 = vpack.c.b16 %v2474, %v2473
      %v2484 = vsel %vm493, %v2455, 0
      %v2487 = vsel %vm493, %v2456, 0
      %v2490 = vsel %vm493, %v2457, 0
      %v2493 = vsel %vm493, %v2458, 0
      %2495 = vmatprep.subr.bf16.mxu0 0
      %2496 = vmatpush1.bf16.msra.mxu0 %v2475
      %2497 = vmatprep.subr.bf16.mxu0 0
      %2498 = vmatpush1.bf16.msra.mxu0 %v2476
      %2499 = vmatprep.subr.bf16.mxu0 0
      %2500 = vmatpush1.bf16.msra.mxu0 %v2477
      %2501 = vmatprep.subr.bf16.mxu0 0
      %2502 = vmatpush1.bf16.msra.mxu0 %v2478
      %2503 = vmatprep.subr.bf16.mxu0 0
      %2504 = vmatpush1.bf16.msra.mxu0 0
      %2505 = vmatprep.subr.bf16.mxu0 0
      %2506 = vmatpush1.bf16.msra.mxu0 0
      %2507 = vmatprep.subr.bf16.mxu0 0
      %2508 = vmatpush1.bf16.msra.mxu0 0
      %2509 = vmatprep.subr.bf16.mxu0 0
      %2510 = vmatpush1.bf16.msra.mxu0 0
      %2511 = vmatprep.subr.bf16.mxu0 0
      %2512 = vmatpush1.bf16.msra.mxu0 0
      %2513 = vmatprep.subr.bf16.mxu0 0
      %2514 = vmatpush1.bf16.msra.mxu0 0
      %2515 = vmatprep.subr.bf16.mxu0 0
      %2516 = vmatpush1.bf16.msra.mxu0 0
      %2517 = vmatprep.subr.bf16.mxu0 0
      %2518 = vmatpush1.bf16.msra.mxu0 0
      %2519 = vmatprep.subr.bf16.mxu0 0
      %2520 = vmatpush1.bf16.msra.mxu0 0
      %2521 = vmatprep.subr.bf16.mxu0 0
      %2522 = vmatpush1.bf16.msra.mxu0 0
      %2523 = vmatprep.subr.bf16.mxu0 0
      %2524 = vmatpush1.bf16.msra.mxu0 0
      %2525 = vmatprep.subr.bf16.mxu0 0
      %2526 = vmatpush1.bf16.msra.mxu0 0
      %2527 = vmatprep.mubr.bf16.mxu0 0
      %2528 = vmatmul.mubr.bf16.gmra.mrb[0].mxu0 %v2484
      %v2529 = vpop.f32.mrb[0].mxu0
      %v2530 = vadd.f32 0.0, %v2529
      %v2531 = vpop.f32.mrb[0].mxu0
      %v2532 = vpop.f32.mrb[0].mxu0
      %v2533 = vadd.f32 0.0, %v2532
      %v2534 = vpop.f32.mrb[0].mxu0
      %2535 = vmatprep.mubr.bf16.mxu0 0
      %2536 = vmatmul.mubr.bf16.gmra.mrb[0].mxu0 %v2487
      %v2537 = vpop.f32.mrb[0].mxu0
      %v2538 = vadd.f32 0.0, %v2537
      %v2539 = vpop.f32.mrb[0].mxu0
      %v2540 = vpop.f32.mrb[0].mxu0
      %v2541 = vadd.f32 0.0, %v2540
      %v2542 = vpop.f32.mrb[0].mxu0
      %2543 = vmatprep.mubr.bf16.mxu0 0
      %2544 = vmatmul.mubr.bf16.gmra.mrb[0].mxu0 %v2490
      %v2545 = vpop.f32.mrb[0].mxu0
      %v2546 = vadd.f32 0.0, %v2545
      %v2547 = vpop.f32.mrb[0].mxu0
      %v2548 = vpop.f32.mrb[0].mxu0
      %v2549 = vadd.f32 0.0, %v2548
      %v2550 = vpop.f32.mrb[0].mxu0
      %2551 = vmatprep.mubr.bf16.mxu0 0
      %2552 = vmatmul.mubr.bf16.gmra.mrb[0].mxu0 %v2493
      %v2553 = vpop.f32.mrb[0].mxu0
      %v2554 = vadd.f32 0.0, %v2553
      %v2555 = vpop.f32.mrb[0].mxu0
      %v2556 = vpop.f32.mrb[0].mxu0
      %v2557 = vadd.f32 0.0, %v2556
      %v2558 = vpop.f32.mrb[0].mxu0
      %2559 = vdwg.mxu0
      %v2560 = vunpack.c.l.b16 %v2329
      %v2561 = vunpack.c.l.b16 %v2342
      %v2562 = vunpack.c.l.b16 %v2355
      %v2563 = vunpack.c.l.b16 %v2368
      %v2564 = vunpack.c.l.b16 %v2381
      %v2565 = vunpack.c.l.b16 %v2394
      %v2566 = vunpack.c.l.b16 %v2407
      %v2567 = vunpack.c.l.b16 %v2420
      %v2568 = vpack.c.b16 %v2561, %v2560
      %v2569 = vpack.c.b16 %v2563, %v2562
      %v2570 = vpack.c.b16 %v2565, %v2564
      %v2571 = vpack.c.b16 %v2567, %v2566
      %v2580 = vunpack.c.l.b16 %v2422
      %v2581 = vunpack.c.l.b16 %v2423
      %v2582 = vunpack.c.l.b16 %v2424
      %v2583 = vunpack.c.l.b16 %v2425
      %v2584 = vunpack.c.l.b16 %v2426
      %v2585 = vunpack.c.l.b16 %v2427
      %v2586 = vunpack.c.l.b16 %v2428
      %v2587 = vunpack.c.l.b16 %v2429
      %v2588 = vpack.c.b16 %v2581, %v2580
      %v2589 = vpack.c.b16 %v2583, %v2582
      %v2590 = vpack.c.b16 %v2585, %v2584
      %v2591 = vpack.c.b16 %v2587, %v2586
      %v2597 = vsel %vm493, %v2568, 0
      %v2600 = vsel %vm493, %v2569, 0
      %v2603 = vsel %vm493, %v2570, 0
      %v2606 = vsel %vm493, %v2571, 0
      %2608 = vmatprep.subr.bf16.mxu0 0
      %2609 = vmatpush1.bf16.msra.mxu0 %v2588
      %2610 = vmatprep.subr.bf16.mxu0 0
      %2611 = vmatpush1.bf16.msra.mxu0 %v2589
      %2612 = vmatprep.subr.bf16.mxu0 0
      %2613 = vmatpush1.bf16.msra.mxu0 %v2590
      %2614 = vmatprep.subr.bf16.mxu0 0
      %2615 = vmatpush1.bf16.msra.mxu0 %v2591
      %2616 = vmatprep.subr.bf16.mxu0 0
      %2617 = vmatpush1.bf16.msra.mxu0 0
      %2618 = vmatprep.subr.bf16.mxu0 0
      %2619 = vmatpush1.bf16.msra.mxu0 0
      %2620 = vmatprep.subr.bf16.mxu0 0
      %2621 = vmatpush1.bf16.msra.mxu0 0
      %2622 = vmatprep.subr.bf16.mxu0 0
      %2623 = vmatpush1.bf16.msra.mxu0 0
      %2624 = vmatprep.subr.bf16.mxu0 0
      %2625 = vmatpush1.bf16.msra.mxu0 0
      %2626 = vmatprep.subr.bf16.mxu0 0
      %2627 = vmatpush1.bf16.msra.mxu0 0
      %2628 = vmatprep.subr.bf16.mxu0 0
      %2629 = vmatpush1.bf16.msra.mxu0 0
      %2630 = vmatprep.subr.bf16.mxu0 0
      %2631 = vmatpush1.bf16.msra.mxu0 0
      %2632 = vmatprep.subr.bf16.mxu0 0
      %2633 = vmatpush1.bf16.msra.mxu0 0
      %2634 = vmatprep.subr.bf16.mxu0 0
      %2635 = vmatpush1.bf16.msra.mxu0 0
      %2636 = vmatprep.subr.bf16.mxu0 0
      %2637 = vmatpush1.bf16.msra.mxu0 0
      %2638 = vmatprep.subr.bf16.mxu0 0
      %2639 = vmatpush1.bf16.msra.mxu0 0
      %2640 = vmatprep.mubr.bf16.mxu0 0
      %2641 = vmatmul.mubr.bf16.gmra.mrb[0].mxu0 %v2597
      %v2642 = vpop.f32.mrb[0].mxu0
      %v2643 = vadd.f32 %v2530, %v2642
      %v2644 = vpop.f32.mrb[0].mxu0
      %v2645 = vpop.f32.mrb[0].mxu0
      %v2646 = vadd.f32 %v2533, %v2645
      %v2647 = vpop.f32.mrb[0].mxu0
      %2648 = vmatprep.mubr.bf16.mxu0 0
      %2649 = vmatmul.mubr.bf16.gmra.mrb[0].mxu0 %v2600
      %v2650 = vpop.f32.mrb[0].mxu0
      %v2651 = vadd.f32 %v2538, %v2650
      %v2652 = vpop.f32.mrb[0].mxu0
      %v2653 = vpop.f32.mrb[0].mxu0
      %v2654 = vadd.f32 %v2541, %v2653
      %v2655 = vpop.f32.mrb[0].mxu0
      %2656 = vmatprep.mubr.bf16.mxu0 0
      %2657 = vmatmul.mubr.bf16.gmra.mrb[0].mxu0 %v2603
      %v2658 = vpop.f32.mrb[0].mxu0
      %v2659 = vadd.f32 %v2546, %v2658
      %v2660 = vpop.f32.mrb[0].mxu0
      %v2661 = vpop.f32.mrb[0].mxu0
      %v2662 = vadd.f32 %v2549, %v2661
      %v2663 = vpop.f32.mrb[0].mxu0
      %2664 = vmatprep.mubr.bf16.mxu0 0
      %2665 = vmatmul.mubr.bf16.gmra.mrb[0].mxu0 %v2606
      %v2666 = vpop.f32.mrb[0].mxu0
      %v2667 = vadd.f32 %v2554, %v2666
      %v2668 = vpop.f32.mrb[0].mxu0
      %v2669 = vpop.f32.mrb[0].mxu0
      %v2670 = vadd.f32 %v2557, %v2669
      %v2671 = vpop.f32.mrb[0].mxu0
      %2672 = vdwg.mxu0
      %v2673 = vld [vmem:[#allocation2 + $0x4] sm:$0xf]
      %v2674 = vld [vmem:[#allocation2 + $0x8] sm:$0x1]
      %v2675 = vld [vmem:[#allocation2 + $0x10] sm:$0xf]
      %v2676 = vld [vmem:[#allocation2 + $0x14] sm:$0x1]
      %v2677 = vld [vmem:[#allocation2 + $0x1c] sm:$0xf]
      %v2678 = vld [vmem:[#allocation2 + $0x20] sm:$0x1]
      %v2679 = vld [vmem:[#allocation2 + $0x28] sm:$0xf]
      %v2680 = vld [vmem:[#allocation2 + $0x2c] sm:$0x1]
      %v2681 = vld [vmem:[#allocation2 + $0x34] sm:$0xf]
      %v2682 = vld [vmem:[#allocation2 + $0x38] sm:$0x1]
      %v2683 = vld [vmem:[#allocation2 + $0x40] sm:$0xf]
      %v2684 = vld [vmem:[#allocation2 + $0x44] sm:$0x1]
      %v2685 = vld [vmem:[#allocation2 + $0x4c] sm:$0xf]
      %v2686 = vld [vmem:[#allocation2 + $0x50] sm:$0x1]
      %v2687 = vld [vmem:[#allocation2 + $0x58] sm:$0xf]
      %v2688 = vld [vmem:[#allocation2 + $0x5c] sm:$0x1]
      %v2690 = vshrl.u32 %v2673, 16
      %v2692 = vrot.slane %v2690, 4
      %v2693 = vshll.u32 %v2673, 16
      %v2695 = vrot.slane %v2693, 5
      %v2696 = vor.u32 %v2692, %v2695
      %v2697 = vrot.slane %v2696, 4
      %v2699 = vshll.u32 %v2674, 16
      %v2701 = vrot.slane %v2699, 5
      %v2702 = vsel %vm702, %v2697, %v2701
      %v2704 = vshrl.u32 %v2675, 16
      %v2706 = vrot.slane %v2704, 4
      %v2707 = vshll.u32 %v2675, 16
      %v2709 = vrot.slane %v2707, 5
      %v2710 = vor.u32 %v2706, %v2709
      %v2711 = vrot.slane %v2710, 4
      %v2713 = vshll.u32 %v2676, 16
      %v2715 = vrot.slane %v2713, 5
      %v2716 = vsel %vm702, %v2711, %v2715
      %v2718 = vshrl.u32 %v2677, 16
      %v2720 = vrot.slane %v2718, 4
      %v2721 = vshll.u32 %v2677, 16
      %v2723 = vrot.slane %v2721, 5
      %v2724 = vor.u32 %v2720, %v2723
      %v2725 = vrot.slane %v2724, 4
      %v2727 = vshll.u32 %v2678, 16
      %v2729 = vrot.slane %v2727, 5
      %v2730 = vsel %vm702, %v2725, %v2729
      %v2732 = vshrl.u32 %v2679, 16
      %v2734 = vrot.slane %v2732, 4
      %v2735 = vshll.u32 %v2679, 16
      %v2737 = vrot.slane %v2735, 5
      %v2738 = vor.u32 %v2734, %v2737
      %v2739 = vrot.slane %v2738, 4
      %v2741 = vshll.u32 %v2680, 16
      %v2743 = vrot.slane %v2741, 5
      %v2744 = vsel %vm702, %v2739, %v2743
      %v2746 = vshrl.u32 %v2681, 16
      %v2748 = vrot.slane %v2746, 4
      %v2749 = vshll.u32 %v2681, 16
      %v2751 = vrot.slane %v2749, 5
      %v2752 = vor.u32 %v2748, %v2751
      %v2753 = vrot.slane %v2752, 4
      %v2755 = vshll.u32 %v2682, 16
      %v2757 = vrot.slane %v2755, 5
      %v2758 = vsel %vm702, %v2753, %v2757
      %v2760 = vshrl.u32 %v2683, 16
      %v2762 = vrot.slane %v2760, 4
      %v2763 = vshll.u32 %v2683, 16
      %v2765 = vrot.slane %v2763, 5
      %v2766 = vor.u32 %v2762, %v2765
      %v2767 = vrot.slane %v2766, 4
      %v2769 = vshll.u32 %v2684, 16
      %v2771 = vrot.slane %v2769, 5
      %v2772 = vsel %vm702, %v2767, %v2771
      %v2774 = vshrl.u32 %v2685, 16
      %v2776 = vrot.slane %v2774, 4
      %v2777 = vshll.u32 %v2685, 16
      %v2779 = vrot.slane %v2777, 5
      %v2780 = vor.u32 %v2776, %v2779
      %v2781 = vrot.slane %v2780, 4
      %v2783 = vshll.u32 %v2686, 16
      %v2785 = vrot.slane %v2783, 5
      %v2786 = vsel %vm702, %v2781, %v2785
      %v2788 = vshrl.u32 %v2687, 16
      %v2790 = vrot.slane %v2788, 4
      %v2791 = vshll.u32 %v2687, 16
      %v2793 = vrot.slane %v2791, 5
      %v2794 = vor.u32 %v2790, %v2793
      %v2795 = vrot.slane %v2794, 4
      %v2797 = vshll.u32 %v2688, 16
      %v2799 = vrot.slane %v2797, 5
      %v2800 = vsel %vm702, %v2795, %v2799
      %s2801 = scalar_lea.vmem %s1, 352
      %v2802 = vld [vmem:[%s2801] sm:$0xf]
      %v2803 = vld [vmem:[%s2801 + $0x4] sm:$0xf]
      %v2804 = vld [vmem:[%s2801 + $0x8] sm:$0xf]
      %v2805 = vld [vmem:[%s2801 + $0xc] sm:$0xf]
      %v2806 = vld [vmem:[%s2801 + $0x10] sm:$0xf]
      %v2807 = vld [vmem:[%s2801 + $0x14] sm:$0xf]
      %v2808 = vld [vmem:[%s2801 + $0x18] sm:$0xf]
      %v2809 = vld [vmem:[%s2801 + $0x1c] sm:$0xf]
      %v2810 = vunpack.c.l.b16 %v2702
      %v2811 = vunpack.c.l.b16 %v2716
      %v2812 = vunpack.c.l.b16 %v2730
      %v2813 = vunpack.c.l.b16 %v2744
      %v2814 = vunpack.c.l.b16 %v2758
      %v2815 = vunpack.c.l.b16 %v2772
      %v2816 = vunpack.c.l.b16 %v2786
      %v2817 = vunpack.c.l.b16 %v2800
      %v2818 = vpack.c.b16 %v2811, %v2810
      %v2819 = vpack.c.b16 %v2813, %v2812
      %v2820 = vpack.c.b16 %v2815, %v2814
      %v2821 = vpack.c.b16 %v2817, %v2816
      %v2830 = vunpack.c.l.b16 %v2802
      %v2831 = vunpack.c.l.b16 %v2803
      %v2832 = vunpack.c.l.b16 %v2804
      %v2833 = vunpack.c.l.b16 %v2805
      %v2834 = vunpack.c.l.b16 %v2806
      %v2835 = vunpack.c.l.b16 %v2807
      %v2836 = vunpack.c.l.b16 %v2808
      %v2837 = vunpack.c.l.b16 %v2809
      %v2838 = vpack.c.b16 %v2831, %v2830
      %v2839 = vpack.c.b16 %v2833, %v2832
      %v2840 = vpack.c.b16 %v2835, %v2834
      %v2841 = vpack.c.b16 %v2837, %v2836
      %v2847 = vsel %vm493, %v2818, 0
      %v2850 = vsel %vm493, %v2819, 0
      %v2853 = vsel %vm493, %v2820, 0
      %v2856 = vsel %vm493, %v2821, 0
      %2858 = vmatprep.subr.bf16.mxu0 0
      %2859 = vmatpush1.bf16.msra.mxu0 %v2838
      %2860 = vmatprep.subr.bf16.mxu0 0
      %2861 = vmatpush1.bf16.msra.mxu0 %v2839
      %2862 = vmatprep.subr.bf16.mxu0 0
      %2863 = vmatpush1.bf16.msra.mxu0 %v2840
      %2864 = vmatprep.subr.bf16.mxu0 0
      %2865 = vmatpush1.bf16.msra.mxu0 %v2841
      %2866 = vmatprep.subr.bf16.mxu0 0
      %2867 = vmatpush1.bf16.msra.mxu0 0
      %2868 = vmatprep.subr.bf16.mxu0 0
      %2869 = vmatpush1.bf16.msra.mxu0 0
      %2870 = vmatprep.subr.bf16.mxu0 0
      %2871 = vmatpush1.bf16.msra.mxu0 0
      %2872 = vmatprep.subr.bf16.mxu0 0
      %2873 = vmatpush1.bf16.msra.mxu0 0
      %2874 = vmatprep.subr.bf16.mxu0 0
      %2875 = vmatpush1.bf16.msra.mxu0 0
      %2876 = vmatprep.subr.bf16.mxu0 0
      %2877 = vmatpush1.bf16.msra.mxu0 0
      %2878 = vmatprep.subr.bf16.mxu0 0
      %2879 = vmatpush1.bf16.msra.mxu0 0
      %2880 = vmatprep.subr.bf16.mxu0 0
      %2881 = vmatpush1.bf16.msra.mxu0 0
      %2882 = vmatprep.subr.bf16.mxu0 0
      %2883 = vmatpush1.bf16.msra.mxu0 0
      %2884 = vmatprep.subr.bf16.mxu0 0
      %2885 = vmatpush1.bf16.msra.mxu0 0
      %2886 = vmatprep.subr.bf16.mxu0 0
      %2887 = vmatpush1.bf16.msra.mxu0 0
      %2888 = vmatprep.subr.bf16.mxu0 0
      %2889 = vmatpush1.bf16.msra.mxu0 0
      %2890 = vmatprep.mubr.bf16.mxu0 0
      %2891 = vmatmul.mubr.bf16.gmra.mrb[0].mxu0 %v2847
      %v2892 = vpop.f32.mrb[0].mxu0
      %v2893 = vadd.f32 0.0, %v2892
      %v2894 = vpop.f32.mrb[0].mxu0
      %v2895 = vpop.f32.mrb[0].mxu0
      %v2896 = vadd.f32 0.0, %v2895
      %v2897 = vpop.f32.mrb[0].mxu0
      %2898 = vmatprep.mubr.bf16.mxu0 0
      %2899 = vmatmul.mubr.bf16.gmra.mrb[0].mxu0 %v2850
      %v2900 = vpop.f32.mrb[0].mxu0
      %v2901 = vadd.f32 0.0, %v2900
      %v2902 = vpop.f32.mrb[0].mxu0
      %v2903 = vpop.f32.mrb[0].mxu0
      %v2904 = vadd.f32 0.0, %v2903
      %v2905 = vpop.f32.mrb[0].mxu0
      %2906 = vmatprep.mubr.bf16.mxu0 0
      %2907 = vmatmul.mubr.bf16.gmra.mrb[0].mxu0 %v2853
      %v2908 = vpop.f32.mrb[0].mxu0
      %v2909 = vadd.f32 0.0, %v2908
      %v2910 = vpop.f32.mrb[0].mxu0
      %v2911 = vpop.f32.mrb[0].mxu0
      %v2912 = vadd.f32 0.0, %v2911
      %v2913 = vpop.f32.mrb[0].mxu0
      %2914 = vmatprep.mubr.bf16.mxu0 0
      %2915 = vmatmul.mubr.bf16.gmra.mrb[0].mxu0 %v2856
      %v2916 = vpop.f32.mrb[0].mxu0
      %v2917 = vadd.f32 0.0, %v2916
      %v2918 = vpop.f32.mrb[0].mxu0
      %v2919 = vpop.f32.mrb[0].mxu0
      %v2920 = vadd.f32 0.0, %v2919
      %v2921 = vpop.f32.mrb[0].mxu0
      %2922 = vdwg.mxu0
      %v2923 = vadd.f32 %v2643, %v2893
      %v2924 = vadd.f32 %v2646, %v2896
      %v2925 = vadd.f32 %v2651, %v2901
      %v2926 = vadd.f32 %v2654, %v2904
      %v2927 = vadd.f32 %v2659, %v2909
      %v2928 = vadd.f32 %v2662, %v2912
      %v2929 = vadd.f32 %v2667, %v2917
      %v2930 = vadd.f32 %v2670, %v2920
      %v2931 = vld [vmem:[%s300] sm:$0x8]
      %v2932 = vld [vmem:[%s300 + $0x4] sm:$0xf]
      %v2933 = vld [vmem:[%s300 + $0xc] sm:$0x8]
      %v2934 = vld [vmem:[%s300 + $0x10] sm:$0xf]
      %v2935 = vld [vmem:[%s300 + $0x18] sm:$0x8]
      %v2936 = vld [vmem:[%s300 + $0x1c] sm:$0xf]
      %v2937 = vld [vmem:[%s300 + $0x24] sm:$0x8]
      %v2938 = vld [vmem:[%s300 + $0x28] sm:$0xf]
      %v2939 = vld [vmem:[%s300 + $0x30] sm:$0x8]
      %v2940 = vld [vmem:[%s300 + $0x34] sm:$0xf]
      %v2941 = vld [vmem:[%s300 + $0x3c] sm:$0x8]
      %v2942 = vld [vmem:[%s300 + $0x40] sm:$0xf]
      %v2943 = vld [vmem:[%s300 + $0x48] sm:$0x8]
      %v2944 = vld [vmem:[%s300 + $0x4c] sm:$0xf]
      %v2945 = vld [vmem:[%s300 + $0x54] sm:$0x8]
      %v2946 = vld [vmem:[%s300 + $0x58] sm:$0xf]
      %v2948 = vshrl.u32 %v2931, 16
      %v2950 = vrot.slane %v2948, 7
      %v2951 = vrot.slane %v2950, 4
      %v2953 = vshrl.u32 %v2932, 16
      %v2955 = vrot.slane %v2953, 7
      %v2956 = vshll.u32 %v2932, 16
      %v2958 = vor.u32 %v2955, %v2956
      %v2959 = vsel %vm327, %v2951, %v2958
      %v2961 = vshrl.u32 %v2933, 16
      %v2963 = vrot.slane %v2961, 7
      %v2964 = vrot.slane %v2963, 4
      %v2966 = vshrl.u32 %v2934, 16
      %v2968 = vrot.slane %v2966, 7
      %v2969 = vshll.u32 %v2934, 16
      %v2971 = vor.u32 %v2968, %v2969
      %v2972 = vsel %vm327, %v2964, %v2971
      %v2974 = vshrl.u32 %v2935, 16
      %v2976 = vrot.slane %v2974, 7
      %v2977 = vrot.slane %v2976, 4
      %v2979 = vshrl.u32 %v2936, 16
      %v2981 = vrot.slane %v2979, 7
      %v2982 = vshll.u32 %v2936, 16
      %v2984 = vor.u32 %v2981, %v2982
      %v2985 = vsel %vm327, %v2977, %v2984
      %v2987 = vshrl.u32 %v2937, 16
      %v2989 = vrot.slane %v2987, 7
      %v2990 = vrot.slane %v2989, 4
      %v2992 = vshrl.u32 %v2938, 16
      %v2994 = vrot.slane %v2992, 7
      %v2995 = vshll.u32 %v2938, 16
      %v2997 = vor.u32 %v2994, %v2995
      %v2998 = vsel %vm327, %v2990, %v2997
      %v3000 = vshrl.u32 %v2939, 16
      %v3002 = vrot.slane %v3000, 7
      %v3003 = vrot.slane %v3002, 4
      %v3005 = vshrl.u32 %v2940, 16
      %v3007 = vrot.slane %v3005, 7
      %v3008 = vshll.u32 %v2940, 16
      %v3010 = vor.u32 %v3007, %v3008
      %v3011 = vsel %vm327, %v3003, %v3010
      %v3013 = vshrl.u32 %v2941, 16
      %v3015 = vrot.slane %v3013, 7
      %v3016 = vrot.slane %v3015, 4
      %v3018 = vshrl.u32 %v2942, 16
      %v3020 = vrot.slane %v3018, 7
      %v3021 = vshll.u32 %v2942, 16
      %v3023 = vor.u32 %v3020, %v3021
      %v3024 = vsel %vm327, %v3016, %v3023
      %v3026 = vshrl.u32 %v2943, 16
      %v3028 = vrot.slane %v3026, 7
      %v3029 = vrot.slane %v3028, 4
      %v3031 = vshrl.u32 %v2944, 16
      %v3033 = vrot.slane %v3031, 7
      %v3034 = vshll.u32 %v2944, 16
      %v3036 = vor.u32 %v3033, %v3034
      %v3037 = vsel %vm327, %v3029, %v3036
      %v3039 = vshrl.u32 %v2945, 16
      %v3041 = vrot.slane %v3039, 7
      %v3042 = vrot.slane %v3041, 4
      %v3044 = vshrl.u32 %v2946, 16
      %v3046 = vrot.slane %v3044, 7
      %v3047 = vshll.u32 %v2946, 16
      %v3049 = vor.u32 %v3046, %v3047
      %v3050 = vsel %vm327, %v3042, %v3049
      %s3051 = scalar_lea.vmem %s1, 384
      %v3052 = vld [vmem:[%s3051] sm:$0xf]
      %v3053 = vld [vmem:[%s3051 + $0x4] sm:$0xf]
      %v3054 = vld [vmem:[%s3051 + $0x8] sm:$0xf]
      %v3055 = vld [vmem:[%s3051 + $0xc] sm:$0xf]
      %v3056 = vld [vmem:[%s3051 + $0x10] sm:$0xf]
      %v3057 = vld [vmem:[%s3051 + $0x14] sm:$0xf]
      %v3058 = vld [vmem:[%s3051 + $0x18] sm:$0xf]
      %v3059 = vld [vmem:[%s3051 + $0x1c] sm:$0xf]
      %v3060 = vunpack.c.l.b16 %v2959
      %v3061 = vunpack.c.l.b16 %v2972
      %v3062 = vunpack.c.l.b16 %v2985
      %v3063 = vunpack.c.l.b16 %v2998
      %v3064 = vunpack.c.l.b16 %v3011
      %v3065 = vunpack.c.l.b16 %v3024
      %v3066 = vunpack.c.l.b16 %v3037
      %v3067 = vunpack.c.l.b16 %v3050
      %v3068 = vpack.c.b16 %v3061, %v3060
      %v3069 = vpack.c.b16 %v3063, %v3062
      %v3070 = vpack.c.b16 %v3065, %v3064
      %v3071 = vpack.c.b16 %v3067, %v3066
      %v3080 = vunpack.c.l.b16 %v3052
      %v3081 = vunpack.c.l.b16 %v3053
      %v3082 = vunpack.c.l.b16 %v3054
      %v3083 = vunpack.c.l.b16 %v3055
      %v3084 = vunpack.c.l.b16 %v3056
      %v3085 = vunpack.c.l.b16 %v3057
      %v3086 = vunpack.c.l.b16 %v3058
      %v3087 = vunpack.c.l.b16 %v3059
      %v3088 = vpack.c.b16 %v3081, %v3080
      %v3089 = vpack.c.b16 %v3083, %v3082
      %v3090 = vpack.c.b16 %v3085, %v3084
      %v3091 = vpack.c.b16 %v3087, %v3086
      %v3097 = vsel %vm493, %v3068, 0
      %v3100 = vsel %vm493, %v3069, 0
      %v3103 = vsel %vm493, %v3070, 0
      %v3106 = vsel %vm493, %v3071, 0
      %3108 = vmatprep.subr.bf16.mxu0 0
      %3109 = vmatpush1.bf16.msra.mxu0 %v3088
      %3110 = vmatprep.subr.bf16.mxu0 0
      %3111 = vmatpush1.bf16.msra.mxu0 %v3089
      %3112 = vmatprep.subr.bf16.mxu0 0
      %3113 = vmatpush1.bf16.msra.mxu0 %v3090
      %3114 = vmatprep.subr.bf16.mxu0 0
      %3115 = vmatpush1.bf16.msra.mxu0 %v3091
      %3116 = vmatprep.subr.bf16.mxu0 0
      %3117 = vmatpush1.bf16.msra.mxu0 0
      %3118 = vmatprep.subr.bf16.mxu0 0
      %3119 = vmatpush1.bf16.msra.mxu0 0
      %3120 = vmatprep.subr.bf16.mxu0 0
      %3121 = vmatpush1.bf16.msra.mxu0 0
      %3122 = vmatprep.subr.bf16.mxu0 0
      %3123 = vmatpush1.bf16.msra.mxu0 0
      %3124 = vmatprep.subr.bf16.mxu0 0
      %3125 = vmatpush1.bf16.msra.mxu0 0
      %3126 = vmatprep.subr.bf16.mxu0 0
      %3127 = vmatpush1.bf16.msra.mxu0 0
      %3128 = vmatprep.subr.bf16.mxu0 0
      %3129 = vmatpush1.bf16.msra.mxu0 0
      %3130 = vmatprep.subr.bf16.mxu0 0
      %3131 = vmatpush1.bf16.msra.mxu0 0
      %3132 = vmatprep.subr.bf16.mxu0 0
      %3133 = vmatpush1.bf16.msra.mxu0 0
      %3134 = vmatprep.subr.bf16.mxu0 0
      %3135 = vmatpush1.bf16.msra.mxu0 0
      %3136 = vmatprep.subr.bf16.mxu0 0
      %3137 = vmatpush1.bf16.msra.mxu0 0
      %3138 = vmatprep.subr.bf16.mxu0 0
      %3139 = vmatpush1.bf16.msra.mxu0 0
      %3140 = vmatprep.mubr.bf16.mxu0 0
      %3141 = vmatmul.mubr.bf16.gmra.mrb[0].mxu0 %v3097
      %v3142 = vpop.f32.mrb[0].mxu0
      %v3143 = vadd.f32 0.0, %v3142
      %v3144 = vpop.f32.mrb[0].mxu0
      %v3145 = vpop.f32.mrb[0].mxu0
      %v3146 = vadd.f32 0.0, %v3145
      %v3147 = vpop.f32.mrb[0].mxu0
      %3148 = vmatprep.mubr.bf16.mxu0 0
      %3149 = vmatmul.mubr.bf16.gmra.mrb[0].mxu0 %v3100
      %v3150 = vpop.f32.mrb[0].mxu0
      %v3151 = vadd.f32 0.0, %v3150
      %v3152 = vpop.f32.mrb[0].mxu0
      %v3153 = vpop.f32.mrb[0].mxu0
      %v3154 = vadd.f32 0.0, %v3153
      %v3155 = vpop.f32.mrb[0].mxu0
      %3156 = vmatprep.mubr.bf16.mxu0 0
      %3157 = vmatmul.mubr.bf16.gmra.mrb[0].mxu0 %v3103
      %v3158 = vpop.f32.mrb[0].mxu0
      %v3159 = vadd.f32 0.0, %v3158
      %v3160 = vpop.f32.mrb[0].mxu0
      %v3161 = vpop.f32.mrb[0].mxu0
      %v3162 = vadd.f32 0.0, %v3161
      %v3163 = vpop.f32.mrb[0].mxu0
      %3164 = vmatprep.mubr.bf16.mxu0 0
      %3165 = vmatmul.mubr.bf16.gmra.mrb[0].mxu0 %v3106
      %v3166 = vpop.f32.mrb[0].mxu0
      %v3167 = vadd.f32 0.0, %v3166
      %v3168 = vpop.f32.mrb[0].mxu0
      %v3169 = vpop.f32.mrb[0].mxu0
      %v3170 = vadd.f32 0.0, %v3169
      %v3171 = vpop.f32.mrb[0].mxu0
      %3172 = vdwg.mxu0
      %v3173 = vadd.f32 %v2923, %v3143
      %v3174 = vadd.f32 %v2924, %v3146
      %v3175 = vadd.f32 %v2925, %v3151
      %v3176 = vadd.f32 %v2926, %v3154
      %v3177 = vadd.f32 %v2927, %v3159
      %v3178 = vadd.f32 %v2928, %v3162
      %v3179 = vadd.f32 %v2929, %v3167
      %v3180 = vadd.f32 %v2930, %v3170
      %s3181 = scalar_lea.vmem %s1, 416
      %v3182 = vld [vmem:[%s3181] sm:$0xf]
      %v3183 = vld [vmem:[%s3181 + $0x4] sm:$0xf]
      %v3184 = vld [vmem:[%s3181 + $0x8] sm:$0xf]
      %v3185 = vld [vmem:[%s3181 + $0xc] sm:$0xf]
      %v3186 = vld [vmem:[%s3181 + $0x10] sm:$0xf]
      %v3187 = vld [vmem:[%s3181 + $0x14] sm:$0xf]
      %v3188 = vld [vmem:[%s3181 + $0x18] sm:$0xf]
      %v3189 = vld [vmem:[%s3181 + $0x1c] sm:$0xf]
      %v3198 = vunpack.c.l.b16 %v2932
      %v3199 = vunpack.c.l.b16 %v2934
      %v3200 = vunpack.c.l.b16 %v2936
      %v3201 = vunpack.c.l.b16 %v2938
      %v3202 = vunpack.c.l.b16 %v2940
      %v3203 = vunpack.c.l.b16 %v2942
      %v3204 = vunpack.c.l.b16 %v2944
      %v3205 = vunpack.c.l.b16 %v2946
      %v3206 = vpack.c.b16 %v3199, %v3198
      %v3207 = vpack.c.b16 %v3201, %v3200
      %v3208 = vpack.c.b16 %v3203, %v3202
      %v3209 = vpack.c.b16 %v3205, %v3204
      %v3218 = vunpack.c.l.b16 %v3182
      %v3219 = vunpack.c.l.b16 %v3183
      %v3220 = vunpack.c.l.b16 %v3184
      %v3221 = vunpack.c.l.b16 %v3185
      %v3222 = vunpack.c.l.b16 %v3186
      %v3223 = vunpack.c.l.b16 %v3187
      %v3224 = vunpack.c.l.b16 %v3188
      %v3225 = vunpack.c.l.b16 %v3189
      %v3226 = vpack.c.b16 %v3219, %v3218
      %v3227 = vpack.c.b16 %v3221, %v3220
      %v3228 = vpack.c.b16 %v3223, %v3222
      %v3229 = vpack.c.b16 %v3225, %v3224
      %v3235 = vsel %vm493, %v3206, 0
      %v3238 = vsel %vm493, %v3207, 0
      %v3241 = vsel %vm493, %v3208, 0
      %v3244 = vsel %vm493, %v3209, 0
      %3246 = vmatprep.subr.bf16.mxu0 0
      %3247 = vmatpush1.bf16.msra.mxu0 %v3226
      %3248 = vmatprep.subr.bf16.mxu0 0
      %3249 = vmatpush1.bf16.msra.mxu0 %v3227
      %3250 = vmatprep.subr.bf16.mxu0 0
      %3251 = vmatpush1.bf16.msra.mxu0 %v3228
      %3252 = vmatprep.subr.bf16.mxu0 0
      %3253 = vmatpush1.bf16.msra.mxu0 %v3229
      %3254 = vmatprep.subr.bf16.mxu0 0
      %3255 = vmatpush1.bf16.msra.mxu0 0
      %3256 = vmatprep.subr.bf16.mxu0 0
      %3257 = vmatpush1.bf16.msra.mxu0 0
      %3258 = vmatprep.subr.bf16.mxu0 0
      %3259 = vmatpush1.bf16.msra.mxu0 0
      %3260 = vmatprep.subr.bf16.mxu0 0
      %3261 = vmatpush1.bf16.msra.mxu0 0
      %3262 = vmatprep.subr.bf16.mxu0 0
      %3263 = vmatpush1.bf16.msra.mxu0 0
      %3264 = vmatprep.subr.bf16.mxu0 0
      %3265 = vmatpush1.bf16.msra.mxu0 0
      %3266 = vmatprep.subr.bf16.mxu0 0
      %3267 = vmatpush1.bf16.msra.mxu0 0
      %3268 = vmatprep.subr.bf16.mxu0 0
      %3269 = vmatpush1.bf16.msra.mxu0 0
      %3270 = vmatprep.subr.bf16.mxu0 0
      %3271 = vmatpush1.bf16.msra.mxu0 0
      %3272 = vmatprep.subr.bf16.mxu0 0
      %3273 = vmatpush1.bf16.msra.mxu0 0
      %3274 = vmatprep.subr.bf16.mxu0 0
      %3275 = vmatpush1.bf16.msra.mxu0 0
      %3276 = vmatprep.subr.bf16.mxu0 0
      %3277 = vmatpush1.bf16.msra.mxu0 0
      %3278 = vmatprep.mubr.bf16.mxu0 0
      %3279 = vmatmul.mubr.bf16.gmra.mrb[0].mxu0 %v3235
      %v3280 = vpop.f32.mrb[0].mxu0
      %v3281 = vadd.f32 0.0, %v3280
      %v3282 = vpop.f32.mrb[0].mxu0
      %v3283 = vpop.f32.mrb[0].mxu0
      %v3284 = vadd.f32 0.0, %v3283
      %v3285 = vpop.f32.mrb[0].mxu0
      %3286 = vmatprep.mubr.bf16.mxu0 0
      %3287 = vmatmul.mubr.bf16.gmra.mrb[0].mxu0 %v3238
      %v3288 = vpop.f32.mrb[0].mxu0
      %v3289 = vadd.f32 0.0, %v3288
      %v3290 = vpop.f32.mrb[0].mxu0
      %v3291 = vpop.f32.mrb[0].mxu0
      %v3292 = vadd.f32 0.0, %v3291
      %v3293 = vpop.f32.mrb[0].mxu0
      %3294 = vmatprep.mubr.bf16.mxu0 0
      %3295 = vmatmul.mubr.bf16.gmra.mrb[0].mxu0 %v3241
      %v3296 = vpop.f32.mrb[0].mxu0
      %v3297 = vadd.f32 0.0, %v3296
      %v3298 = vpop.f32.mrb[0].mxu0
      %v3299 = vpop.f32.mrb[0].mxu0
      %v3300 = vadd.f32 0.0, %v3299
      %v3301 = vpop.f32.mrb[0].mxu0
      %3302 = vmatprep.mubr.bf16.mxu0 0
      %3303 = vmatmul.mubr.bf16.gmra.mrb[0].mxu0 %v3244
      %v3304 = vpop.f32.mrb[0].mxu0
      %v3305 = vadd.f32 0.0, %v3304
      %v3306 = vpop.f32.mrb[0].mxu0
      %v3307 = vpop.f32.mrb[0].mxu0
      %v3308 = vadd.f32 0.0, %v3307
      %v3309 = vpop.f32.mrb[0].mxu0
      %3310 = vdwg.mxu0
      %v3311 = vadd.f32 %v3173, %v3281
      %v3312 = vadd.f32 %v3174, %v3284
      %v3313 = vadd.f32 %v3175, %v3289
      %v3314 = vadd.f32 %v3176, %v3292
      %v3315 = vadd.f32 %v3177, %v3297
      %v3316 = vadd.f32 %v3178, %v3300
      %v3317 = vadd.f32 %v3179, %v3305
      %v3318 = vadd.f32 %v3180, %v3308
      %v3319 = vld [vmem:[%s300 + $0x4] sm:$0xf]
      %v3320 = vld [vmem:[%s300 + $0x8] sm:$0x1]
      %v3321 = vld [vmem:[%s300 + $0x10] sm:$0xf]
      %v3322 = vld [vmem:[%s300 + $0x14] sm:$0x1]
      %v3323 = vld [vmem:[%s300 + $0x1c] sm:$0xf]
      %v3324 = vld [vmem:[%s300 + $0x20] sm:$0x1]
      %v3325 = vld [vmem:[%s300 + $0x28] sm:$0xf]
      %v3326 = vld [vmem:[%s300 + $0x2c] sm:$0x1]
      %v3327 = vld [vmem:[%s300 + $0x34] sm:$0xf]
      %v3328 = vld [vmem:[%s300 + $0x38] sm:$0x1]
      %v3329 = vld [vmem:[%s300 + $0x40] sm:$0xf]
      %v3330 = vld [vmem:[%s300 + $0x44] sm:$0x1]
      %v3331 = vld [vmem:[%s300 + $0x4c] sm:$0xf]
      %v3332 = vld [vmem:[%s300 + $0x50] sm:$0x1]
      %v3333 = vld [vmem:[%s300 + $0x58] sm:$0xf]
      %v3334 = vld [vmem:[%s300 + $0x5c] sm:$0x1]
      %v3336 = vshrl.u32 %v3319, 16
      %v3338 = vrot.slane %v3336, 4
      %v3339 = vshll.u32 %v3319, 16
      %v3341 = vrot.slane %v3339, 5
      %v3342 = vor.u32 %v3338, %v3341
      %v3343 = vrot.slane %v3342, 4
      %v3345 = vshll.u32 %v3320, 16
      %v3347 = vrot.slane %v3345, 5
      %v3348 = vsel %vm702, %v3343, %v3347
      %v3350 = vshrl.u32 %v3321, 16
      %v3352 = vrot.slane %v3350, 4
      %v3353 = vshll.u32 %v3321, 16
      %v3355 = vrot.slane %v3353, 5
      %v3356 = vor.u32 %v3352, %v3355
      %v3357 = vrot.slane %v3356, 4
      %v3359 = vshll.u32 %v3322, 16
      %v3361 = vrot.slane %v3359, 5
      %v3362 = vsel %vm702, %v3357, %v3361
      %v3364 = vshrl.u32 %v3323, 16
      %v3366 = vrot.slane %v3364, 4
      %v3367 = vshll.u32 %v3323, 16
      %v3369 = vrot.slane %v3367, 5
      %v3370 = vor.u32 %v3366, %v3369
      %v3371 = vrot.slane %v3370, 4
      %v3373 = vshll.u32 %v3324, 16
      %v3375 = vrot.slane %v3373, 5
      %v3376 = vsel %vm702, %v3371, %v3375
      %v3378 = vshrl.u32 %v3325, 16
      %v3380 = vrot.slane %v3378, 4
      %v3381 = vshll.u32 %v3325, 16
      %v3383 = vrot.slane %v3381, 5
      %v3384 = vor.u32 %v3380, %v3383
      %v3385 = vrot.slane %v3384, 4
      %v3387 = vshll.u32 %v3326, 16
      %v3389 = vrot.slane %v3387, 5
      %v3390 = vsel %vm702, %v3385, %v3389
      %v3392 = vshrl.u32 %v3327, 16
      %v3394 = vrot.slane %v3392, 4
      %v3395 = vshll.u32 %v3327, 16
      %v3397 = vrot.slane %v3395, 5
      %v3398 = vor.u32 %v3394, %v3397
      %v3399 = vrot.slane %v3398, 4
      %v3401 = vshll.u32 %v3328, 16
      %v3403 = vrot.slane %v3401, 5
      %v3404 = vsel %vm702, %v3399, %v3403
      %v3406 = vshrl.u32 %v3329, 16
      %v3408 = vrot.slane %v3406, 4
      %v3409 = vshll.u32 %v3329, 16
      %v3411 = vrot.slane %v3409, 5
      %v3412 = vor.u32 %v3408, %v3411
      %v3413 = vrot.slane %v3412, 4
      %v3415 = vshll.u32 %v3330, 16
      %v3417 = vrot.slane %v3415, 5
      %v3418 = vsel %vm702, %v3413, %v3417
      %v3420 = vshrl.u32 %v3331, 16
      %v3422 = vrot.slane %v3420, 4
      %v3423 = vshll.u32 %v3331, 16
      %v3425 = vrot.slane %v3423, 5
      %v3426 = vor.u32 %v3422, %v3425
      %v3427 = vrot.slane %v3426, 4
      %v3429 = vshll.u32 %v3332, 16
      %v3431 = vrot.slane %v3429, 5
      %v3432 = vsel %vm702, %v3427, %v3431
      %v3434 = vshrl.u32 %v3333, 16
      %v3436 = vrot.slane %v3434, 4
      %v3437 = vshll.u32 %v3333, 16
      %v3439 = vrot.slane %v3437, 5
      %v3440 = vor.u32 %v3436, %v3439
      %v3441 = vrot.slane %v3440, 4
      %v3443 = vshll.u32 %v3334, 16
      %v3445 = vrot.slane %v3443, 5
      %v3446 = vsel %vm702, %v3441, %v3445
      %s3447 = scalar_lea.vmem %s1, 448
      %v3448 = vld [vmem:[%s3447] sm:$0xf]
      %v3449 = vld [vmem:[%s3447 + $0x4] sm:$0xf]
      %v3450 = vld [vmem:[%s3447 + $0x8] sm:$0xf]
      %v3451 = vld [vmem:[%s3447 + $0xc] sm:$0xf]
      %v3452 = vld [vmem:[%s3447 + $0x10] sm:$0xf]
      %v3453 = vld [vmem:[%s3447 + $0x14] sm:$0xf]
      %v3454 = vld [vmem:[%s3447 + $0x18] sm:$0xf]
      %v3455 = vld [vmem:[%s3447 + $0x1c] sm:$0xf]
      %v3456 = vunpack.c.l.b16 %v3348
      %v3457 = vunpack.c.l.b16 %v3362
      %v3458 = vunpack.c.l.b16 %v3376
      %v3459 = vunpack.c.l.b16 %v3390
      %v3460 = vunpack.c.l.b16 %v3404
      %v3461 = vunpack.c.l.b16 %v3418
      %v3462 = vunpack.c.l.b16 %v3432
      %v3463 = vunpack.c.l.b16 %v3446
      %v3464 = vpack.c.b16 %v3457, %v3456
      %v3465 = vpack.c.b16 %v3459, %v3458
      %v3466 = vpack.c.b16 %v3461, %v3460
      %v3467 = vpack.c.b16 %v3463, %v3462
      %v3476 = vunpack.c.l.b16 %v3448
      %v3477 = vunpack.c.l.b16 %v3449
      %v3478 = vunpack.c.l.b16 %v3450
      %v3479 = vunpack.c.l.b16 %v3451
      %v3480 = vunpack.c.l.b16 %v3452
      %v3481 = vunpack.c.l.b16 %v3453
      %v3482 = vunpack.c.l.b16 %v3454
      %v3483 = vunpack.c.l.b16 %v3455
      %v3484 = vpack.c.b16 %v3477, %v3476
      %v3485 = vpack.c.b16 %v3479, %v3478
      %v3486 = vpack.c.b16 %v3481, %v3480
      %v3487 = vpack.c.b16 %v3483, %v3482
      %v3493 = vsel %vm493, %v3464, 0
      %v3496 = vsel %vm493, %v3465, 0
      %v3499 = vsel %vm493, %v3466, 0
      %v3502 = vsel %vm493, %v3467, 0
      %3504 = vmatprep.subr.bf16.mxu0 0
      %3505 = vmatpush1.bf16.msra.mxu0 %v3484
      %3506 = vmatprep.subr.bf16.mxu0 0
      %3507 = vmatpush1.bf16.msra.mxu0 %v3485
      %3508 = vmatprep.subr.bf16.mxu0 0
      %3509 = vmatpush1.bf16.msra.mxu0 %v3486
      %3510 = vmatprep.subr.bf16.mxu0 0
      %3511 = vmatpush1.bf16.msra.mxu0 %v3487
      %3512 = vmatprep.subr.bf16.mxu0 0
      %3513 = vmatpush1.bf16.msra.mxu0 0
      %3514 = vmatprep.subr.bf16.mxu0 0
      %3515 = vmatpush1.bf16.msra.mxu0 0
      %3516 = vmatprep.subr.bf16.mxu0 0
      %3517 = vmatpush1.bf16.msra.mxu0 0
      %3518 = vmatprep.subr.bf16.mxu0 0
      %3519 = vmatpush1.bf16.msra.mxu0 0
      %3520 = vmatprep.subr.bf16.mxu0 0
      %3521 = vmatpush1.bf16.msra.mxu0 0
      %3522 = vmatprep.subr.bf16.mxu0 0
      %3523 = vmatpush1.bf16.msra.mxu0 0
      %3524 = vmatprep.subr.bf16.mxu0 0
      %3525 = vmatpush1.bf16.msra.mxu0 0
      %3526 = vmatprep.subr.bf16.mxu0 0
      %3527 = vmatpush1.bf16.msra.mxu0 0
      %3528 = vmatprep.subr.bf16.mxu0 0
      %3529 = vmatpush1.bf16.msra.mxu0 0
      %3530 = vmatprep.subr.bf16.mxu0 0
      %3531 = vmatpush1.bf16.msra.mxu0 0
      %3532 = vmatprep.subr.bf16.mxu0 0
      %3533 = vmatpush1.bf16.msra.mxu0 0
      %3534 = vmatprep.subr.bf16.mxu0 0
      %3535 = vmatpush1.bf16.msra.mxu0 0
      %3536 = vmatprep.mubr.bf16.mxu0 0
      %3537 = vmatmul.mubr.bf16.gmra.mrb[0].mxu0 %v3493
      %v3538 = vpop.f32.mrb[0].mxu0
      %v3539 = vadd.f32 0.0, %v3538
      %v3540 = vpop.f32.mrb[0].mxu0
      %v3541 = vpop.f32.mrb[0].mxu0
      %v3542 = vadd.f32 0.0, %v3541
      %v3543 = vpop.f32.mrb[0].mxu0
      %3544 = vmatprep.mubr.bf16.mxu0 0
      %3545 = vmatmul.mubr.bf16.gmra.mrb[0].mxu0 %v3496
      %v3546 = vpop.f32.mrb[0].mxu0
      %v3547 = vadd.f32 0.0, %v3546
      %v3548 = vpop.f32.mrb[0].mxu0
      %v3549 = vpop.f32.mrb[0].mxu0
      %v3550 = vadd.f32 0.0, %v3549
      %v3551 = vpop.f32.mrb[0].mxu0
      %3552 = vmatprep.mubr.bf16.mxu0 0
      %3553 = vmatmul.mubr.bf16.gmra.mrb[0].mxu0 %v3499
      %v3554 = vpop.f32.mrb[0].mxu0
      %v3555 = vadd.f32 0.0, %v3554
      %v3556 = vpop.f32.mrb[0].mxu0
      %v3557 = vpop.f32.mrb[0].mxu0
      %v3558 = vadd.f32 0.0, %v3557
      %v3559 = vpop.f32.mrb[0].mxu0
      %3560 = vmatprep.mubr.bf16.mxu0 0
      %3561 = vmatmul.mubr.bf16.gmra.mrb[0].mxu0 %v3502
      %v3562 = vpop.f32.mrb[0].mxu0
      %v3563 = vadd.f32 0.0, %v3562
      %v3564 = vpop.f32.mrb[0].mxu0
      %v3565 = vpop.f32.mrb[0].mxu0
      %v3566 = vadd.f32 0.0, %v3565
      %v3567 = vpop.f32.mrb[0].mxu0
      %3568 = vdwg.mxu0
      %v3569 = vadd.f32 %v3311, %v3539
      %v3570 = vadd.f32 %v3312, %v3542
      %v3571 = vadd.f32 %v3313, %v3547
      %v3572 = vadd.f32 %v3314, %v3550
      %v3573 = vadd.f32 %v3315, %v3555
      %v3574 = vadd.f32 %v3316, %v3558
      %v3575 = vadd.f32 %v3317, %v3563
      %v3576 = vadd.f32 %v3318, %v3566
      %v3577 = vld [vmem:[%s1591] sm:$0x8]
      %v3578 = vld [vmem:[%s1591 + $0x4] sm:$0xf]
      %v3579 = vld [vmem:[%s1591 + $0xc] sm:$0x8]
      %v3580 = vld [vmem:[%s1591 + $0x10] sm:$0xf]
      %v3581 = vld [vmem:[%s1591 + $0x18] sm:$0x8]
      %v3582 = vld [vmem:[%s1591 + $0x1c] sm:$0xf]
      %v3583 = vld [vmem:[%s1591 + $0x24] sm:$0x8]
      %v3584 = vld [vmem:[%s1591 + $0x28] sm:$0xf]
      %v3585 = vld [vmem:[%s1591 + $0x30] sm:$0x8]
      %v3586 = vld [vmem:[%s1591 + $0x34] sm:$0xf]
      %v3587 = vld [vmem:[%s1591 + $0x3c] sm:$0x8]
      %v3588 = vld [vmem:[%s1591 + $0x40] sm:$0xf]
      %v3589 = vld [vmem:[%s1591 + $0x48] sm:$0x8]
      %v3590 = vld [vmem:[%s1591 + $0x4c] sm:$0xf]
      %v3591 = vld [vmem:[%s1591 + $0x54] sm:$0x8]
      %v3592 = vld [vmem:[%s1591 + $0x58] sm:$0xf]
      %v3594 = vshrl.u32 %v3577, 16
      %v3596 = vrot.slane %v3594, 7
      %v3597 = vrot.slane %v3596, 4
      %v3599 = vshrl.u32 %v3578, 16
      %v3601 = vrot.slane %v3599, 7
      %v3602 = vshll.u32 %v3578, 16
      %v3604 = vor.u32 %v3601, %v3602
      %v3605 = vsel %vm327, %v3597, %v3604
      %v3607 = vshrl.u32 %v3579, 16
      %v3609 = vrot.slane %v3607, 7
      %v3610 = vrot.slane %v3609, 4
      %v3612 = vshrl.u32 %v3580, 16
      %v3614 = vrot.slane %v3612, 7
      %v3615 = vshll.u32 %v3580, 16
      %v3617 = vor.u32 %v3614, %v3615
      %v3618 = vsel %vm327, %v3610, %v3617
      %v3620 = vshrl.u32 %v3581, 16
      %v3622 = vrot.slane %v3620, 7
      %v3623 = vrot.slane %v3622, 4
      %v3625 = vshrl.u32 %v3582, 16
      %v3627 = vrot.slane %v3625, 7
      %v3628 = vshll.u32 %v3582, 16
      %v3630 = vor.u32 %v3627, %v3628
      %v3631 = vsel %vm327, %v3623, %v3630
      %v3633 = vshrl.u32 %v3583, 16
      %v3635 = vrot.slane %v3633, 7
      %v3636 = vrot.slane %v3635, 4
      %v3638 = vshrl.u32 %v3584, 16
      %v3640 = vrot.slane %v3638, 7
      %v3641 = vshll.u32 %v3584, 16
      %v3643 = vor.u32 %v3640, %v3641
      %v3644 = vsel %vm327, %v3636, %v3643
      %v3646 = vshrl.u32 %v3585, 16
      %v3648 = vrot.slane %v3646, 7
      %v3649 = vrot.slane %v3648, 4
      %v3651 = vshrl.u32 %v3586, 16
      %v3653 = vrot.slane %v3651, 7
      %v3654 = vshll.u32 %v3586, 16
      %v3656 = vor.u32 %v3653, %v3654
      %v3657 = vsel %vm327, %v3649, %v3656
      %v3659 = vshrl.u32 %v3587, 16
      %v3661 = vrot.slane %v3659, 7
      %v3662 = vrot.slane %v3661, 4
      %v3664 = vshrl.u32 %v3588, 16
      %v3666 = vrot.slane %v3664, 7
      %v3667 = vshll.u32 %v3588, 16
      %v3669 = vor.u32 %v3666, %v3667
      %v3670 = vsel %vm327, %v3662, %v3669
      %v3672 = vshrl.u32 %v3589, 16
      %v3674 = vrot.slane %v3672, 7
      %v3675 = vrot.slane %v3674, 4
      %v3677 = vshrl.u32 %v3590, 16
      %v3679 = vrot.slane %v3677, 7
      %v3680 = vshll.u32 %v3590, 16
      %v3682 = vor.u32 %v3679, %v3680
      %v3683 = vsel %vm327, %v3675, %v3682
      %v3685 = vshrl.u32 %v3591, 16
      %v3687 = vrot.slane %v3685, 7
      %v3688 = vrot.slane %v3687, 4
      %v3690 = vshrl.u32 %v3592, 16
      %v3692 = vrot.slane %v3690, 7
      %v3693 = vshll.u32 %v3592, 16
      %v3695 = vor.u32 %v3692, %v3693
      %v3696 = vsel %vm327, %v3688, %v3695
      %s3697 = scalar_lea.vmem %s1, 480
      %v3698 = vld [vmem:[%s3697] sm:$0xf]
      %v3699 = vld [vmem:[%s3697 + $0x4] sm:$0xf]
      %v3700 = vld [vmem:[%s3697 + $0x8] sm:$0xf]
      %v3701 = vld [vmem:[%s3697 + $0xc] sm:$0xf]
      %v3702 = vld [vmem:[%s3697 + $0x10] sm:$0xf]
      %v3703 = vld [vmem:[%s3697 + $0x14] sm:$0xf]
      %v3704 = vld [vmem:[%s3697 + $0x18] sm:$0xf]
      %v3705 = vld [vmem:[%s3697 + $0x1c] sm:$0xf]
      %v3706 = vunpack.c.l.b16 %v3605
      %v3707 = vunpack.c.l.b16 %v3618
      %v3708 = vunpack.c.l.b16 %v3631
      %v3709 = vunpack.c.l.b16 %v3644
      %v3710 = vunpack.c.l.b16 %v3657
      %v3711 = vunpack.c.l.b16 %v3670
      %v3712 = vunpack.c.l.b16 %v3683
      %v3713 = vunpack.c.l.b16 %v3696
      %v3714 = vpack.c.b16 %v3707, %v3706
      %v3715 = vpack.c.b16 %v3709, %v3708
      %v3716 = vpack.c.b16 %v3711, %v3710
      %v3717 = vpack.c.b16 %v3713, %v3712
      %v3726 = vunpack.c.l.b16 %v3698
      %v3727 = vunpack.c.l.b16 %v3699
      %v3728 = vunpack.c.l.b16 %v3700
      %v3729 = vunpack.c.l.b16 %v3701
      %v3730 = vunpack.c.l.b16 %v3702
      %v3731 = vunpack.c.l.b16 %v3703
      %v3732 = vunpack.c.l.b16 %v3704
      %v3733 = vunpack.c.l.b16 %v3705
      %v3734 = vpack.c.b16 %v3727, %v3726
      %v3735 = vpack.c.b16 %v3729, %v3728
      %v3736 = vpack.c.b16 %v3731, %v3730
      %v3737 = vpack.c.b16 %v3733, %v3732
      %v3743 = vsel %vm493, %v3714, 0
      %v3746 = vsel %vm493, %v3715, 0
      %v3749 = vsel %vm493, %v3716, 0
      %v3752 = vsel %vm493, %v3717, 0
      %3754 = vmatprep.subr.bf16.mxu0 0
      %3755 = vmatpush1.bf16.msra.mxu0 %v3734
      %3756 = vmatprep.subr.bf16.mxu0 0
      %3757 = vmatpush1.bf16.msra.mxu0 %v3735
      %3758 = vmatprep.subr.bf16.mxu0 0
      %3759 = vmatpush1.bf16.msra.mxu0 %v3736
      %3760 = vmatprep.subr.bf16.mxu0 0
      %3761 = vmatpush1.bf16.msra.mxu0 %v3737
      %3762 = vmatprep.subr.bf16.mxu0 0
      %3763 = vmatpush1.bf16.msra.mxu0 0
      %3764 = vmatprep.subr.bf16.mxu0 0
      %3765 = vmatpush1.bf16.msra.mxu0 0
      %3766 = vmatprep.subr.bf16.mxu0 0
      %3767 = vmatpush1.bf16.msra.mxu0 0
      %3768 = vmatprep.subr.bf16.mxu0 0
      %3769 = vmatpush1.bf16.msra.mxu0 0
      %3770 = vmatprep.subr.bf16.mxu0 0
      %3771 = vmatpush1.bf16.msra.mxu0 0
      %3772 = vmatprep.subr.bf16.mxu0 0
      %3773 = vmatpush1.bf16.msra.mxu0 0
      %3774 = vmatprep.subr.bf16.mxu0 0
      %3775 = vmatpush1.bf16.msra.mxu0 0
      %3776 = vmatprep.subr.bf16.mxu0 0
      %3777 = vmatpush1.bf16.msra.mxu0 0
      %3778 = vmatprep.subr.bf16.mxu0 0
      %3779 = vmatpush1.bf16.msra.mxu0 0
      %3780 = vmatprep.subr.bf16.mxu0 0
      %3781 = vmatpush1.bf16.msra.mxu0 0
      %3782 = vmatprep.subr.bf16.mxu0 0
      %3783 = vmatpush1.bf16.msra.mxu0 0
      %3784 = vmatprep.subr.bf16.mxu0 0
      %3785 = vmatpush1.bf16.msra.mxu0 0
      %3786 = vmatprep.mubr.bf16.mxu0 0
      %3787 = vmatmul.mubr.bf16.gmra.mrb[0].mxu0 %v3743
      %v3788 = vpop.f32.mrb[0].mxu0
      %v3789 = vadd.f32 0.0, %v3788
      %v3790 = vpop.f32.mrb[0].mxu0
      %v3791 = vpop.f32.mrb[0].mxu0
      %v3792 = vadd.f32 0.0, %v3791
      %v3793 = vpop.f32.mrb[0].mxu0
      %3794 = vmatprep.mubr.bf16.mxu0 0
      %3795 = vmatmul.mubr.bf16.gmra.mrb[0].mxu0 %v3746
      %v3796 = vpop.f32.mrb[0].mxu0
      %v3797 = vadd.f32 0.0, %v3796
      %v3798 = vpop.f32.mrb[0].mxu0
      %v3799 = vpop.f32.mrb[0].mxu0
      %v3800 = vadd.f32 0.0, %v3799
      %v3801 = vpop.f32.mrb[0].mxu0
      %3802 = vmatprep.mubr.bf16.mxu0 0
      %3803 = vmatmul.mubr.bf16.gmra.mrb[0].mxu0 %v3749
      %v3804 = vpop.f32.mrb[0].mxu0
      %v3805 = vadd.f32 0.0, %v3804
      %v3806 = vpop.f32.mrb[0].mxu0
      %v3807 = vpop.f32.mrb[0].mxu0
      %v3808 = vadd.f32 0.0, %v3807
      %v3809 = vpop.f32.mrb[0].mxu0
      %3810 = vmatprep.mubr.bf16.mxu0 0
      %3811 = vmatmul.mubr.bf16.gmra.mrb[0].mxu0 %v3752
      %v3812 = vpop.f32.mrb[0].mxu0
      %v3813 = vadd.f32 0.0, %v3812
      %v3814 = vpop.f32.mrb[0].mxu0
      %v3815 = vpop.f32.mrb[0].mxu0
      %v3816 = vadd.f32 0.0, %v3815
      %v3817 = vpop.f32.mrb[0].mxu0
      %3818 = vdwg.mxu0
      %v3819 = vadd.f32 %v3569, %v3789
      %v3820 = vadd.f32 %v3570, %v3792
      %v3821 = vadd.f32 %v3571, %v3797
      %v3822 = vadd.f32 %v3572, %v3800
      %v3823 = vadd.f32 %v3573, %v3805
      %v3824 = vadd.f32 %v3574, %v3808
      %v3825 = vadd.f32 %v3575, %v3813
      %v3826 = vadd.f32 %v3576, %v3816
      %s3827 = scalar_lea.vmem %s1, 512
      %v3828 = vld [vmem:[%s3827] sm:$0xf]
      %v3829 = vld [vmem:[%s3827 + $0x4] sm:$0xf]
      %v3830 = vld [vmem:[%s3827 + $0x8] sm:$0xf]
      %v3831 = vld [vmem:[%s3827 + $0xc] sm:$0xf]
      %v3832 = vld [vmem:[%s3827 + $0x10] sm:$0xf]
      %v3833 = vld [vmem:[%s3827 + $0x14] sm:$0xf]
      %v3834 = vld [vmem:[%s3827 + $0x18] sm:$0xf]
      %v3835 = vld [vmem:[%s3827 + $0x1c] sm:$0xf]
      %v3844 = vunpack.c.l.b16 %v3578
      %v3845 = vunpack.c.l.b16 %v3580
      %v3846 = vunpack.c.l.b16 %v3582
      %v3847 = vunpack.c.l.b16 %v3584
      %v3848 = vunpack.c.l.b16 %v3586
      %v3849 = vunpack.c.l.b16 %v3588
      %v3850 = vunpack.c.l.b16 %v3590
      %v3851 = vunpack.c.l.b16 %v3592
      %v3852 = vpack.c.b16 %v3845, %v3844
      %v3853 = vpack.c.b16 %v3847, %v3846
      %v3854 = vpack.c.b16 %v3849, %v3848
      %v3855 = vpack.c.b16 %v3851, %v3850
      %v3864 = vunpack.c.l.b16 %v3828
      %v3865 = vunpack.c.l.b16 %v3829
      %v3866 = vunpack.c.l.b16 %v3830
      %v3867 = vunpack.c.l.b16 %v3831
      %v3868 = vunpack.c.l.b16 %v3832
      %v3869 = vunpack.c.l.b16 %v3833
      %v3870 = vunpack.c.l.b16 %v3834
      %v3871 = vunpack.c.l.b16 %v3835
      %v3872 = vpack.c.b16 %v3865, %v3864
      %v3873 = vpack.c.b16 %v3867, %v3866
      %v3874 = vpack.c.b16 %v3869, %v3868
      %v3875 = vpack.c.b16 %v3871, %v3870
      %v3881 = vsel %vm493, %v3852, 0
      %v3884 = vsel %vm493, %v3853, 0
      %v3887 = vsel %vm493, %v3854, 0
      %v3890 = vsel %vm493, %v3855, 0
      %3892 = vmatprep.subr.bf16.mxu0 0
      %3893 = vmatpush1.bf16.msra.mxu0 %v3872
      %3894 = vmatprep.subr.bf16.mxu0 0
      %3895 = vmatpush1.bf16.msra.mxu0 %v3873
      %3896 = vmatprep.subr.bf16.mxu0 0
      %3897 = vmatpush1.bf16.msra.mxu0 %v3874
      %3898 = vmatprep.subr.bf16.mxu0 0
      %3899 = vmatpush1.bf16.msra.mxu0 %v3875
      %3900 = vmatprep.subr.bf16.mxu0 0
      %3901 = vmatpush1.bf16.msra.mxu0 0
      %3902 = vmatprep.subr.bf16.mxu0 0
      %3903 = vmatpush1.bf16.msra.mxu0 0
      %3904 = vmatprep.subr.bf16.mxu0 0
      %3905 = vmatpush1.bf16.msra.mxu0 0
      %3906 = vmatprep.subr.bf16.mxu0 0
      %3907 = vmatpush1.bf16.msra.mxu0 0
      %3908 = vmatprep.subr.bf16.mxu0 0
      %3909 = vmatpush1.bf16.msra.mxu0 0
      %3910 = vmatprep.subr.bf16.mxu0 0
      %3911 = vmatpush1.bf16.msra.mxu0 0
      %3912 = vmatprep.subr.bf16.mxu0 0
      %3913 = vmatpush1.bf16.msra.mxu0 0
      %3914 = vmatprep.subr.bf16.mxu0 0
      %3915 = vmatpush1.bf16.msra.mxu0 0
      %3916 = vmatprep.subr.bf16.mxu0 0
      %3917 = vmatpush1.bf16.msra.mxu0 0
      %3918 = vmatprep.subr.bf16.mxu0 0
      %3919 = vmatpush1.bf16.msra.mxu0 0
      %3920 = vmatprep.subr.bf16.mxu0 0
      %3921 = vmatpush1.bf16.msra.mxu0 0
      %3922 = vmatprep.subr.bf16.mxu0 0
      %3923 = vmatpush1.bf16.msra.mxu0 0
      %3924 = vmatprep.mubr.bf16.mxu0 0
      %3925 = vmatmul.mubr.bf16.gmra.mrb[0].mxu0 %v3881
      %v3926 = vpop.f32.mrb[0].mxu0
      %v3927 = vadd.f32 0.0, %v3926
      %v3928 = vpop.f32.mrb[0].mxu0
      %v3929 = vpop.f32.mrb[0].mxu0
      %v3930 = vadd.f32 0.0, %v3929
      %v3931 = vpop.f32.mrb[0].mxu0
      %3932 = vmatprep.mubr.bf16.mxu0 0
      %3933 = vmatmul.mubr.bf16.gmra.mrb[0].mxu0 %v3884
      %v3934 = vpop.f32.mrb[0].mxu0
      %v3935 = vadd.f32 0.0, %v3934
      %v3936 = vpop.f32.mrb[0].mxu0
      %v3937 = vpop.f32.mrb[0].mxu0
      %v3938 = vadd.f32 0.0, %v3937
      %v3939 = vpop.f32.mrb[0].mxu0
      %3940 = vmatprep.mubr.bf16.mxu0 0
      %3941 = vmatmul.mubr.bf16.gmra.mrb[0].mxu0 %v3887
      %v3942 = vpop.f32.mrb[0].mxu0
      %v3943 = vadd.f32 0.0, %v3942
      %v3944 = vpop.f32.mrb[0].mxu0
      %v3945 = vpop.f32.mrb[0].mxu0
      %v3946 = vadd.f32 0.0, %v3945
      %v3947 = vpop.f32.mrb[0].mxu0
      %3948 = vmatprep.mubr.bf16.mxu0 0
      %3949 = vmatmul.mubr.bf16.gmra.mrb[0].mxu0 %v3890
      %v3950 = vpop.f32.mrb[0].mxu0
      %v3951 = vadd.f32 0.0, %v3950
      %v3952 = vpop.f32.mrb[0].mxu0
      %v3953 = vpop.f32.mrb[0].mxu0
      %v3954 = vadd.f32 0.0, %v3953
      %v3955 = vpop.f32.mrb[0].mxu0
      %3956 = vdwg.mxu0
      %v3957 = vadd.f32 %v3819, %v3927
      %v3958 = vadd.f32 %v3820, %v3930
      %v3959 = vadd.f32 %v3821, %v3935
      %v3960 = vadd.f32 %v3822, %v3938
      %v3961 = vadd.f32 %v3823, %v3943
      %v3962 = vadd.f32 %v3824, %v3946
      %v3963 = vadd.f32 %v3825, %v3951
      %v3964 = vadd.f32 %v3826, %v3954
      %v3965 = vld [vmem:[%s1591 + $0x4] sm:$0xf]
      %v3966 = vld [vmem:[%s1591 + $0x8] sm:$0x1]
      %v3967 = vld [vmem:[%s1591 + $0x10] sm:$0xf]
      %v3968 = vld [vmem:[%s1591 + $0x14] sm:$0x1]
      %v3969 = vld [vmem:[%s1591 + $0x1c] sm:$0xf]
      %v3970 = vld [vmem:[%s1591 + $0x20] sm:$0x1]
      %v3971 = vld [vmem:[%s1591 + $0x28] sm:$0xf]
      %v3972 = vld [vmem:[%s1591 + $0x2c] sm:$0x1]
      %v3973 = vld [vmem:[%s1591 + $0x34] sm:$0xf]
      %v3974 = vld [vmem:[%s1591 + $0x38] sm:$0x1]
      %v3975 = vld [vmem:[%s1591 + $0x40] sm:$0xf]
      %v3976 = vld [vmem:[%s1591 + $0x44] sm:$0x1]
      %v3977 = vld [vmem:[%s1591 + $0x4c] sm:$0xf]
      %v3978 = vld [vmem:[%s1591 + $0x50] sm:$0x1]
      %v3979 = vld [vmem:[%s1591 + $0x58] sm:$0xf]
      %v3980 = vld [vmem:[%s1591 + $0x5c] sm:$0x1]
      %v3982 = vshrl.u32 %v3965, 16
      %v3984 = vrot.slane %v3982, 4
      %v3985 = vshll.u32 %v3965, 16
      %v3987 = vrot.slane %v3985, 5
      %v3988 = vor.u32 %v3984, %v3987
      %v3989 = vrot.slane %v3988, 4
      %v3991 = vshll.u32 %v3966, 16
      %v3993 = vrot.slane %v3991, 5
      %v3994 = vsel %vm702, %v3989, %v3993
      %v3996 = vshrl.u32 %v3967, 16
      %v3998 = vrot.slane %v3996, 4
      %v3999 = vshll.u32 %v3967, 16
      %v4001 = vrot.slane %v3999, 5
      %v4002 = vor.u32 %v3998, %v4001
      %v4003 = vrot.slane %v4002, 4
      %v4005 = vshll.u32 %v3968, 16
      %v4007 = vrot.slane %v4005, 5
      %v4008 = vsel %vm702, %v4003, %v4007
      %v4010 = vshrl.u32 %v3969, 16
      %v4012 = vrot.slane %v4010, 4
      %v4013 = vshll.u32 %v3969, 16
      %v4015 = vrot.slane %v4013, 5
      %v4016 = vor.u32 %v4012, %v4015
      %v4017 = vrot.slane %v4016, 4
      %v4019 = vshll.u32 %v3970, 16
      %v4021 = vrot.slane %v4019, 5
      %v4022 = vsel %vm702, %v4017, %v4021
      %v4024 = vshrl.u32 %v3971, 16
      %v4026 = vrot.slane %v4024, 4
      %v4027 = vshll.u32 %v3971, 16
      %v4029 = vrot.slane %v4027, 5
      %v4030 = vor.u32 %v4026, %v4029
      %v4031 = vrot.slane %v4030, 4
      %v4033 = vshll.u32 %v3972, 16
      %v4035 = vrot.slane %v4033, 5
      %v4036 = vsel %vm702, %v4031, %v4035
      %v4038 = vshrl.u32 %v3973, 16
      %v4040 = vrot.slane %v4038, 4
      %v4041 = vshll.u32 %v3973, 16
      %v4043 = vrot.slane %v4041, 5
      %v4044 = vor.u32 %v4040, %v4043
      %v4045 = vrot.slane %v4044, 4
      %v4047 = vshll.u32 %v3974, 16
      %v4049 = vrot.slane %v4047, 5
      %v4050 = vsel %vm702, %v4045, %v4049
      %v4052 = vshrl.u32 %v3975, 16
      %v4054 = vrot.slane %v4052, 4
      %v4055 = vshll.u32 %v3975, 16
      %v4057 = vrot.slane %v4055, 5
      %v4058 = vor.u32 %v4054, %v4057
      %v4059 = vrot.slane %v4058, 4
      %v4061 = vshll.u32 %v3976, 16
      %v4063 = vrot.slane %v4061, 5
      %v4064 = vsel %vm702, %v4059, %v4063
      %v4066 = vshrl.u32 %v3977, 16
      %v4068 = vrot.slane %v4066, 4
      %v4069 = vshll.u32 %v3977, 16
      %v4071 = vrot.slane %v4069, 5
      %v4072 = vor.u32 %v4068, %v4071
      %v4073 = vrot.slane %v4072, 4
      %v4075 = vshll.u32 %v3978, 16
      %v4077 = vrot.slane %v4075, 5
      %v4078 = vsel %vm702, %v4073, %v4077
      %v4080 = vshrl.u32 %v3979, 16
      %v4082 = vrot.slane %v4080, 4
      %v4083 = vshll.u32 %v3979, 16
      %v4085 = vrot.slane %v4083, 5
      %v4086 = vor.u32 %v4082, %v4085
      %v4087 = vrot.slane %v4086, 4
      %v4089 = vshll.u32 %v3980, 16
      %v4091 = vrot.slane %v4089, 5
      %v4092 = vsel %vm702, %v4087, %v4091
      %s4093 = scalar_lea.vmem %s1, 544
      %v4094 = vld [vmem:[%s4093] sm:$0xf]
      %v4095 = vld [vmem:[%s4093 + $0x4] sm:$0xf]
      %v4096 = vld [vmem:[%s4093 + $0x8] sm:$0xf]
      %v4097 = vld [vmem:[%s4093 + $0xc] sm:$0xf]
      %v4098 = vld [vmem:[%s4093 + $0x10] sm:$0xf]
      %v4099 = vld [vmem:[%s4093 + $0x14] sm:$0xf]
      %v4100 = vld [vmem:[%s4093 + $0x18] sm:$0xf]
      %v4101 = vld [vmem:[%s4093 + $0x1c] sm:$0xf]
      %v4102 = vunpack.c.l.b16 %v3994
      %v4103 = vunpack.c.l.b16 %v4008
      %v4104 = vunpack.c.l.b16 %v4022
      %v4105 = vunpack.c.l.b16 %v4036
      %v4106 = vunpack.c.l.b16 %v4050
      %v4107 = vunpack.c.l.b16 %v4064
      %v4108 = vunpack.c.l.b16 %v4078
      %v4109 = vunpack.c.l.b16 %v4092
      %v4110 = vpack.c.b16 %v4103, %v4102
      %v4111 = vpack.c.b16 %v4105, %v4104
      %v4112 = vpack.c.b16 %v4107, %v4106
      %v4113 = vpack.c.b16 %v4109, %v4108
      %v4122 = vunpack.c.l.b16 %v4094
      %v4123 = vunpack.c.l.b16 %v4095
      %v4124 = vunpack.c.l.b16 %v4096
      %v4125 = vunpack.c.l.b16 %v4097
      %v4126 = vunpack.c.l.b16 %v4098
      %v4127 = vunpack.c.l.b16 %v4099
      %v4128 = vunpack.c.l.b16 %v4100
      %v4129 = vunpack.c.l.b16 %v4101
      %v4130 = vpack.c.b16 %v4123, %v4122
      %v4131 = vpack.c.b16 %v4125, %v4124
      %v4132 = vpack.c.b16 %v4127, %v4126
      %v4133 = vpack.c.b16 %v4129, %v4128
      %v4139 = vsel %vm493, %v4110, 0
      %v4142 = vsel %vm493, %v4111, 0
      %v4145 = vsel %vm493, %v4112, 0
      %v4148 = vsel %vm493, %v4113, 0
      %4150 = vmatprep.subr.bf16.mxu0 0
      %4151 = vmatpush1.bf16.msra.mxu0 %v4130
      %4152 = vmatprep.subr.bf16.mxu0 0
      %4153 = vmatpush1.bf16.msra.mxu0 %v4131
      %4154 = vmatprep.subr.bf16.mxu0 0
      %4155 = vmatpush1.bf16.msra.mxu0 %v4132
      %4156 = vmatprep.subr.bf16.mxu0 0
      %4157 = vmatpush1.bf16.msra.mxu0 %v4133
      %4158 = vmatprep.subr.bf16.mxu0 0
      %4159 = vmatpush1.bf16.msra.mxu0 0
      %4160 = vmatprep.subr.bf16.mxu0 0
      %4161 = vmatpush1.bf16.msra.mxu0 0
      %4162 = vmatprep.subr.bf16.mxu0 0
      %4163 = vmatpush1.bf16.msra.mxu0 0
      %4164 = vmatprep.subr.bf16.mxu0 0
      %4165 = vmatpush1.bf16.msra.mxu0 0
      %4166 = vmatprep.subr.bf16.mxu0 0
      %4167 = vmatpush1.bf16.msra.mxu0 0
      %4168 = vmatprep.subr.bf16.mxu0 0
      %4169 = vmatpush1.bf16.msra.mxu0 0
      %4170 = vmatprep.subr.bf16.mxu0 0
      %4171 = vmatpush1.bf16.msra.mxu0 0
      %4172 = vmatprep.subr.bf16.mxu0 0
      %4173 = vmatpush1.bf16.msra.mxu0 0
      %4174 = vmatprep.subr.bf16.mxu0 0
      %4175 = vmatpush1.bf16.msra.mxu0 0
      %4176 = vmatprep.subr.bf16.mxu0 0
      %4177 = vmatpush1.bf16.msra.mxu0 0
      %4178 = vmatprep.subr.bf16.mxu0 0
      %4179 = vmatpush1.bf16.msra.mxu0 0
      %4180 = vmatprep.subr.bf16.mxu0 0
      %4181 = vmatpush1.bf16.msra.mxu0 0
      %4182 = vmatprep.mubr.bf16.mxu0 0
      %4183 = vmatmul.mubr.bf16.gmra.mrb[0].mxu0 %v4139
      %v4184 = vpop.f32.mrb[0].mxu0
      %v4185 = vadd.f32 0.0, %v4184
      %v4186 = vpop.f32.mrb[0].mxu0
      %v4187 = vpop.f32.mrb[0].mxu0
      %v4188 = vadd.f32 0.0, %v4187
      %v4189 = vpop.f32.mrb[0].mxu0
      %4190 = vmatprep.mubr.bf16.mxu0 0
      %4191 = vmatmul.mubr.bf16.gmra.mrb[0].mxu0 %v4142
      %v4192 = vpop.f32.mrb[0].mxu0
      %v4193 = vadd.f32 0.0, %v4192
      %v4194 = vpop.f32.mrb[0].mxu0
      %v4195 = vpop.f32.mrb[0].mxu0
      %v4196 = vadd.f32 0.0, %v4195
      %v4197 = vpop.f32.mrb[0].mxu0
      %4198 = vmatprep.mubr.bf16.mxu0 0
      %4199 = vmatmul.mubr.bf16.gmra.mrb[0].mxu0 %v4145
      %v4200 = vpop.f32.mrb[0].mxu0
      %v4201 = vadd.f32 0.0, %v4200
      %v4202 = vpop.f32.mrb[0].mxu0
      %v4203 = vpop.f32.mrb[0].mxu0
      %v4204 = vadd.f32 0.0, %v4203
      %v4205 = vpop.f32.mrb[0].mxu0
      %4206 = vmatprep.mubr.bf16.mxu0 0
      %4207 = vmatmul.mubr.bf16.gmra.mrb[0].mxu0 %v4148
      %v4208 = vpop.f32.mrb[0].mxu0
      %v4209 = vadd.f32 0.0, %v4208
      %v4210 = vpop.f32.mrb[0].mxu0
      %v4211 = vpop.f32.mrb[0].mxu0
      %v4212 = vadd.f32 0.0, %v4211
      %v4213 = vpop.f32.mrb[0].mxu0
      %4214 = vdwg.mxu0
      %v4215 = vadd.f32 %v3957, %v4185
      %v4216 = vadd.f32 %v3958, %v4188
      %v4217 = vadd.f32 %v3959, %v4193
      %v4218 = vadd.f32 %v3960, %v4196
      %v4219 = vadd.f32 %v3961, %v4201
      %v4220 = vadd.f32 %v3962, %v4204
      %v4221 = vadd.f32 %v3963, %v4209
      %v4222 = vadd.f32 %v3964, %v4212
      %s4223 = scalar_lea.vmem %s2, 1
      %v4224 = vld [vmem:[%s4223] sm:$0x1]
      %v4226 = vlaneseq
      %v4227 = vshrl.u32 %v4226, 7
      %v4228 = vsub.s32 0, %v4227
      %v4229 = vrot.slane %v4224, %v4228
      %v4231 = vadd.f32 %v4215, %v4229
      %v4232 = vadd.f32 %v4216, %v4229
      %v4233 = vadd.f32 %v4217, %v4229
      %v4234 = vadd.f32 %v4218, %v4229
      %v4235 = vadd.f32 %v4219, %v4229
      %v4236 = vadd.f32 %v4220, %v4229
      %v4237 = vadd.f32 %v4221, %v4229
      %v4238 = vadd.f32 %v4222, %v4229
      %v4239 = vadd.f32 %v4231, %v292
      %v4240 = vadd.f32 %v4232, %v293
      %v4241 = vadd.f32 %v4233, %v294
      %v4242 = vadd.f32 %v4234, %v295
      %v4243 = vadd.f32 %v4235, %v296
      %v4244 = vadd.f32 %v4236, %v297
      %v4245 = vadd.f32 %v4237, %v298
      %v4246 = vadd.f32 %v4238, %v299
      %v4247 = vmax.f32 %v4239, 0.0
      %v4248 = vmax.f32 %v4240, 0.0
      %v4249 = vmax.f32 %v4241, 0.0
      %v4250 = vmax.f32 %v4242, 0.0
      %v4251 = vmax.f32 %v4243, 0.0
      %v4252 = vmax.f32 %v4244, 0.0
      %v4253 = vmax.f32 %v4245, 0.0
      %v4254 = vmax.f32 %v4246, 0.0
      %v4255 = vpack.c.bf16 %v4248, %v4247
      %v4256 = vpack.c.bf16 %v4250, %v4249
      %v4257 = vpack.c.bf16 %v4252, %v4251
      %v4258 = vpack.c.bf16 %v4254, %v4253
      %v4263 = vunpack.c.l.b16 %v4255
      %v4264 = vunpack.c.h.b16 %v4255
      %v4265 = vunpack.c.l.b16 %v4256
      %v4266 = vunpack.c.h.b16 %v4256
      %v4267 = vunpack.c.l.b16 %v4257
      %v4268 = vunpack.c.h.b16 %v4257
      %v4269 = vunpack.c.l.b16 %v4258
      %v4270 = vunpack.c.h.b16 %v4258
      %v4271 = vpack.c.b16 %v4263, %v4263
      %v4272 = vpack.c.b16 %v4264, %v4264
      %v4273 = vpack.c.b16 %v4265, %v4265
      %v4274 = vpack.c.b16 %v4266, %v4266
      %v4275 = vpack.c.b16 %v4267, %v4267
      %v4276 = vpack.c.b16 %v4268, %v4268
      %v4277 = vpack.c.b16 %v4269, %v4269
      %v4278 = vpack.c.b16 %v4270, %v4270
      %4287 = vst.msk [vmem:[%s300 + $0x4] sm:$0xf] %vm253, %v4271
      %4288 = vst.msk [vmem:[%s300 + $0x10] sm:$0xf] %vm253, %v4272
      %4289 = vst.msk [vmem:[%s300 + $0x1c] sm:$0xf] %vm253, %v4273
      %4290 = vst.msk [vmem:[%s300 + $0x28] sm:$0xf] %vm253, %v4274
      %4291 = vst.msk [vmem:[%s300 + $0x34] sm:$0xf] %vm253, %v4275
      %4292 = vst.msk [vmem:[%s300 + $0x40] sm:$0xf] %vm253, %v4276
      %4293 = vst.msk [vmem:[%s300 + $0x4c] sm:$0xf] %vm253, %v4277
      %4294 = vst.msk [vmem:[%s300 + $0x58] sm:$0xf] %vm253, %v4278
      %v4295 = vld [vmem:[#allocation2] sm:$0x8]
      %v4296 = vld [vmem:[#allocation2 + $0x4] sm:$0xf]
      %v4297 = vld [vmem:[#allocation2 + $0xc] sm:$0x8]
      %v4298 = vld [vmem:[#allocation2 + $0x10] sm:$0xf]
      %v4299 = vld [vmem:[#allocation2 + $0x18] sm:$0x8]
      %v4300 = vld [vmem:[#allocation2 + $0x1c] sm:$0xf]
      %v4301 = vld [vmem:[#allocation2 + $0x24] sm:$0x8]
      %v4302 = vld [vmem:[#allocation2 + $0x28] sm:$0xf]
      %v4303 = vld [vmem:[#allocation2 + $0x30] sm:$0x8]
      %v4304 = vld [vmem:[#allocation2 + $0x34] sm:$0xf]
      %v4305 = vld [vmem:[#allocation2 + $0x3c] sm:$0x8]
      %v4306 = vld [vmem:[#allocation2 + $0x40] sm:$0xf]
      %v4307 = vld [vmem:[#allocation2 + $0x48] sm:$0x8]
      %v4308 = vld [vmem:[#allocation2 + $0x4c] sm:$0xf]
      %v4309 = vld [vmem:[#allocation2 + $0x54] sm:$0x8]
      %v4310 = vld [vmem:[#allocation2 + $0x58] sm:$0xf]
      %v4312 = vshrl.u32 %v4295, 16
      %v4314 = vrot.slane %v4312, 7
      %v4315 = vrot.slane %v4314, 4
      %v4317 = vshrl.u32 %v4296, 16
      %v4319 = vrot.slane %v4317, 7
      %v4320 = vshll.u32 %v4296, 16
      %v4322 = vor.u32 %v4319, %v4320
      %v4323 = vsel %vm327, %v4315, %v4322
      %v4325 = vshrl.u32 %v4297, 16
      %v4327 = vrot.slane %v4325, 7
      %v4328 = vrot.slane %v4327, 4
      %v4330 = vshrl.u32 %v4298, 16
      %v4332 = vrot.slane %v4330, 7
      %v4333 = vshll.u32 %v4298, 16
      %v4335 = vor.u32 %v4332, %v4333
      %v4336 = vsel %vm327, %v4328, %v4335
      %v4338 = vshrl.u32 %v4299, 16
      %v4340 = vrot.slane %v4338, 7
      %v4341 = vrot.slane %v4340, 4
      %v4343 = vshrl.u32 %v4300, 16
      %v4345 = vrot.slane %v4343, 7
      %v4346 = vshll.u32 %v4300, 16
      %v4348 = vor.u32 %v4345, %v4346
      %v4349 = vsel %vm327, %v4341, %v4348
      %v4351 = vshrl.u32 %v4301, 16
      %v4353 = vrot.slane %v4351, 7
      %v4354 = vrot.slane %v4353, 4
      %v4356 = vshrl.u32 %v4302, 16
      %v4358 = vrot.slane %v4356, 7
      %v4359 = vshll.u32 %v4302, 16
      %v4361 = vor.u32 %v4358, %v4359
      %v4362 = vsel %vm327, %v4354, %v4361
      %v4364 = vshrl.u32 %v4303, 16
      %v4366 = vrot.slane %v4364, 7
      %v4367 = vrot.slane %v4366, 4
      %v4369 = vshrl.u32 %v4304, 16
      %v4371 = vrot.slane %v4369, 7
      %v4372 = vshll.u32 %v4304, 16
      %v4374 = vor.u32 %v4371, %v4372
      %v4375 = vsel %vm327, %v4367, %v4374
      %v4377 = vshrl.u32 %v4305, 16
      %v4379 = vrot.slane %v4377, 7
      %v4380 = vrot.slane %v4379, 4
      %v4382 = vshrl.u32 %v4306, 16
      %v4384 = vrot.slane %v4382, 7
      %v4385 = vshll.u32 %v4306, 16
      %v4387 = vor.u32 %v4384, %v4385
      %v4388 = vsel %vm327, %v4380, %v4387
      %v4390 = vshrl.u32 %v4307, 16
      %v4392 = vrot.slane %v4390, 7
      %v4393 = vrot.slane %v4392, 4
      %v4395 = vshrl.u32 %v4308, 16
      %v4397 = vrot.slane %v4395, 7
      %v4398 = vshll.u32 %v4308, 16
      %v4400 = vor.u32 %v4397, %v4398
      %v4401 = vsel %vm327, %v4393, %v4400
      %v4403 = vshrl.u32 %v4309, 16
      %v4405 = vrot.slane %v4403, 7
      %v4406 = vrot.slane %v4405, 4
      %v4408 = vshrl.u32 %v4310, 16
      %v4410 = vrot.slane %v4408, 7
      %v4411 = vshll.u32 %v4310, 16
      %v4413 = vor.u32 %v4410, %v4411
      %v4414 = vsel %vm327, %v4406, %v4413
      %s4415 = scalar_lea.vmem %s1, 576
      %v4416 = vld [vmem:[%s4415] sm:$0xf]
      %v4417 = vld [vmem:[%s4415 + $0x4] sm:$0xf]
      %v4418 = vld [vmem:[%s4415 + $0x8] sm:$0xf]
      %v4419 = vld [vmem:[%s4415 + $0xc] sm:$0xf]
      %v4420 = vld [vmem:[%s4415 + $0x10] sm:$0xf]
      %v4421 = vld [vmem:[%s4415 + $0x14] sm:$0xf]
      %v4422 = vld [vmem:[%s4415 + $0x18] sm:$0xf]
      %v4423 = vld [vmem:[%s4415 + $0x1c] sm:$0xf]
      %s4424 = scalar_lea.vmem %s1, 608
      %v4425 = vld [vmem:[%s4424] sm:$0xf]
      %v4426 = vld [vmem:[%s4424 + $0x4] sm:$0xf]
      %v4427 = vld [vmem:[%s4424 + $0x8] sm:$0xf]
      %v4428 = vld [vmem:[%s4424 + $0xc] sm:$0xf]
      %v4429 = vld [vmem:[%s4424 + $0x10] sm:$0xf]
      %v4430 = vld [vmem:[%s4424 + $0x14] sm:$0xf]
      %v4431 = vld [vmem:[%s4424 + $0x18] sm:$0xf]
      %v4432 = vld [vmem:[%s4424 + $0x1c] sm:$0xf]
      %v4441 = vunpack.c.l.b16 %v4296
      %v4442 = vunpack.c.l.b16 %v4298
      %v4443 = vunpack.c.l.b16 %v4300
      %v4444 = vunpack.c.l.b16 %v4302
      %v4445 = vunpack.c.l.b16 %v4304
      %v4446 = vunpack.c.l.b16 %v4306
      %v4447 = vunpack.c.l.b16 %v4308
      %v4448 = vunpack.c.l.b16 %v4310
      %v4449 = vpack.c.b16 %v4442, %v4441
      %v4450 = vpack.c.b16 %v4444, %v4443
      %v4451 = vpack.c.b16 %v4446, %v4445
      %v4452 = vpack.c.b16 %v4448, %v4447
      %v4461 = vunpack.c.l.b16 %v4425
      %v4462 = vunpack.c.l.b16 %v4426
      %v4463 = vunpack.c.l.b16 %v4427
      %v4464 = vunpack.c.l.b16 %v4428
      %v4465 = vunpack.c.l.b16 %v4429
      %v4466 = vunpack.c.l.b16 %v4430
      %v4467 = vunpack.c.l.b16 %v4431
      %v4468 = vunpack.c.l.b16 %v4432
      %v4469 = vpack.c.b16 %v4462, %v4461
      %v4470 = vpack.c.b16 %v4464, %v4463
      %v4471 = vpack.c.b16 %v4466, %v4465
      %v4472 = vpack.c.b16 %v4468, %v4467
      %v4478 = vsel %vm493, %v4449, 0
      %v4481 = vsel %vm493, %v4450, 0
      %v4484 = vsel %vm493, %v4451, 0
      %v4487 = vsel %vm493, %v4452, 0
      %4489 = vmatprep.subr.bf16.mxu0 0
      %4490 = vmatpush1.bf16.msra.mxu0 %v4469
      %4491 = vmatprep.subr.bf16.mxu0 0
      %4492 = vmatpush1.bf16.msra.mxu0 %v4470
      %4493 = vmatprep.subr.bf16.mxu0 0
      %4494 = vmatpush1.bf16.msra.mxu0 %v4471
      %4495 = vmatprep.subr.bf16.mxu0 0
      %4496 = vmatpush1.bf16.msra.mxu0 %v4472
      %4497 = vmatprep.subr.bf16.mxu0 0
      %4498 = vmatpush1.bf16.msra.mxu0 0
      %4499 = vmatprep.subr.bf16.mxu0 0
      %4500 = vmatpush1.bf16.msra.mxu0 0
      %4501 = vmatprep.subr.bf16.mxu0 0
      %4502 = vmatpush1.bf16.msra.mxu0 0
      %4503 = vmatprep.subr.bf16.mxu0 0
      %4504 = vmatpush1.bf16.msra.mxu0 0
      %4505 = vmatprep.subr.bf16.mxu0 0
      %4506 = vmatpush1.bf16.msra.mxu0 0
      %4507 = vmatprep.subr.bf16.mxu0 0
      %4508 = vmatpush1.bf16.msra.mxu0 0
      %4509 = vmatprep.subr.bf16.mxu0 0
      %4510 = vmatpush1.bf16.msra.mxu0 0
      %4511 = vmatprep.subr.bf16.mxu0 0
      %4512 = vmatpush1.bf16.msra.mxu0 0
      %4513 = vmatprep.subr.bf16.mxu0 0
      %4514 = vmatpush1.bf16.msra.mxu0 0
      %4515 = vmatprep.subr.bf16.mxu0 0
      %4516 = vmatpush1.bf16.msra.mxu0 0
      %4517 = vmatprep.subr.bf16.mxu0 0
      %4518 = vmatpush1.bf16.msra.mxu0 0
      %4519 = vmatprep.subr.bf16.mxu0 0
      %4520 = vmatpush1.bf16.msra.mxu0 0
      %4521 = vmatprep.mubr.bf16.mxu0 0
      %4522 = vmatmul.mubr.bf16.gmra.mrb[0].mxu0 %v4478
      %v4523 = vpop.f32.mrb[0].mxu0
      %v4524 = vadd.f32 0.0, %v4523
      %v4525 = vpop.f32.mrb[0].mxu0
      %v4526 = vpop.f32.mrb[0].mxu0
      %v4527 = vadd.f32 0.0, %v4526
      %v4528 = vpop.f32.mrb[0].mxu0
      %4529 = vmatprep.mubr.bf16.mxu0 0
      %4530 = vmatmul.mubr.bf16.gmra.mrb[0].mxu0 %v4481
      %v4531 = vpop.f32.mrb[0].mxu0
      %v4532 = vadd.f32 0.0, %v4531
      %v4533 = vpop.f32.mrb[0].mxu0
      %v4534 = vpop.f32.mrb[0].mxu0
      %v4535 = vadd.f32 0.0, %v4534
      %v4536 = vpop.f32.mrb[0].mxu0
      %4537 = vmatprep.mubr.bf16.mxu0 0
      %4538 = vmatmul.mubr.bf16.gmra.mrb[0].mxu0 %v4484
      %v4539 = vpop.f32.mrb[0].mxu0
      %v4540 = vadd.f32 0.0, %v4539
      %v4541 = vpop.f32.mrb[0].mxu0
      %v4542 = vpop.f32.mrb[0].mxu0
      %v4543 = vadd.f32 0.0, %v4542
      %v4544 = vpop.f32.mrb[0].mxu0
      %4545 = vmatprep.mubr.bf16.mxu0 0
      %4546 = vmatmul.mubr.bf16.gmra.mrb[0].mxu0 %v4487
      %v4547 = vpop.f32.mrb[0].mxu0
      %v4548 = vadd.f32 0.0, %v4547
      %v4549 = vpop.f32.mrb[0].mxu0
      %v4550 = vpop.f32.mrb[0].mxu0
      %v4551 = vadd.f32 0.0, %v4550
      %v4552 = vpop.f32.mrb[0].mxu0
      %4553 = vdwg.mxu0
      %v4554 = vunpack.c.l.b16 %v4323
      %v4555 = vunpack.c.l.b16 %v4336
      %v4556 = vunpack.c.l.b16 %v4349
      %v4557 = vunpack.c.l.b16 %v4362
      %v4558 = vunpack.c.l.b16 %v4375
      %v4559 = vunpack.c.l.b16 %v4388
      %v4560 = vunpack.c.l.b16 %v4401
      %v4561 = vunpack.c.l.b16 %v4414
      %v4562 = vpack.c.b16 %v4555, %v4554
      %v4563 = vpack.c.b16 %v4557, %v4556
      %v4564 = vpack.c.b16 %v4559, %v4558
      %v4565 = vpack.c.b16 %v4561, %v4560
      %v4574 = vunpack.c.l.b16 %v4416
      %v4575 = vunpack.c.l.b16 %v4417
      %v4576 = vunpack.c.l.b16 %v4418
      %v4577 = vunpack.c.l.b16 %v4419
      %v4578 = vunpack.c.l.b16 %v4420
      %v4579 = vunpack.c.l.b16 %v4421
      %v4580 = vunpack.c.l.b16 %v4422
      %v4581 = vunpack.c.l.b16 %v4423
      %v4582 = vpack.c.b16 %v4575, %v4574
      %v4583 = vpack.c.b16 %v4577, %v4576
      %v4584 = vpack.c.b16 %v4579, %v4578
      %v4585 = vpack.c.b16 %v4581, %v4580
      %v4591 = vsel %vm493, %v4562, 0
      %v4594 = vsel %vm493, %v4563, 0
      %v4597 = vsel %vm493, %v4564, 0
      %v4600 = vsel %vm493, %v4565, 0
      %4602 = vmatprep.subr.bf16.mxu0 0
      %4603 = vmatpush1.bf16.msra.mxu0 %v4582
      %4604 = vmatprep.subr.bf16.mxu0 0
      %4605 = vmatpush1.bf16.msra.mxu0 %v4583
      %4606 = vmatprep.subr.bf16.mxu0 0
      %4607 = vmatpush1.bf16.msra.mxu0 %v4584
      %4608 = vmatprep.subr.bf16.mxu0 0
      %4609 = vmatpush1.bf16.msra.mxu0 %v4585
      %4610 = vmatprep.subr.bf16.mxu0 0
      %4611 = vmatpush1.bf16.msra.mxu0 0
      %4612 = vmatprep.subr.bf16.mxu0 0
      %4613 = vmatpush1.bf16.msra.mxu0 0
      %4614 = vmatprep.subr.bf16.mxu0 0
      %4615 = vmatpush1.bf16.msra.mxu0 0
      %4616 = vmatprep.subr.bf16.mxu0 0
      %4617 = vmatpush1.bf16.msra.mxu0 0
      %4618 = vmatprep.subr.bf16.mxu0 0
      %4619 = vmatpush1.bf16.msra.mxu0 0
      %4620 = vmatprep.subr.bf16.mxu0 0
      %4621 = vmatpush1.bf16.msra.mxu0 0
      %4622 = vmatprep.subr.bf16.mxu0 0
      %4623 = vmatpush1.bf16.msra.mxu0 0
      %4624 = vmatprep.subr.bf16.mxu0 0
      %4625 = vmatpush1.bf16.msra.mxu0 0
      %4626 = vmatprep.subr.bf16.mxu0 0
      %4627 = vmatpush1.bf16.msra.mxu0 0
      %4628 = vmatprep.subr.bf16.mxu0 0
      %4629 = vmatpush1.bf16.msra.mxu0 0
      %4630 = vmatprep.subr.bf16.mxu0 0
      %4631 = vmatpush1.bf16.msra.mxu0 0
      %4632 = vmatprep.subr.bf16.mxu0 0
      %4633 = vmatpush1.bf16.msra.mxu0 0
      %4634 = vmatprep.mubr.bf16.mxu0 0
      %4635 = vmatmul.mubr.bf16.gmra.mrb[0].mxu0 %v4591
      %v4636 = vpop.f32.mrb[0].mxu0
      %v4637 = vadd.f32 %v4524, %v4636
      %v4638 = vpop.f32.mrb[0].mxu0
      %v4639 = vpop.f32.mrb[0].mxu0
      %v4640 = vadd.f32 %v4527, %v4639
      %v4641 = vpop.f32.mrb[0].mxu0
      %4642 = vmatprep.mubr.bf16.mxu0 0
      %4643 = vmatmul.mubr.bf16.gmra.mrb[0].mxu0 %v4594
      %v4644 = vpop.f32.mrb[0].mxu0
      %v4645 = vadd.f32 %v4532, %v4644
      %v4646 = vpop.f32.mrb[0].mxu0
      %v4647 = vpop.f32.mrb[0].mxu0
      %v4648 = vadd.f32 %v4535, %v4647
      %v4649 = vpop.f32.mrb[0].mxu0
      %4650 = vmatprep.mubr.bf16.mxu0 0
      %4651 = vmatmul.mubr.bf16.gmra.mrb[0].mxu0 %v4597
      %v4652 = vpop.f32.mrb[0].mxu0
      %v4653 = vadd.f32 %v4540, %v4652
      %v4654 = vpop.f32.mrb[0].mxu0
      %v4655 = vpop.f32.mrb[0].mxu0
      %v4656 = vadd.f32 %v4543, %v4655
      %v4657 = vpop.f32.mrb[0].mxu0
      %4658 = vmatprep.mubr.bf16.mxu0 0
      %4659 = vmatmul.mubr.bf16.gmra.mrb[0].mxu0 %v4600
      %v4660 = vpop.f32.mrb[0].mxu0
      %v4661 = vadd.f32 %v4548, %v4660
      %v4662 = vpop.f32.mrb[0].mxu0
      %v4663 = vpop.f32.mrb[0].mxu0
      %v4664 = vadd.f32 %v4551, %v4663
      %v4665 = vpop.f32.mrb[0].mxu0
      %4666 = vdwg.mxu0
      %v4667 = vld [vmem:[#allocation2 + $0x4] sm:$0xf]
      %v4668 = vld [vmem:[#allocation2 + $0x8] sm:$0x1]
      %v4669 = vld [vmem:[#allocation2 + $0x10] sm:$0xf]
      %v4670 = vld [vmem:[#allocation2 + $0x14] sm:$0x1]
      %v4671 = vld [vmem:[#allocation2 + $0x1c] sm:$0xf]
      %v4672 = vld [vmem:[#allocation2 + $0x20] sm:$0x1]
      %v4673 = vld [vmem:[#allocation2 + $0x28] sm:$0xf]
      %v4674 = vld [vmem:[#allocation2 + $0x2c] sm:$0x1]
      %v4675 = vld [vmem:[#allocation2 + $0x34] sm:$0xf]
      %v4676 = vld [vmem:[#allocation2 + $0x38] sm:$0x1]
      %v4677 = vld [vmem:[#allocation2 + $0x40] sm:$0xf]
      %v4678 = vld [vmem:[#allocation2 + $0x44] sm:$0x1]
      %v4679 = vld [vmem:[#allocation2 + $0x4c] sm:$0xf]
      %v4680 = vld [vmem:[#allocation2 + $0x50] sm:$0x1]
      %v4681 = vld [vmem:[#allocation2 + $0x58] sm:$0xf]
      %v4682 = vld [vmem:[#allocation2 + $0x5c] sm:$0x1]
      %v4684 = vshrl.u32 %v4667, 16
      %v4686 = vrot.slane %v4684, 4
      %v4687 = vshll.u32 %v4667, 16
      %v4689 = vrot.slane %v4687, 5
      %v4690 = vor.u32 %v4686, %v4689
      %v4691 = vrot.slane %v4690, 4
      %v4693 = vshll.u32 %v4668, 16
      %v4695 = vrot.slane %v4693, 5
      %v4696 = vsel %vm702, %v4691, %v4695
      %v4698 = vshrl.u32 %v4669, 16
      %v4700 = vrot.slane %v4698, 4
      %v4701 = vshll.u32 %v4669, 16
      %v4703 = vrot.slane %v4701, 5
      %v4704 = vor.u32 %v4700, %v4703
      %v4705 = vrot.slane %v4704, 4
      %v4707 = vshll.u32 %v4670, 16
      %v4709 = vrot.slane %v4707, 5
      %v4710 = vsel %vm702, %v4705, %v4709
      %v4712 = vshrl.u32 %v4671, 16
      %v4714 = vrot.slane %v4712, 4
      %v4715 = vshll.u32 %v4671, 16
      %v4717 = vrot.slane %v4715, 5
      %v4718 = vor.u32 %v4714, %v4717
      %v4719 = vrot.slane %v4718, 4
      %v4721 = vshll.u32 %v4672, 16
      %v4723 = vrot.slane %v4721, 5
      %v4724 = vsel %vm702, %v4719, %v4723
      %v4726 = vshrl.u32 %v4673, 16
      %v4728 = vrot.slane %v4726, 4
      %v4729 = vshll.u32 %v4673, 16
      %v4731 = vrot.slane %v4729, 5
      %v4732 = vor.u32 %v4728, %v4731
      %v4733 = vrot.slane %v4732, 4
      %v4735 = vshll.u32 %v4674, 16
      %v4737 = vrot.slane %v4735, 5
      %v4738 = vsel %vm702, %v4733, %v4737
      %v4740 = vshrl.u32 %v4675, 16
      %v4742 = vrot.slane %v4740, 4
      %v4743 = vshll.u32 %v4675, 16
      %v4745 = vrot.slane %v4743, 5
      %v4746 = vor.u32 %v4742, %v4745
      %v4747 = vrot.slane %v4746, 4
      %v4749 = vshll.u32 %v4676, 16
      %v4751 = vrot.slane %v4749, 5
      %v4752 = vsel %vm702, %v4747, %v4751
      %v4754 = vshrl.u32 %v4677, 16
      %v4756 = vrot.slane %v4754, 4
      %v4757 = vshll.u32 %v4677, 16
      %v4759 = vrot.slane %v4757, 5
      %v4760 = vor.u32 %v4756, %v4759
      %v4761 = vrot.slane %v4760, 4
      %v4763 = vshll.u32 %v4678, 16
      %v4765 = vrot.slane %v4763, 5
      %v4766 = vsel %vm702, %v4761, %v4765
      %v4768 = vshrl.u32 %v4679, 16
      %v4770 = vrot.slane %v4768, 4
      %v4771 = vshll.u32 %v4679, 16
      %v4773 = vrot.slane %v4771, 5
      %v4774 = vor.u32 %v4770, %v4773
      %v4775 = vrot.slane %v4774, 4
      %v4777 = vshll.u32 %v4680, 16
      %v4779 = vrot.slane %v4777, 5
      %v4780 = vsel %vm702, %v4775, %v4779
      %v4782 = vshrl.u32 %v4681, 16
      %v4784 = vrot.slane %v4782, 4
      %v4785 = vshll.u32 %v4681, 16
      %v4787 = vrot.slane %v4785, 5
      %v4788 = vor.u32 %v4784, %v4787
      %v4789 = vrot.slane %v4788, 4
      %v4791 = vshll.u32 %v4682, 16
      %v4793 = vrot.slane %v4791, 5
      %v4794 = vsel %vm702, %v4789, %v4793
      %s4795 = scalar_lea.vmem %s1, 640
      %v4796 = vld [vmem:[%s4795] sm:$0xf]
      %v4797 = vld [vmem:[%s4795 + $0x4] sm:$0xf]
      %v4798 = vld [vmem:[%s4795 + $0x8] sm:$0xf]
      %v4799 = vld [vmem:[%s4795 + $0xc] sm:$0xf]
      %v4800 = vld [vmem:[%s4795 + $0x10] sm:$0xf]
      %v4801 = vld [vmem:[%s4795 + $0x14] sm:$0xf]
      %v4802 = vld [vmem:[%s4795 + $0x18] sm:$0xf]
      %v4803 = vld [vmem:[%s4795 + $0x1c] sm:$0xf]
      %v4804 = vunpack.c.l.b16 %v4696
      %v4805 = vunpack.c.l.b16 %v4710
      %v4806 = vunpack.c.l.b16 %v4724
      %v4807 = vunpack.c.l.b16 %v4738
      %v4808 = vunpack.c.l.b16 %v4752
      %v4809 = vunpack.c.l.b16 %v4766
      %v4810 = vunpack.c.l.b16 %v4780
      %v4811 = vunpack.c.l.b16 %v4794
      %v4812 = vpack.c.b16 %v4805, %v4804
      %v4813 = vpack.c.b16 %v4807, %v4806
      %v4814 = vpack.c.b16 %v4809, %v4808
      %v4815 = vpack.c.b16 %v4811, %v4810
      %v4824 = vunpack.c.l.b16 %v4796
      %v4825 = vunpack.c.l.b16 %v4797
      %v4826 = vunpack.c.l.b16 %v4798
      %v4827 = vunpack.c.l.b16 %v4799
      %v4828 = vunpack.c.l.b16 %v4800
      %v4829 = vunpack.c.l.b16 %v4801
      %v4830 = vunpack.c.l.b16 %v4802
      %v4831 = vunpack.c.l.b16 %v4803
      %v4832 = vpack.c.b16 %v4825, %v4824
      %v4833 = vpack.c.b16 %v4827, %v4826
      %v4834 = vpack.c.b16 %v4829, %v4828
      %v4835 = vpack.c.b16 %v4831, %v4830
      %v4841 = vsel %vm493, %v4812, 0
      %v4844 = vsel %vm493, %v4813, 0
      %v4847 = vsel %vm493, %v4814, 0
      %v4850 = vsel %vm493, %v4815, 0
      %4852 = vmatprep.subr.bf16.mxu0 0
      %4853 = vmatpush1.bf16.msra.mxu0 %v4832
      %4854 = vmatprep.subr.bf16.mxu0 0
      %4855 = vmatpush1.bf16.msra.mxu0 %v4833
      %4856 = vmatprep.subr.bf16.mxu0 0
      %4857 = vmatpush1.bf16.msra.mxu0 %v4834
      %4858 = vmatprep.subr.bf16.mxu0 0
      %4859 = vmatpush1.bf16.msra.mxu0 %v4835
      %4860 = vmatprep.subr.bf16.mxu0 0
      %4861 = vmatpush1.bf16.msra.mxu0 0
      %4862 = vmatprep.subr.bf16.mxu0 0
      %4863 = vmatpush1.bf16.msra.mxu0 0
      %4864 = vmatprep.subr.bf16.mxu0 0
      %4865 = vmatpush1.bf16.msra.mxu0 0
      %4866 = vmatprep.subr.bf16.mxu0 0
      %4867 = vmatpush1.bf16.msra.mxu0 0
      %4868 = vmatprep.subr.bf16.mxu0 0
      %4869 = vmatpush1.bf16.msra.mxu0 0
      %4870 = vmatprep.subr.bf16.mxu0 0
      %4871 = vmatpush1.bf16.msra.mxu0 0
      %4872 = vmatprep.subr.bf16.mxu0 0
      %4873 = vmatpush1.bf16.msra.mxu0 0
      %4874 = vmatprep.subr.bf16.mxu0 0
      %4875 = vmatpush1.bf16.msra.mxu0 0
      %4876 = vmatprep.subr.bf16.mxu0 0
      %4877 = vmatpush1.bf16.msra.mxu0 0
      %4878 = vmatprep.subr.bf16.mxu0 0
      %4879 = vmatpush1.bf16.msra.mxu0 0
      %4880 = vmatprep.subr.bf16.mxu0 0
      %4881 = vmatpush1.bf16.msra.mxu0 0
      %4882 = vmatprep.subr.bf16.mxu0 0
      %4883 = vmatpush1.bf16.msra.mxu0 0
      %4884 = vmatprep.mubr.bf16.mxu0 0
      %4885 = vmatmul.mubr.bf16.gmra.mrb[0].mxu0 %v4841
      %v4886 = vpop.f32.mrb[0].mxu0
      %v4887 = vadd.f32 0.0, %v4886
      %v4888 = vpop.f32.mrb[0].mxu0
      %v4889 = vpop.f32.mrb[0].mxu0
      %v4890 = vadd.f32 0.0, %v4889
      %v4891 = vpop.f32.mrb[0].mxu0
      %4892 = vmatprep.mubr.bf16.mxu0 0
      %4893 = vmatmul.mubr.bf16.gmra.mrb[0].mxu0 %v4844
      %v4894 = vpop.f32.mrb[0].mxu0
      %v4895 = vadd.f32 0.0, %v4894
      %v4896 = vpop.f32.mrb[0].mxu0
      %v4897 = vpop.f32.mrb[0].mxu0
      %v4898 = vadd.f32 0.0, %v4897
      %v4899 = vpop.f32.mrb[0].mxu0
      %4900 = vmatprep.mubr.bf16.mxu0 0
      %4901 = vmatmul.mubr.bf16.gmra.mrb[0].mxu0 %v4847
      %v4902 = vpop.f32.mrb[0].mxu0
      %v4903 = vadd.f32 0.0, %v4902
      %v4904 = vpop.f32.mrb[0].mxu0
      %v4905 = vpop.f32.mrb[0].mxu0
      %v4906 = vadd.f32 0.0, %v4905
      %v4907 = vpop.f32.mrb[0].mxu0
      %4908 = vmatprep.mubr.bf16.mxu0 0
      %4909 = vmatmul.mubr.bf16.gmra.mrb[0].mxu0 %v4850
      %v4910 = vpop.f32.mrb[0].mxu0
      %v4911 = vadd.f32 0.0, %v4910
      %v4912 = vpop.f32.mrb[0].mxu0
      %v4913 = vpop.f32.mrb[0].mxu0
      %v4914 = vadd.f32 0.0, %v4913
      %v4915 = vpop.f32.mrb[0].mxu0
      %4916 = vdwg.mxu0
      %v4917 = vadd.f32 %v4637, %v4887
      %v4918 = vadd.f32 %v4640, %v4890
      %v4919 = vadd.f32 %v4645, %v4895
      %v4920 = vadd.f32 %v4648, %v4898
      %v4921 = vadd.f32 %v4653, %v4903
      %v4922 = vadd.f32 %v4656, %v4906
      %v4923 = vadd.f32 %v4661, %v4911
      %v4924 = vadd.f32 %v4664, %v4914
      %v4925 = vld [vmem:[%s300] sm:$0x8]
      %v4926 = vld [vmem:[%s300 + $0x4] sm:$0xf]
      %v4927 = vld [vmem:[%s300 + $0xc] sm:$0x8]
      %v4928 = vld [vmem:[%s300 + $0x10] sm:$0xf]
      %v4929 = vld [vmem:[%s300 + $0x18] sm:$0x8]
      %v4930 = vld [vmem:[%s300 + $0x1c] sm:$0xf]
      %v4931 = vld [vmem:[%s300 + $0x24] sm:$0x8]
      %v4932 = vld [vmem:[%s300 + $0x28] sm:$0xf]
      %v4933 = vld [vmem:[%s300 + $0x30] sm:$0x8]
      %v4934 = vld [vmem:[%s300 + $0x34] sm:$0xf]
      %v4935 = vld [vmem:[%s300 + $0x3c] sm:$0x8]
      %v4936 = vld [vmem:[%s300 + $0x40] sm:$0xf]
      %v4937 = vld [vmem:[%s300 + $0x48] sm:$0x8]
      %v4938 = vld [vmem:[%s300 + $0x4c] sm:$0xf]
      %v4939 = vld [vmem:[%s300 + $0x54] sm:$0x8]
      %v4940 = vld [vmem:[%s300 + $0x58] sm:$0xf]
      %v4942 = vshrl.u32 %v4925, 16
      %v4944 = vrot.slane %v4942, 7
      %v4945 = vrot.slane %v4944, 4
      %v4947 = vshrl.u32 %v4926, 16
      %v4949 = vrot.slane %v4947, 7
      %v4950 = vshll.u32 %v4926, 16
      %v4952 = vor.u32 %v4949, %v4950
      %v4953 = vsel %vm327, %v4945, %v4952
      %v4955 = vshrl.u32 %v4927, 16
      %v4957 = vrot.slane %v4955, 7
      %v4958 = vrot.slane %v4957, 4
      %v4960 = vshrl.u32 %v4928, 16
      %v4962 = vrot.slane %v4960, 7
      %v4963 = vshll.u32 %v4928, 16
      %v4965 = vor.u32 %v4962, %v4963
      %v4966 = vsel %vm327, %v4958, %v4965
      %v4968 = vshrl.u32 %v4929, 16
      %v4970 = vrot.slane %v4968, 7
      %v4971 = vrot.slane %v4970, 4
      %v4973 = vshrl.u32 %v4930, 16
      %v4975 = vrot.slane %v4973, 7
      %v4976 = vshll.u32 %v4930, 16
      %v4978 = vor.u32 %v4975, %v4976
      %v4979 = vsel %vm327, %v4971, %v4978
      %v4981 = vshrl.u32 %v4931, 16
      %v4983 = vrot.slane %v4981, 7
      %v4984 = vrot.slane %v4983, 4
      %v4986 = vshrl.u32 %v4932, 16
      %v4988 = vrot.slane %v4986, 7
      %v4989 = vshll.u32 %v4932, 16
      %v4991 = vor.u32 %v4988, %v4989
      %v4992 = vsel %vm327, %v4984, %v4991
      %v4994 = vshrl.u32 %v4933, 16
      %v4996 = vrot.slane %v4994, 7
      %v4997 = vrot.slane %v4996, 4
      %v4999 = vshrl.u32 %v4934, 16
      %v5001 = vrot.slane %v4999, 7
      %v5002 = vshll.u32 %v4934, 16
      %v5004 = vor.u32 %v5001, %v5002
      %v5005 = vsel %vm327, %v4997, %v5004
      %v5007 = vshrl.u32 %v4935, 16
      %v5009 = vrot.slane %v5007, 7
      %v5010 = vrot.slane %v5009, 4
      %v5012 = vshrl.u32 %v4936, 16
      %v5014 = vrot.slane %v5012, 7
      %v5015 = vshll.u32 %v4936, 16
      %v5017 = vor.u32 %v5014, %v5015
      %v5018 = vsel %vm327, %v5010, %v5017
      %v5020 = vshrl.u32 %v4937, 16
      %v5022 = vrot.slane %v5020, 7
      %v5023 = vrot.slane %v5022, 4
      %v5025 = vshrl.u32 %v4938, 16
      %v5027 = vrot.slane %v5025, 7
      %v5028 = vshll.u32 %v4938, 16
      %v5030 = vor.u32 %v5027, %v5028
      %v5031 = vsel %vm327, %v5023, %v5030
      %v5033 = vshrl.u32 %v4939, 16
      %v5035 = vrot.slane %v5033, 7
      %v5036 = vrot.slane %v5035, 4
      %v5038 = vshrl.u32 %v4940, 16
      %v5040 = vrot.slane %v5038, 7
      %v5041 = vshll.u32 %v4940, 16
      %v5043 = vor.u32 %v5040, %v5041
      %v5044 = vsel %vm327, %v5036, %v5043
      %s5045 = scalar_lea.vmem %s1, 672
      %v5046 = vld [vmem:[%s5045] sm:$0xf]
      %v5047 = vld [vmem:[%s5045 + $0x4] sm:$0xf]
      %v5048 = vld [vmem:[%s5045 + $0x8] sm:$0xf]
      %v5049 = vld [vmem:[%s5045 + $0xc] sm:$0xf]
      %v5050 = vld [vmem:[%s5045 + $0x10] sm:$0xf]
      %v5051 = vld [vmem:[%s5045 + $0x14] sm:$0xf]
      %v5052 = vld [vmem:[%s5045 + $0x18] sm:$0xf]
      %v5053 = vld [vmem:[%s5045 + $0x1c] sm:$0xf]
      %v5054 = vunpack.c.l.b16 %v4953
      %v5055 = vunpack.c.l.b16 %v4966
      %v5056 = vunpack.c.l.b16 %v4979
      %v5057 = vunpack.c.l.b16 %v4992
      %v5058 = vunpack.c.l.b16 %v5005
      %v5059 = vunpack.c.l.b16 %v5018
      %v5060 = vunpack.c.l.b16 %v5031
      %v5061 = vunpack.c.l.b16 %v5044
      %v5062 = vpack.c.b16 %v5055, %v5054
      %v5063 = vpack.c.b16 %v5057, %v5056
      %v5064 = vpack.c.b16 %v5059, %v5058
      %v5065 = vpack.c.b16 %v5061, %v5060
      %v5074 = vunpack.c.l.b16 %v5046
      %v5075 = vunpack.c.l.b16 %v5047
      %v5076 = vunpack.c.l.b16 %v5048
      %v5077 = vunpack.c.l.b16 %v5049
      %v5078 = vunpack.c.l.b16 %v5050
      %v5079 = vunpack.c.l.b16 %v5051
      %v5080 = vunpack.c.l.b16 %v5052
      %v5081 = vunpack.c.l.b16 %v5053
      %v5082 = vpack.c.b16 %v5075, %v5074
      %v5083 = vpack.c.b16 %v5077, %v5076
      %v5084 = vpack.c.b16 %v5079, %v5078
      %v5085 = vpack.c.b16 %v5081, %v5080
      %v5091 = vsel %vm493, %v5062, 0
      %v5094 = vsel %vm493, %v5063, 0
      %v5097 = vsel %vm493, %v5064, 0
      %v5100 = vsel %vm493, %v5065, 0
      %5102 = vmatprep.subr.bf16.mxu0 0
      %5103 = vmatpush1.bf16.msra.mxu0 %v5082
      %5104 = vmatprep.subr.bf16.mxu0 0
      %5105 = vmatpush1.bf16.msra.mxu0 %v5083
      %5106 = vmatprep.subr.bf16.mxu0 0
      %5107 = vmatpush1.bf16.msra.mxu0 %v5084
      %5108 = vmatprep.subr.bf16.mxu0 0
      %5109 = vmatpush1.bf16.msra.mxu0 %v5085
      %5110 = vmatprep.subr.bf16.mxu0 0
      %5111 = vmatpush1.bf16.msra.mxu0 0
      %5112 = vmatprep.subr.bf16.mxu0 0
      %5113 = vmatpush1.bf16.msra.mxu0 0
      %5114 = vmatprep.subr.bf16.mxu0 0
      %5115 = vmatpush1.bf16.msra.mxu0 0
      %5116 = vmatprep.subr.bf16.mxu0 0
      %5117 = vmatpush1.bf16.msra.mxu0 0
      %5118 = vmatprep.subr.bf16.mxu0 0
      %5119 = vmatpush1.bf16.msra.mxu0 0
      %5120 = vmatprep.subr.bf16.mxu0 0
      %5121 = vmatpush1.bf16.msra.mxu0 0
      %5122 = vmatprep.subr.bf16.mxu0 0
      %5123 = vmatpush1.bf16.msra.mxu0 0
      %5124 = vmatprep.subr.bf16.mxu0 0
      %5125 = vmatpush1.bf16.msra.mxu0 0
      %5126 = vmatprep.subr.bf16.mxu0 0
      %5127 = vmatpush1.bf16.msra.mxu0 0
      %5128 = vmatprep.subr.bf16.mxu0 0
      %5129 = vmatpush1.bf16.msra.mxu0 0
      %5130 = vmatprep.subr.bf16.mxu0 0
      %5131 = vmatpush1.bf16.msra.mxu0 0
      %5132 = vmatprep.subr.bf16.mxu0 0
      %5133 = vmatpush1.bf16.msra.mxu0 0
      %5134 = vmatprep.mubr.bf16.mxu0 0
      %5135 = vmatmul.mubr.bf16.gmra.mrb[0].mxu0 %v5091
      %v5136 = vpop.f32.mrb[0].mxu0
      %v5137 = vadd.f32 0.0, %v5136
      %v5138 = vpop.f32.mrb[0].mxu0
      %v5139 = vpop.f32.mrb[0].mxu0
      %v5140 = vadd.f32 0.0, %v5139
      %v5141 = vpop.f32.mrb[0].mxu0
      %5142 = vmatprep.mubr.bf16.mxu0 0
      %5143 = vmatmul.mubr.bf16.gmra.mrb[0].mxu0 %v5094
      %v5144 = vpop.f32.mrb[0].mxu0
      %v5145 = vadd.f32 0.0, %v5144
      %v5146 = vpop.f32.mrb[0].mxu0
      %v5147 = vpop.f32.mrb[0].mxu0
      %v5148 = vadd.f32 0.0, %v5147
      %v5149 = vpop.f32.mrb[0].mxu0
      %5150 = vmatprep.mubr.bf16.mxu0 0
      %5151 = vmatmul.mubr.bf16.gmra.mrb[0].mxu0 %v5097
      %v5152 = vpop.f32.mrb[0].mxu0
      %v5153 = vadd.f32 0.0, %v5152
      %v5154 = vpop.f32.mrb[0].mxu0
      %v5155 = vpop.f32.mrb[0].mxu0
      %v5156 = vadd.f32 0.0, %v5155
      %v5157 = vpop.f32.mrb[0].mxu0
      %5158 = vmatprep.mubr.bf16.mxu0 0
      %5159 = vmatmul.mubr.bf16.gmra.mrb[0].mxu0 %v5100
      %v5160 = vpop.f32.mrb[0].mxu0
      %v5161 = vadd.f32 0.0, %v5160
      %v5162 = vpop.f32.mrb[0].mxu0
      %v5163 = vpop.f32.mrb[0].mxu0
      %v5164 = vadd.f32 0.0, %v5163
      %v5165 = vpop.f32.mrb[0].mxu0
      %5166 = vdwg.mxu0
      %v5167 = vadd.f32 %v4917, %v5137
      %v5168 = vadd.f32 %v4918, %v5140
      %v5169 = vadd.f32 %v4919, %v5145
      %v5170 = vadd.f32 %v4920, %v5148
      %v5171 = vadd.f32 %v4921, %v5153
      %v5172 = vadd.f32 %v4922, %v5156
      %v5173 = vadd.f32 %v4923, %v5161
      %v5174 = vadd.f32 %v4924, %v5164
      %s5175 = scalar_lea.vmem %s1, 704
      %v5176 = vld [vmem:[%s5175] sm:$0xf]
      %v5177 = vld [vmem:[%s5175 + $0x4] sm:$0xf]
      %v5178 = vld [vmem:[%s5175 + $0x8] sm:$0xf]
      %v5179 = vld [vmem:[%s5175 + $0xc] sm:$0xf]
      %v5180 = vld [vmem:[%s5175 + $0x10] sm:$0xf]
      %v5181 = vld [vmem:[%s5175 + $0x14] sm:$0xf]
      %v5182 = vld [vmem:[%s5175 + $0x18] sm:$0xf]
      %v5183 = vld [vmem:[%s5175 + $0x1c] sm:$0xf]
      %v5192 = vunpack.c.l.b16 %v4926
      %v5193 = vunpack.c.l.b16 %v4928
      %v5194 = vunpack.c.l.b16 %v4930
      %v5195 = vunpack.c.l.b16 %v4932
      %v5196 = vunpack.c.l.b16 %v4934
      %v5197 = vunpack.c.l.b16 %v4936
      %v5198 = vunpack.c.l.b16 %v4938
      %v5199 = vunpack.c.l.b16 %v4940
      %v5200 = vpack.c.b16 %v5193, %v5192
      %v5201 = vpack.c.b16 %v5195, %v5194
      %v5202 = vpack.c.b16 %v5197, %v5196
      %v5203 = vpack.c.b16 %v5199, %v5198
      %v5212 = vunpack.c.l.b16 %v5176
      %v5213 = vunpack.c.l.b16 %v5177
      %v5214 = vunpack.c.l.b16 %v5178
      %v5215 = vunpack.c.l.b16 %v5179
      %v5216 = vunpack.c.l.b16 %v5180
      %v5217 = vunpack.c.l.b16 %v5181
      %v5218 = vunpack.c.l.b16 %v5182
      %v5219 = vunpack.c.l.b16 %v5183
      %v5220 = vpack.c.b16 %v5213, %v5212
      %v5221 = vpack.c.b16 %v5215, %v5214
      %v5222 = vpack.c.b16 %v5217, %v5216
      %v5223 = vpack.c.b16 %v5219, %v5218
      %v5229 = vsel %vm493, %v5200, 0
      %v5232 = vsel %vm493, %v5201, 0
      %v5235 = vsel %vm493, %v5202, 0
      %v5238 = vsel %vm493, %v5203, 0
      %5240 = vmatprep.subr.bf16.mxu0 0
      %5241 = vmatpush1.bf16.msra.mxu0 %v5220
      %5242 = vmatprep.subr.bf16.mxu0 0
      %5243 = vmatpush1.bf16.msra.mxu0 %v5221
      %5244 = vmatprep.subr.bf16.mxu0 0
      %5245 = vmatpush1.bf16.msra.mxu0 %v5222
      %5246 = vmatprep.subr.bf16.mxu0 0
      %5247 = vmatpush1.bf16.msra.mxu0 %v5223
      %5248 = vmatprep.subr.bf16.mxu0 0
      %5249 = vmatpush1.bf16.msra.mxu0 0
      %5250 = vmatprep.subr.bf16.mxu0 0
      %5251 = vmatpush1.bf16.msra.mxu0 0
      %5252 = vmatprep.subr.bf16.mxu0 0
      %5253 = vmatpush1.bf16.msra.mxu0 0
      %5254 = vmatprep.subr.bf16.mxu0 0
      %5255 = vmatpush1.bf16.msra.mxu0 0
      %5256 = vmatprep.subr.bf16.mxu0 0
      %5257 = vmatpush1.bf16.msra.mxu0 0
      %5258 = vmatprep.subr.bf16.mxu0 0
      %5259 = vmatpush1.bf16.msra.mxu0 0
      %5260 = vmatprep.subr.bf16.mxu0 0
      %5261 = vmatpush1.bf16.msra.mxu0 0
      %5262 = vmatprep.subr.bf16.mxu0 0
      %5263 = vmatpush1.bf16.msra.mxu0 0
      %5264 = vmatprep.subr.bf16.mxu0 0
      %5265 = vmatpush1.bf16.msra.mxu0 0
      %5266 = vmatprep.subr.bf16.mxu0 0
      %5267 = vmatpush1.bf16.msra.mxu0 0
      %5268 = vmatprep.subr.bf16.mxu0 0
      %5269 = vmatpush1.bf16.msra.mxu0 0
      %5270 = vmatprep.subr.bf16.mxu0 0
      %5271 = vmatpush1.bf16.msra.mxu0 0
      %5272 = vmatprep.mubr.bf16.mxu0 0
      %5273 = vmatmul.mubr.bf16.gmra.mrb[0].mxu0 %v5229
      %v5274 = vpop.f32.mrb[0].mxu0
      %v5275 = vadd.f32 0.0, %v5274
      %v5276 = vpop.f32.mrb[0].mxu0
      %v5277 = vpop.f32.mrb[0].mxu0
      %v5278 = vadd.f32 0.0, %v5277
      %v5279 = vpop.f32.mrb[0].mxu0
      %5280 = vmatprep.mubr.bf16.mxu0 0
      %5281 = vmatmul.mubr.bf16.gmra.mrb[0].mxu0 %v5232
      %v5282 = vpop.f32.mrb[0].mxu0
      %v5283 = vadd.f32 0.0, %v5282
      %v5284 = vpop.f32.mrb[0].mxu0
      %v5285 = vpop.f32.mrb[0].mxu0
      %v5286 = vadd.f32 0.0, %v5285
      %v5287 = vpop.f32.mrb[0].mxu0
      %5288 = vmatprep.mubr.bf16.mxu0 0
      %5289 = vmatmul.mubr.bf16.gmra.mrb[0].mxu0 %v5235
      %v5290 = vpop.f32.mrb[0].mxu0
      %v5291 = vadd.f32 0.0, %v5290
      %v5292 = vpop.f32.mrb[0].mxu0
      %v5293 = vpop.f32.mrb[0].mxu0
      %v5294 = vadd.f32 0.0, %v5293
      %v5295 = vpop.f32.mrb[0].mxu0
      %5296 = vmatprep.mubr.bf16.mxu0 0
      %5297 = vmatmul.mubr.bf16.gmra.mrb[0].mxu0 %v5238
      %v5298 = vpop.f32.mrb[0].mxu0
      %v5299 = vadd.f32 0.0, %v5298
      %v5300 = vpop.f32.mrb[0].mxu0
      %v5301 = vpop.f32.mrb[0].mxu0
      %v5302 = vadd.f32 0.0, %v5301
      %v5303 = vpop.f32.mrb[0].mxu0
      %5304 = vdwg.mxu0
      %v5305 = vadd.f32 %v5167, %v5275
      %v5306 = vadd.f32 %v5168, %v5278
      %v5307 = vadd.f32 %v5169, %v5283
      %v5308 = vadd.f32 %v5170, %v5286
      %v5309 = vadd.f32 %v5171, %v5291
      %v5310 = vadd.f32 %v5172, %v5294
      %v5311 = vadd.f32 %v5173, %v5299
      %v5312 = vadd.f32 %v5174, %v5302
      %v5313 = vld [vmem:[%s300 + $0x4] sm:$0xf]
      %v5314 = vld [vmem:[%s300 + $0x8] sm:$0x1]
      %v5315 = vld [vmem:[%s300 + $0x10] sm:$0xf]
      %v5316 = vld [vmem:[%s300 + $0x14] sm:$0x1]
      %v5317 = vld [vmem:[%s300 + $0x1c] sm:$0xf]
      %v5318 = vld [vmem:[%s300 + $0x20] sm:$0x1]
      %v5319 = vld [vmem:[%s300 + $0x28] sm:$0xf]
      %v5320 = vld [vmem:[%s300 + $0x2c] sm:$0x1]
      %v5321 = vld [vmem:[%s300 + $0x34] sm:$0xf]
      %v5322 = vld [vmem:[%s300 + $0x38] sm:$0x1]
      %v5323 = vld [vmem:[%s300 + $0x40] sm:$0xf]
      %v5324 = vld [vmem:[%s300 + $0x44] sm:$0x1]
      %v5325 = vld [vmem:[%s300 + $0x4c] sm:$0xf]
      %v5326 = vld [vmem:[%s300 + $0x50] sm:$0x1]
      %v5327 = vld [vmem:[%s300 + $0x58] sm:$0xf]
      %v5328 = vld [vmem:[%s300 + $0x5c] sm:$0x1]
      %v5330 = vshrl.u32 %v5313, 16
      %v5332 = vrot.slane %v5330, 4
      %v5333 = vshll.u32 %v5313, 16
      %v5335 = vrot.slane %v5333, 5
      %v5336 = vor.u32 %v5332, %v5335
      %v5337 = vrot.slane %v5336, 4
      %v5339 = vshll.u32 %v5314, 16
      %v5341 = vrot.slane %v5339, 5
      %v5342 = vsel %vm702, %v5337, %v5341
      %v5344 = vshrl.u32 %v5315, 16
      %v5346 = vrot.slane %v5344, 4
      %v5347 = vshll.u32 %v5315, 16
      %v5349 = vrot.slane %v5347, 5
      %v5350 = vor.u32 %v5346, %v5349
      %v5351 = vrot.slane %v5350, 4
      %v5353 = vshll.u32 %v5316, 16
      %v5355 = vrot.slane %v5353, 5
      %v5356 = vsel %vm702, %v5351, %v5355
      %v5358 = vshrl.u32 %v5317, 16
      %v5360 = vrot.slane %v5358, 4
      %v5361 = vshll.u32 %v5317, 16
      %v5363 = vrot.slane %v5361, 5
      %v5364 = vor.u32 %v5360, %v5363
      %v5365 = vrot.slane %v5364, 4
      %v5367 = vshll.u32 %v5318, 16
      %v5369 = vrot.slane %v5367, 5
      %v5370 = vsel %vm702, %v5365, %v5369
      %v5372 = vshrl.u32 %v5319, 16
      %v5374 = vrot.slane %v5372, 4
      %v5375 = vshll.u32 %v5319, 16
      %v5377 = vrot.slane %v5375, 5
      %v5378 = vor.u32 %v5374, %v5377
      %v5379 = vrot.slane %v5378, 4
      %v5381 = vshll.u32 %v5320, 16
      %v5383 = vrot.slane %v5381, 5
      %v5384 = vsel %vm702, %v5379, %v5383
      %v5386 = vshrl.u32 %v5321, 16
      %v5388 = vrot.slane %v5386, 4
      %v5389 = vshll.u32 %v5321, 16
      %v5391 = vrot.slane %v5389, 5
      %v5392 = vor.u32 %v5388, %v5391
      %v5393 = vrot.slane %v5392, 4
      %v5395 = vshll.u32 %v5322, 16
      %v5397 = vrot.slane %v5395, 5
      %v5398 = vsel %vm702, %v5393, %v5397
      %v5400 = vshrl.u32 %v5323, 16
      %v5402 = vrot.slane %v5400, 4
      %v5403 = vshll.u32 %v5323, 16
      %v5405 = vrot.slane %v5403, 5
      %v5406 = vor.u32 %v5402, %v5405
      %v5407 = vrot.slane %v5406, 4
      %v5409 = vshll.u32 %v5324, 16
      %v5411 = vrot.slane %v5409, 5
      %v5412 = vsel %vm702, %v5407, %v5411
      %v5414 = vshrl.u32 %v5325, 16
      %v5416 = vrot.slane %v5414, 4
      %v5417 = vshll.u32 %v5325, 16
      %v5419 = vrot.slane %v5417, 5
      %v5420 = vor.u32 %v5416, %v5419
      %v5421 = vrot.slane %v5420, 4
      %v5423 = vshll.u32 %v5326, 16
      %v5425 = vrot.slane %v5423, 5
      %v5426 = vsel %vm702, %v5421, %v5425
      %v5428 = vshrl.u32 %v5327, 16
      %v5430 = vrot.slane %v5428, 4
      %v5431 = vshll.u32 %v5327, 16
      %v5433 = vrot.slane %v5431, 5
      %v5434 = vor.u32 %v5430, %v5433
      %v5435 = vrot.slane %v5434, 4
      %v5437 = vshll.u32 %v5328, 16
      %v5439 = vrot.slane %v5437, 5
      %v5440 = vsel %vm702, %v5435, %v5439
      %s5441 = scalar_lea.vmem %s1, 736
      %v5442 = vld [vmem:[%s5441] sm:$0xf]
      %v5443 = vld [vmem:[%s5441 + $0x4] sm:$0xf]
      %v5444 = vld [vmem:[%s5441 + $0x8] sm:$0xf]
      %v5445 = vld [vmem:[%s5441 + $0xc] sm:$0xf]
      %v5446 = vld [vmem:[%s5441 + $0x10] sm:$0xf]
      %v5447 = vld [vmem:[%s5441 + $0x14] sm:$0xf]
      %v5448 = vld [vmem:[%s5441 + $0x18] sm:$0xf]
      %v5449 = vld [vmem:[%s5441 + $0x1c] sm:$0xf]
      %v5450 = vunpack.c.l.b16 %v5342
      %v5451 = vunpack.c.l.b16 %v5356
      %v5452 = vunpack.c.l.b16 %v5370
      %v5453 = vunpack.c.l.b16 %v5384
      %v5454 = vunpack.c.l.b16 %v5398
      %v5455 = vunpack.c.l.b16 %v5412
      %v5456 = vunpack.c.l.b16 %v5426
      %v5457 = vunpack.c.l.b16 %v5440
      %v5458 = vpack.c.b16 %v5451, %v5450
      %v5459 = vpack.c.b16 %v5453, %v5452
      %v5460 = vpack.c.b16 %v5455, %v5454
      %v5461 = vpack.c.b16 %v5457, %v5456
      %v5470 = vunpack.c.l.b16 %v5442
      %v5471 = vunpack.c.l.b16 %v5443
      %v5472 = vunpack.c.l.b16 %v5444
      %v5473 = vunpack.c.l.b16 %v5445
      %v5474 = vunpack.c.l.b16 %v5446
      %v5475 = vunpack.c.l.b16 %v5447
      %v5476 = vunpack.c.l.b16 %v5448
      %v5477 = vunpack.c.l.b16 %v5449
      %v5478 = vpack.c.b16 %v5471, %v5470
      %v5479 = vpack.c.b16 %v5473, %v5472
      %v5480 = vpack.c.b16 %v5475, %v5474
      %v5481 = vpack.c.b16 %v5477, %v5476
      %v5487 = vsel %vm493, %v5458, 0
      %v5490 = vsel %vm493, %v5459, 0
      %v5493 = vsel %vm493, %v5460, 0
      %v5496 = vsel %vm493, %v5461, 0
      %5498 = vmatprep.subr.bf16.mxu0 0
      %5499 = vmatpush1.bf16.msra.mxu0 %v5478
      %5500 = vmatprep.subr.bf16.mxu0 0
      %5501 = vmatpush1.bf16.msra.mxu0 %v5479
      %5502 = vmatprep.subr.bf16.mxu0 0
      %5503 = vmatpush1.bf16.msra.mxu0 %v5480
      %5504 = vmatprep.subr.bf16.mxu0 0
      %5505 = vmatpush1.bf16.msra.mxu0 %v5481
      %5506 = vmatprep.subr.bf16.mxu0 0
      %5507 = vmatpush1.bf16.msra.mxu0 0
      %5508 = vmatprep.subr.bf16.mxu0 0
      %5509 = vmatpush1.bf16.msra.mxu0 0
      %5510 = vmatprep.subr.bf16.mxu0 0
      %5511 = vmatpush1.bf16.msra.mxu0 0
      %5512 = vmatprep.subr.bf16.mxu0 0
      %5513 = vmatpush1.bf16.msra.mxu0 0
      %5514 = vmatprep.subr.bf16.mxu0 0
      %5515 = vmatpush1.bf16.msra.mxu0 0
      %5516 = vmatprep.subr.bf16.mxu0 0
      %5517 = vmatpush1.bf16.msra.mxu0 0
      %5518 = vmatprep.subr.bf16.mxu0 0
      %5519 = vmatpush1.bf16.msra.mxu0 0
      %5520 = vmatprep.subr.bf16.mxu0 0
      %5521 = vmatpush1.bf16.msra.mxu0 0
      %5522 = vmatprep.subr.bf16.mxu0 0
      %5523 = vmatpush1.bf16.msra.mxu0 0
      %5524 = vmatprep.subr.bf16.mxu0 0
      %5525 = vmatpush1.bf16.msra.mxu0 0
      %5526 = vmatprep.subr.bf16.mxu0 0
      %5527 = vmatpush1.bf16.msra.mxu0 0
      %5528 = vmatprep.subr.bf16.mxu0 0
      %5529 = vmatpush1.bf16.msra.mxu0 0
      %5530 = vmatprep.mubr.bf16.mxu0 0
      %5531 = vmatmul.mubr.bf16.gmra.mrb[0].mxu0 %v5487
      %v5532 = vpop.f32.mrb[0].mxu0
      %v5533 = vadd.f32 0.0, %v5532
      %v5534 = vpop.f32.mrb[0].mxu0
      %v5535 = vpop.f32.mrb[0].mxu0
      %v5536 = vadd.f32 0.0, %v5535
      %v5537 = vpop.f32.mrb[0].mxu0
      %5538 = vmatprep.mubr.bf16.mxu0 0
      %5539 = vmatmul.mubr.bf16.gmra.mrb[0].mxu0 %v5490
      %v5540 = vpop.f32.mrb[0].mxu0
      %v5541 = vadd.f32 0.0, %v5540
      %v5542 = vpop.f32.mrb[0].mxu0
      %v5543 = vpop.f32.mrb[0].mxu0
      %v5544 = vadd.f32 0.0, %v5543
      %v5545 = vpop.f32.mrb[0].mxu0
      %5546 = vmatprep.mubr.bf16.mxu0 0
      %5547 = vmatmul.mubr.bf16.gmra.mrb[0].mxu0 %v5493
      %v5548 = vpop.f32.mrb[0].mxu0
      %v5549 = vadd.f32 0.0, %v5548
      %v5550 = vpop.f32.mrb[0].mxu0
      %v5551 = vpop.f32.mrb[0].mxu0
      %v5552 = vadd.f32 0.0, %v5551
      %v5553 = vpop.f32.mrb[0].mxu0
      %5554 = vmatprep.mubr.bf16.mxu0 0
      %5555 = vmatmul.mubr.bf16.gmra.mrb[0].mxu0 %v5496
      %v5556 = vpop.f32.mrb[0].mxu0
      %v5557 = vadd.f32 0.0, %v5556
      %v5558 = vpop.f32.mrb[0].mxu0
      %v5559 = vpop.f32.mrb[0].mxu0
      %v5560 = vadd.f32 0.0, %v5559
      %v5561 = vpop.f32.mrb[0].mxu0
      %5562 = vdwg.mxu0
      %v5563 = vadd.f32 %v5305, %v5533
      %v5564 = vadd.f32 %v5306, %v5536
      %v5565 = vadd.f32 %v5307, %v5541
      %v5566 = vadd.f32 %v5308, %v5544
      %v5567 = vadd.f32 %v5309, %v5549
      %v5568 = vadd.f32 %v5310, %v5552
      %v5569 = vadd.f32 %v5311, %v5557
      %v5570 = vadd.f32 %v5312, %v5560
      %v5571 = vld [vmem:[%s1591] sm:$0x8]
      %v5572 = vld [vmem:[%s1591 + $0x4] sm:$0xf]
      %v5573 = vld [vmem:[%s1591 + $0xc] sm:$0x8]
      %v5574 = vld [vmem:[%s1591 + $0x10] sm:$0xf]
      %v5575 = vld [vmem:[%s1591 + $0x18] sm:$0x8]
      %v5576 = vld [vmem:[%s1591 + $0x1c] sm:$0xf]
      %v5577 = vld [vmem:[%s1591 + $0x24] sm:$0x8]
      %v5578 = vld [vmem:[%s1591 + $0x28] sm:$0xf]
      %v5579 = vld [vmem:[%s1591 + $0x30] sm:$0x8]
      %v5580 = vld [vmem:[%s1591 + $0x34] sm:$0xf]
      %v5581 = vld [vmem:[%s1591 + $0x3c] sm:$0x8]
      %v5582 = vld [vmem:[%s1591 + $0x40] sm:$0xf]
      %v5583 = vld [vmem:[%s1591 + $0x48] sm:$0x8]
      %v5584 = vld [vmem:[%s1591 + $0x4c] sm:$0xf]
      %v5585 = vld [vmem:[%s1591 + $0x54] sm:$0x8]
      %v5586 = vld [vmem:[%s1591 + $0x58] sm:$0xf]
      %v5588 = vshrl.u32 %v5571, 16
      %v5590 = vrot.slane %v5588, 7
      %v5591 = vrot.slane %v5590, 4
      %v5593 = vshrl.u32 %v5572, 16
      %v5595 = vrot.slane %v5593, 7
      %v5596 = vshll.u32 %v5572, 16
      %v5598 = vor.u32 %v5595, %v5596
      %v5599 = vsel %vm327, %v5591, %v5598
      %v5601 = vshrl.u32 %v5573, 16
      %v5603 = vrot.slane %v5601, 7
      %v5604 = vrot.slane %v5603, 4
      %v5606 = vshrl.u32 %v5574, 16
      %v5608 = vrot.slane %v5606, 7
      %v5609 = vshll.u32 %v5574, 16
      %v5611 = vor.u32 %v5608, %v5609
      %v5612 = vsel %vm327, %v5604, %v5611
      %v5614 = vshrl.u32 %v5575, 16
      %v5616 = vrot.slane %v5614, 7
      %v5617 = vrot.slane %v5616, 4
      %v5619 = vshrl.u32 %v5576, 16
      %v5621 = vrot.slane %v5619, 7
      %v5622 = vshll.u32 %v5576, 16
      %v5624 = vor.u32 %v5621, %v5622
      %v5625 = vsel %vm327, %v5617, %v5624
      %v5627 = vshrl.u32 %v5577, 16
      %v5629 = vrot.slane %v5627, 7
      %v5630 = vrot.slane %v5629, 4
      %v5632 = vshrl.u32 %v5578, 16
      %v5634 = vrot.slane %v5632, 7
      %v5635 = vshll.u32 %v5578, 16
      %v5637 = vor.u32 %v5634, %v5635
      %v5638 = vsel %vm327, %v5630, %v5637
      %v5640 = vshrl.u32 %v5579, 16
      %v5642 = vrot.slane %v5640, 7
      %v5643 = vrot.slane %v5642, 4
      %v5645 = vshrl.u32 %v5580, 16
      %v5647 = vrot.slane %v5645, 7
      %v5648 = vshll.u32 %v5580, 16
      %v5650 = vor.u32 %v5647, %v5648
      %v5651 = vsel %vm327, %v5643, %v5650
      %v5653 = vshrl.u32 %v5581, 16
      %v5655 = vrot.slane %v5653, 7
      %v5656 = vrot.slane %v5655, 4
      %v5658 = vshrl.u32 %v5582, 16
      %v5660 = vrot.slane %v5658, 7
      %v5661 = vshll.u32 %v5582, 16
      %v5663 = vor.u32 %v5660, %v5661
      %v5664 = vsel %vm327, %v5656, %v5663
      %v5666 = vshrl.u32 %v5583, 16
      %v5668 = vrot.slane %v5666, 7
      %v5669 = vrot.slane %v5668, 4
      %v5671 = vshrl.u32 %v5584, 16
      %v5673 = vrot.slane %v5671, 7
      %v5674 = vshll.u32 %v5584, 16
      %v5676 = vor.u32 %v5673, %v5674
      %v5677 = vsel %vm327, %v5669, %v5676
      %v5679 = vshrl.u32 %v5585, 16
      %v5681 = vrot.slane %v5679, 7
      %v5682 = vrot.slane %v5681, 4
      %v5684 = vshrl.u32 %v5586, 16
      %v5686 = vrot.slane %v5684, 7
      %v5687 = vshll.u32 %v5586, 16
      %v5689 = vor.u32 %v5686, %v5687
      %v5690 = vsel %vm327, %v5682, %v5689
      %s5691 = scalar_lea.vmem %s1, 768
      %v5692 = vld [vmem:[%s5691] sm:$0xf]
      %v5693 = vld [vmem:[%s5691 + $0x4] sm:$0xf]
      %v5694 = vld [vmem:[%s5691 + $0x8] sm:$0xf]
      %v5695 = vld [vmem:[%s5691 + $0xc] sm:$0xf]
      %v5696 = vld [vmem:[%s5691 + $0x10] sm:$0xf]
      %v5697 = vld [vmem:[%s5691 + $0x14] sm:$0xf]
      %v5698 = vld [vmem:[%s5691 + $0x18] sm:$0xf]
      %v5699 = vld [vmem:[%s5691 + $0x1c] sm:$0xf]
      %v5700 = vunpack.c.l.b16 %v5599
      %v5701 = vunpack.c.l.b16 %v5612
      %v5702 = vunpack.c.l.b16 %v5625
      %v5703 = vunpack.c.l.b16 %v5638
      %v5704 = vunpack.c.l.b16 %v5651
      %v5705 = vunpack.c.l.b16 %v5664
      %v5706 = vunpack.c.l.b16 %v5677
      %v5707 = vunpack.c.l.b16 %v5690
      %v5708 = vpack.c.b16 %v5701, %v5700
      %v5709 = vpack.c.b16 %v5703, %v5702
      %v5710 = vpack.c.b16 %v5705, %v5704
      %v5711 = vpack.c.b16 %v5707, %v5706
      %v5720 = vunpack.c.l.b16 %v5692
      %v5721 = vunpack.c.l.b16 %v5693
      %v5722 = vunpack.c.l.b16 %v5694
      %v5723 = vunpack.c.l.b16 %v5695
      %v5724 = vunpack.c.l.b16 %v5696
      %v5725 = vunpack.c.l.b16 %v5697
      %v5726 = vunpack.c.l.b16 %v5698
      %v5727 = vunpack.c.l.b16 %v5699
      %v5728 = vpack.c.b16 %v5721, %v5720
      %v5729 = vpack.c.b16 %v5723, %v5722
      %v5730 = vpack.c.b16 %v5725, %v5724
      %v5731 = vpack.c.b16 %v5727, %v5726
      %v5737 = vsel %vm493, %v5708, 0
      %v5740 = vsel %vm493, %v5709, 0
      %v5743 = vsel %vm493, %v5710, 0
      %v5746 = vsel %vm493, %v5711, 0
      %5748 = vmatprep.subr.bf16.mxu0 0
      %5749 = vmatpush1.bf16.msra.mxu0 %v5728
      %5750 = vmatprep.subr.bf16.mxu0 0
      %5751 = vmatpush1.bf16.msra.mxu0 %v5729
      %5752 = vmatprep.subr.bf16.mxu0 0
      %5753 = vmatpush1.bf16.msra.mxu0 %v5730
      %5754 = vmatprep.subr.bf16.mxu0 0
      %5755 = vmatpush1.bf16.msra.mxu0 %v5731
      %5756 = vmatprep.subr.bf16.mxu0 0
      %5757 = vmatpush1.bf16.msra.mxu0 0
      %5758 = vmatprep.subr.bf16.mxu0 0
      %5759 = vmatpush1.bf16.msra.mxu0 0
      %5760 = vmatprep.subr.bf16.mxu0 0
      %5761 = vmatpush1.bf16.msra.mxu0 0
      %5762 = vmatprep.subr.bf16.mxu0 0
      %5763 = vmatpush1.bf16.msra.mxu0 0
      %5764 = vmatprep.subr.bf16.mxu0 0
      %5765 = vmatpush1.bf16.msra.mxu0 0
      %5766 = vmatprep.subr.bf16.mxu0 0
      %5767 = vmatpush1.bf16.msra.mxu0 0
      %5768 = vmatprep.subr.bf16.mxu0 0
      %5769 = vmatpush1.bf16.msra.mxu0 0
      %5770 = vmatprep.subr.bf16.mxu0 0
      %5771 = vmatpush1.bf16.msra.mxu0 0
      %5772 = vmatprep.subr.bf16.mxu0 0
      %5773 = vmatpush1.bf16.msra.mxu0 0
      %5774 = vmatprep.subr.bf16.mxu0 0
      %5775 = vmatpush1.bf16.msra.mxu0 0
      %5776 = vmatprep.subr.bf16.mxu0 0
      %5777 = vmatpush1.bf16.msra.mxu0 0
      %5778 = vmatprep.subr.bf16.mxu0 0
      %5779 = vmatpush1.bf16.msra.mxu0 0
      %5780 = vmatprep.mubr.bf16.mxu0 0
      %5781 = vmatmul.mubr.bf16.gmra.mrb[0].mxu0 %v5737
      %v5782 = vpop.f32.mrb[0].mxu0
      %v5783 = vadd.f32 0.0, %v5782
      %v5784 = vpop.f32.mrb[0].mxu0
      %v5785 = vpop.f32.mrb[0].mxu0
      %v5786 = vadd.f32 0.0, %v5785
      %v5787 = vpop.f32.mrb[0].mxu0
      %5788 = vmatprep.mubr.bf16.mxu0 0
      %5789 = vmatmul.mubr.bf16.gmra.mrb[0].mxu0 %v5740
      %v5790 = vpop.f32.mrb[0].mxu0
      %v5791 = vadd.f32 0.0, %v5790
      %v5792 = vpop.f32.mrb[0].mxu0
      %v5793 = vpop.f32.mrb[0].mxu0
      %v5794 = vadd.f32 0.0, %v5793
      %v5795 = vpop.f32.mrb[0].mxu0
      %5796 = vmatprep.mubr.bf16.mxu0 0
      %5797 = vmatmul.mubr.bf16.gmra.mrb[0].mxu0 %v5743
      %v5798 = vpop.f32.mrb[0].mxu0
      %v5799 = vadd.f32 0.0, %v5798
      %v5800 = vpop.f32.mrb[0].mxu0
      %v5801 = vpop.f32.mrb[0].mxu0
      %v5802 = vadd.f32 0.0, %v5801
      %v5803 = vpop.f32.mrb[0].mxu0
      %5804 = vmatprep.mubr.bf16.mxu0 0
      %5805 = vmatmul.mubr.bf16.gmra.mrb[0].mxu0 %v5746
      %v5806 = vpop.f32.mrb[0].mxu0
      %v5807 = vadd.f32 0.0, %v5806
      %v5808 = vpop.f32.mrb[0].mxu0
      %v5809 = vpop.f32.mrb[0].mxu0
      %v5810 = vadd.f32 0.0, %v5809
      %v5811 = vpop.f32.mrb[0].mxu0
      %5812 = vdwg.mxu0
      %v5813 = vadd.f32 %v5563, %v5783
      %v5814 = vadd.f32 %v5564, %v5786
      %v5815 = vadd.f32 %v5565, %v5791
      %v5816 = vadd.f32 %v5566, %v5794
      %v5817 = vadd.f32 %v5567, %v5799
      %v5818 = vadd.f32 %v5568, %v5802
      %v5819 = vadd.f32 %v5569, %v5807
      %v5820 = vadd.f32 %v5570, %v5810
      %s5821 = scalar_lea.vmem %s1, 800
      %v5822 = vld [vmem:[%s5821] sm:$0xf]
      %v5823 = vld [vmem:[%s5821 + $0x4] sm:$0xf]
      %v5824 = vld [vmem:[%s5821 + $0x8] sm:$0xf]
      %v5825 = vld [vmem:[%s5821 + $0xc] sm:$0xf]
      %v5826 = vld [vmem:[%s5821 + $0x10] sm:$0xf]
      %v5827 = vld [vmem:[%s5821 + $0x14] sm:$0xf]
      %v5828 = vld [vmem:[%s5821 + $0x18] sm:$0xf]
      %v5829 = vld [vmem:[%s5821 + $0x1c] sm:$0xf]
      %v5838 = vunpack.c.l.b16 %v5572
      %v5839 = vunpack.c.l.b16 %v5574
      %v5840 = vunpack.c.l.b16 %v5576
      %v5841 = vunpack.c.l.b16 %v5578
      %v5842 = vunpack.c.l.b16 %v5580
      %v5843 = vunpack.c.l.b16 %v5582
      %v5844 = vunpack.c.l.b16 %v5584
      %v5845 = vunpack.c.l.b16 %v5586
      %v5846 = vpack.c.b16 %v5839, %v5838
      %v5847 = vpack.c.b16 %v5841, %v5840
      %v5848 = vpack.c.b16 %v5843, %v5842
      %v5849 = vpack.c.b16 %v5845, %v5844
      %v5858 = vunpack.c.l.b16 %v5822
      %v5859 = vunpack.c.l.b16 %v5823
      %v5860 = vunpack.c.l.b16 %v5824
      %v5861 = vunpack.c.l.b16 %v5825
      %v5862 = vunpack.c.l.b16 %v5826
      %v5863 = vunpack.c.l.b16 %v5827
      %v5864 = vunpack.c.l.b16 %v5828
      %v5865 = vunpack.c.l.b16 %v5829
      %v5866 = vpack.c.b16 %v5859, %v5858
      %v5867 = vpack.c.b16 %v5861, %v5860
      %v5868 = vpack.c.b16 %v5863, %v5862
      %v5869 = vpack.c.b16 %v5865, %v5864
      %v5875 = vsel %vm493, %v5846, 0
      %v5878 = vsel %vm493, %v5847, 0
      %v5881 = vsel %vm493, %v5848, 0
      %v5884 = vsel %vm493, %v5849, 0
      %5886 = vmatprep.subr.bf16.mxu0 0
      %5887 = vmatpush1.bf16.msra.mxu0 %v5866
      %5888 = vmatprep.subr.bf16.mxu0 0
      %5889 = vmatpush1.bf16.msra.mxu0 %v5867
      %5890 = vmatprep.subr.bf16.mxu0 0
      %5891 = vmatpush1.bf16.msra.mxu0 %v5868
      %5892 = vmatprep.subr.bf16.mxu0 0
      %5893 = vmatpush1.bf16.msra.mxu0 %v5869
      %5894 = vmatprep.subr.bf16.mxu0 0
      %5895 = vmatpush1.bf16.msra.mxu0 0
      %5896 = vmatprep.subr.bf16.mxu0 0
      %5897 = vmatpush1.bf16.msra.mxu0 0
      %5898 = vmatprep.subr.bf16.mxu0 0
      %5899 = vmatpush1.bf16.msra.mxu0 0
      %5900 = vmatprep.subr.bf16.mxu0 0
      %5901 = vmatpush1.bf16.msra.mxu0 0
      %5902 = vmatprep.subr.bf16.mxu0 0
      %5903 = vmatpush1.bf16.msra.mxu0 0
      %5904 = vmatprep.subr.bf16.mxu0 0
      %5905 = vmatpush1.bf16.msra.mxu0 0
      %5906 = vmatprep.subr.bf16.mxu0 0
      %5907 = vmatpush1.bf16.msra.mxu0 0
      %5908 = vmatprep.subr.bf16.mxu0 0
      %5909 = vmatpush1.bf16.msra.mxu0 0
      %5910 = vmatprep.subr.bf16.mxu0 0
      %5911 = vmatpush1.bf16.msra.mxu0 0
      %5912 = vmatprep.subr.bf16.mxu0 0
      %5913 = vmatpush1.bf16.msra.mxu0 0
      %5914 = vmatprep.subr.bf16.mxu0 0
      %5915 = vmatpush1.bf16.msra.mxu0 0
      %5916 = vmatprep.subr.bf16.mxu0 0
      %5917 = vmatpush1.bf16.msra.mxu0 0
      %5918 = vmatprep.mubr.bf16.mxu0 0
      %5919 = vmatmul.mubr.bf16.gmra.mrb[0].mxu0 %v5875
      %v5920 = vpop.f32.mrb[0].mxu0
      %v5921 = vadd.f32 0.0, %v5920
      %v5922 = vpop.f32.mrb[0].mxu0
      %v5923 = vpop.f32.mrb[0].mxu0
      %v5924 = vadd.f32 0.0, %v5923
      %v5925 = vpop.f32.mrb[0].mxu0
      %5926 = vmatprep.mubr.bf16.mxu0 0
      %5927 = vmatmul.mubr.bf16.gmra.mrb[0].mxu0 %v5878
      %v5928 = vpop.f32.mrb[0].mxu0
      %v5929 = vadd.f32 0.0, %v5928
      %v5930 = vpop.f32.mrb[0].mxu0
      %v5931 = vpop.f32.mrb[0].mxu0
      %v5932 = vadd.f32 0.0, %v5931
      %v5933 = vpop.f32.mrb[0].mxu0
      %5934 = vmatprep.mubr.bf16.mxu0 0
      %5935 = vmatmul.mubr.bf16.gmra.mrb[0].mxu0 %v5881
      %v5936 = vpop.f32.mrb[0].mxu0
      %v5937 = vadd.f32 0.0, %v5936
      %v5938 = vpop.f32.mrb[0].mxu0
      %v5939 = vpop.f32.mrb[0].mxu0
      %v5940 = vadd.f32 0.0, %v5939
      %v5941 = vpop.f32.mrb[0].mxu0
      %5942 = vmatprep.mubr.bf16.mxu0 0
      %5943 = vmatmul.mubr.bf16.gmra.mrb[0].mxu0 %v5884
      %v5944 = vpop.f32.mrb[0].mxu0
      %v5945 = vadd.f32 0.0, %v5944
      %v5946 = vpop.f32.mrb[0].mxu0
      %v5947 = vpop.f32.mrb[0].mxu0
      %v5948 = vadd.f32 0.0, %v5947
      %v5949 = vpop.f32.mrb[0].mxu0
      %5950 = vdwg.mxu0
      %v5951 = vadd.f32 %v5813, %v5921
      %v5952 = vadd.f32 %v5814, %v5924
      %v5953 = vadd.f32 %v5815, %v5929
      %v5954 = vadd.f32 %v5816, %v5932
      %v5955 = vadd.f32 %v5817, %v5937
      %v5956 = vadd.f32 %v5818, %v5940
      %v5957 = vadd.f32 %v5819, %v5945
      %v5958 = vadd.f32 %v5820, %v5948
      %v5959 = vld [vmem:[%s1591 + $0x4] sm:$0xf]
      %v5960 = vld [vmem:[%s1591 + $0x8] sm:$0x1]
      %v5961 = vld [vmem:[%s1591 + $0x10] sm:$0xf]
      %v5962 = vld [vmem:[%s1591 + $0x14] sm:$0x1]
      %v5963 = vld [vmem:[%s1591 + $0x1c] sm:$0xf]
      %v5964 = vld [vmem:[%s1591 + $0x20] sm:$0x1]
      %v5965 = vld [vmem:[%s1591 + $0x28] sm:$0xf]
      %v5966 = vld [vmem:[%s1591 + $0x2c] sm:$0x1]
      %v5967 = vld [vmem:[%s1591 + $0x34] sm:$0xf]
      %v5968 = vld [vmem:[%s1591 + $0x38] sm:$0x1]
      %v5969 = vld [vmem:[%s1591 + $0x40] sm:$0xf]
      %v5970 = vld [vmem:[%s1591 + $0x44] sm:$0x1]
      %v5971 = vld [vmem:[%s1591 + $0x4c] sm:$0xf]
      %v5972 = vld [vmem:[%s1591 + $0x50] sm:$0x1]
      %v5973 = vld [vmem:[%s1591 + $0x58] sm:$0xf]
      %v5974 = vld [vmem:[%s1591 + $0x5c] sm:$0x1]
      %v5976 = vshrl.u32 %v5959, 16
      %v5978 = vrot.slane %v5976, 4
      %v5979 = vshll.u32 %v5959, 16
      %v5981 = vrot.slane %v5979, 5
      %v5982 = vor.u32 %v5978, %v5981
      %v5983 = vrot.slane %v5982, 4
      %v5985 = vshll.u32 %v5960, 16
      %v5987 = vrot.slane %v5985, 5
      %v5988 = vsel %vm702, %v5983, %v5987
      %v5990 = vshrl.u32 %v5961, 16
      %v5992 = vrot.slane %v5990, 4
      %v5993 = vshll.u32 %v5961, 16
      %v5995 = vrot.slane %v5993, 5
      %v5996 = vor.u32 %v5992, %v5995
      %v5997 = vrot.slane %v5996, 4
      %v5999 = vshll.u32 %v5962, 16
      %v6001 = vrot.slane %v5999, 5
      %v6002 = vsel %vm702, %v5997, %v6001
      %v6004 = vshrl.u32 %v5963, 16
      %v6006 = vrot.slane %v6004, 4
      %v6007 = vshll.u32 %v5963, 16
      %v6009 = vrot.slane %v6007, 5
      %v6010 = vor.u32 %v6006, %v6009
      %v6011 = vrot.slane %v6010, 4
      %v6013 = vshll.u32 %v5964, 16
      %v6015 = vrot.slane %v6013, 5
      %v6016 = vsel %vm702, %v6011, %v6015
      %v6018 = vshrl.u32 %v5965, 16
      %v6020 = vrot.slane %v6018, 4
      %v6021 = vshll.u32 %v5965, 16
      %v6023 = vrot.slane %v6021, 5
      %v6024 = vor.u32 %v6020, %v6023
      %v6025 = vrot.slane %v6024, 4
      %v6027 = vshll.u32 %v5966, 16
      %v6029 = vrot.slane %v6027, 5
      %v6030 = vsel %vm702, %v6025, %v6029
      %v6032 = vshrl.u32 %v5967, 16
      %v6034 = vrot.slane %v6032, 4
      %v6035 = vshll.u32 %v5967, 16
      %v6037 = vrot.slane %v6035, 5
      %v6038 = vor.u32 %v6034, %v6037
      %v6039 = vrot.slane %v6038, 4
      %v6041 = vshll.u32 %v5968, 16
      %v6043 = vrot.slane %v6041, 5
      %v6044 = vsel %vm702, %v6039, %v6043
      %v6046 = vshrl.u32 %v5969, 16
      %v6048 = vrot.slane %v6046, 4
      %v6049 = vshll.u32 %v5969, 16
      %v6051 = vrot.slane %v6049, 5
      %v6052 = vor.u32 %v6048, %v6051
      %v6053 = vrot.slane %v6052, 4
      %v6055 = vshll.u32 %v5970, 16
      %v6057 = vrot.slane %v6055, 5
      %v6058 = vsel %vm702, %v6053, %v6057
      %v6060 = vshrl.u32 %v5971, 16
      %v6062 = vrot.slane %v6060, 4
      %v6063 = vshll.u32 %v5971, 16
      %v6065 = vrot.slane %v6063, 5
      %v6066 = vor.u32 %v6062, %v6065
      %v6067 = vrot.slane %v6066, 4
      %v6069 = vshll.u32 %v5972, 16
      %v6071 = vrot.slane %v6069, 5
      %v6072 = vsel %vm702, %v6067, %v6071
      %v6074 = vshrl.u32 %v5973, 16
      %v6076 = vrot.slane %v6074, 4
      %v6077 = vshll.u32 %v5973, 16
      %v6079 = vrot.slane %v6077, 5
      %v6080 = vor.u32 %v6076, %v6079
      %v6081 = vrot.slane %v6080, 4
      %v6083 = vshll.u32 %v5974, 16
      %v6085 = vrot.slane %v6083, 5
      %v6086 = vsel %vm702, %v6081, %v6085
      %s6087 = scalar_lea.vmem %s1, 832
      %v6088 = vld [vmem:[%s6087] sm:$0xf]
      %v6089 = vld [vmem:[%s6087 + $0x4] sm:$0xf]
      %v6090 = vld [vmem:[%s6087 + $0x8] sm:$0xf]
      %v6091 = vld [vmem:[%s6087 + $0xc] sm:$0xf]
      %v6092 = vld [vmem:[%s6087 + $0x10] sm:$0xf]
      %v6093 = vld [vmem:[%s6087 + $0x14] sm:$0xf]
      %v6094 = vld [vmem:[%s6087 + $0x18] sm:$0xf]
      %v6095 = vld [vmem:[%s6087 + $0x1c] sm:$0xf]
      %v6096 = vunpack.c.l.b16 %v5988
      %v6097 = vunpack.c.l.b16 %v6002
      %v6098 = vunpack.c.l.b16 %v6016
      %v6099 = vunpack.c.l.b16 %v6030
      %v6100 = vunpack.c.l.b16 %v6044
      %v6101 = vunpack.c.l.b16 %v6058
      %v6102 = vunpack.c.l.b16 %v6072
      %v6103 = vunpack.c.l.b16 %v6086
      %v6104 = vpack.c.b16 %v6097, %v6096
      %v6105 = vpack.c.b16 %v6099, %v6098
      %v6106 = vpack.c.b16 %v6101, %v6100
      %v6107 = vpack.c.b16 %v6103, %v6102
      %v6116 = vunpack.c.l.b16 %v6088
      %v6117 = vunpack.c.l.b16 %v6089
      %v6118 = vunpack.c.l.b16 %v6090
      %v6119 = vunpack.c.l.b16 %v6091
      %v6120 = vunpack.c.l.b16 %v6092
      %v6121 = vunpack.c.l.b16 %v6093
      %v6122 = vunpack.c.l.b16 %v6094
      %v6123 = vunpack.c.l.b16 %v6095
      %v6124 = vpack.c.b16 %v6117, %v6116
      %v6125 = vpack.c.b16 %v6119, %v6118
      %v6126 = vpack.c.b16 %v6121, %v6120
      %v6127 = vpack.c.b16 %v6123, %v6122
      %v6133 = vsel %vm493, %v6104, 0
      %v6136 = vsel %vm493, %v6105, 0
      %v6139 = vsel %vm493, %v6106, 0
      %v6142 = vsel %vm493, %v6107, 0
      %6144 = vmatprep.subr.bf16.mxu0 0
      %6145 = vmatpush1.bf16.msra.mxu0 %v6124
      %6146 = vmatprep.subr.bf16.mxu0 0
      %6147 = vmatpush1.bf16.msra.mxu0 %v6125
      %6148 = vmatprep.subr.bf16.mxu0 0
      %6149 = vmatpush1.bf16.msra.mxu0 %v6126
      %6150 = vmatprep.subr.bf16.mxu0 0
      %6151 = vmatpush1.bf16.msra.mxu0 %v6127
      %6152 = vmatprep.subr.bf16.mxu0 0
      %6153 = vmatpush1.bf16.msra.mxu0 0
      %6154 = vmatprep.subr.bf16.mxu0 0
      %6155 = vmatpush1.bf16.msra.mxu0 0
      %6156 = vmatprep.subr.bf16.mxu0 0
      %6157 = vmatpush1.bf16.msra.mxu0 0
      %6158 = vmatprep.subr.bf16.mxu0 0
      %6159 = vmatpush1.bf16.msra.mxu0 0
      %6160 = vmatprep.subr.bf16.mxu0 0
      %6161 = vmatpush1.bf16.msra.mxu0 0
      %6162 = vmatprep.subr.bf16.mxu0 0
      %6163 = vmatpush1.bf16.msra.mxu0 0
      %6164 = vmatprep.subr.bf16.mxu0 0
      %6165 = vmatpush1.bf16.msra.mxu0 0
      %6166 = vmatprep.subr.bf16.mxu0 0
      %6167 = vmatpush1.bf16.msra.mxu0 0
      %6168 = vmatprep.subr.bf16.mxu0 0
      %6169 = vmatpush1.bf16.msra.mxu0 0
      %6170 = vmatprep.subr.bf16.mxu0 0
      %6171 = vmatpush1.bf16.msra.mxu0 0
      %6172 = vmatprep.subr.bf16.mxu0 0
      %6173 = vmatpush1.bf16.msra.mxu0 0
      %6174 = vmatprep.subr.bf16.mxu0 0
      %6175 = vmatpush1.bf16.msra.mxu0 0
      %6176 = vmatprep.mubr.bf16.mxu0 0
      %6177 = vmatmul.mubr.bf16.gmra.mrb[0].mxu0 %v6133
      %v6178 = vpop.f32.mrb[0].mxu0
      %v6179 = vadd.f32 0.0, %v6178
      %v6180 = vpop.f32.mrb[0].mxu0
      %v6181 = vpop.f32.mrb[0].mxu0
      %v6182 = vadd.f32 0.0, %v6181
      %v6183 = vpop.f32.mrb[0].mxu0
      %6184 = vmatprep.mubr.bf16.mxu0 0
      %6185 = vmatmul.mubr.bf16.gmra.mrb[0].mxu0 %v6136
      %v6186 = vpop.f32.mrb[0].mxu0
      %v6187 = vadd.f32 0.0, %v6186
      %v6188 = vpop.f32.mrb[0].mxu0
      %v6189 = vpop.f32.mrb[0].mxu0
      %v6190 = vadd.f32 0.0, %v6189
      %v6191 = vpop.f32.mrb[0].mxu0
      %6192 = vmatprep.mubr.bf16.mxu0 0
      %6193 = vmatmul.mubr.bf16.gmra.mrb[0].mxu0 %v6139
      %v6194 = vpop.f32.mrb[0].mxu0
      %v6195 = vadd.f32 0.0, %v6194
      %v6196 = vpop.f32.mrb[0].mxu0
      %v6197 = vpop.f32.mrb[0].mxu0
      %v6198 = vadd.f32 0.0, %v6197
      %v6199 = vpop.f32.mrb[0].mxu0
      %6200 = vmatprep.mubr.bf16.mxu0 0
      %6201 = vmatmul.mubr.bf16.gmra.mrb[0].mxu0 %v6142
      %v6202 = vpop.f32.mrb[0].mxu0
      %v6203 = vadd.f32 0.0, %v6202
      %v6204 = vpop.f32.mrb[0].mxu0
      %v6205 = vpop.f32.mrb[0].mxu0
      %v6206 = vadd.f32 0.0, %v6205
      %v6207 = vpop.f32.mrb[0].mxu0
      %6208 = vdwg.mxu0
      %v6209 = vadd.f32 %v5951, %v6179
      %v6210 = vadd.f32 %v5952, %v6182
      %v6211 = vadd.f32 %v5953, %v6187
      %v6212 = vadd.f32 %v5954, %v6190
      %v6213 = vadd.f32 %v5955, %v6195
      %v6214 = vadd.f32 %v5956, %v6198
      %v6215 = vadd.f32 %v5957, %v6203
      %v6216 = vadd.f32 %v5958, %v6206
      %s6217 = scalar_lea.vmem %s2, 2
      %v6218 = vld [vmem:[%s6217] sm:$0x1]
      %v6220 = vlaneseq
      %v6221 = vshrl.u32 %v6220, 7
      %v6222 = vsub.s32 0, %v6221
      %v6223 = vrot.slane %v6218, %v6222
      %v6225 = vadd.f32 %v6209, %v6223
      %v6226 = vadd.f32 %v6210, %v6223
      %v6227 = vadd.f32 %v6211, %v6223
      %v6228 = vadd.f32 %v6212, %v6223
      %v6229 = vadd.f32 %v6213, %v6223
      %v6230 = vadd.f32 %v6214, %v6223
      %v6231 = vadd.f32 %v6215, %v6223
      %v6232 = vadd.f32 %v6216, %v6223
      %v6233 = vmax.f32 %v6225, 0.0
      %v6234 = vmax.f32 %v6226, 0.0
      %v6235 = vmax.f32 %v6227, 0.0
      %v6236 = vmax.f32 %v6228, 0.0
      %v6237 = vmax.f32 %v6229, 0.0
      %v6238 = vmax.f32 %v6230, 0.0
      %v6239 = vmax.f32 %v6231, 0.0
      %v6240 = vmax.f32 %v6232, 0.0
      %v6241 = vpack.c.bf16 %v6234, %v6233
      %v6242 = vpack.c.bf16 %v6236, %v6235
      %v6243 = vpack.c.bf16 %v6238, %v6237
      %v6244 = vpack.c.bf16 %v6240, %v6239
      %v6249 = vunpack.c.l.b16 %v6241
      %v6250 = vunpack.c.h.b16 %v6241
      %v6251 = vunpack.c.l.b16 %v6242
      %v6252 = vunpack.c.h.b16 %v6242
      %v6253 = vunpack.c.l.b16 %v6243
      %v6254 = vunpack.c.h.b16 %v6243
      %v6255 = vunpack.c.l.b16 %v6244
      %v6256 = vunpack.c.h.b16 %v6244
      %v6257 = vpack.c.b16 %v6249, %v6249
      %v6258 = vpack.c.b16 %v6250, %v6250
      %v6259 = vpack.c.b16 %v6251, %v6251
      %v6260 = vpack.c.b16 %v6252, %v6252
      %v6261 = vpack.c.b16 %v6253, %v6253
      %v6262 = vpack.c.b16 %v6254, %v6254
      %v6263 = vpack.c.b16 %v6255, %v6255
      %v6264 = vpack.c.b16 %v6256, %v6256
      %6273 = vst.msk [vmem:[%s300 + $0x4] sm:$0xf] %vm253, %v6257
      %6274 = vst.msk [vmem:[%s300 + $0x10] sm:$0xf] %vm253, %v6258
      %6275 = vst.msk [vmem:[%s300 + $0x1c] sm:$0xf] %vm253, %v6259
      %6276 = vst.msk [vmem:[%s300 + $0x28] sm:$0xf] %vm253, %v6260
      %6277 = vst.msk [vmem:[%s300 + $0x34] sm:$0xf] %vm253, %v6261
      %6278 = vst.msk [vmem:[%s300 + $0x40] sm:$0xf] %vm253, %v6262
      %6279 = vst.msk [vmem:[%s300 + $0x4c] sm:$0xf] %vm253, %v6263
      %6280 = vst.msk [vmem:[%s300 + $0x58] sm:$0xf] %vm253, %v6264
      %v6281 = vld [vmem:[#allocation2] sm:$0x8]
      %v6282 = vld [vmem:[#allocation2 + $0x4] sm:$0xf]
      %v6283 = vld [vmem:[#allocation2 + $0xc] sm:$0x8]
      %v6284 = vld [vmem:[#allocation2 + $0x10] sm:$0xf]
      %v6285 = vld [vmem:[#allocation2 + $0x18] sm:$0x8]
      %v6286 = vld [vmem:[#allocation2 + $0x1c] sm:$0xf]
      %v6287 = vld [vmem:[#allocation2 + $0x24] sm:$0x8]
      %v6288 = vld [vmem:[#allocation2 + $0x28] sm:$0xf]
      %v6289 = vld [vmem:[#allocation2 + $0x30] sm:$0x8]
      %v6290 = vld [vmem:[#allocation2 + $0x34] sm:$0xf]
      %v6291 = vld [vmem:[#allocation2 + $0x3c] sm:$0x8]
      %v6292 = vld [vmem:[#allocation2 + $0x40] sm:$0xf]
      %v6293 = vld [vmem:[#allocation2 + $0x48] sm:$0x8]
      %v6294 = vld [vmem:[#allocation2 + $0x4c] sm:$0xf]
      %v6295 = vld [vmem:[#allocation2 + $0x54] sm:$0x8]
      %v6296 = vld [vmem:[#allocation2 + $0x58] sm:$0xf]
      %v6298 = vshrl.u32 %v6281, 16
      %v6300 = vrot.slane %v6298, 7
      %v6301 = vrot.slane %v6300, 4
      %v6303 = vshrl.u32 %v6282, 16
      %v6305 = vrot.slane %v6303, 7
      %v6306 = vshll.u32 %v6282, 16
      %v6308 = vor.u32 %v6305, %v6306
      %v6309 = vsel %vm327, %v6301, %v6308
      %v6311 = vshrl.u32 %v6283, 16
      %v6313 = vrot.slane %v6311, 7
      %v6314 = vrot.slane %v6313, 4
      %v6316 = vshrl.u32 %v6284, 16
      %v6318 = vrot.slane %v6316, 7
      %v6319 = vshll.u32 %v6284, 16
      %v6321 = vor.u32 %v6318, %v6319
      %v6322 = vsel %vm327, %v6314, %v6321
      %v6324 = vshrl.u32 %v6285, 16
      %v6326 = vrot.slane %v6324, 7
      %v6327 = vrot.slane %v6326, 4
      %v6329 = vshrl.u32 %v6286, 16
      %v6331 = vrot.slane %v6329, 7
      %v6332 = vshll.u32 %v6286, 16
      %v6334 = vor.u32 %v6331, %v6332
      %v6335 = vsel %vm327, %v6327, %v6334
      %v6337 = vshrl.u32 %v6287, 16
      %v6339 = vrot.slane %v6337, 7
      %v6340 = vrot.slane %v6339, 4
      %v6342 = vshrl.u32 %v6288, 16
      %v6344 = vrot.slane %v6342, 7
      %v6345 = vshll.u32 %v6288, 16
      %v6347 = vor.u32 %v6344, %v6345
      %v6348 = vsel %vm327, %v6340, %v6347
      %v6350 = vshrl.u32 %v6289, 16
      %v6352 = vrot.slane %v6350, 7
      %v6353 = vrot.slane %v6352, 4
      %v6355 = vshrl.u32 %v6290, 16
      %v6357 = vrot.slane %v6355, 7
      %v6358 = vshll.u32 %v6290, 16
      %v6360 = vor.u32 %v6357, %v6358
      %v6361 = vsel %vm327, %v6353, %v6360
      %v6363 = vshrl.u32 %v6291, 16
      %v6365 = vrot.slane %v6363, 7
      %v6366 = vrot.slane %v6365, 4
      %v6368 = vshrl.u32 %v6292, 16
      %v6370 = vrot.slane %v6368, 7
      %v6371 = vshll.u32 %v6292, 16
      %v6373 = vor.u32 %v6370, %v6371
      %v6374 = vsel %vm327, %v6366, %v6373
      %v6376 = vshrl.u32 %v6293, 16
      %v6378 = vrot.slane %v6376, 7
      %v6379 = vrot.slane %v6378, 4
      %v6381 = vshrl.u32 %v6294, 16
      %v6383 = vrot.slane %v6381, 7
      %v6384 = vshll.u32 %v6294, 16
      %v6386 = vor.u32 %v6383, %v6384
      %v6387 = vsel %vm327, %v6379, %v6386
      %v6389 = vshrl.u32 %v6295, 16
      %v6391 = vrot.slane %v6389, 7
      %v6392 = vrot.slane %v6391, 4
      %v6394 = vshrl.u32 %v6296, 16
      %v6396 = vrot.slane %v6394, 7
      %v6397 = vshll.u32 %v6296, 16
      %v6399 = vor.u32 %v6396, %v6397
      %v6400 = vsel %vm327, %v6392, %v6399
      %s6401 = scalar_lea.vmem %s1, 864
      %v6402 = vld [vmem:[%s6401] sm:$0xf]
      %v6403 = vld [vmem:[%s6401 + $0x4] sm:$0xf]
      %v6404 = vld [vmem:[%s6401 + $0x8] sm:$0xf]
      %v6405 = vld [vmem:[%s6401 + $0xc] sm:$0xf]
      %v6406 = vld [vmem:[%s6401 + $0x10] sm:$0xf]
      %v6407 = vld [vmem:[%s6401 + $0x14] sm:$0xf]
      %v6408 = vld [vmem:[%s6401 + $0x18] sm:$0xf]
      %v6409 = vld [vmem:[%s6401 + $0x1c] sm:$0xf]
      %s6410 = scalar_lea.vmem %s1, 896
      %v6411 = vld [vmem:[%s6410] sm:$0xf]
      %v6412 = vld [vmem:[%s6410 + $0x4] sm:$0xf]
      %v6413 = vld [vmem:[%s6410 + $0x8] sm:$0xf]
      %v6414 = vld [vmem:[%s6410 + $0xc] sm:$0xf]
      %v6415 = vld [vmem:[%s6410 + $0x10] sm:$0xf]
      %v6416 = vld [vmem:[%s6410 + $0x14] sm:$0xf]
      %v6417 = vld [vmem:[%s6410 + $0x18] sm:$0xf]
      %v6418 = vld [vmem:[%s6410 + $0x1c] sm:$0xf]
      %v6427 = vunpack.c.l.b16 %v6282
      %v6428 = vunpack.c.l.b16 %v6284
      %v6429 = vunpack.c.l.b16 %v6286
      %v6430 = vunpack.c.l.b16 %v6288
      %v6431 = vunpack.c.l.b16 %v6290
      %v6432 = vunpack.c.l.b16 %v6292
      %v6433 = vunpack.c.l.b16 %v6294
      %v6434 = vunpack.c.l.b16 %v6296
      %v6435 = vpack.c.b16 %v6428, %v6427
      %v6436 = vpack.c.b16 %v6430, %v6429
      %v6437 = vpack.c.b16 %v6432, %v6431
      %v6438 = vpack.c.b16 %v6434, %v6433
      %v6447 = vunpack.c.l.b16 %v6411
      %v6448 = vunpack.c.l.b16 %v6412
      %v6449 = vunpack.c.l.b16 %v6413
      %v6450 = vunpack.c.l.b16 %v6414
      %v6451 = vunpack.c.l.b16 %v6415
      %v6452 = vunpack.c.l.b16 %v6416
      %v6453 = vunpack.c.l.b16 %v6417
      %v6454 = vunpack.c.l.b16 %v6418
      %v6455 = vpack.c.b16 %v6448, %v6447
      %v6456 = vpack.c.b16 %v6450, %v6449
      %v6457 = vpack.c.b16 %v6452, %v6451
      %v6458 = vpack.c.b16 %v6454, %v6453
      %v6464 = vsel %vm493, %v6435, 0
      %v6467 = vsel %vm493, %v6436, 0
      %v6470 = vsel %vm493, %v6437, 0
      %v6473 = vsel %vm493, %v6438, 0
      %6475 = vmatprep.subr.bf16.mxu0 0
      %6476 = vmatpush1.bf16.msra.mxu0 %v6455
      %6477 = vmatprep.subr.bf16.mxu0 0
      %6478 = vmatpush1.bf16.msra.mxu0 %v6456
      %6479 = vmatprep.subr.bf16.mxu0 0
      %6480 = vmatpush1.bf16.msra.mxu0 %v6457
      %6481 = vmatprep.subr.bf16.mxu0 0
      %6482 = vmatpush1.bf16.msra.mxu0 %v6458
      %6483 = vmatprep.subr.bf16.mxu0 0
      %6484 = vmatpush1.bf16.msra.mxu0 0
      %6485 = vmatprep.subr.bf16.mxu0 0
      %6486 = vmatpush1.bf16.msra.mxu0 0
      %6487 = vmatprep.subr.bf16.mxu0 0
      %6488 = vmatpush1.bf16.msra.mxu0 0
      %6489 = vmatprep.subr.bf16.mxu0 0
      %6490 = vmatpush1.bf16.msra.mxu0 0
      %6491 = vmatprep.subr.bf16.mxu0 0
      %6492 = vmatpush1.bf16.msra.mxu0 0
      %6493 = vmatprep.subr.bf16.mxu0 0
      %6494 = vmatpush1.bf16.msra.mxu0 0
      %6495 = vmatprep.subr.bf16.mxu0 0
      %6496 = vmatpush1.bf16.msra.mxu0 0
      %6497 = vmatprep.subr.bf16.mxu0 0
      %6498 = vmatpush1.bf16.msra.mxu0 0
      %6499 = vmatprep.subr.bf16.mxu0 0
      %6500 = vmatpush1.bf16.msra.mxu0 0
      %6501 = vmatprep.subr.bf16.mxu0 0
      %6502 = vmatpush1.bf16.msra.mxu0 0
      %6503 = vmatprep.subr.bf16.mxu0 0
      %6504 = vmatpush1.bf16.msra.mxu0 0
      %6505 = vmatprep.subr.bf16.mxu0 0
      %6506 = vmatpush1.bf16.msra.mxu0 0
      %6507 = vmatprep.mubr.bf16.mxu0 0
      %6508 = vmatmul.mubr.bf16.gmra.mrb[0].mxu0 %v6464
      %v6509 = vpop.f32.mrb[0].mxu0
      %v6510 = vadd.f32 0.0, %v6509
      %v6511 = vpop.f32.mrb[0].mxu0
      %v6512 = vpop.f32.mrb[0].mxu0
      %v6513 = vadd.f32 0.0, %v6512
      %v6514 = vpop.f32.mrb[0].mxu0
      %6515 = vmatprep.mubr.bf16.mxu0 0
      %6516 = vmatmul.mubr.bf16.gmra.mrb[0].mxu0 %v6467
      %v6517 = vpop.f32.mrb[0].mxu0
      %v6518 = vadd.f32 0.0, %v6517
      %v6519 = vpop.f32.mrb[0].mxu0
      %v6520 = vpop.f32.mrb[0].mxu0
      %v6521 = vadd.f32 0.0, %v6520
      %v6522 = vpop.f32.mrb[0].mxu0
      %6523 = vmatprep.mubr.bf16.mxu0 0
      %6524 = vmatmul.mubr.bf16.gmra.mrb[0].mxu0 %v6470
      %v6525 = vpop.f32.mrb[0].mxu0
      %v6526 = vadd.f32 0.0, %v6525
      %v6527 = vpop.f32.mrb[0].mxu0
      %v6528 = vpop.f32.mrb[0].mxu0
      %v6529 = vadd.f32 0.0, %v6528
      %v6530 = vpop.f32.mrb[0].mxu0
      %6531 = vmatprep.mubr.bf16.mxu0 0
      %6532 = vmatmul.mubr.bf16.gmra.mrb[0].mxu0 %v6473
      %v6533 = vpop.f32.mrb[0].mxu0
      %v6534 = vadd.f32 0.0, %v6533
      %v6535 = vpop.f32.mrb[0].mxu0
      %v6536 = vpop.f32.mrb[0].mxu0
      %v6537 = vadd.f32 0.0, %v6536
      %v6538 = vpop.f32.mrb[0].mxu0
      %6539 = vdwg.mxu0
      %v6540 = vunpack.c.l.b16 %v6309
      %v6541 = vunpack.c.l.b16 %v6322
      %v6542 = vunpack.c.l.b16 %v6335
      %v6543 = vunpack.c.l.b16 %v6348
      %v6544 = vunpack.c.l.b16 %v6361
      %v6545 = vunpack.c.l.b16 %v6374
      %v6546 = vunpack.c.l.b16 %v6387
      %v6547 = vunpack.c.l.b16 %v6400
      %v6548 = vpack.c.b16 %v6541, %v6540
      %v6549 = vpack.c.b16 %v6543, %v6542
      %v6550 = vpack.c.b16 %v6545, %v6544
      %v6551 = vpack.c.b16 %v6547, %v6546
      %v6560 = vunpack.c.l.b16 %v6402
      %v6561 = vunpack.c.l.b16 %v6403
      %v6562 = vunpack.c.l.b16 %v6404
      %v6563 = vunpack.c.l.b16 %v6405
      %v6564 = vunpack.c.l.b16 %v6406
      %v6565 = vunpack.c.l.b16 %v6407
      %v6566 = vunpack.c.l.b16 %v6408
      %v6567 = vunpack.c.l.b16 %v6409
      %v6568 = vpack.c.b16 %v6561, %v6560
      %v6569 = vpack.c.b16 %v6563, %v6562
      %v6570 = vpack.c.b16 %v6565, %v6564
      %v6571 = vpack.c.b16 %v6567, %v6566
      %v6577 = vsel %vm493, %v6548, 0
      %v6580 = vsel %vm493, %v6549, 0
      %v6583 = vsel %vm493, %v6550, 0
      %v6586 = vsel %vm493, %v6551, 0
      %6588 = vmatprep.subr.bf16.mxu0 0
      %6589 = vmatpush1.bf16.msra.mxu0 %v6568
      %6590 = vmatprep.subr.bf16.mxu0 0
      %6591 = vmatpush1.bf16.msra.mxu0 %v6569
      %6592 = vmatprep.subr.bf16.mxu0 0
      %6593 = vmatpush1.bf16.msra.mxu0 %v6570
      %6594 = vmatprep.subr.bf16.mxu0 0
      %6595 = vmatpush1.bf16.msra.mxu0 %v6571
      %6596 = vmatprep.subr.bf16.mxu0 0
      %6597 = vmatpush1.bf16.msra.mxu0 0
      %6598 = vmatprep.subr.bf16.mxu0 0
      %6599 = vmatpush1.bf16.msra.mxu0 0
      %6600 = vmatprep.subr.bf16.mxu0 0
      %6601 = vmatpush1.bf16.msra.mxu0 0
      %6602 = vmatprep.subr.bf16.mxu0 0
      %6603 = vmatpush1.bf16.msra.mxu0 0
      %6604 = vmatprep.subr.bf16.mxu0 0
      %6605 = vmatpush1.bf16.msra.mxu0 0
      %6606 = vmatprep.subr.bf16.mxu0 0
      %6607 = vmatpush1.bf16.msra.mxu0 0
      %6608 = vmatprep.subr.bf16.mxu0 0
      %6609 = vmatpush1.bf16.msra.mxu0 0
      %6610 = vmatprep.subr.bf16.mxu0 0
      %6611 = vmatpush1.bf16.msra.mxu0 0
      %6612 = vmatprep.subr.bf16.mxu0 0
      %6613 = vmatpush1.bf16.msra.mxu0 0
      %6614 = vmatprep.subr.bf16.mxu0 0
      %6615 = vmatpush1.bf16.msra.mxu0 0
      %6616 = vmatprep.subr.bf16.mxu0 0
      %6617 = vmatpush1.bf16.msra.mxu0 0
      %6618 = vmatprep.subr.bf16.mxu0 0
      %6619 = vmatpush1.bf16.msra.mxu0 0
      %6620 = vmatprep.mubr.bf16.mxu0 0
      %6621 = vmatmul.mubr.bf16.gmra.mrb[0].mxu0 %v6577
      %v6622 = vpop.f32.mrb[0].mxu0
      %v6623 = vadd.f32 %v6510, %v6622
      %v6624 = vpop.f32.mrb[0].mxu0
      %v6625 = vpop.f32.mrb[0].mxu0
      %v6626 = vadd.f32 %v6513, %v6625
      %v6627 = vpop.f32.mrb[0].mxu0
      %6628 = vmatprep.mubr.bf16.mxu0 0
      %6629 = vmatmul.mubr.bf16.gmra.mrb[0].mxu0 %v6580
      %v6630 = vpop.f32.mrb[0].mxu0
      %v6631 = vadd.f32 %v6518, %v6630
      %v6632 = vpop.f32.mrb[0].mxu0
      %v6633 = vpop.f32.mrb[0].mxu0
      %v6634 = vadd.f32 %v6521, %v6633
      %v6635 = vpop.f32.mrb[0].mxu0
      %6636 = vmatprep.mubr.bf16.mxu0 0
      %6637 = vmatmul.mubr.bf16.gmra.mrb[0].mxu0 %v6583
      %v6638 = vpop.f32.mrb[0].mxu0
      %v6639 = vadd.f32 %v6526, %v6638
      %v6640 = vpop.f32.mrb[0].mxu0
      %v6641 = vpop.f32.mrb[0].mxu0
      %v6642 = vadd.f32 %v6529, %v6641
      %v6643 = vpop.f32.mrb[0].mxu0
      %6644 = vmatprep.mubr.bf16.mxu0 0
      %6645 = vmatmul.mubr.bf16.gmra.mrb[0].mxu0 %v6586
      %v6646 = vpop.f32.mrb[0].mxu0
      %v6647 = vadd.f32 %v6534, %v6646
      %v6648 = vpop.f32.mrb[0].mxu0
      %v6649 = vpop.f32.mrb[0].mxu0
      %v6650 = vadd.f32 %v6537, %v6649
      %v6651 = vpop.f32.mrb[0].mxu0
      %6652 = vdwg.mxu0
      %v6653 = vld [vmem:[#allocation2 + $0x4] sm:$0xf]
      %v6654 = vld [vmem:[#allocation2 + $0x8] sm:$0x1]
      %v6655 = vld [vmem:[#allocation2 + $0x10] sm:$0xf]
      %v6656 = vld [vmem:[#allocation2 + $0x14] sm:$0x1]
      %v6657 = vld [vmem:[#allocation2 + $0x1c] sm:$0xf]
      %v6658 = vld [vmem:[#allocation2 + $0x20] sm:$0x1]
      %v6659 = vld [vmem:[#allocation2 + $0x28] sm:$0xf]
      %v6660 = vld [vmem:[#allocation2 + $0x2c] sm:$0x1]
      %v6661 = vld [vmem:[#allocation2 + $0x34] sm:$0xf]
      %v6662 = vld [vmem:[#allocation2 + $0x38] sm:$0x1]
      %v6663 = vld [vmem:[#allocation2 + $0x40] sm:$0xf]
      %v6664 = vld [vmem:[#allocation2 + $0x44] sm:$0x1]
      %v6665 = vld [vmem:[#allocation2 + $0x4c] sm:$0xf]
      %v6666 = vld [vmem:[#allocation2 + $0x50] sm:$0x1]
      %v6667 = vld [vmem:[#allocation2 + $0x58] sm:$0xf]
      %v6668 = vld [vmem:[#allocation2 + $0x5c] sm:$0x1]
      %v6670 = vshrl.u32 %v6653, 16
      %v6672 = vrot.slane %v6670, 4
      %v6673 = vshll.u32 %v6653, 16
      %v6675 = vrot.slane %v6673, 5
      %v6676 = vor.u32 %v6672, %v6675
      %v6677 = vrot.slane %v6676, 4
      %v6679 = vshll.u32 %v6654, 16
      %v6681 = vrot.slane %v6679, 5
      %v6682 = vsel %vm702, %v6677, %v6681
      %v6684 = vshrl.u32 %v6655, 16
      %v6686 = vrot.slane %v6684, 4
      %v6687 = vshll.u32 %v6655, 16
      %v6689 = vrot.slane %v6687, 5
      %v6690 = vor.u32 %v6686, %v6689
      %v6691 = vrot.slane %v6690, 4
      %v6693 = vshll.u32 %v6656, 16
      %v6695 = vrot.slane %v6693, 5
      %v6696 = vsel %vm702, %v6691, %v6695
      %v6698 = vshrl.u32 %v6657, 16
      %v6700 = vrot.slane %v6698, 4
      %v6701 = vshll.u32 %v6657, 16
      %v6703 = vrot.slane %v6701, 5
      %v6704 = vor.u32 %v6700, %v6703
      %v6705 = vrot.slane %v6704, 4
      %v6707 = vshll.u32 %v6658, 16
      %v6709 = vrot.slane %v6707, 5
      %v6710 = vsel %vm702, %v6705, %v6709
      %v6712 = vshrl.u32 %v6659, 16
      %v6714 = vrot.slane %v6712, 4
      %v6715 = vshll.u32 %v6659, 16
      %v6717 = vrot.slane %v6715, 5
      %v6718 = vor.u32 %v6714, %v6717
      %v6719 = vrot.slane %v6718, 4
      %v6721 = vshll.u32 %v6660, 16
      %v6723 = vrot.slane %v6721, 5
      %v6724 = vsel %vm702, %v6719, %v6723
      %v6726 = vshrl.u32 %v6661, 16
      %v6728 = vrot.slane %v6726, 4
      %v6729 = vshll.u32 %v6661, 16
      %v6731 = vrot.slane %v6729, 5
      %v6732 = vor.u32 %v6728, %v6731
      %v6733 = vrot.slane %v6732, 4
      %v6735 = vshll.u32 %v6662, 16
      %v6737 = vrot.slane %v6735, 5
      %v6738 = vsel %vm702, %v6733, %v6737
      %v6740 = vshrl.u32 %v6663, 16
      %v6742 = vrot.slane %v6740, 4
      %v6743 = vshll.u32 %v6663, 16
      %v6745 = vrot.slane %v6743, 5
      %v6746 = vor.u32 %v6742, %v6745
      %v6747 = vrot.slane %v6746, 4
      %v6749 = vshll.u32 %v6664, 16
      %v6751 = vrot.slane %v6749, 5
      %v6752 = vsel %vm702, %v6747, %v6751
      %v6754 = vshrl.u32 %v6665, 16
      %v6756 = vrot.slane %v6754, 4
      %v6757 = vshll.u32 %v6665, 16
      %v6759 = vrot.slane %v6757, 5
      %v6760 = vor.u32 %v6756, %v6759
      %v6761 = vrot.slane %v6760, 4
      %v6763 = vshll.u32 %v6666, 16
      %v6765 = vrot.slane %v6763, 5
      %v6766 = vsel %vm702, %v6761, %v6765
      %v6768 = vshrl.u32 %v6667, 16
      %v6770 = vrot.slane %v6768, 4
      %v6771 = vshll.u32 %v6667, 16
      %v6773 = vrot.slane %v6771, 5
      %v6774 = vor.u32 %v6770, %v6773
      %v6775 = vrot.slane %v6774, 4
      %v6777 = vshll.u32 %v6668, 16
      %v6779 = vrot.slane %v6777, 5
      %v6780 = vsel %vm702, %v6775, %v6779
      %s6781 = scalar_lea.vmem %s1, 928
      %v6782 = vld [vmem:[%s6781] sm:$0xf]
      %v6783 = vld [vmem:[%s6781 + $0x4] sm:$0xf]
      %v6784 = vld [vmem:[%s6781 + $0x8] sm:$0xf]
      %v6785 = vld [vmem:[%s6781 + $0xc] sm:$0xf]
      %v6786 = vld [vmem:[%s6781 + $0x10] sm:$0xf]
      %v6787 = vld [vmem:[%s6781 + $0x14] sm:$0xf]
      %v6788 = vld [vmem:[%s6781 + $0x18] sm:$0xf]
      %v6789 = vld [vmem:[%s6781 + $0x1c] sm:$0xf]
      %v6790 = vunpack.c.l.b16 %v6682
      %v6791 = vunpack.c.l.b16 %v6696
      %v6792 = vunpack.c.l.b16 %v6710
      %v6793 = vunpack.c.l.b16 %v6724
      %v6794 = vunpack.c.l.b16 %v6738
      %v6795 = vunpack.c.l.b16 %v6752
      %v6796 = vunpack.c.l.b16 %v6766
      %v6797 = vunpack.c.l.b16 %v6780
      %v6798 = vpack.c.b16 %v6791, %v6790
      %v6799 = vpack.c.b16 %v6793, %v6792
      %v6800 = vpack.c.b16 %v6795, %v6794
      %v6801 = vpack.c.b16 %v6797, %v6796
      %v6810 = vunpack.c.l.b16 %v6782
      %v6811 = vunpack.c.l.b16 %v6783
      %v6812 = vunpack.c.l.b16 %v6784
      %v6813 = vunpack.c.l.b16 %v6785
      %v6814 = vunpack.c.l.b16 %v6786
      %v6815 = vunpack.c.l.b16 %v6787
      %v6816 = vunpack.c.l.b16 %v6788
      %v6817 = vunpack.c.l.b16 %v6789
      %v6818 = vpack.c.b16 %v6811, %v6810
      %v6819 = vpack.c.b16 %v6813, %v6812
      %v6820 = vpack.c.b16 %v6815, %v6814
      %v6821 = vpack.c.b16 %v6817, %v6816
      %v6827 = vsel %vm493, %v6798, 0
      %v6830 = vsel %vm493, %v6799, 0
      %v6833 = vsel %vm493, %v6800, 0
      %v6836 = vsel %vm493, %v6801, 0
      %6838 = vmatprep.subr.bf16.mxu0 0
      %6839 = vmatpush1.bf16.msra.mxu0 %v6818
      %6840 = vmatprep.subr.bf16.mxu0 0
      %6841 = vmatpush1.bf16.msra.mxu0 %v6819
      %6842 = vmatprep.subr.bf16.mxu0 0
      %6843 = vmatpush1.bf16.msra.mxu0 %v6820
      %6844 = vmatprep.subr.bf16.mxu0 0
      %6845 = vmatpush1.bf16.msra.mxu0 %v6821
      %6846 = vmatprep.subr.bf16.mxu0 0
      %6847 = vmatpush1.bf16.msra.mxu0 0
      %6848 = vmatprep.subr.bf16.mxu0 0
      %6849 = vmatpush1.bf16.msra.mxu0 0
      %6850 = vmatprep.subr.bf16.mxu0 0
      %6851 = vmatpush1.bf16.msra.mxu0 0
      %6852 = vmatprep.subr.bf16.mxu0 0
      %6853 = vmatpush1.bf16.msra.mxu0 0
      %6854 = vmatprep.subr.bf16.mxu0 0
      %6855 = vmatpush1.bf16.msra.mxu0 0
      %6856 = vmatprep.subr.bf16.mxu0 0
      %6857 = vmatpush1.bf16.msra.mxu0 0
      %6858 = vmatprep.subr.bf16.mxu0 0
      %6859 = vmatpush1.bf16.msra.mxu0 0
      %6860 = vmatprep.subr.bf16.mxu0 0
      %6861 = vmatpush1.bf16.msra.mxu0 0
      %6862 = vmatprep.subr.bf16.mxu0 0
      %6863 = vmatpush1.bf16.msra.mxu0 0
      %6864 = vmatprep.subr.bf16.mxu0 0
      %6865 = vmatpush1.bf16.msra.mxu0 0
      %6866 = vmatprep.subr.bf16.mxu0 0
      %6867 = vmatpush1.bf16.msra.mxu0 0
      %6868 = vmatprep.subr.bf16.mxu0 0
      %6869 = vmatpush1.bf16.msra.mxu0 0
      %6870 = vmatprep.mubr.bf16.mxu0 0
      %6871 = vmatmul.mubr.bf16.gmra.mrb[0].mxu0 %v6827
      %v6872 = vpop.f32.mrb[0].mxu0
      %v6873 = vadd.f32 0.0, %v6872
      %v6874 = vpop.f32.mrb[0].mxu0
      %v6875 = vpop.f32.mrb[0].mxu0
      %v6876 = vadd.f32 0.0, %v6875
      %v6877 = vpop.f32.mrb[0].mxu0
      %6878 = vmatprep.mubr.bf16.mxu0 0
      %6879 = vmatmul.mubr.bf16.gmra.mrb[0].mxu0 %v6830
      %v6880 = vpop.f32.mrb[0].mxu0
      %v6881 = vadd.f32 0.0, %v6880
      %v6882 = vpop.f32.mrb[0].mxu0
      %v6883 = vpop.f32.mrb[0].mxu0
      %v6884 = vadd.f32 0.0, %v6883
      %v6885 = vpop.f32.mrb[0].mxu0
      %6886 = vmatprep.mubr.bf16.mxu0 0
      %6887 = vmatmul.mubr.bf16.gmra.mrb[0].mxu0 %v6833
      %v6888 = vpop.f32.mrb[0].mxu0
      %v6889 = vadd.f32 0.0, %v6888
      %v6890 = vpop.f32.mrb[0].mxu0
      %v6891 = vpop.f32.mrb[0].mxu0
      %v6892 = vadd.f32 0.0, %v6891
      %v6893 = vpop.f32.mrb[0].mxu0
      %6894 = vmatprep.mubr.bf16.mxu0 0
      %6895 = vmatmul.mubr.bf16.gmra.mrb[0].mxu0 %v6836
      %v6896 = vpop.f32.mrb[0].mxu0
      %v6897 = vadd.f32 0.0, %v6896
      %v6898 = vpop.f32.mrb[0].mxu0
      %v6899 = vpop.f32.mrb[0].mxu0
      %v6900 = vadd.f32 0.0, %v6899
      %v6901 = vpop.f32.mrb[0].mxu0
      %6902 = vdwg.mxu0
      %v6903 = vadd.f32 %v6623, %v6873
      %v6904 = vadd.f32 %v6626, %v6876
      %v6905 = vadd.f32 %v6631, %v6881
      %v6906 = vadd.f32 %v6634, %v6884
      %v6907 = vadd.f32 %v6639, %v6889
      %v6908 = vadd.f32 %v6642, %v6892
      %v6909 = vadd.f32 %v6647, %v6897
      %v6910 = vadd.f32 %v6650, %v6900
      %v6911 = vld [vmem:[%s300] sm:$0x8]
      %v6912 = vld [vmem:[%s300 + $0x4] sm:$0xf]
      %v6913 = vld [vmem:[%s300 + $0xc] sm:$0x8]
      %v6914 = vld [vmem:[%s300 + $0x10] sm:$0xf]
      %v6915 = vld [vmem:[%s300 + $0x18] sm:$0x8]
      %v6916 = vld [vmem:[%s300 + $0x1c] sm:$0xf]
      %v6917 = vld [vmem:[%s300 + $0x24] sm:$0x8]
      %v6918 = vld [vmem:[%s300 + $0x28] sm:$0xf]
      %v6919 = vld [vmem:[%s300 + $0x30] sm:$0x8]
      %v6920 = vld [vmem:[%s300 + $0x34] sm:$0xf]
      %v6921 = vld [vmem:[%s300 + $0x3c] sm:$0x8]
      %v6922 = vld [vmem:[%s300 + $0x40] sm:$0xf]
      %v6923 = vld [vmem:[%s300 + $0x48] sm:$0x8]
      %v6924 = vld [vmem:[%s300 + $0x4c] sm:$0xf]
      %v6925 = vld [vmem:[%s300 + $0x54] sm:$0x8]
      %v6926 = vld [vmem:[%s300 + $0x58] sm:$0xf]
      %v6928 = vshrl.u32 %v6911, 16
      %v6930 = vrot.slane %v6928, 7
      %v6931 = vrot.slane %v6930, 4
      %v6933 = vshrl.u32 %v6912, 16
      %v6935 = vrot.slane %v6933, 7
      %v6936 = vshll.u32 %v6912, 16
      %v6938 = vor.u32 %v6935, %v6936
      %v6939 = vsel %vm327, %v6931, %v6938
      %v6941 = vshrl.u32 %v6913, 16
      %v6943 = vrot.slane %v6941, 7
      %v6944 = vrot.slane %v6943, 4
      %v6946 = vshrl.u32 %v6914, 16
      %v6948 = vrot.slane %v6946, 7
      %v6949 = vshll.u32 %v6914, 16
      %v6951 = vor.u32 %v6948, %v6949
      %v6952 = vsel %vm327, %v6944, %v6951
      %v6954 = vshrl.u32 %v6915, 16
      %v6956 = vrot.slane %v6954, 7
      %v6957 = vrot.slane %v6956, 4
      %v6959 = vshrl.u32 %v6916, 16
      %v6961 = vrot.slane %v6959, 7
      %v6962 = vshll.u32 %v6916, 16
      %v6964 = vor.u32 %v6961, %v6962
      %v6965 = vsel %vm327, %v6957, %v6964
      %v6967 = vshrl.u32 %v6917, 16
      %v6969 = vrot.slane %v6967, 7
      %v6970 = vrot.slane %v6969, 4
      %v6972 = vshrl.u32 %v6918, 16
      %v6974 = vrot.slane %v6972, 7
      %v6975 = vshll.u32 %v6918, 16
      %v6977 = vor.u32 %v6974, %v6975
      %v6978 = vsel %vm327, %v6970, %v6977
      %v6980 = vshrl.u32 %v6919, 16
      %v6982 = vrot.slane %v6980, 7
      %v6983 = vrot.slane %v6982, 4
      %v6985 = vshrl.u32 %v6920, 16
      %v6987 = vrot.slane %v6985, 7
      %v6988 = vshll.u32 %v6920, 16
      %v6990 = vor.u32 %v6987, %v6988
      %v6991 = vsel %vm327, %v6983, %v6990
      %v6993 = vshrl.u32 %v6921, 16
      %v6995 = vrot.slane %v6993, 7
      %v6996 = vrot.slane %v6995, 4
      %v6998 = vshrl.u32 %v6922, 16
      %v7000 = vrot.slane %v6998, 7
      %v7001 = vshll.u32 %v6922, 16
      %v7003 = vor.u32 %v7000, %v7001
      %v7004 = vsel %vm327, %v6996, %v7003
      %v7006 = vshrl.u32 %v6923, 16
      %v7008 = vrot.slane %v7006, 7
      %v7009 = vrot.slane %v7008, 4
      %v7011 = vshrl.u32 %v6924, 16
      %v7013 = vrot.slane %v7011, 7
      %v7014 = vshll.u32 %v6924, 16
      %v7016 = vor.u32 %v7013, %v7014
      %v7017 = vsel %vm327, %v7009, %v7016
      %v7019 = vshrl.u32 %v6925, 16
      %v7021 = vrot.slane %v7019, 7
      %v7022 = vrot.slane %v7021, 4
      %v7024 = vshrl.u32 %v6926, 16
      %v7026 = vrot.slane %v7024, 7
      %v7027 = vshll.u32 %v6926, 16
      %v7029 = vor.u32 %v7026, %v7027
      %v7030 = vsel %vm327, %v7022, %v7029
      %s7031 = scalar_lea.vmem %s1, 960
      %v7032 = vld [vmem:[%s7031] sm:$0xf]
      %v7033 = vld [vmem:[%s7031 + $0x4] sm:$0xf]
      %v7034 = vld [vmem:[%s7031 + $0x8] sm:$0xf]
      %v7035 = vld [vmem:[%s7031 + $0xc] sm:$0xf]
      %v7036 = vld [vmem:[%s7031 + $0x10] sm:$0xf]
      %v7037 = vld [vmem:[%s7031 + $0x14] sm:$0xf]
      %v7038 = vld [vmem:[%s7031 + $0x18] sm:$0xf]
      %v7039 = vld [vmem:[%s7031 + $0x1c] sm:$0xf]
      %v7040 = vunpack.c.l.b16 %v6939
      %v7041 = vunpack.c.l.b16 %v6952
      %v7042 = vunpack.c.l.b16 %v6965
      %v7043 = vunpack.c.l.b16 %v6978
      %v7044 = vunpack.c.l.b16 %v6991
      %v7045 = vunpack.c.l.b16 %v7004
      %v7046 = vunpack.c.l.b16 %v7017
      %v7047 = vunpack.c.l.b16 %v7030
      %v7048 = vpack.c.b16 %v7041, %v7040
      %v7049 = vpack.c.b16 %v7043, %v7042
      %v7050 = vpack.c.b16 %v7045, %v7044
      %v7051 = vpack.c.b16 %v7047, %v7046
      %v7060 = vunpack.c.l.b16 %v7032
      %v7061 = vunpack.c.l.b16 %v7033
      %v7062 = vunpack.c.l.b16 %v7034
      %v7063 = vunpack.c.l.b16 %v7035
      %v7064 = vunpack.c.l.b16 %v7036
      %v7065 = vunpack.c.l.b16 %v7037
      %v7066 = vunpack.c.l.b16 %v7038
      %v7067 = vunpack.c.l.b16 %v7039
      %v7068 = vpack.c.b16 %v7061, %v7060
      %v7069 = vpack.c.b16 %v7063, %v7062
      %v7070 = vpack.c.b16 %v7065, %v7064
      %v7071 = vpack.c.b16 %v7067, %v7066
      %v7077 = vsel %vm493, %v7048, 0
      %v7080 = vsel %vm493, %v7049, 0
      %v7083 = vsel %vm493, %v7050, 0
      %v7086 = vsel %vm493, %v7051, 0
      %7088 = vmatprep.subr.bf16.mxu0 0
      %7089 = vmatpush1.bf16.msra.mxu0 %v7068
      %7090 = vmatprep.subr.bf16.mxu0 0
      %7091 = vmatpush1.bf16.msra.mxu0 %v7069
      %7092 = vmatprep.subr.bf16.mxu0 0
      %7093 = vmatpush1.bf16.msra.mxu0 %v7070
      %7094 = vmatprep.subr.bf16.mxu0 0
      %7095 = vmatpush1.bf16.msra.mxu0 %v7071
      %7096 = vmatprep.subr.bf16.mxu0 0
      %7097 = vmatpush1.bf16.msra.mxu0 0
      %7098 = vmatprep.subr.bf16.mxu0 0
      %7099 = vmatpush1.bf16.msra.mxu0 0
      %7100 = vmatprep.subr.bf16.mxu0 0
      %7101 = vmatpush1.bf16.msra.mxu0 0
      %7102 = vmatprep.subr.bf16.mxu0 0
      %7103 = vmatpush1.bf16.msra.mxu0 0
      %7104 = vmatprep.subr.bf16.mxu0 0
      %7105 = vmatpush1.bf16.msra.mxu0 0
      %7106 = vmatprep.subr.bf16.mxu0 0
      %7107 = vmatpush1.bf16.msra.mxu0 0
      %7108 = vmatprep.subr.bf16.mxu0 0
      %7109 = vmatpush1.bf16.msra.mxu0 0
      %7110 = vmatprep.subr.bf16.mxu0 0
      %7111 = vmatpush1.bf16.msra.mxu0 0
      %7112 = vmatprep.subr.bf16.mxu0 0
      %7113 = vmatpush1.bf16.msra.mxu0 0
      %7114 = vmatprep.subr.bf16.mxu0 0
      %7115 = vmatpush1.bf16.msra.mxu0 0
      %7116 = vmatprep.subr.bf16.mxu0 0
      %7117 = vmatpush1.bf16.msra.mxu0 0
      %7118 = vmatprep.subr.bf16.mxu0 0
      %7119 = vmatpush1.bf16.msra.mxu0 0
      %7120 = vmatprep.mubr.bf16.mxu0 0
      %7121 = vmatmul.mubr.bf16.gmra.mrb[0].mxu0 %v7077
      %v7122 = vpop.f32.mrb[0].mxu0
      %v7123 = vadd.f32 0.0, %v7122
      %v7124 = vpop.f32.mrb[0].mxu0
      %v7125 = vpop.f32.mrb[0].mxu0
      %v7126 = vadd.f32 0.0, %v7125
      %v7127 = vpop.f32.mrb[0].mxu0
      %7128 = vmatprep.mubr.bf16.mxu0 0
      %7129 = vmatmul.mubr.bf16.gmra.mrb[0].mxu0 %v7080
      %v7130 = vpop.f32.mrb[0].mxu0
      %v7131 = vadd.f32 0.0, %v7130
      %v7132 = vpop.f32.mrb[0].mxu0
      %v7133 = vpop.f32.mrb[0].mxu0
      %v7134 = vadd.f32 0.0, %v7133
      %v7135 = vpop.f32.mrb[0].mxu0
      %7136 = vmatprep.mubr.bf16.mxu0 0
      %7137 = vmatmul.mubr.bf16.gmra.mrb[0].mxu0 %v7083
      %v7138 = vpop.f32.mrb[0].mxu0
      %v7139 = vadd.f32 0.0, %v7138
      %v7140 = vpop.f32.mrb[0].mxu0
      %v7141 = vpop.f32.mrb[0].mxu0
      %v7142 = vadd.f32 0.0, %v7141
      %v7143 = vpop.f32.mrb[0].mxu0
      %7144 = vmatprep.mubr.bf16.mxu0 0
      %7145 = vmatmul.mubr.bf16.gmra.mrb[0].mxu0 %v7086
      %v7146 = vpop.f32.mrb[0].mxu0
      %v7147 = vadd.f32 0.0, %v7146
      %v7148 = vpop.f32.mrb[0].mxu0
      %v7149 = vpop.f32.mrb[0].mxu0
      %v7150 = vadd.f32 0.0, %v7149
      %v7151 = vpop.f32.mrb[0].mxu0
      %7152 = vdwg.mxu0
      %v7153 = vadd.f32 %v6903, %v7123
      %v7154 = vadd.f32 %v6904, %v7126
      %v7155 = vadd.f32 %v6905, %v7131
      %v7156 = vadd.f32 %v6906, %v7134
      %v7157 = vadd.f32 %v6907, %v7139
      %v7158 = vadd.f32 %v6908, %v7142
      %v7159 = vadd.f32 %v6909, %v7147
      %v7160 = vadd.f32 %v6910, %v7150
      %s7161 = scalar_lea.vmem %s1, 992
      %v7162 = vld [vmem:[%s7161] sm:$0xf]
      %v7163 = vld [vmem:[%s7161 + $0x4] sm:$0xf]
      %v7164 = vld [vmem:[%s7161 + $0x8] sm:$0xf]
      %v7165 = vld [vmem:[%s7161 + $0xc] sm:$0xf]
      %v7166 = vld [vmem:[%s7161 + $0x10] sm:$0xf]
      %v7167 = vld [vmem:[%s7161 + $0x14] sm:$0xf]
      %v7168 = vld [vmem:[%s7161 + $0x18] sm:$0xf]
      %v7169 = vld [vmem:[%s7161 + $0x1c] sm:$0xf]
      %v7178 = vunpack.c.l.b16 %v6912
      %v7179 = vunpack.c.l.b16 %v6914
      %v7180 = vunpack.c.l.b16 %v6916
      %v7181 = vunpack.c.l.b16 %v6918
      %v7182 = vunpack.c.l.b16 %v6920
      %v7183 = vunpack.c.l.b16 %v6922
      %v7184 = vunpack.c.l.b16 %v6924
      %v7185 = vunpack.c.l.b16 %v6926
      %v7186 = vpack.c.b16 %v7179, %v7178
      %v7187 = vpack.c.b16 %v7181, %v7180
      %v7188 = vpack.c.b16 %v7183, %v7182
      %v7189 = vpack.c.b16 %v7185, %v7184
      %v7198 = vunpack.c.l.b16 %v7162
      %v7199 = vunpack.c.l.b16 %v7163
      %v7200 = vunpack.c.l.b16 %v7164
      %v7201 = vunpack.c.l.b16 %v7165
      %v7202 = vunpack.c.l.b16 %v7166
      %v7203 = vunpack.c.l.b16 %v7167
      %v7204 = vunpack.c.l.b16 %v7168
      %v7205 = vunpack.c.l.b16 %v7169
      %v7206 = vpack.c.b16 %v7199, %v7198
      %v7207 = vpack.c.b16 %v7201, %v7200
      %v7208 = vpack.c.b16 %v7203, %v7202
      %v7209 = vpack.c.b16 %v7205, %v7204
      %v7215 = vsel %vm493, %v7186, 0
      %v7218 = vsel %vm493, %v7187, 0
      %v7221 = vsel %vm493, %v7188, 0
      %v7224 = vsel %vm493, %v7189, 0
      %7226 = vmatprep.subr.bf16.mxu0 0
      %7227 = vmatpush1.bf16.msra.mxu0 %v7206
      %7228 = vmatprep.subr.bf16.mxu0 0
      %7229 = vmatpush1.bf16.msra.mxu0 %v7207
      %7230 = vmatprep.subr.bf16.mxu0 0
      %7231 = vmatpush1.bf16.msra.mxu0 %v7208
      %7232 = vmatprep.subr.bf16.mxu0 0
      %7233 = vmatpush1.bf16.msra.mxu0 %v7209
      %7234 = vmatprep.subr.bf16.mxu0 0
      %7235 = vmatpush1.bf16.msra.mxu0 0
      %7236 = vmatprep.subr.bf16.mxu0 0
      %7237 = vmatpush1.bf16.msra.mxu0 0
      %7238 = vmatprep.subr.bf16.mxu0 0
      %7239 = vmatpush1.bf16.msra.mxu0 0
      %7240 = vmatprep.subr.bf16.mxu0 0
      %7241 = vmatpush1.bf16.msra.mxu0 0
      %7242 = vmatprep.subr.bf16.mxu0 0
      %7243 = vmatpush1.bf16.msra.mxu0 0
      %7244 = vmatprep.subr.bf16.mxu0 0
      %7245 = vmatpush1.bf16.msra.mxu0 0
      %7246 = vmatprep.subr.bf16.mxu0 0
      %7247 = vmatpush1.bf16.msra.mxu0 0
      %7248 = vmatprep.subr.bf16.mxu0 0
      %7249 = vmatpush1.bf16.msra.mxu0 0
      %7250 = vmatprep.subr.bf16.mxu0 0
      %7251 = vmatpush1.bf16.msra.mxu0 0
      %7252 = vmatprep.subr.bf16.mxu0 0
      %7253 = vmatpush1.bf16.msra.mxu0 0
      %7254 = vmatprep.subr.bf16.mxu0 0
      %7255 = vmatpush1.bf16.msra.mxu0 0
      %7256 = vmatprep.subr.bf16.mxu0 0
      %7257 = vmatpush1.bf16.msra.mxu0 0
      %7258 = vmatprep.mubr.bf16.mxu0 0
      %7259 = vmatmul.mubr.bf16.gmra.mrb[0].mxu0 %v7215
      %v7260 = vpop.f32.mrb[0].mxu0
      %v7261 = vadd.f32 0.0, %v7260
      %v7262 = vpop.f32.mrb[0].mxu0
      %v7263 = vpop.f32.mrb[0].mxu0
      %v7264 = vadd.f32 0.0, %v7263
      %v7265 = vpop.f32.mrb[0].mxu0
      %7266 = vmatprep.mubr.bf16.mxu0 0
      %7267 = vmatmul.mubr.bf16.gmra.mrb[0].mxu0 %v7218
      %v7268 = vpop.f32.mrb[0].mxu0
      %v7269 = vadd.f32 0.0, %v7268
      %v7270 = vpop.f32.mrb[0].mxu0
      %v7271 = vpop.f32.mrb[0].mxu0
      %v7272 = vadd.f32 0.0, %v7271
      %v7273 = vpop.f32.mrb[0].mxu0
      %7274 = vmatprep.mubr.bf16.mxu0 0
      %7275 = vmatmul.mubr.bf16.gmra.mrb[0].mxu0 %v7221
      %v7276 = vpop.f32.mrb[0].mxu0
      %v7277 = vadd.f32 0.0, %v7276
      %v7278 = vpop.f32.mrb[0].mxu0
      %v7279 = vpop.f32.mrb[0].mxu0
      %v7280 = vadd.f32 0.0, %v7279
      %v7281 = vpop.f32.mrb[0].mxu0
      %7282 = vmatprep.mubr.bf16.mxu0 0
      %7283 = vmatmul.mubr.bf16.gmra.mrb[0].mxu0 %v7224
      %v7284 = vpop.f32.mrb[0].mxu0
      %v7285 = vadd.f32 0.0, %v7284
      %v7286 = vpop.f32.mrb[0].mxu0
      %v7287 = vpop.f32.mrb[0].mxu0
      %v7288 = vadd.f32 0.0, %v7287
      %v7289 = vpop.f32.mrb[0].mxu0
      %7290 = vdwg.mxu0
      %v7291 = vadd.f32 %v7153, %v7261
      %v7292 = vadd.f32 %v7154, %v7264
      %v7293 = vadd.f32 %v7155, %v7269
      %v7294 = vadd.f32 %v7156, %v7272
      %v7295 = vadd.f32 %v7157, %v7277
      %v7296 = vadd.f32 %v7158, %v7280
      %v7297 = vadd.f32 %v7159, %v7285
      %v7298 = vadd.f32 %v7160, %v7288
      %v7299 = vld [vmem:[%s300 + $0x4] sm:$0xf]
      %v7300 = vld [vmem:[%s300 + $0x8] sm:$0x1]
      %v7301 = vld [vmem:[%s300 + $0x10] sm:$0xf]
      %v7302 = vld [vmem:[%s300 + $0x14] sm:$0x1]
      %v7303 = vld [vmem:[%s300 + $0x1c] sm:$0xf]
      %v7304 = vld [vmem:[%s300 + $0x20] sm:$0x1]
      %v7305 = vld [vmem:[%s300 + $0x28] sm:$0xf]
      %v7306 = vld [vmem:[%s300 + $0x2c] sm:$0x1]
      %v7307 = vld [vmem:[%s300 + $0x34] sm:$0xf]
      %v7308 = vld [vmem:[%s300 + $0x38] sm:$0x1]
      %v7309 = vld [vmem:[%s300 + $0x40] sm:$0xf]
      %v7310 = vld [vmem:[%s300 + $0x44] sm:$0x1]
      %v7311 = vld [vmem:[%s300 + $0x4c] sm:$0xf]
      %v7312 = vld [vmem:[%s300 + $0x50] sm:$0x1]
      %v7313 = vld [vmem:[%s300 + $0x58] sm:$0xf]
      %v7314 = vld [vmem:[%s300 + $0x5c] sm:$0x1]
      %v7316 = vshrl.u32 %v7299, 16
      %v7318 = vrot.slane %v7316, 4
      %v7319 = vshll.u32 %v7299, 16
      %v7321 = vrot.slane %v7319, 5
      %v7322 = vor.u32 %v7318, %v7321
      %v7323 = vrot.slane %v7322, 4
      %v7325 = vshll.u32 %v7300, 16
      %v7327 = vrot.slane %v7325, 5
      %v7328 = vsel %vm702, %v7323, %v7327
      %v7330 = vshrl.u32 %v7301, 16
      %v7332 = vrot.slane %v7330, 4
      %v7333 = vshll.u32 %v7301, 16
      %v7335 = vrot.slane %v7333, 5
      %v7336 = vor.u32 %v7332, %v7335
      %v7337 = vrot.slane %v7336, 4
      %v7339 = vshll.u32 %v7302, 16
      %v7341 = vrot.slane %v7339, 5
      %v7342 = vsel %vm702, %v7337, %v7341
      %v7344 = vshrl.u32 %v7303, 16
      %v7346 = vrot.slane %v7344, 4
      %v7347 = vshll.u32 %v7303, 16
      %v7349 = vrot.slane %v7347, 5
      %v7350 = vor.u32 %v7346, %v7349
      %v7351 = vrot.slane %v7350, 4
      %v7353 = vshll.u32 %v7304, 16
      %v7355 = vrot.slane %v7353, 5
      %v7356 = vsel %vm702, %v7351, %v7355
      %v7358 = vshrl.u32 %v7305, 16
      %v7360 = vrot.slane %v7358, 4
      %v7361 = vshll.u32 %v7305, 16
      %v7363 = vrot.slane %v7361, 5
      %v7364 = vor.u32 %v7360, %v7363
      %v7365 = vrot.slane %v7364, 4
      %v7367 = vshll.u32 %v7306, 16
      %v7369 = vrot.slane %v7367, 5
      %v7370 = vsel %vm702, %v7365, %v7369
      %v7372 = vshrl.u32 %v7307, 16
      %v7374 = vrot.slane %v7372, 4
      %v7375 = vshll.u32 %v7307, 16
      %v7377 = vrot.slane %v7375, 5
      %v7378 = vor.u32 %v7374, %v7377
      %v7379 = vrot.slane %v7378, 4
      %v7381 = vshll.u32 %v7308, 16
      %v7383 = vrot.slane %v7381, 5
      %v7384 = vsel %vm702, %v7379, %v7383
      %v7386 = vshrl.u32 %v7309, 16
      %v7388 = vrot.slane %v7386, 4
      %v7389 = vshll.u32 %v7309, 16
      %v7391 = vrot.slane %v7389, 5
      %v7392 = vor.u32 %v7388, %v7391
      %v7393 = vrot.slane %v7392, 4
      %v7395 = vshll.u32 %v7310, 16
      %v7397 = vrot.slane %v7395, 5
      %v7398 = vsel %vm702, %v7393, %v7397
      %v7400 = vshrl.u32 %v7311, 16
      %v7402 = vrot.slane %v7400, 4
      %v7403 = vshll.u32 %v7311, 16
      %v7405 = vrot.slane %v7403, 5
      %v7406 = vor.u32 %v7402, %v7405
      %v7407 = vrot.slane %v7406, 4
      %v7409 = vshll.u32 %v7312, 16
      %v7411 = vrot.slane %v7409, 5
      %v7412 = vsel %vm702, %v7407, %v7411
      %v7414 = vshrl.u32 %v7313, 16
      %v7416 = vrot.slane %v7414, 4
      %v7417 = vshll.u32 %v7313, 16
      %v7419 = vrot.slane %v7417, 5
      %v7420 = vor.u32 %v7416, %v7419
      %v7421 = vrot.slane %v7420, 4
      %v7423 = vshll.u32 %v7314, 16
      %v7425 = vrot.slane %v7423, 5
      %v7426 = vsel %vm702, %v7421, %v7425
      %s7427 = scalar_lea.vmem %s1, 1024
      %v7428 = vld [vmem:[%s7427] sm:$0xf]
      %v7429 = vld [vmem:[%s7427 + $0x4] sm:$0xf]
      %v7430 = vld [vmem:[%s7427 + $0x8] sm:$0xf]
      %v7431 = vld [vmem:[%s7427 + $0xc] sm:$0xf]
      %v7432 = vld [vmem:[%s7427 + $0x10] sm:$0xf]
      %v7433 = vld [vmem:[%s7427 + $0x14] sm:$0xf]
      %v7434 = vld [vmem:[%s7427 + $0x18] sm:$0xf]
      %v7435 = vld [vmem:[%s7427 + $0x1c] sm:$0xf]
      %v7436 = vunpack.c.l.b16 %v7328
      %v7437 = vunpack.c.l.b16 %v7342
      %v7438 = vunpack.c.l.b16 %v7356
      %v7439 = vunpack.c.l.b16 %v7370
      %v7440 = vunpack.c.l.b16 %v7384
      %v7441 = vunpack.c.l.b16 %v7398
      %v7442 = vunpack.c.l.b16 %v7412
      %v7443 = vunpack.c.l.b16 %v7426
      %v7444 = vpack.c.b16 %v7437, %v7436
      %v7445 = vpack.c.b16 %v7439, %v7438
      %v7446 = vpack.c.b16 %v7441, %v7440
      %v7447 = vpack.c.b16 %v7443, %v7442
      %v7456 = vunpack.c.l.b16 %v7428
      %v7457 = vunpack.c.l.b16 %v7429
      %v7458 = vunpack.c.l.b16 %v7430
      %v7459 = vunpack.c.l.b16 %v7431
      %v7460 = vunpack.c.l.b16 %v7432
      %v7461 = vunpack.c.l.b16 %v7433
      %v7462 = vunpack.c.l.b16 %v7434
      %v7463 = vunpack.c.l.b16 %v7435
      %v7464 = vpack.c.b16 %v7457, %v7456
      %v7465 = vpack.c.b16 %v7459, %v7458
      %v7466 = vpack.c.b16 %v7461, %v7460
      %v7467 = vpack.c.b16 %v7463, %v7462
      %v7473 = vsel %vm493, %v7444, 0
      %v7476 = vsel %vm493, %v7445, 0
      %v7479 = vsel %vm493, %v7446, 0
      %v7482 = vsel %vm493, %v7447, 0
      %7484 = vmatprep.subr.bf16.mxu0 0
      %7485 = vmatpush1.bf16.msra.mxu0 %v7464
      %7486 = vmatprep.subr.bf16.mxu0 0
      %7487 = vmatpush1.bf16.msra.mxu0 %v7465
      %7488 = vmatprep.subr.bf16.mxu0 0
      %7489 = vmatpush1.bf16.msra.mxu0 %v7466
      %7490 = vmatprep.subr.bf16.mxu0 0
      %7491 = vmatpush1.bf16.msra.mxu0 %v7467
      %7492 = vmatprep.subr.bf16.mxu0 0
      %7493 = vmatpush1.bf16.msra.mxu0 0
      %7494 = vmatprep.subr.bf16.mxu0 0
      %7495 = vmatpush1.bf16.msra.mxu0 0
      %7496 = vmatprep.subr.bf16.mxu0 0
      %7497 = vmatpush1.bf16.msra.mxu0 0
      %7498 = vmatprep.subr.bf16.mxu0 0
      %7499 = vmatpush1.bf16.msra.mxu0 0
      %7500 = vmatprep.subr.bf16.mxu0 0
      %7501 = vmatpush1.bf16.msra.mxu0 0
      %7502 = vmatprep.subr.bf16.mxu0 0
      %7503 = vmatpush1.bf16.msra.mxu0 0
      %7504 = vmatprep.subr.bf16.mxu0 0
      %7505 = vmatpush1.bf16.msra.mxu0 0
      %7506 = vmatprep.subr.bf16.mxu0 0
      %7507 = vmatpush1.bf16.msra.mxu0 0
      %7508 = vmatprep.subr.bf16.mxu0 0
      %7509 = vmatpush1.bf16.msra.mxu0 0
      %7510 = vmatprep.subr.bf16.mxu0 0
      %7511 = vmatpush1.bf16.msra.mxu0 0
      %7512 = vmatprep.subr.bf16.mxu0 0
      %7513 = vmatpush1.bf16.msra.mxu0 0
      %7514 = vmatprep.subr.bf16.mxu0 0
      %7515 = vmatpush1.bf16.msra.mxu0 0
      %7516 = vmatprep.mubr.bf16.mxu0 0
      %7517 = vmatmul.mubr.bf16.gmra.mrb[0].mxu0 %v7473
      %v7518 = vpop.f32.mrb[0].mxu0
      %v7519 = vadd.f32 0.0, %v7518
      %v7520 = vpop.f32.mrb[0].mxu0
      %v7521 = vpop.f32.mrb[0].mxu0
      %v7522 = vadd.f32 0.0, %v7521
      %v7523 = vpop.f32.mrb[0].mxu0
      %7524 = vmatprep.mubr.bf16.mxu0 0
      %7525 = vmatmul.mubr.bf16.gmra.mrb[0].mxu0 %v7476
      %v7526 = vpop.f32.mrb[0].mxu0
      %v7527 = vadd.f32 0.0, %v7526
      %v7528 = vpop.f32.mrb[0].mxu0
      %v7529 = vpop.f32.mrb[0].mxu0
      %v7530 = vadd.f32 0.0, %v7529
      %v7531 = vpop.f32.mrb[0].mxu0
      %7532 = vmatprep.mubr.bf16.mxu0 0
      %7533 = vmatmul.mubr.bf16.gmra.mrb[0].mxu0 %v7479
      %v7534 = vpop.f32.mrb[0].mxu0
      %v7535 = vadd.f32 0.0, %v7534
      %v7536 = vpop.f32.mrb[0].mxu0
      %v7537 = vpop.f32.mrb[0].mxu0
      %v7538 = vadd.f32 0.0, %v7537
      %v7539 = vpop.f32.mrb[0].mxu0
      %7540 = vmatprep.mubr.bf16.mxu0 0
      %7541 = vmatmul.mubr.bf16.gmra.mrb[0].mxu0 %v7482
      %v7542 = vpop.f32.mrb[0].mxu0
      %v7543 = vadd.f32 0.0, %v7542
      %v7544 = vpop.f32.mrb[0].mxu0
      %v7545 = vpop.f32.mrb[0].mxu0
      %v7546 = vadd.f32 0.0, %v7545
      %v7547 = vpop.f32.mrb[0].mxu0
      %7548 = vdwg.mxu0
      %v7549 = vadd.f32 %v7291, %v7519
      %v7550 = vadd.f32 %v7292, %v7522
      %v7551 = vadd.f32 %v7293, %v7527
      %v7552 = vadd.f32 %v7294, %v7530
      %v7553 = vadd.f32 %v7295, %v7535
      %v7554 = vadd.f32 %v7296, %v7538
      %v7555 = vadd.f32 %v7297, %v7543
      %v7556 = vadd.f32 %v7298, %v7546
      %v7557 = vld [vmem:[%s1591] sm:$0x8]
      %v7558 = vld [vmem:[%s1591 + $0x4] sm:$0xf]
      %v7559 = vld [vmem:[%s1591 + $0xc] sm:$0x8]
      %v7560 = vld [vmem:[%s1591 + $0x10] sm:$0xf]
      %v7561 = vld [vmem:[%s1591 + $0x18] sm:$0x8]
      %v7562 = vld [vmem:[%s1591 + $0x1c] sm:$0xf]
      %v7563 = vld [vmem:[%s1591 + $0x24] sm:$0x8]
      %v7564 = vld [vmem:[%s1591 + $0x28] sm:$0xf]
      %v7565 = vld [vmem:[%s1591 + $0x30] sm:$0x8]
      %v7566 = vld [vmem:[%s1591 + $0x34] sm:$0xf]
      %v7567 = vld [vmem:[%s1591 + $0x3c] sm:$0x8]
      %v7568 = vld [vmem:[%s1591 + $0x40] sm:$0xf]
      %v7569 = vld [vmem:[%s1591 + $0x48] sm:$0x8]
      %v7570 = vld [vmem:[%s1591 + $0x4c] sm:$0xf]
      %v7571 = vld [vmem:[%s1591 + $0x54] sm:$0x8]
      %v7572 = vld [vmem:[%s1591 + $0x58] sm:$0xf]
      %v7574 = vshrl.u32 %v7557, 16
      %v7576 = vrot.slane %v7574, 7
      %v7577 = vrot.slane %v7576, 4
      %v7579 = vshrl.u32 %v7558, 16
      %v7581 = vrot.slane %v7579, 7
      %v7582 = vshll.u32 %v7558, 16
      %v7584 = vor.u32 %v7581, %v7582
      %v7585 = vsel %vm327, %v7577, %v7584
      %v7587 = vshrl.u32 %v7559, 16
      %v7589 = vrot.slane %v7587, 7
      %v7590 = vrot.slane %v7589, 4
      %v7592 = vshrl.u32 %v7560, 16
      %v7594 = vrot.slane %v7592, 7
      %v7595 = vshll.u32 %v7560, 16
      %v7597 = vor.u32 %v7594, %v7595
      %v7598 = vsel %vm327, %v7590, %v7597
      %v7600 = vshrl.u32 %v7561, 16
      %v7602 = vrot.slane %v7600, 7
      %v7603 = vrot.slane %v7602, 4
      %v7605 = vshrl.u32 %v7562, 16
      %v7607 = vrot.slane %v7605, 7
      %v7608 = vshll.u32 %v7562, 16
      %v7610 = vor.u32 %v7607, %v7608
      %v7611 = vsel %vm327, %v7603, %v7610
      %v7613 = vshrl.u32 %v7563, 16
      %v7615 = vrot.slane %v7613, 7
      %v7616 = vrot.slane %v7615, 4
      %v7618 = vshrl.u32 %v7564, 16
      %v7620 = vrot.slane %v7618, 7
      %v7621 = vshll.u32 %v7564, 16
      %v7623 = vor.u32 %v7620, %v7621
      %v7624 = vsel %vm327, %v7616, %v7623
      %v7626 = vshrl.u32 %v7565, 16
      %v7628 = vrot.slane %v7626, 7
      %v7629 = vrot.slane %v7628, 4
      %v7631 = vshrl.u32 %v7566, 16
      %v7633 = vrot.slane %v7631, 7
      %v7634 = vshll.u32 %v7566, 16
      %v7636 = vor.u32 %v7633, %v7634
      %v7637 = vsel %vm327, %v7629, %v7636
      %v7639 = vshrl.u32 %v7567, 16
      %v7641 = vrot.slane %v7639, 7
      %v7642 = vrot.slane %v7641, 4
      %v7644 = vshrl.u32 %v7568, 16
      %v7646 = vrot.slane %v7644, 7
      %v7647 = vshll.u32 %v7568, 16
      %v7649 = vor.u32 %v7646, %v7647
      %v7650 = vsel %vm327, %v7642, %v7649
      %v7652 = vshrl.u32 %v7569, 16
      %v7654 = vrot.slane %v7652, 7
      %v7655 = vrot.slane %v7654, 4
      %v7657 = vshrl.u32 %v7570, 16
      %v7659 = vrot.slane %v7657, 7
      %v7660 = vshll.u32 %v7570, 16
      %v7662 = vor.u32 %v7659, %v7660
      %v7663 = vsel %vm327, %v7655, %v7662
      %v7665 = vshrl.u32 %v7571, 16
      %v7667 = vrot.slane %v7665, 7
      %v7668 = vrot.slane %v7667, 4
      %v7670 = vshrl.u32 %v7572, 16
      %v7672 = vrot.slane %v7670, 7
      %v7673 = vshll.u32 %v7572, 16
      %v7675 = vor.u32 %v7672, %v7673
      %v7676 = vsel %vm327, %v7668, %v7675
      %s7677 = scalar_lea.vmem %s1, 1056
      %v7678 = vld [vmem:[%s7677] sm:$0xf]
      %v7679 = vld [vmem:[%s7677 + $0x4] sm:$0xf]
      %v7680 = vld [vmem:[%s7677 + $0x8] sm:$0xf]
      %v7681 = vld [vmem:[%s7677 + $0xc] sm:$0xf]
      %v7682 = vld [vmem:[%s7677 + $0x10] sm:$0xf]
      %v7683 = vld [vmem:[%s7677 + $0x14] sm:$0xf]
      %v7684 = vld [vmem:[%s7677 + $0x18] sm:$0xf]
      %v7685 = vld [vmem:[%s7677 + $0x1c] sm:$0xf]
      %v7686 = vunpack.c.l.b16 %v7585
      %v7687 = vunpack.c.l.b16 %v7598
      %v7688 = vunpack.c.l.b16 %v7611
      %v7689 = vunpack.c.l.b16 %v7624
      %v7690 = vunpack.c.l.b16 %v7637
      %v7691 = vunpack.c.l.b16 %v7650
      %v7692 = vunpack.c.l.b16 %v7663
      %v7693 = vunpack.c.l.b16 %v7676
      %v7694 = vpack.c.b16 %v7687, %v7686
      %v7695 = vpack.c.b16 %v7689, %v7688
      %v7696 = vpack.c.b16 %v7691, %v7690
      %v7697 = vpack.c.b16 %v7693, %v7692
      %v7706 = vunpack.c.l.b16 %v7678
      %v7707 = vunpack.c.l.b16 %v7679
      %v7708 = vunpack.c.l.b16 %v7680
      %v7709 = vunpack.c.l.b16 %v7681
      %v7710 = vunpack.c.l.b16 %v7682
      %v7711 = vunpack.c.l.b16 %v7683
      %v7712 = vunpack.c.l.b16 %v7684
      %v7713 = vunpack.c.l.b16 %v7685
      %v7714 = vpack.c.b16 %v7707, %v7706
      %v7715 = vpack.c.b16 %v7709, %v7708
      %v7716 = vpack.c.b16 %v7711, %v7710
      %v7717 = vpack.c.b16 %v7713, %v7712
      %v7723 = vsel %vm493, %v7694, 0
      %v7726 = vsel %vm493, %v7695, 0
      %v7729 = vsel %vm493, %v7696, 0
      %v7732 = vsel %vm493, %v7697, 0
      %7734 = vmatprep.subr.bf16.mxu0 0
      %7735 = vmatpush1.bf16.msra.mxu0 %v7714
      %7736 = vmatprep.subr.bf16.mxu0 0
      %7737 = vmatpush1.bf16.msra.mxu0 %v7715
      %7738 = vmatprep.subr.bf16.mxu0 0
      %7739 = vmatpush1.bf16.msra.mxu0 %v7716
      %7740 = vmatprep.subr.bf16.mxu0 0
      %7741 = vmatpush1.bf16.msra.mxu0 %v7717
      %7742 = vmatprep.subr.bf16.mxu0 0
      %7743 = vmatpush1.bf16.msra.mxu0 0
      %7744 = vmatprep.subr.bf16.mxu0 0
      %7745 = vmatpush1.bf16.msra.mxu0 0
      %7746 = vmatprep.subr.bf16.mxu0 0
      %7747 = vmatpush1.bf16.msra.mxu0 0
      %7748 = vmatprep.subr.bf16.mxu0 0
      %7749 = vmatpush1.bf16.msra.mxu0 0
      %7750 = vmatprep.subr.bf16.mxu0 0
      %7751 = vmatpush1.bf16.msra.mxu0 0
      %7752 = vmatprep.subr.bf16.mxu0 0
      %7753 = vmatpush1.bf16.msra.mxu0 0
      %7754 = vmatprep.subr.bf16.mxu0 0
      %7755 = vmatpush1.bf16.msra.mxu0 0
      %7756 = vmatprep.subr.bf16.mxu0 0
      %7757 = vmatpush1.bf16.msra.mxu0 0
      %7758 = vmatprep.subr.bf16.mxu0 0
      %7759 = vmatpush1.bf16.msra.mxu0 0
      %7760 = vmatprep.subr.bf16.mxu0 0
      %7761 = vmatpush1.bf16.msra.mxu0 0
      %7762 = vmatprep.subr.bf16.mxu0 0
      %7763 = vmatpush1.bf16.msra.mxu0 0
      %7764 = vmatprep.subr.bf16.mxu0 0
      %7765 = vmatpush1.bf16.msra.mxu0 0
      %7766 = vmatprep.mubr.bf16.mxu0 0
      %7767 = vmatmul.mubr.bf16.gmra.mrb[0].mxu0 %v7723
      %v7768 = vpop.f32.mrb[0].mxu0
      %v7769 = vadd.f32 0.0, %v7768
      %v7770 = vpop.f32.mrb[0].mxu0
      %v7771 = vpop.f32.mrb[0].mxu0
      %v7772 = vadd.f32 0.0, %v7771
      %v7773 = vpop.f32.mrb[0].mxu0
      %7774 = vmatprep.mubr.bf16.mxu0 0
      %7775 = vmatmul.mubr.bf16.gmra.mrb[0].mxu0 %v7726
      %v7776 = vpop.f32.mrb[0].mxu0
      %v7777 = vadd.f32 0.0, %v7776
      %v7778 = vpop.f32.mrb[0].mxu0
      %v7779 = vpop.f32.mrb[0].mxu0
      %v7780 = vadd.f32 0.0, %v7779
      %v7781 = vpop.f32.mrb[0].mxu0
      %7782 = vmatprep.mubr.bf16.mxu0 0
      %7783 = vmatmul.mubr.bf16.gmra.mrb[0].mxu0 %v7729
      %v7784 = vpop.f32.mrb[0].mxu0
      %v7785 = vadd.f32 0.0, %v7784
      %v7786 = vpop.f32.mrb[0].mxu0
      %v7787 = vpop.f32.mrb[0].mxu0
      %v7788 = vadd.f32 0.0, %v7787
      %v7789 = vpop.f32.mrb[0].mxu0
      %7790 = vmatprep.mubr.bf16.mxu0 0
      %7791 = vmatmul.mubr.bf16.gmra.mrb[0].mxu0 %v7732
      %v7792 = vpop.f32.mrb[0].mxu0
      %v7793 = vadd.f32 0.0, %v7792
      %v7794 = vpop.f32.mrb[0].mxu0
      %v7795 = vpop.f32.mrb[0].mxu0
      %v7796 = vadd.f32 0.0, %v7795
      %v7797 = vpop.f32.mrb[0].mxu0
      %7798 = vdwg.mxu0
      %v7799 = vadd.f32 %v7549, %v7769
      %v7800 = vadd.f32 %v7550, %v7772
      %v7801 = vadd.f32 %v7551, %v7777
      %v7802 = vadd.f32 %v7552, %v7780
      %v7803 = vadd.f32 %v7553, %v7785
      %v7804 = vadd.f32 %v7554, %v7788
      %v7805 = vadd.f32 %v7555, %v7793
      %v7806 = vadd.f32 %v7556, %v7796
      %s7807 = scalar_lea.vmem %s1, 1088
      %v7808 = vld [vmem:[%s7807] sm:$0xf]
      %v7809 = vld [vmem:[%s7807 + $0x4] sm:$0xf]
      %v7810 = vld [vmem:[%s7807 + $0x8] sm:$0xf]
      %v7811 = vld [vmem:[%s7807 + $0xc] sm:$0xf]
      %v7812 = vld [vmem:[%s7807 + $0x10] sm:$0xf]
      %v7813 = vld [vmem:[%s7807 + $0x14] sm:$0xf]
      %v7814 = vld [vmem:[%s7807 + $0x18] sm:$0xf]
      %v7815 = vld [vmem:[%s7807 + $0x1c] sm:$0xf]
      %v7824 = vunpack.c.l.b16 %v7558
      %v7825 = vunpack.c.l.b16 %v7560
      %v7826 = vunpack.c.l.b16 %v7562
      %v7827 = vunpack.c.l.b16 %v7564
      %v7828 = vunpack.c.l.b16 %v7566
      %v7829 = vunpack.c.l.b16 %v7568
      %v7830 = vunpack.c.l.b16 %v7570
      %v7831 = vunpack.c.l.b16 %v7572
      %v7832 = vpack.c.b16 %v7825, %v7824
      %v7833 = vpack.c.b16 %v7827, %v7826
      %v7834 = vpack.c.b16 %v7829, %v7828
      %v7835 = vpack.c.b16 %v7831, %v7830
      %v7844 = vunpack.c.l.b16 %v7808
      %v7845 = vunpack.c.l.b16 %v7809
      %v7846 = vunpack.c.l.b16 %v7810
      %v7847 = vunpack.c.l.b16 %v7811
      %v7848 = vunpack.c.l.b16 %v7812
      %v7849 = vunpack.c.l.b16 %v7813
      %v7850 = vunpack.c.l.b16 %v7814
      %v7851 = vunpack.c.l.b16 %v7815
      %v7852 = vpack.c.b16 %v7845, %v7844
      %v7853 = vpack.c.b16 %v7847, %v7846
      %v7854 = vpack.c.b16 %v7849, %v7848
      %v7855 = vpack.c.b16 %v7851, %v7850
      %v7861 = vsel %vm493, %v7832, 0
      %v7864 = vsel %vm493, %v7833, 0
      %v7867 = vsel %vm493, %v7834, 0
      %v7870 = vsel %vm493, %v7835, 0
      %7872 = vmatprep.subr.bf16.mxu0 0
      %7873 = vmatpush1.bf16.msra.mxu0 %v7852
      %7874 = vmatprep.subr.bf16.mxu0 0
      %7875 = vmatpush1.bf16.msra.mxu0 %v7853
      %7876 = vmatprep.subr.bf16.mxu0 0
      %7877 = vmatpush1.bf16.msra.mxu0 %v7854
      %7878 = vmatprep.subr.bf16.mxu0 0
      %7879 = vmatpush1.bf16.msra.mxu0 %v7855
      %7880 = vmatprep.subr.bf16.mxu0 0
      %7881 = vmatpush1.bf16.msra.mxu0 0
      %7882 = vmatprep.subr.bf16.mxu0 0
      %7883 = vmatpush1.bf16.msra.mxu0 0
      %7884 = vmatprep.subr.bf16.mxu0 0
      %7885 = vmatpush1.bf16.msra.mxu0 0
      %7886 = vmatprep.subr.bf16.mxu0 0
      %7887 = vmatpush1.bf16.msra.mxu0 0
      %7888 = vmatprep.subr.bf16.mxu0 0
      %7889 = vmatpush1.bf16.msra.mxu0 0
      %7890 = vmatprep.subr.bf16.mxu0 0
      %7891 = vmatpush1.bf16.msra.mxu0 0
      %7892 = vmatprep.subr.bf16.mxu0 0
      %7893 = vmatpush1.bf16.msra.mxu0 0
      %7894 = vmatprep.subr.bf16.mxu0 0
      %7895 = vmatpush1.bf16.msra.mxu0 0
      %7896 = vmatprep.subr.bf16.mxu0 0
      %7897 = vmatpush1.bf16.msra.mxu0 0
      %7898 = vmatprep.subr.bf16.mxu0 0
      %7899 = vmatpush1.bf16.msra.mxu0 0
      %7900 = vmatprep.subr.bf16.mxu0 0
      %7901 = vmatpush1.bf16.msra.mxu0 0
      %7902 = vmatprep.subr.bf16.mxu0 0
      %7903 = vmatpush1.bf16.msra.mxu0 0
      %7904 = vmatprep.mubr.bf16.mxu0 0
      %7905 = vmatmul.mubr.bf16.gmra.mrb[0].mxu0 %v7861
      %v7906 = vpop.f32.mrb[0].mxu0
      %v7907 = vadd.f32 0.0, %v7906
      %v7908 = vpop.f32.mrb[0].mxu0
      %v7909 = vpop.f32.mrb[0].mxu0
      %v7910 = vadd.f32 0.0, %v7909
      %v7911 = vpop.f32.mrb[0].mxu0
      %7912 = vmatprep.mubr.bf16.mxu0 0
      %7913 = vmatmul.mubr.bf16.gmra.mrb[0].mxu0 %v7864
      %v7914 = vpop.f32.mrb[0].mxu0
      %v7915 = vadd.f32 0.0, %v7914
      %v7916 = vpop.f32.mrb[0].mxu0
      %v7917 = vpop.f32.mrb[0].mxu0
      %v7918 = vadd.f32 0.0, %v7917
      %v7919 = vpop.f32.mrb[0].mxu0
      %7920 = vmatprep.mubr.bf16.mxu0 0
      %7921 = vmatmul.mubr.bf16.gmra.mrb[0].mxu0 %v7867
      %v7922 = vpop.f32.mrb[0].mxu0
      %v7923 = vadd.f32 0.0, %v7922
      %v7924 = vpop.f32.mrb[0].mxu0
      %v7925 = vpop.f32.mrb[0].mxu0
      %v7926 = vadd.f32 0.0, %v7925
      %v7927 = vpop.f32.mrb[0].mxu0
      %7928 = vmatprep.mubr.bf16.mxu0 0
      %7929 = vmatmul.mubr.bf16.gmra.mrb[0].mxu0 %v7870
      %v7930 = vpop.f32.mrb[0].mxu0
      %v7931 = vadd.f32 0.0, %v7930
      %v7932 = vpop.f32.mrb[0].mxu0
      %v7933 = vpop.f32.mrb[0].mxu0
      %v7934 = vadd.f32 0.0, %v7933
      %v7935 = vpop.f32.mrb[0].mxu0
      %7936 = vdwg.mxu0
      %v7937 = vadd.f32 %v7799, %v7907
      %v7938 = vadd.f32 %v7800, %v7910
      %v7939 = vadd.f32 %v7801, %v7915
      %v7940 = vadd.f32 %v7802, %v7918
      %v7941 = vadd.f32 %v7803, %v7923
      %v7942 = vadd.f32 %v7804, %v7926
      %v7943 = vadd.f32 %v7805, %v7931
      %v7944 = vadd.f32 %v7806, %v7934
      %v7945 = vld [vmem:[%s1591 + $0x4] sm:$0xf]
      %v7946 = vld [vmem:[%s1591 + $0x8] sm:$0x1]
      %v7947 = vld [vmem:[%s1591 + $0x10] sm:$0xf]
      %v7948 = vld [vmem:[%s1591 + $0x14] sm:$0x1]
      %v7949 = vld [vmem:[%s1591 + $0x1c] sm:$0xf]
      %v7950 = vld [vmem:[%s1591 + $0x20] sm:$0x1]
      %v7951 = vld [vmem:[%s1591 + $0x28] sm:$0xf]
      %v7952 = vld [vmem:[%s1591 + $0x2c] sm:$0x1]
      %v7953 = vld [vmem:[%s1591 + $0x34] sm:$0xf]
      %v7954 = vld [vmem:[%s1591 + $0x38] sm:$0x1]
      %v7955 = vld [vmem:[%s1591 + $0x40] sm:$0xf]
      %v7956 = vld [vmem:[%s1591 + $0x44] sm:$0x1]
      %v7957 = vld [vmem:[%s1591 + $0x4c] sm:$0xf]
      %v7958 = vld [vmem:[%s1591 + $0x50] sm:$0x1]
      %v7959 = vld [vmem:[%s1591 + $0x58] sm:$0xf]
      %v7960 = vld [vmem:[%s1591 + $0x5c] sm:$0x1]
      %v7962 = vshrl.u32 %v7945, 16
      %v7964 = vrot.slane %v7962, 4
      %v7965 = vshll.u32 %v7945, 16
      %v7967 = vrot.slane %v7965, 5
      %v7968 = vor.u32 %v7964, %v7967
      %v7969 = vrot.slane %v7968, 4
      %v7971 = vshll.u32 %v7946, 16
      %v7973 = vrot.slane %v7971, 5
      %v7974 = vsel %vm702, %v7969, %v7973
      %v7976 = vshrl.u32 %v7947, 16
      %v7978 = vrot.slane %v7976, 4
      %v7979 = vshll.u32 %v7947, 16
      %v7981 = vrot.slane %v7979, 5
      %v7982 = vor.u32 %v7978, %v7981
      %v7983 = vrot.slane %v7982, 4
      %v7985 = vshll.u32 %v7948, 16
      %v7987 = vrot.slane %v7985, 5
      %v7988 = vsel %vm702, %v7983, %v7987
      %v7990 = vshrl.u32 %v7949, 16
      %v7992 = vrot.slane %v7990, 4
      %v7993 = vshll.u32 %v7949, 16
      %v7995 = vrot.slane %v7993, 5
      %v7996 = vor.u32 %v7992, %v7995
      %v7997 = vrot.slane %v7996, 4
      %v7999 = vshll.u32 %v7950, 16
      %v8001 = vrot.slane %v7999, 5
      %v8002 = vsel %vm702, %v7997, %v8001
      %v8004 = vshrl.u32 %v7951, 16
      %v8006 = vrot.slane %v8004, 4
      %v8007 = vshll.u32 %v7951, 16
      %v8009 = vrot.slane %v8007, 5
      %v8010 = vor.u32 %v8006, %v8009
      %v8011 = vrot.slane %v8010, 4
      %v8013 = vshll.u32 %v7952, 16
      %v8015 = vrot.slane %v8013, 5
      %v8016 = vsel %vm702, %v8011, %v8015
      %v8018 = vshrl.u32 %v7953, 16
      %v8020 = vrot.slane %v8018, 4
      %v8021 = vshll.u32 %v7953, 16
      %v8023 = vrot.slane %v8021, 5
      %v8024 = vor.u32 %v8020, %v8023
      %v8025 = vrot.slane %v8024, 4
      %v8027 = vshll.u32 %v7954, 16
      %v8029 = vrot.slane %v8027, 5
      %v8030 = vsel %vm702, %v8025, %v8029
      %v8032 = vshrl.u32 %v7955, 16
      %v8034 = vrot.slane %v8032, 4
      %v8035 = vshll.u32 %v7955, 16
      %v8037 = vrot.slane %v8035, 5
      %v8038 = vor.u32 %v8034, %v8037
      %v8039 = vrot.slane %v8038, 4
      %v8041 = vshll.u32 %v7956, 16
      %v8043 = vrot.slane %v8041, 5
      %v8044 = vsel %vm702, %v8039, %v8043
      %v8046 = vshrl.u32 %v7957, 16
      %v8048 = vrot.slane %v8046, 4
      %v8049 = vshll.u32 %v7957, 16
      %v8051 = vrot.slane %v8049, 5
      %v8052 = vor.u32 %v8048, %v8051
      %v8053 = vrot.slane %v8052, 4
      %v8055 = vshll.u32 %v7958, 16
      %v8057 = vrot.slane %v8055, 5
      %v8058 = vsel %vm702, %v8053, %v8057
      %v8060 = vshrl.u32 %v7959, 16
      %v8062 = vrot.slane %v8060, 4
      %v8063 = vshll.u32 %v7959, 16
      %v8065 = vrot.slane %v8063, 5
      %v8066 = vor.u32 %v8062, %v8065
      %v8067 = vrot.slane %v8066, 4
      %v8069 = vshll.u32 %v7960, 16
      %v8071 = vrot.slane %v8069, 5
      %v8072 = vsel %vm702, %v8067, %v8071
      %s8073 = scalar_lea.vmem %s1, 1120
      %v8074 = vld [vmem:[%s8073] sm:$0xf]
      %v8075 = vld [vmem:[%s8073 + $0x4] sm:$0xf]
      %v8076 = vld [vmem:[%s8073 + $0x8] sm:$0xf]
      %v8077 = vld [vmem:[%s8073 + $0xc] sm:$0xf]
      %v8078 = vld [vmem:[%s8073 + $0x10] sm:$0xf]
      %v8079 = vld [vmem:[%s8073 + $0x14] sm:$0xf]
      %v8080 = vld [vmem:[%s8073 + $0x18] sm:$0xf]
      %v8081 = vld [vmem:[%s8073 + $0x1c] sm:$0xf]
      %v8082 = vunpack.c.l.b16 %v7974
      %v8083 = vunpack.c.l.b16 %v7988
      %v8084 = vunpack.c.l.b16 %v8002
      %v8085 = vunpack.c.l.b16 %v8016
      %v8086 = vunpack.c.l.b16 %v8030
      %v8087 = vunpack.c.l.b16 %v8044
      %v8088 = vunpack.c.l.b16 %v8058
      %v8089 = vunpack.c.l.b16 %v8072
      %v8090 = vpack.c.b16 %v8083, %v8082
      %v8091 = vpack.c.b16 %v8085, %v8084
      %v8092 = vpack.c.b16 %v8087, %v8086
      %v8093 = vpack.c.b16 %v8089, %v8088
      %v8102 = vunpack.c.l.b16 %v8074
      %v8103 = vunpack.c.l.b16 %v8075
      %v8104 = vunpack.c.l.b16 %v8076
      %v8105 = vunpack.c.l.b16 %v8077
      %v8106 = vunpack.c.l.b16 %v8078
      %v8107 = vunpack.c.l.b16 %v8079
      %v8108 = vunpack.c.l.b16 %v8080
      %v8109 = vunpack.c.l.b16 %v8081
      %v8110 = vpack.c.b16 %v8103, %v8102
      %v8111 = vpack.c.b16 %v8105, %v8104
      %v8112 = vpack.c.b16 %v8107, %v8106
      %v8113 = vpack.c.b16 %v8109, %v8108
      %v8119 = vsel %vm493, %v8090, 0
      %v8122 = vsel %vm493, %v8091, 0
      %v8125 = vsel %vm493, %v8092, 0
      %v8128 = vsel %vm493, %v8093, 0
      %8130 = vmatprep.subr.bf16.mxu0 0
      %8131 = vmatpush1.bf16.msra.mxu0 %v8110
      %8132 = vmatprep.subr.bf16.mxu0 0
      %8133 = vmatpush1.bf16.msra.mxu0 %v8111
      %8134 = vmatprep.subr.bf16.mxu0 0
      %8135 = vmatpush1.bf16.msra.mxu0 %v8112
      %8136 = vmatprep.subr.bf16.mxu0 0
      %8137 = vmatpush1.bf16.msra.mxu0 %v8113
      %8138 = vmatprep.subr.bf16.mxu0 0
      %8139 = vmatpush1.bf16.msra.mxu0 0
      %8140 = vmatprep.subr.bf16.mxu0 0
      %8141 = vmatpush1.bf16.msra.mxu0 0
      %8142 = vmatprep.subr.bf16.mxu0 0
      %8143 = vmatpush1.bf16.msra.mxu0 0
      %8144 = vmatprep.subr.bf16.mxu0 0
      %8145 = vmatpush1.bf16.msra.mxu0 0
      %8146 = vmatprep.subr.bf16.mxu0 0
      %8147 = vmatpush1.bf16.msra.mxu0 0
      %8148 = vmatprep.subr.bf16.mxu0 0
      %8149 = vmatpush1.bf16.msra.mxu0 0
      %8150 = vmatprep.subr.bf16.mxu0 0
      %8151 = vmatpush1.bf16.msra.mxu0 0
      %8152 = vmatprep.subr.bf16.mxu0 0
      %8153 = vmatpush1.bf16.msra.mxu0 0
      %8154 = vmatprep.subr.bf16.mxu0 0
      %8155 = vmatpush1.bf16.msra.mxu0 0
      %8156 = vmatprep.subr.bf16.mxu0 0
      %8157 = vmatpush1.bf16.msra.mxu0 0
      %8158 = vmatprep.subr.bf16.mxu0 0
      %8159 = vmatpush1.bf16.msra.mxu0 0
      %8160 = vmatprep.subr.bf16.mxu0 0
      %8161 = vmatpush1.bf16.msra.mxu0 0
      %8162 = vmatprep.mubr.bf16.mxu0 0
      %8163 = vmatmul.mubr.bf16.gmra.mrb[0].mxu0 %v8119
      %v8164 = vpop.f32.mrb[0].mxu0
      %v8165 = vadd.f32 0.0, %v8164
      %v8166 = vpop.f32.mrb[0].mxu0
      %v8167 = vpop.f32.mrb[0].mxu0
      %v8168 = vadd.f32 0.0, %v8167
      %v8169 = vpop.f32.mrb[0].mxu0
      %8170 = vmatprep.mubr.bf16.mxu0 0
      %8171 = vmatmul.mubr.bf16.gmra.mrb[0].mxu0 %v8122
      %v8172 = vpop.f32.mrb[0].mxu0
      %v8173 = vadd.f32 0.0, %v8172
      %v8174 = vpop.f32.mrb[0].mxu0
      %v8175 = vpop.f32.mrb[0].mxu0
      %v8176 = vadd.f32 0.0, %v8175
      %v8177 = vpop.f32.mrb[0].mxu0
      %8178 = vmatprep.mubr.bf16.mxu0 0
      %8179 = vmatmul.mubr.bf16.gmra.mrb[0].mxu0 %v8125
      %v8180 = vpop.f32.mrb[0].mxu0
      %v8181 = vadd.f32 0.0, %v8180
      %v8182 = vpop.f32.mrb[0].mxu0
      %v8183 = vpop.f32.mrb[0].mxu0
      %v8184 = vadd.f32 0.0, %v8183
      %v8185 = vpop.f32.mrb[0].mxu0
      %8186 = vmatprep.mubr.bf16.mxu0 0
      %8187 = vmatmul.mubr.bf16.gmra.mrb[0].mxu0 %v8128
      %v8188 = vpop.f32.mrb[0].mxu0
      %v8189 = vadd.f32 0.0, %v8188
      %v8190 = vpop.f32.mrb[0].mxu0
      %v8191 = vpop.f32.mrb[0].mxu0
      %v8192 = vadd.f32 0.0, %v8191
      %v8193 = vpop.f32.mrb[0].mxu0
      %8194 = vdwg.mxu0
      %v8195 = vadd.f32 %v7937, %v8165
      %v8196 = vadd.f32 %v7938, %v8168
      %v8197 = vadd.f32 %v7939, %v8173
      %v8198 = vadd.f32 %v7940, %v8176
      %v8199 = vadd.f32 %v7941, %v8181
      %v8200 = vadd.f32 %v7942, %v8184
      %v8201 = vadd.f32 %v7943, %v8189
      %v8202 = vadd.f32 %v7944, %v8192
      %s8203 = scalar_lea.vmem %s2, 3
      %v8204 = vld [vmem:[%s8203] sm:$0x1]
      %v8206 = vlaneseq
      %v8207 = vshrl.u32 %v8206, 7
      %v8208 = vsub.s32 0, %v8207
      %v8209 = vrot.slane %v8204, %v8208
      %v8211 = vadd.f32 %v8195, %v8209
      %v8212 = vadd.f32 %v8196, %v8209
      %v8213 = vadd.f32 %v8197, %v8209
      %v8214 = vadd.f32 %v8198, %v8209
      %v8215 = vadd.f32 %v8199, %v8209
      %v8216 = vadd.f32 %v8200, %v8209
      %v8217 = vadd.f32 %v8201, %v8209
      %v8218 = vadd.f32 %v8202, %v8209
      %v8219 = vadd.f32 %v8211, %v4247
      %v8220 = vadd.f32 %v8212, %v4248
      %v8221 = vadd.f32 %v8213, %v4249
      %v8222 = vadd.f32 %v8214, %v4250
      %v8223 = vadd.f32 %v8215, %v4251
      %v8224 = vadd.f32 %v8216, %v4252
      %v8225 = vadd.f32 %v8217, %v4253
      %v8226 = vadd.f32 %v8218, %v4254
      %v8227 = vmax.f32 %v8219, 0.0
      %v8228 = vmax.f32 %v8220, 0.0
      %v8229 = vmax.f32 %v8221, 0.0
      %v8230 = vmax.f32 %v8222, 0.0
      %v8231 = vmax.f32 %v8223, 0.0
      %v8232 = vmax.f32 %v8224, 0.0
      %v8233 = vmax.f32 %v8225, 0.0
      %v8234 = vmax.f32 %v8226, 0.0
      %v8235 = vld [vmem:[%s3] sm:$0xf]
      %v8236 = vld [vmem:[%s3 + $0x4] sm:$0xf]
      %v8237 = vld [vmem:[%s3 + $0x8] sm:$0xf]
      %v8238 = vld [vmem:[%s3 + $0xc] sm:$0xf]
      %v8239 = vld [vmem:[%s3 + $0x10] sm:$0xf]
      %v8240 = vld [vmem:[%s3 + $0x14] sm:$0xf]
      %v8241 = vld [vmem:[%s3 + $0x18] sm:$0xf]
      %v8242 = vld [vmem:[%s3 + $0x1c] sm:$0xf]
      %v8243 = vld [vmem:[%s3 + $0x20] sm:$0xf]
      %v8244 = vld [vmem:[%s3 + $0x24] sm:$0xf]
      %v8245 = vld [vmem:[%s3 + $0x28] sm:$0xf]
      %v8246 = vld [vmem:[%s3 + $0x2c] sm:$0xf]
      %v8247 = vld [vmem:[%s3 + $0x30] sm:$0xf]
      %v8248 = vld [vmem:[%s3 + $0x34] sm:$0xf]
      %v8249 = vld [vmem:[%s3 + $0x38] sm:$0xf]
      %v8250 = vld [vmem:[%s3 + $0x3c] sm:$0xf]
      %v8251 = vld [vmem:[%s3 + $0x40] sm:$0xf]
      %v8252 = vld [vmem:[%s3 + $0x44] sm:$0xf]
      %v8253 = vld [vmem:[%s3 + $0x48] sm:$0xf]
      %v8254 = vld [vmem:[%s3 + $0x4c] sm:$0xf]
      %v8255 = vld [vmem:[%s3 + $0x50] sm:$0xf]
      %v8256 = vld [vmem:[%s3 + $0x54] sm:$0xf]
      %v8257 = vld [vmem:[%s3 + $0x58] sm:$0xf]
      %v8258 = vld [vmem:[%s3 + $0x5c] sm:$0xf]
      %v8259 = vld [vmem:[%s3 + $0x60] sm:$0xf]
      %v8260 = vld [vmem:[%s3 + $0x64] sm:$0xf]
      %v8261 = vld [vmem:[%s3 + $0x68] sm:$0xf]
      %v8262 = vld [vmem:[%s3 + $0x6c] sm:$0xf]
      %v8263 = vld [vmem:[%s3 + $0x70] sm:$0xf]
      %v8264 = vld [vmem:[%s3 + $0x74] sm:$0xf]
      %v8265 = vld [vmem:[%s3 + $0x78] sm:$0xf]
      %v8266 = vld [vmem:[%s3 + $0x7c] sm:$0xf]
      %v8267 = vld [vmem:[%s3 + $0x80] sm:$0xf]
      %v8268 = vld [vmem:[%s3 + $0x84] sm:$0xf]
      %v8269 = vld [vmem:[%s3 + $0x88] sm:$0xf]
      %v8270 = vld [vmem:[%s3 + $0x8c] sm:$0xf]
      %v8271 = vld [vmem:[%s3 + $0x90] sm:$0xf]
      %v8272 = vld [vmem:[%s3 + $0x94] sm:$0xf]
      %v8273 = vld [vmem:[%s3 + $0x98] sm:$0xf]
      %v8274 = vld [vmem:[%s3 + $0x9c] sm:$0xf]
      %v8275 = vld [vmem:[%s3 + $0xa0] sm:$0xf]
      %v8276 = vld [vmem:[%s3 + $0xa4] sm:$0xf]
      %v8277 = vld [vmem:[%s3 + $0xa8] sm:$0xf]
      %v8278 = vld [vmem:[%s3 + $0xac] sm:$0xf]
      %v8279 = vld [vmem:[%s3 + $0xb0] sm:$0xf]
      %v8280 = vld [vmem:[%s3 + $0xb4] sm:$0xf]
      %v8281 = vld [vmem:[%s3 + $0xb8] sm:$0xf]
      %v8282 = vld [vmem:[%s3 + $0xbc] sm:$0xf]
      %v8283 = vld [vmem:[%s3 + $0xc0] sm:$0xf]
      %v8284 = vld [vmem:[%s3 + $0xc4] sm:$0xf]
      %v8285 = vld [vmem:[%s3 + $0xc8] sm:$0xf]
      %v8286 = vld [vmem:[%s3 + $0xcc] sm:$0xf]
      %v8287 = vld [vmem:[%s3 + $0xd0] sm:$0xf]
      %v8288 = vld [vmem:[%s3 + $0xd4] sm:$0xf]
      %v8289 = vld [vmem:[%s3 + $0xd8] sm:$0xf]
      %v8290 = vld [vmem:[%s3 + $0xdc] sm:$0xf]
      %v8291 = vld [vmem:[%s3 + $0xe0] sm:$0xf]
      %v8292 = vld [vmem:[%s3 + $0xe4] sm:$0xf]
      %v8293 = vld [vmem:[%s3 + $0xe8] sm:$0xf]
      %v8294 = vld [vmem:[%s3 + $0xec] sm:$0xf]
      %v8295 = vld [vmem:[%s3 + $0xf0] sm:$0xf]
      %v8296 = vld [vmem:[%s3 + $0xf4] sm:$0xf]
      %v8297 = vld [vmem:[%s3 + $0xf8] sm:$0xf]
      %v8298 = vld [vmem:[%s3 + $0xfc] sm:$0xf]
      %v8299 = vpack.c.bf16 %v8228, %v8227
      %v8300 = vpack.c.bf16 %v8230, %v8229
      %v8301 = vpack.c.bf16 %v8232, %v8231
      %v8302 = vpack.c.bf16 %v8234, %v8233
      %v8367 = vunpack.c.l.b16 %v8235
      %v8368 = vunpack.c.l.b16 %v8236
      %v8369 = vunpack.c.l.b16 %v8237
      %v8370 = vunpack.c.l.b16 %v8238
      %v8371 = vunpack.c.l.b16 %v8239
      %v8372 = vunpack.c.l.b16 %v8240
      %v8373 = vunpack.c.l.b16 %v8241
      %v8374 = vunpack.c.l.b16 %v8242
      %v8375 = vunpack.c.l.b16 %v8243
      %v8376 = vunpack.c.l.b16 %v8244
      %v8377 = vunpack.c.l.b16 %v8245
      %v8378 = vunpack.c.l.b16 %v8246
      %v8379 = vunpack.c.l.b16 %v8247
      %v8380 = vunpack.c.l.b16 %v8248
      %v8381 = vunpack.c.l.b16 %v8249
      %v8382 = vunpack.c.l.b16 %v8250
      %v8383 = vunpack.c.l.b16 %v8251
      %v8384 = vunpack.c.l.b16 %v8252
      %v8385 = vunpack.c.l.b16 %v8253
      %v8386 = vunpack.c.l.b16 %v8254
      %v8387 = vunpack.c.l.b16 %v8255
      %v8388 = vunpack.c.l.b16 %v8256
      %v8389 = vunpack.c.l.b16 %v8257
      %v8390 = vunpack.c.l.b16 %v8258
      %v8391 = vunpack.c.l.b16 %v8259
      %v8392 = vunpack.c.l.b16 %v8260
      %v8393 = vunpack.c.l.b16 %v8261
      %v8394 = vunpack.c.l.b16 %v8262
      %v8395 = vunpack.c.l.b16 %v8263
      %v8396 = vunpack.c.l.b16 %v8264
      %v8397 = vunpack.c.l.b16 %v8265
      %v8398 = vunpack.c.l.b16 %v8266
      %v8399 = vunpack.c.l.b16 %v8267
      %v8400 = vunpack.c.l.b16 %v8268
      %v8401 = vunpack.c.l.b16 %v8269
      %v8402 = vunpack.c.l.b16 %v8270
      %v8403 = vunpack.c.l.b16 %v8271
      %v8404 = vunpack.c.l.b16 %v8272
      %v8405 = vunpack.c.l.b16 %v8273
      %v8406 = vunpack.c.l.b16 %v8274
      %v8407 = vunpack.c.l.b16 %v8275
      %v8408 = vunpack.c.l.b16 %v8276
      %v8409 = vunpack.c.l.b16 %v8277
      %v8410 = vunpack.c.l.b16 %v8278
      %v8411 = vunpack.c.l.b16 %v8279
      %v8412 = vunpack.c.l.b16 %v8280
      %v8413 = vunpack.c.l.b16 %v8281
      %v8414 = vunpack.c.l.b16 %v8282
      %v8415 = vunpack.c.l.b16 %v8283
      %v8416 = vunpack.c.l.b16 %v8284
      %v8417 = vunpack.c.l.b16 %v8285
      %v8418 = vunpack.c.l.b16 %v8286
      %v8419 = vunpack.c.l.b16 %v8287
      %v8420 = vunpack.c.l.b16 %v8288
      %v8421 = vunpack.c.l.b16 %v8289
      %v8422 = vunpack.c.l.b16 %v8290
      %v8423 = vunpack.c.l.b16 %v8291
      %v8424 = vunpack.c.l.b16 %v8292
      %v8425 = vunpack.c.l.b16 %v8293
      %v8426 = vunpack.c.l.b16 %v8294
      %v8427 = vunpack.c.l.b16 %v8295
      %v8428 = vunpack.c.l.b16 %v8296
      %v8429 = vunpack.c.l.b16 %v8297
      %v8430 = vunpack.c.l.b16 %v8298
      %v8431 = vpack.c.b16 %v8368, %v8367
      %v8432 = vpack.c.b16 %v8370, %v8369
      %v8433 = vpack.c.b16 %v8372, %v8371
      %v8434 = vpack.c.b16 %v8374, %v8373
      %v8435 = vpack.c.b16 %v8376, %v8375
      %v8436 = vpack.c.b16 %v8378, %v8377
      %v8437 = vpack.c.b16 %v8380, %v8379
      %v8438 = vpack.c.b16 %v8382, %v8381
      %v8439 = vpack.c.b16 %v8384, %v8383
      %v8440 = vpack.c.b16 %v8386, %v8385
      %v8441 = vpack.c.b16 %v8388, %v8387
      %v8442 = vpack.c.b16 %v8390, %v8389
      %v8443 = vpack.c.b16 %v8392, %v8391
      %v8444 = vpack.c.b16 %v8394, %v8393
      %v8445 = vpack.c.b16 %v8396, %v8395
      %v8446 = vpack.c.b16 %v8398, %v8397
      %v8447 = vpack.c.b16 %v8400, %v8399
      %v8448 = vpack.c.b16 %v8402, %v8401
      %v8449 = vpack.c.b16 %v8404, %v8403
      %v8450 = vpack.c.b16 %v8406, %v8405
      %v8451 = vpack.c.b16 %v8408, %v8407
      %v8452 = vpack.c.b16 %v8410, %v8409
      %v8453 = vpack.c.b16 %v8412, %v8411
      %v8454 = vpack.c.b16 %v8414, %v8413
      %v8455 = vpack.c.b16 %v8416, %v8415
      %v8456 = vpack.c.b16 %v8418, %v8417
      %v8457 = vpack.c.b16 %v8420, %v8419
      %v8458 = vpack.c.b16 %v8422, %v8421
      %v8459 = vpack.c.b16 %v8424, %v8423
      %v8460 = vpack.c.b16 %v8426, %v8425
      %v8461 = vpack.c.b16 %v8428, %v8427
      %v8462 = vpack.c.b16 %v8430, %v8429
      %v8464 = vsel %vm493, %v8431, 0
      %v8467 = vsel %vm493, %v8432, 0
      %v8470 = vsel %vm493, %v8433, 0
      %v8473 = vsel %vm493, %v8434, 0
      %v8476 = vsel %vm493, %v8435, 0
      %v8479 = vsel %vm493, %v8436, 0
      %v8482 = vsel %vm493, %v8437, 0
      %v8485 = vsel %vm493, %v8438, 0
      %v8488 = vsel %vm493, %v8439, 0
      %v8491 = vsel %vm493, %v8440, 0
      %v8494 = vsel %vm493, %v8441, 0
      %v8497 = vsel %vm493, %v8442, 0
      %v8500 = vsel %vm493, %v8443, 0
      %v8503 = vsel %vm493, %v8444, 0
      %v8506 = vsel %vm493, %v8445, 0
      %v8509 = vsel %vm493, %v8446, 0
      %v8512 = vsel %vm493, %v8447, 0
      %v8515 = vsel %vm493, %v8448, 0
      %v8518 = vsel %vm493, %v8449, 0
      %v8521 = vsel %vm493, %v8450, 0
      %v8524 = vsel %vm493, %v8451, 0
      %v8527 = vsel %vm493, %v8452, 0
      %v8530 = vsel %vm493, %v8453, 0
      %v8533 = vsel %vm493, %v8454, 0
      %v8536 = vsel %vm493, %v8455, 0
      %v8539 = vsel %vm493, %v8456, 0
      %v8542 = vsel %vm493, %v8457, 0
      %v8545 = vsel %vm493, %v8458, 0
      %v8548 = vsel %vm493, %v8459, 0
      %v8551 = vsel %vm493, %v8460, 0
      %v8554 = vsel %vm493, %v8461, 0
      %v8557 = vsel %vm493, %v8462, 0
      %8559 = vmatprep.subr.bf16.mxu0 0
      %8560 = vmatpush1.bf16.msra.mxu0 %v8299
      %8561 = vmatprep.subr.bf16.mxu0 0
      %8562 = vmatpush1.bf16.msra.mxu0 %v8300
      %8563 = vmatprep.subr.bf16.mxu0 0
      %8564 = vmatpush1.bf16.msra.mxu0 %v8301
      %8565 = vmatprep.subr.bf16.mxu0 0
      %8566 = vmatpush1.bf16.msra.mxu0 %v8302
      %8567 = vmatprep.subr.bf16.mxu0 0
      %8568 = vmatpush1.bf16.msra.mxu0 0
      %8569 = vmatprep.subr.bf16.mxu0 0
      %8570 = vmatpush1.bf16.msra.mxu0 0
      %8571 = vmatprep.subr.bf16.mxu0 0
      %8572 = vmatpush1.bf16.msra.mxu0 0
      %8573 = vmatprep.subr.bf16.mxu0 0
      %8574 = vmatpush1.bf16.msra.mxu0 0
      %8575 = vmatprep.subr.bf16.mxu0 0
      %8576 = vmatpush1.bf16.msra.mxu0 0
      %8577 = vmatprep.subr.bf16.mxu0 0
      %8578 = vmatpush1.bf16.msra.mxu0 0
      %8579 = vmatprep.subr.bf16.mxu0 0
      %8580 = vmatpush1.bf16.msra.mxu0 0
      %8581 = vmatprep.subr.bf16.mxu0 0
      %8582 = vmatpush1.bf16.msra.mxu0 0
      %8583 = vmatprep.subr.bf16.mxu0 0
      %8584 = vmatpush1.bf16.msra.mxu0 0
      %8585 = vmatprep.subr.bf16.mxu0 0
      %8586 = vmatpush1.bf16.msra.mxu0 0
      %8587 = vmatprep.subr.bf16.mxu0 0
      %8588 = vmatpush1.bf16.msra.mxu0 0
      %8589 = vmatprep.subr.bf16.mxu0 0
      %8590 = vmatpush1.bf16.msra.mxu0 0
      %8591 = vmatprep.mubr.bf16.mxu0 0
      %8592 = vmatmul.mubr.bf16.gmra.mrb[0].mxu0 %v8464
      %v8593 = vpop.f32.mrb[0].mxu0
      %v8594 = vadd.f32 0.0, %v8593
      %v8595 = vpop.f32.mrb[0].mxu0
      %v8596 = vpop.f32.mrb[0].mxu0
      %v8597 = vadd.f32 0.0, %v8596
      %v8598 = vpop.f32.mrb[0].mxu0
      %8599 = vmatprep.mubr.bf16.mxu0 0
      %8600 = vmatmul.mubr.bf16.gmra.mrb[0].mxu0 %v8467
      %v8601 = vpop.f32.mrb[0].mxu0
      %v8602 = vadd.f32 0.0, %v8601
      %v8603 = vpop.f32.mrb[0].mxu0
      %v8604 = vpop.f32.mrb[0].mxu0
      %v8605 = vadd.f32 0.0, %v8604
      %v8606 = vpop.f32.mrb[0].mxu0
      %8607 = vmatprep.mubr.bf16.mxu0 0
      %8608 = vmatmul.mubr.bf16.gmra.mrb[0].mxu0 %v8470
      %v8609 = vpop.f32.mrb[0].mxu0
      %v8610 = vadd.f32 0.0, %v8609
      %v8611 = vpop.f32.mrb[0].mxu0
      %v8612 = vpop.f32.mrb[0].mxu0
      %v8613 = vadd.f32 0.0, %v8612
      %v8614 = vpop.f32.mrb[0].mxu0
      %8615 = vmatprep.mubr.bf16.mxu0 0
      %8616 = vmatmul.mubr.bf16.gmra.mrb[0].mxu0 %v8473
      %v8617 = vpop.f32.mrb[0].mxu0
      %v8618 = vadd.f32 0.0, %v8617
      %v8619 = vpop.f32.mrb[0].mxu0
      %v8620 = vpop.f32.mrb[0].mxu0
      %v8621 = vadd.f32 0.0, %v8620
      %v8622 = vpop.f32.mrb[0].mxu0
      %8623 = vmatprep.mubr.bf16.mxu0 0
      %8624 = vmatmul.mubr.bf16.gmra.mrb[0].mxu0 %v8476
      %v8625 = vpop.f32.mrb[0].mxu0
      %v8626 = vadd.f32 0.0, %v8625
      %v8627 = vpop.f32.mrb[0].mxu0
      %v8628 = vpop.f32.mrb[0].mxu0
      %v8629 = vadd.f32 0.0, %v8628
      %v8630 = vpop.f32.mrb[0].mxu0
      %8631 = vmatprep.mubr.bf16.mxu0 0
      %8632 = vmatmul.mubr.bf16.gmra.mrb[0].mxu0 %v8479
      %v8633 = vpop.f32.mrb[0].mxu0
      %v8634 = vadd.f32 0.0, %v8633
      %v8635 = vpop.f32.mrb[0].mxu0
      %v8636 = vpop.f32.mrb[0].mxu0
      %v8637 = vadd.f32 0.0, %v8636
      %v8638 = vpop.f32.mrb[0].mxu0
      %8639 = vmatprep.mubr.bf16.mxu0 0
      %8640 = vmatmul.mubr.bf16.gmra.mrb[0].mxu0 %v8482
      %v8641 = vpop.f32.mrb[0].mxu0
      %v8642 = vadd.f32 0.0, %v8641
      %v8643 = vpop.f32.mrb[0].mxu0
      %v8644 = vpop.f32.mrb[0].mxu0
      %v8645 = vadd.f32 0.0, %v8644
      %v8646 = vpop.f32.mrb[0].mxu0
      %8647 = vmatprep.mubr.bf16.mxu0 0
      %8648 = vmatmul.mubr.bf16.gmra.mrb[0].mxu0 %v8485
      %v8649 = vpop.f32.mrb[0].mxu0
      %v8650 = vadd.f32 0.0, %v8649
      %v8651 = vpop.f32.mrb[0].mxu0
      %v8652 = vpop.f32.mrb[0].mxu0
      %v8653 = vadd.f32 0.0, %v8652
      %v8654 = vpop.f32.mrb[0].mxu0
      %8655 = vmatprep.mubr.bf16.mxu0 0
      %8656 = vmatmul.mubr.bf16.gmra.mrb[0].mxu0 %v8488
      %v8657 = vpop.f32.mrb[0].mxu0
      %v8658 = vadd.f32 0.0, %v8657
      %v8659 = vpop.f32.mrb[0].mxu0
      %v8660 = vpop.f32.mrb[0].mxu0
      %v8661 = vadd.f32 0.0, %v8660
      %v8662 = vpop.f32.mrb[0].mxu0
      %8663 = vmatprep.mubr.bf16.mxu0 0
      %8664 = vmatmul.mubr.bf16.gmra.mrb[0].mxu0 %v8491
      %v8665 = vpop.f32.mrb[0].mxu0
      %v8666 = vadd.f32 0.0, %v8665
      %v8667 = vpop.f32.mrb[0].mxu0
      %v8668 = vpop.f32.mrb[0].mxu0
      %v8669 = vadd.f32 0.0, %v8668
      %v8670 = vpop.f32.mrb[0].mxu0
      %8671 = vmatprep.mubr.bf16.mxu0 0
      %8672 = vmatmul.mubr.bf16.gmra.mrb[0].mxu0 %v8494
      %v8673 = vpop.f32.mrb[0].mxu0
      %v8674 = vadd.f32 0.0, %v8673
      %v8675 = vpop.f32.mrb[0].mxu0
      %v8676 = vpop.f32.mrb[0].mxu0
      %v8677 = vadd.f32 0.0, %v8676
      %v8678 = vpop.f32.mrb[0].mxu0
      %8679 = vmatprep.mubr.bf16.mxu0 0
      %8680 = vmatmul.mubr.bf16.gmra.mrb[0].mxu0 %v8497
      %v8681 = vpop.f32.mrb[0].mxu0
      %v8682 = vadd.f32 0.0, %v8681
      %v8683 = vpop.f32.mrb[0].mxu0
      %v8684 = vpop.f32.mrb[0].mxu0
      %v8685 = vadd.f32 0.0, %v8684
      %v8686 = vpop.f32.mrb[0].mxu0
      %8687 = vmatprep.mubr.bf16.mxu0 0
      %8688 = vmatmul.mubr.bf16.gmra.mrb[0].mxu0 %v8500
      %v8689 = vpop.f32.mrb[0].mxu0
      %v8690 = vadd.f32 0.0, %v8689
      %v8691 = vpop.f32.mrb[0].mxu0
      %v8692 = vpop.f32.mrb[0].mxu0
      %v8693 = vadd.f32 0.0, %v8692
      %v8694 = vpop.f32.mrb[0].mxu0
      %8695 = vmatprep.mubr.bf16.mxu0 0
      %8696 = vmatmul.mubr.bf16.gmra.mrb[0].mxu0 %v8503
      %v8697 = vpop.f32.mrb[0].mxu0
      %v8698 = vadd.f32 0.0, %v8697
      %v8699 = vpop.f32.mrb[0].mxu0
      %v8700 = vpop.f32.mrb[0].mxu0
      %v8701 = vadd.f32 0.0, %v8700
      %v8702 = vpop.f32.mrb[0].mxu0
      %8703 = vmatprep.mubr.bf16.mxu0 0
      %8704 = vmatmul.mubr.bf16.gmra.mrb[0].mxu0 %v8506
      %v8705 = vpop.f32.mrb[0].mxu0
      %v8706 = vadd.f32 0.0, %v8705
      %v8707 = vpop.f32.mrb[0].mxu0
      %v8708 = vpop.f32.mrb[0].mxu0
      %v8709 = vadd.f32 0.0, %v8708
      %v8710 = vpop.f32.mrb[0].mxu0
      %8711 = vmatprep.mubr.bf16.mxu0 0
      %8712 = vmatmul.mubr.bf16.gmra.mrb[0].mxu0 %v8509
      %v8713 = vpop.f32.mrb[0].mxu0
      %v8714 = vadd.f32 0.0, %v8713
      %v8715 = vpop.f32.mrb[0].mxu0
      %v8716 = vpop.f32.mrb[0].mxu0
      %v8717 = vadd.f32 0.0, %v8716
      %v8718 = vpop.f32.mrb[0].mxu0
      %8719 = vmatprep.mubr.bf16.mxu0 0
      %8720 = vmatmul.mubr.bf16.gmra.mrb[0].mxu0 %v8512
      %v8721 = vpop.f32.mrb[0].mxu0
      %v8722 = vadd.f32 0.0, %v8721
      %v8723 = vpop.f32.mrb[0].mxu0
      %v8724 = vpop.f32.mrb[0].mxu0
      %v8725 = vadd.f32 0.0, %v8724
      %v8726 = vpop.f32.mrb[0].mxu0
      %8727 = vmatprep.mubr.bf16.mxu0 0
      %8728 = vmatmul.mubr.bf16.gmra.mrb[0].mxu0 %v8515
      %v8729 = vpop.f32.mrb[0].mxu0
      %v8730 = vadd.f32 0.0, %v8729
      %v8731 = vpop.f32.mrb[0].mxu0
      %v8732 = vpop.f32.mrb[0].mxu0
      %v8733 = vadd.f32 0.0, %v8732
      %v8734 = vpop.f32.mrb[0].mxu0
      %8735 = vmatprep.mubr.bf16.mxu0 0
      %8736 = vmatmul.mubr.bf16.gmra.mrb[0].mxu0 %v8518
      %v8737 = vpop.f32.mrb[0].mxu0
      %v8738 = vadd.f32 0.0, %v8737
      %v8739 = vpop.f32.mrb[0].mxu0
      %v8740 = vpop.f32.mrb[0].mxu0
      %v8741 = vadd.f32 0.0, %v8740
      %v8742 = vpop.f32.mrb[0].mxu0
      %8743 = vmatprep.mubr.bf16.mxu0 0
      %8744 = vmatmul.mubr.bf16.gmra.mrb[0].mxu0 %v8521
      %v8745 = vpop.f32.mrb[0].mxu0
      %v8746 = vadd.f32 0.0, %v8745
      %v8747 = vpop.f32.mrb[0].mxu0
      %v8748 = vpop.f32.mrb[0].mxu0
      %v8749 = vadd.f32 0.0, %v8748
      %v8750 = vpop.f32.mrb[0].mxu0
      %8751 = vmatprep.mubr.bf16.mxu0 0
      %8752 = vmatmul.mubr.bf16.gmra.mrb[0].mxu0 %v8524
      %v8753 = vpop.f32.mrb[0].mxu0
      %v8754 = vadd.f32 0.0, %v8753
      %v8755 = vpop.f32.mrb[0].mxu0
      %v8756 = vpop.f32.mrb[0].mxu0
      %v8757 = vadd.f32 0.0, %v8756
      %v8758 = vpop.f32.mrb[0].mxu0
      %8759 = vmatprep.mubr.bf16.mxu0 0
      %8760 = vmatmul.mubr.bf16.gmra.mrb[0].mxu0 %v8527
      %v8761 = vpop.f32.mrb[0].mxu0
      %v8762 = vadd.f32 0.0, %v8761
      %v8763 = vpop.f32.mrb[0].mxu0
      %v8764 = vpop.f32.mrb[0].mxu0
      %v8765 = vadd.f32 0.0, %v8764
      %v8766 = vpop.f32.mrb[0].mxu0
      %8767 = vmatprep.mubr.bf16.mxu0 0
      %8768 = vmatmul.mubr.bf16.gmra.mrb[0].mxu0 %v8530
      %v8769 = vpop.f32.mrb[0].mxu0
      %v8770 = vadd.f32 0.0, %v8769
      %v8771 = vpop.f32.mrb[0].mxu0
      %v8772 = vpop.f32.mrb[0].mxu0
      %v8773 = vadd.f32 0.0, %v8772
      %v8774 = vpop.f32.mrb[0].mxu0
      %8775 = vmatprep.mubr.bf16.mxu0 0
      %8776 = vmatmul.mubr.bf16.gmra.mrb[0].mxu0 %v8533
      %v8777 = vpop.f32.mrb[0].mxu0
      %v8778 = vadd.f32 0.0, %v8777
      %v8779 = vpop.f32.mrb[0].mxu0
      %v8780 = vpop.f32.mrb[0].mxu0
      %v8781 = vadd.f32 0.0, %v8780
      %v8782 = vpop.f32.mrb[0].mxu0
      %8783 = vmatprep.mubr.bf16.mxu0 0
      %8784 = vmatmul.mubr.bf16.gmra.mrb[0].mxu0 %v8536
      %v8785 = vpop.f32.mrb[0].mxu0
      %v8786 = vadd.f32 0.0, %v8785
      %v8787 = vpop.f32.mrb[0].mxu0
      %v8788 = vpop.f32.mrb[0].mxu0
      %v8789 = vadd.f32 0.0, %v8788
      %v8790 = vpop.f32.mrb[0].mxu0
      %8791 = vmatprep.mubr.bf16.mxu0 0
      %8792 = vmatmul.mubr.bf16.gmra.mrb[0].mxu0 %v8539
      %v8793 = vpop.f32.mrb[0].mxu0
      %v8794 = vadd.f32 0.0, %v8793
      %v8795 = vpop.f32.mrb[0].mxu0
      %v8796 = vpop.f32.mrb[0].mxu0
      %v8797 = vadd.f32 0.0, %v8796
      %v8798 = vpop.f32.mrb[0].mxu0
      %8799 = vmatprep.mubr.bf16.mxu0 0
      %8800 = vmatmul.mubr.bf16.gmra.mrb[0].mxu0 %v8542
      %v8801 = vpop.f32.mrb[0].mxu0
      %v8802 = vadd.f32 0.0, %v8801
      %v8803 = vpop.f32.mrb[0].mxu0
      %v8804 = vpop.f32.mrb[0].mxu0
      %v8805 = vadd.f32 0.0, %v8804
      %v8806 = vpop.f32.mrb[0].mxu0
      %8807 = vmatprep.mubr.bf16.mxu0 0
      %8808 = vmatmul.mubr.bf16.gmra.mrb[0].mxu0 %v8545
      %v8809 = vpop.f32.mrb[0].mxu0
      %v8810 = vadd.f32 0.0, %v8809
      %v8811 = vpop.f32.mrb[0].mxu0
      %v8812 = vpop.f32.mrb[0].mxu0
      %v8813 = vadd.f32 0.0, %v8812
      %v8814 = vpop.f32.mrb[0].mxu0
      %8815 = vmatprep.mubr.bf16.mxu0 0
      %8816 = vmatmul.mubr.bf16.gmra.mrb[0].mxu0 %v8548
      %v8817 = vpop.f32.mrb[0].mxu0
      %v8818 = vadd.f32 0.0, %v8817
      %v8819 = vpop.f32.mrb[0].mxu0
      %v8820 = vpop.f32.mrb[0].mxu0
      %v8821 = vadd.f32 0.0, %v8820
      %v8822 = vpop.f32.mrb[0].mxu0
      %8823 = vmatprep.mubr.bf16.mxu0 0
      %8824 = vmatmul.mubr.bf16.gmra.mrb[0].mxu0 %v8551
      %v8825 = vpop.f32.mrb[0].mxu0
      %v8826 = vadd.f32 0.0, %v8825
      %v8827 = vpop.f32.mrb[0].mxu0
      %v8828 = vpop.f32.mrb[0].mxu0
      %v8829 = vadd.f32 0.0, %v8828
      %v8830 = vpop.f32.mrb[0].mxu0
      %8831 = vmatprep.mubr.bf16.mxu0 0
      %8832 = vmatmul.mubr.bf16.gmra.mrb[0].mxu0 %v8554
      %v8833 = vpop.f32.mrb[0].mxu0
      %v8834 = vadd.f32 0.0, %v8833
      %v8835 = vpop.f32.mrb[0].mxu0
      %v8836 = vpop.f32.mrb[0].mxu0
      %v8837 = vadd.f32 0.0, %v8836
      %v8838 = vpop.f32.mrb[0].mxu0
      %8839 = vmatprep.mubr.bf16.mxu0 0
      %8840 = vmatmul.mubr.bf16.gmra.mrb[0].mxu0 %v8557
      %v8841 = vpop.f32.mrb[0].mxu0
      %v8842 = vadd.f32 0.0, %v8841
      %v8843 = vpop.f32.mrb[0].mxu0
      %v8844 = vpop.f32.mrb[0].mxu0
      %v8845 = vadd.f32 0.0, %v8844
      %v8846 = vpop.f32.mrb[0].mxu0
      %8847 = vdwg.mxu0
      %v8848 = vld [vmem:[%s4] sm:$0xf]
      %v8849 = vld [vmem:[%s4 + $0x4] sm:$0xf]
      %v8850 = vpack.c.bf16 %v8597, %v8594
      %v8851 = vpack.c.bf16 %v8605, %v8602
      %v8852 = vpack.c.bf16 %v8613, %v8610
      %v8853 = vpack.c.bf16 %v8621, %v8618
      %v8854 = vpack.c.bf16 %v8629, %v8626
      %v8855 = vpack.c.bf16 %v8637, %v8634
      %v8856 = vpack.c.bf16 %v8645, %v8642
      %v8857 = vpack.c.bf16 %v8653, %v8650
      %v8858 = vpack.c.bf16 %v8661, %v8658
      %v8859 = vpack.c.bf16 %v8669, %v8666
      %v8860 = vpack.c.bf16 %v8677, %v8674
      %v8861 = vpack.c.bf16 %v8685, %v8682
      %v8862 = vpack.c.bf16 %v8693, %v8690
      %v8863 = vpack.c.bf16 %v8701, %v8698
      %v8864 = vpack.c.bf16 %v8709, %v8706
      %v8865 = vpack.c.bf16 %v8717, %v8714
      %v8866 = vpack.c.bf16 %v8725, %v8722
      %v8867 = vpack.c.bf16 %v8733, %v8730
      %v8868 = vpack.c.bf16 %v8741, %v8738
      %v8869 = vpack.c.bf16 %v8749, %v8746
      %v8870 = vpack.c.bf16 %v8757, %v8754
      %v8871 = vpack.c.bf16 %v8765, %v8762
      %v8872 = vpack.c.bf16 %v8773, %v8770
      %v8873 = vpack.c.bf16 %v8781, %v8778
      %v8874 = vpack.c.bf16 %v8789, %v8786
      %v8875 = vpack.c.bf16 %v8797, %v8794
      %v8876 = vpack.c.bf16 %v8805, %v8802
      %v8877 = vpack.c.bf16 %v8813, %v8810
      %v8878 = vpack.c.bf16 %v8821, %v8818
      %v8879 = vpack.c.bf16 %v8829, %v8826
      %v8880 = vpack.c.bf16 %v8837, %v8834
      %v8881 = vpack.c.bf16 %v8845, %v8842
      %v8882 = vld [vmem:[%s5] sm:$0xff]
      %v8883 = vld [vmem:[%s5 + $0x8] sm:$0xff]
      %v8884 = vld [vmem:[%s5 + $0x10] sm:$0xff]
      %v8885 = vld [vmem:[%s5 + $0x18] sm:$0xff]
      %v8886 = vld [vmem:[%s5 + $0x20] sm:$0xff]
      %v8887 = vld [vmem:[%s5 + $0x28] sm:$0xff]
      %v8888 = vld [vmem:[%s5 + $0x30] sm:$0xff]
      %v8889 = vld [vmem:[%s5 + $0x38] sm:$0xff]
      %v8892 = vunpack.c.l.b16 %v8848
      %v8893 = vunpack.c.l.b16 %v8849
      %v8894 = vpack.c.b16 %v8893, %v8892
      %v8896 = vsel %vm493, %v8894, 0
      %v8899 = vsel %vm493, %v8850, 0
      %v8902 = vsel %vm493, %v8851, 0
      %v8905 = vsel %vm493, %v8852, 0
      %v8908 = vsel %vm493, %v8853, 0
      %v8911 = vsel %vm493, %v8854, 0
      %v8914 = vsel %vm493, %v8855, 0
      %v8917 = vsel %vm493, %v8856, 0
      %v8920 = vsel %vm493, %v8857, 0
      %v8923 = vsel %vm493, %v8858, 0
      %v8926 = vsel %vm493, %v8859, 0
      %v8929 = vsel %vm493, %v8860, 0
      %v8932 = vsel %vm493, %v8861, 0
      %v8935 = vsel %vm493, %v8862, 0
      %v8938 = vsel %vm493, %v8863, 0
      %v8941 = vsel %vm493, %v8864, 0
      %v8944 = vsel %vm493, %v8865, 0
      %v8947 = vsel %vm493, %v8866, 0
      %v8950 = vsel %vm493, %v8867, 0
      %v8953 = vsel %vm493, %v8868, 0
      %v8956 = vsel %vm493, %v8869, 0
      %v8959 = vsel %vm493, %v8870, 0
      %v8962 = vsel %vm493, %v8871, 0
      %v8965 = vsel %vm493, %v8872, 0
      %v8968 = vsel %vm493, %v8873, 0
      %v8971 = vsel %vm493, %v8874, 0
      %v8974 = vsel %vm493, %v8875, 0
      %v8977 = vsel %vm493, %v8876, 0
      %v8980 = vsel %vm493, %v8877, 0
      %v8983 = vsel %vm493, %v8878, 0
      %v8986 = vsel %vm493, %v8879, 0
      %v8989 = vsel %vm493, %v8880, 0
      %v8992 = vsel %vm493, %v8881, 0
      %8994 = vmatprep.subr.bf16.mxu0 0
      %8995 = vmatpush1.bf16.xpose.msra.mxu0 %v8899
      %8996 = vmatprep.subr.bf16.mxu0 0
      %8997 = vmatpush1.bf16.xpose.msra.mxu0 %v8902
      %8998 = vmatprep.subr.bf16.mxu0 0
      %8999 = vmatpush1.bf16.xpose.msra.mxu0 %v8905
      %9000 = vmatprep.subr.bf16.mxu0 0
      %9001 = vmatpush1.bf16.xpose.msra.mxu0 %v8908
      %9002 = vmatprep.subr.bf16.mxu0 0
      %9003 = vmatpush1.bf16.xpose.msra.mxu0 %v8911
      %9004 = vmatprep.subr.bf16.mxu0 0
      %9005 = vmatpush1.bf16.xpose.msra.mxu0 %v8914
      %9006 = vmatprep.subr.bf16.mxu0 0
      %9007 = vmatpush1.bf16.xpose.msra.mxu0 %v8917
      %9008 = vmatprep.subr.bf16.mxu0 0
      %9009 = vmatpush1.bf16.xpose.msra.mxu0 %v8920
      %9010 = vmatprep.subr.bf16.mxu0 0
      %9011 = vmatpush1.bf16.xpose.msra.mxu0 %v8923
      %9012 = vmatprep.subr.bf16.mxu0 0
      %9013 = vmatpush1.bf16.xpose.msra.mxu0 %v8926
      %9014 = vmatprep.subr.bf16.mxu0 0
      %9015 = vmatpush1.bf16.xpose.msra.mxu0 %v8929
      %9016 = vmatprep.subr.bf16.mxu0 0
      %9017 = vmatpush1.bf16.xpose.msra.mxu0 %v8932
      %9018 = vmatprep.subr.bf16.mxu0 0
      %9019 = vmatpush1.bf16.xpose.msra.mxu0 %v8935
      %9020 = vmatprep.subr.bf16.mxu0 0
      %9021 = vmatpush1.bf16.xpose.msra.mxu0 %v8938
      %9022 = vmatprep.subr.bf16.mxu0 0
      %9023 = vmatpush1.bf16.xpose.msra.mxu0 %v8941
      %9024 = vmatprep.subr.bf16.mxu0 0
      %9025 = vmatpush1.bf16.xpose.msra.mxu0 %v8944
      %9026 = vmatprep.mubr.bf16.mxu0 0
      %9027 = vmatmul.mubr.bf16.gmra.mrb[0].mxu0 %v8896
      %v9028 = vpop.f32.mrb[0].mxu0
      %v9029 = vadd.f32 %v8882, %v9028
      %v9030 = vpop.f32.mrb[0].mxu0
      %v9031 = vadd.f32 %v8883, %v9030
      %v9032 = vpop.f32.mrb[0].mxu0
      %v9033 = vadd.f32 %v8886, %v9032
      %v9034 = vpop.f32.mrb[0].mxu0
      %v9035 = vadd.f32 %v8887, %v9034
      %9036 = vdwg.mxu0
      %9037 = vmatprep.subr.bf16.mxu0 0
      %9038 = vmatpush1.bf16.xpose.msra.mxu0 %v8947
      %9039 = vmatprep.subr.bf16.mxu0 0
      %9040 = vmatpush1.bf16.xpose.msra.mxu0 %v8950
      %9041 = vmatprep.subr.bf16.mxu0 0
      %9042 = vmatpush1.bf16.xpose.msra.mxu0 %v8953
      %9043 = vmatprep.subr.bf16.mxu0 0
      %9044 = vmatpush1.bf16.xpose.msra.mxu0 %v8956
      %9045 = vmatprep.subr.bf16.mxu0 0
      %9046 = vmatpush1.bf16.xpose.msra.mxu0 %v8959
      %9047 = vmatprep.subr.bf16.mxu0 0
      %9048 = vmatpush1.bf16.xpose.msra.mxu0 %v8962
      %9049 = vmatprep.subr.bf16.mxu0 0
      %9050 = vmatpush1.bf16.xpose.msra.mxu0 %v8965
      %9051 = vmatprep.subr.bf16.mxu0 0
      %9052 = vmatpush1.bf16.xpose.msra.mxu0 %v8968
      %9053 = vmatprep.subr.bf16.mxu0 0
      %9054 = vmatpush1.bf16.xpose.msra.mxu0 %v8971
      %9055 = vmatprep.subr.bf16.mxu0 0
      %9056 = vmatpush1.bf16.xpose.msra.mxu0 %v8974
      %9057 = vmatprep.subr.bf16.mxu0 0
      %9058 = vmatpush1.bf16.xpose.msra.mxu0 %v8977
      %9059 = vmatprep.subr.bf16.mxu0 0
      %9060 = vmatpush1.bf16.xpose.msra.mxu0 %v8980
      %9061 = vmatprep.subr.bf16.mxu0 0
      %9062 = vmatpush1.bf16.xpose.msra.mxu0 %v8983
      %9063 = vmatprep.subr.bf16.mxu0 0
      %9064 = vmatpush1.bf16.xpose.msra.mxu0 %v8986
      %9065 = vmatprep.subr.bf16.mxu0 0
      %9066 = vmatpush1.bf16.xpose.msra.mxu0 %v8989
      %9067 = vmatprep.subr.bf16.mxu0 0
      %9068 = vmatpush1.bf16.xpose.msra.mxu0 %v8992
      %9069 = vmatprep.mubr.bf16.mxu0 0
      %9070 = vmatmul.mubr.bf16.gmra.mrb[0].mxu0 %v8896
      %v9071 = vpop.f32.mrb[0].mxu0
      %v9072 = vadd.f32 %v8884, %v9071
      %v9073 = vpop.f32.mrb[0].mxu0
      %v9074 = vadd.f32 %v8885, %v9073
      %v9075 = vpop.f32.mrb[0].mxu0
      %v9076 = vadd.f32 %v8888, %v9075
      %v9077 = vpop.f32.mrb[0].mxu0
      %v9078 = vadd.f32 %v8889, %v9077
      %9079 = vdwg.mxu0
      %v9080 = vlaneseq
      %v9081 = vshrl.u32 %v9080, 7
      %v9082 = vadd.s32 %v9081, 8
      %vm9083 = vcmp.lt.s32.totalorder %v9081, 10
      %vm9084 = vcmp.lt.s32.totalorder %v9082, 10
      %v9085 = vsel %vm9083, %v9029, -1e+30
      %v9086 = vsel %vm9083, %v9031, -1e+30
      %v9087 = vsel %vm9083, %v9072, -1e+30
      %v9088 = vsel %vm9083, %v9074, -1e+30
      %v9089 = vsel %vm9084, %v9033, -1e+30
      %v9090 = vsel %vm9084, %v9035, -1e+30
      %v9091 = vsel %vm9084, %v9076, -1e+30
      %v9092 = vsel %vm9084, %v9078, -1e+30
      %v9093 = vmax.f32 %v9085, %v9089
      %v9094 = vrot.slane %v9093, 4
      %v9095 = vmax.f32 %v9093, %v9094
      %v9096 = vrot.slane %v9095, 2
      %v9097 = vmax.f32 %v9095, %v9096
      %v9098 = vrot.slane %v9097, 1
      %v9099 = vmax.f32 %v9097, %v9098
      %v9100 = vmax.f32 %v9086, %v9090
      %v9101 = vrot.slane %v9100, 4
      %v9102 = vmax.f32 %v9100, %v9101
      %v9103 = vrot.slane %v9102, 2
      %v9104 = vmax.f32 %v9102, %v9103
      %v9105 = vrot.slane %v9104, 1
      %v9106 = vmax.f32 %v9104, %v9105
      %v9107 = vmax.f32 %v9087, %v9091
      %v9108 = vrot.slane %v9107, 4
      %v9109 = vmax.f32 %v9107, %v9108
      %v9110 = vrot.slane %v9109, 2
      %v9111 = vmax.f32 %v9109, %v9110
      %v9112 = vrot.slane %v9111, 1
      %v9113 = vmax.f32 %v9111, %v9112
      %v9114 = vmax.f32 %v9088, %v9092
      %v9115 = vrot.slane %v9114, 4
      %v9116 = vmax.f32 %v9114, %v9115
      %v9117 = vrot.slane %v9116, 2
      %v9118 = vmax.f32 %v9116, %v9117
      %v9119 = vrot.slane %v9118, 1
      %v9120 = vmax.f32 %v9118, %v9119
      %v9121 = vsub.f32 %v9085, %v9099
      %v9122 = vsub.f32 %v9086, %v9106
      %v9123 = vsub.f32 %v9087, %v9113
      %v9124 = vsub.f32 %v9088, %v9120
      %v9125 = vsub.f32 %v9089, %v9099
      %v9126 = vsub.f32 %v9090, %v9106
      %v9127 = vsub.f32 %v9091, %v9113
      %v9128 = vsub.f32 %v9092, %v9120
      %v9129 = vmul.f32 %v9121, 1.442695
      %v9130 = vpow.pop %v9129
      %v9131 = vmul.f32 %v9122, 1.442695
      %v9132 = vpow.pop %v9131
      %v9133 = vmul.f32 %v9123, 1.442695
      %v9134 = vpow.pop %v9133
      %v9135 = vmul.f32 %v9124, 1.442695
      %v9136 = vpow.pop %v9135
      %v9137 = vmul.f32 %v9125, 1.442695
      %v9138 = vpow.pop %v9137
      %v9139 = vmul.f32 %v9126, 1.442695
      %v9140 = vpow.pop %v9139
      %v9141 = vmul.f32 %v9127, 1.442695
      %v9142 = vpow.pop %v9141
      %v9143 = vmul.f32 %v9128, 1.442695
      %v9144 = vpow.pop %v9143
      %v9145 = vadd.f32 %v9130, %v9138
      %v9146 = vrot.slane %v9145, 4
      %v9147 = vadd.f32 %v9145, %v9146
      %v9148 = vrot.slane %v9147, 2
      %v9149 = vadd.f32 %v9147, %v9148
      %v9150 = vrot.slane %v9149, 1
      %v9151 = vadd.f32 %v9149, %v9150
      %v9152 = vadd.f32 %v9132, %v9140
      %v9153 = vrot.slane %v9152, 4
      %v9154 = vadd.f32 %v9152, %v9153
      %v9155 = vrot.slane %v9154, 2
      %v9156 = vadd.f32 %v9154, %v9155
      %v9157 = vrot.slane %v9156, 1
      %v9158 = vadd.f32 %v9156, %v9157
      %v9159 = vadd.f32 %v9134, %v9142
      %v9160 = vrot.slane %v9159, 4
      %v9161 = vadd.f32 %v9159, %v9160
      %v9162 = vrot.slane %v9161, 2
      %v9163 = vadd.f32 %v9161, %v9162
      %v9164 = vrot.slane %v9163, 1
      %v9165 = vadd.f32 %v9163, %v9164
      %v9166 = vadd.f32 %v9136, %v9144
      %v9167 = vrot.slane %v9166, 4
      %v9168 = vadd.f32 %v9166, %v9167
      %v9169 = vrot.slane %v9168, 2
      %v9170 = vadd.f32 %v9168, %v9169
      %v9171 = vrot.slane %v9170, 1
      %v9172 = vadd.f32 %v9170, %v9171
      %v9173 = vrcp.pop %v9151
      %v9174 = vmul.f32 %v9130, %v9173
      %v9175 = vrcp.pop %v9158
      %v9176 = vmul.f32 %v9132, %v9175
      %v9177 = vrcp.pop %v9165
      %v9178 = vmul.f32 %v9134, %v9177
      %v9179 = vrcp.pop %v9172
      %v9180 = vmul.f32 %v9136, %v9179
      %v9181 = vmul.f32 %v9138, %v9173
      %v9182 = vmul.f32 %v9140, %v9175
      %v9183 = vmul.f32 %v9142, %v9177
      %v9184 = vmul.f32 %v9144, %v9179
      %9185 = vst [vmem:[%s251] sm:$0xff] %v9174
      %9186 = vst [vmem:[%s251 + $0x8] sm:$0xff] %v9176
      %9187 = vst [vmem:[%s251 + $0x10] sm:$0xff] %v9178
      %9188 = vst [vmem:[%s251 + $0x18] sm:$0xff] %v9180
      %9189 = vst [vmem:[%s251 + $0x20] sm:$0xff] %v9181
      %9190 = vst [vmem:[%s251 + $0x28] sm:$0xff] %v9182
      %9191 = vst [vmem:[%s251 + $0x30] sm:$0xff] %v9183
      %9192 = vst [vmem:[%s251 + $0x38] sm:$0xff] %v9184
      %p9193 = scmp.lt.s32.totalorder %s17, 1
      %s9194 = scalar_select %p9193, %s17, 1
      %s9195 = smul.addr %s9194, 8
      %s9196 = smul.addr %s9195, 8
      %s9197 = scalar_lea.vmem %s6, %s9196
      // Predicated region
      $region45: #{forward.3} parent=43 // pred_check
        %p9198 = pneg %p166
      $region46: #{forward.3} parent=43 // pred_check_branch
        %9200 = sbr.rel (%p9198) target = $region48
      $region47: #{forward.3} parent=43 // pred_region
        _
      $region48: #{forward.3} parent=43 // pred_fallthru
        _
    $region44: #{forward.3} parent=5 // pred_fallthru
      _
    %p9201 = scmp.le.s32.totalorder 2, %s12
    // Predicated region
    $region49: #{forward.3} parent=5 // pred_check
      %p9202 = pneg %p9201
    $region50: #{forward.3} parent=5 // pred_check_branch
      %9204 = sbr.rel (%p9202) target = $region52
    $region51: #{forward.3} parent=5 // pred_region
      %s9205 = ssub.s32 %s12, 2
      // Predicated region
      $region53: #{forward.3} parent=51 // pred_check
        %p9206 = pneg %p172
      $region54: #{forward.3} parent=51 // pred_check_branch
        %9208 = sbr.rel (%p9206) target = $region56
      $region55: #{forward.3} parent=51 // pred_region
        %p9209 = scmp.lt.s32.totalorder %s18, 1
        %s9210 = scalar_select %p9209, %s18, 1
        %s9211 = smul.addr %s9210, 8
        %s9212 = smul.addr %s9211, 8
        %s9213 = scalar_lea.vmem %s6, %s9212
      $region56: #{forward.3} parent=51 // pred_fallthru
        _
    $region52: #{forward.3} parent=5 // pred_fallthru
      _
  $region6: #{forward.3} parent=0 // loop_footer
    %s16 = sadd.s32 1, %s12
  $region7: #{forward.3} parent=0 // loop_footer_branch
    %11 = sbr.rel target = $region3
  $region8: #{forward.3} parent=0 // loop_exit
    _

</llo_original>
